<compile_context>
chip_gen: v7x
topology: tpu7x:2x2x1
jax: 0.10.0
libtpu: 0.0.40
codegen_flags: <defaults>
</compile_context>

<pallas_src>
import functools

import jax
import jax.numpy as jnp
from jax.experimental import pallas as pl
from jax.experimental.pallas import tpu as pltpu


# ---------------------------------------------------------------------------
# Fused Pallas kernel: GNN layers + fc_out + LSTM + decoder (whole batch)
# ---------------------------------------------------------------------------

def _make_fused_kernel(num_layers, T, B, output_dim):
    nclamp = min(output_dim, 2)      # channels 0 (and 1) are clamped to >= 0

    def kernel(xe_ref, A_ref, Wc_ref, bc_ref, gma_ref, bta_ref,
               fcw_ref, fcb_ref, wih_ref, whh_ref, bl_ref,
               dw_ref, db_ref, o_ref, hs_ref):
        N = A_ref.shape[-1]
        Q = T * B                     # (t, b) groups; rows ordered (t, b, n)
        BN = B * N
        R = whh_ref.shape[0]

        # ---------------- GNN encoder: HydroConv -> ReLU -> LayerNorm -------
        # Layer 0's node Linear W0 is pre-applied in the wrapper, so the input
        # is already H channels wide.
        h2 = xe_ref[...]                                      # [Q*N, H]
        for l in range(num_layers):
            A = A_ref[l]                                      # [N, N]
            C = h2.shape[-1]
            h3 = h2.reshape(Q, N, C)                          # leading split: free
            # Mass-conserving node mixing, batched over q = T*B (known-good
            # batched dot_general form; see header note).
            Ab = jnp.broadcast_to(A, (Q, N, N))
            agg = jnp.einsum('qmn,qnc->qmc', Ab, h3,
                             preferred_element_type=jnp.float32)
            agg2 = agg.reshape(Q * N, C)                      # leading merge: free
            if l == 0:
                u = agg2 + bc_ref[0]                          # W0 pre-applied
            else:
                u = jnp.dot(agg2, Wc_ref[l - 1],
                            preferred_element_type=jnp.float32) + bc_ref[l]
            a = jnp.maximum(u, 0.0)                           # relu; dropout p=0
            # LayerNorm (eps=1e-5, affine), single reduction sweep in f32.
            mu = jnp.mean(a, axis=-1, keepdims=True)
            var = jnp.mean(a * a, axis=-1, keepdims=True) - mu * mu
            h2 = (a - mu) * jax.lax.rsqrt(var + 1e-5) * gma_ref[l] + bta_ref[l]

        # ---------------- encoder fc_out ------------------------------------
        emb = jnp.dot(h2, fcw_ref[...],
                      preferred_element_type=jnp.float32) + fcb_ref[...]  # [Q*N, H]

        # ---------------- LSTM ----------------------------------------------
        # Input projection hoisted out of the recurrence: ONE matmul for all
        # timesteps and all 4 gates (4R = 128 lanes exactly).
        gx = jnp.dot(emb, wih_ref[...],
                     preferred_element_type=jnp.float32) + bl_ref[...]    # [Q*N, 4R]

        h_st = jnp.zeros((BN, R), jnp.float32)
        c_st = jnp.zeros((BN, R), jnp.float32)
        for t in range(T):            # serial recurrence; only h/c carried live
            g = gx[t * BN:(t + 1) * BN, :] + jnp.dot(
                h_st, whh_ref[...], preferred_element_type=jnp.float32)
            i_g = jax.nn.sigmoid(g[:, 0:R])
            f_g = jax.nn.sigmoid(g[:, R:2 * R])
            g_g = jnp.tanh(g[:, 2 * R:3 * R])
            o_g = jax.nn.sigmoid(g[:, 3 * R:4 * R])
            c_st = f_g * c_st + i_g * g_g
            h_st = o_g * jnp.tanh(c_st)
            hs_ref[t] = h_st                                  # VMEM scratch

        # ---------------- decoder + clamp -----------------------------------
        rnn2 = hs_ref[...].reshape(T * BN, R)                 # leading merge: free
        dec = jnp.dot(rnn2, dw_ref[...],
                      preferred_element_type=jnp.float32) + db_ref[...]   # [T*BN, OD]
        if nclamp >= output_dim:
            dec = jnp.maximum(dec, 0.0)   # every channel is clamped at 0
        elif nclamp > 0:
            col = jax.lax.broadcasted_iota(jnp.int32, dec.shape, 1)
            dec = jnp.where(col < nclamp, jnp.maximum(dec, 0.0), dec)
        o_ref[...] = dec

    return kernel


# ---------------------------------------------------------------------------
# Glue: per-layer [N, N] aggregation operator (edge MLP + scatter-add) in JAX
# ---------------------------------------------------------------------------
# TODO(synk): the per-edge softplus-MLP + scatter_add of MessagePassing has no
# clean Pallas TPU expression; it is folded into a dense [N, N] operator per
# layer (shared by all batch samples, since graph/edge_attr are tiled per
# batch) built once in plain JAX before the fused kernel runs.

def build_aggr_matrix(edge_index, edge_attr, N, We, be):
    src, dst = edge_index[0], edge_index[1]
    w = jax.nn.softplus(edge_attr @ We + be)[:, 0]      # [E] edge weights
    A = jnp.zeros((N, N), jnp.float32)
    A = A.at[dst, src].add(w)       # + w * x[src]
    A = A.at[dst, dst].add(-w)      # - w * x[dst]
    return A


# ---------------------------------------------------------------------------
# Full forward pass (single fused pallas_call, no grid -- batch in the rows)
# ---------------------------------------------------------------------------

def recurrent_gnn_surrogate(X_seq, edge_index, edge_attr, params, *,
                            num_layers, output_dim):
    B, T, N, Fin = X_seq.shape
    H = params["fc_W"].shape[0]
    R = params["Whh"].shape[0]

    # Per-layer [N, N] mass-conserving operators.
    A_all = jnp.stack([
        build_aggr_matrix(edge_index, edge_attr, N,
                          params["edge_W"][l], params["edge_b"][l])
        for l in range(num_layers)])                              # [L, N, N]

    # Layer-0 Linear pre-applied to the raw input:  (A0 x) W0 == A0 (x W0).
    xe = jnp.einsum('btnf,fh->btnh', X_seq, params["conv_W"][0])  # [B,T,N,H]
    xe = xe.transpose(1, 0, 2, 3).reshape(T * B * N, H)           # rows (t,b,n)

    # Stacked per-layer parameters (few, large operands instead of ~20 small).
    if num_layers > 1:
        Wc_all = jnp.stack(params["conv_W"][1:])                  # [L-1, H, H]
    else:
        Wc_all = jnp.zeros((1, H, H), jnp.float32)                # unused
    bc_all = jnp.stack(params["conv_b"])                          # [L, 1, H]
    gma_all = jnp.stack(params["ln_g"])                           # [L, 1, H]
    bta_all = jnp.stack(params["ln_b"])                           # [L, 1, H]

    inputs = [xe, A_all, Wc_all, bc_all, gma_all, bta_all,
              params["fc_W"], params["fc_b"],
              params["Wih"], params["Whh"], params["b_lstm"],
              params["dec_W"], params["dec_b"]]

    vmem = pl.BlockSpec(memory_space=pltpu.MemorySpace.VMEM)
    out2 = pl.pallas_call(
        _make_fused_kernel(num_layers, T, B, output_dim),
        out_shape=jax.ShapeDtypeStruct((T * B * N, output_dim), jnp.float32),
        in_specs=[vmem] * len(inputs),
        out_specs=vmem,
        scratch_shapes=[pltpu.VMEM((T, B * N, R), jnp.float32)],  # hidden states
    )(*inputs)

    # rows (t, b, n) -> [B, T, N, output_dim]
    return out2.reshape(T, B, N, output_dim).transpose(1, 0, 2, 3)


# ---------------------------------------------------------------------------
# Main
# ---------------------------------------------------------------------------

if __name__ == "__main__":
    B, T, N, Fin = 2, 8, 16, 4       # batch, seq len, nodes, in_channels
    H = 32                           # hidden_channels
    R = 32                           # rnn_hidden_dim
    OD = 2                           # output_dim
    ED = 3                           # edge_dim
    NUM_LAYERS = 2

    key = jax.random.PRNGKey(0)
    ks = jax.random.split(key, 20)

    X_seq = jax.random.normal(ks[0], (B, T, N, Fin), jnp.float32)

    # deterministic bidirectional ring graph over N nodes: E = 2N edges
    idx = jnp.arange(N, dtype=jnp.int32)
    src = jnp.concatenate([idx, (idx + 1) % N])
    dst = jnp.concatenate([(idx + 1) % N, idx])
    edge_index = jnp.stack([src, dst])                   # [2, E]
    E = edge_index.shape[1]
    edge_attr = jax.random.normal(ks[1], (E, ED), jnp.float32)

    def init(k, shape, scale=0.1):
        return scale * jax.random.normal(k, shape, jnp.float32)

    params = {
        # HydroConv: layer 0 (Fin->H), layer 1 (H->H); one edge-MLP per layer
        "conv_W": [init(ks[2], (Fin, H)), init(ks[3], (H, H))],
        "conv_b": [init(ks[4], (1, H)), init(ks[5], (1, H))],
        "edge_W": [init(ks[6], (ED, 1)), init(ks[7], (ED, 1))],
        "edge_b": [init(ks[8], (1,)), init(ks[9], (1,))],
        "ln_g":   [jnp.ones((1, H), jnp.float32), jnp.ones((1, H), jnp.float32)],
        "ln_b":   [jnp.zeros((1, H), jnp.float32), jnp.zeros((1, H), jnp.float32)],
        "fc_W":   init(ks[10], (H, H)),
        "fc_b":   init(ks[11], (1, H)),
        # LSTM: gate order i, f, g, o (PyTorch); b = b_ih + b_hh combined
        "Wih":    init(ks[12], (H, 4 * R)),
        "Whh":    init(ks[13], (R, 4 * R)),
        "b_lstm": init(ks[14], (1, 4 * R)),
        "dec_W":  init(ks[15], (R, OD)),
        "dec_b":  init(ks[16], (1, OD)),
    }

    fwd = jax.jit(functools.partial(recurrent_gnn_surrogate,
                                    num_layers=NUM_LAYERS, output_dim=OD))
    out = fwd(X_seq, edge_index, edge_attr, params)
    out = jax.block_until_ready(out)
    assert out.shape == (B, T, N, OD)
    print("KERNEL_OK")
</pallas_src>

<mosaic_0001>
module attributes {stable_mosaic.version = 11 : i64} {
  func.func private @main(%arg0: i32) attributes {dimension_semantics = [#tpu.dimension_semantics<core_parallel>], iteration_bounds = array<i64: 2>, tpu.core_type = #tpu.core_type<sc_scalar_subcore>, window_params = []} {
    return
  }
}

module attributes {stable_mosaic.version = 11 : i64} {
  func.func private @main(%arg0: i32) attributes {dimension_semantics = [#tpu.dimension_semantics<core_parallel>], iteration_bounds = array<i64: 2>, tpu.core_type = #tpu.core_type<sc_scalar_subcore>, window_params = []} {
    return
  }
}

module attributes {stable_mosaic.version = 11 : i64} {
  func.func @kernel(%arg0: memref<256x32xf32, #tpu.memory_space<vmem>>, %arg1: memref<2x16x16xf32, #tpu.memory_space<vmem>>, %arg2: memref<1x32x32xf32, #tpu.memory_space<vmem>>, %arg3: memref<2x1x32xf32, #tpu.memory_space<vmem>>, %arg4: memref<2x1x32xf32, #tpu.memory_space<vmem>>, %arg5: memref<2x1x32xf32, #tpu.memory_space<vmem>>, %arg6: memref<32x32xf32, #tpu.memory_space<vmem>>, %arg7: memref<1x32xf32, #tpu.memory_space<vmem>>, %arg8: memref<32x128xf32, #tpu.memory_space<vmem>>, %arg9: memref<32x128xf32, #tpu.memory_space<vmem>>, %arg10: memref<1x128xf32, #tpu.memory_space<vmem>>, %arg11: memref<32x2xf32, #tpu.memory_space<vmem>>, %arg12: memref<1x2xf32, #tpu.memory_space<vmem>>, %arg13: memref<256x2xf32, #tpu.memory_space<vmem>>, %arg14: memref<8x32x32xf32, #tpu.memory_space<vmem>>) attributes {dimension_semantics = [], scalar_prefetch = 0 : i64, scratch_operands = 1 : i64, tpu.core_type = #tpu.core_type<tc>} {
    %c0 = arith.constant 0 : index
    %c0_0 = arith.constant 0 : index
    %0 = vector.load %arg0[%c0, %c0_0] : memref<256x32xf32, #tpu.memory_space<vmem>>, vector<256x32xf32>
    %c0_1 = arith.constant 0 : index
    %c0_2 = arith.constant 0 : index
    %c0_3 = arith.constant 0 : index
    %1 = vector.load %arg1[%c0_1, %c0_2, %c0_3] : memref<2x16x16xf32, #tpu.memory_space<vmem>>, vector<1x16x16xf32>
    %2 = vector.shape_cast %1 : vector<1x16x16xf32> to vector<16x16xf32>
    %3 = vector.shape_cast %0 : vector<256x32xf32> to vector<16x16x32xf32>
    %4 = vector.shape_cast %2 : vector<16x16xf32> to vector<1x16x16xf32>
    %5 = vector.broadcast %4 : vector<1x16x16xf32> to vector<16x16x16xf32>
    "tpu.trace_start"() <{level = 10 : i32, message = "qmn,qnc->qmc"}> : () -> ()
    %cst = arith.constant dense<0.000000e+00> : vector<16x16x32xf32>
    %6 = tpu.matmul %5, %3, %cst {dimension_numbers = #tpu.dot_dimension_numbers<[2], [1], [1], [2], [0, 0, 0, 1, 1, 2], [0], [0]>} : vector<16x16x16xf32>, vector<16x16x32xf32>, vector<16x16x32xf32> -> vector<16x16x32xf32>
    "tpu.trace_stop"() : () -> ()
    %7 = vector.shape_cast %6 : vector<16x16x32xf32> to vector<256x32xf32>
    %c0_4 = arith.constant 0 : index
    %c0_5 = arith.constant 0 : index
    %c0_6 = arith.constant 0 : index
    %8 = vector.load %arg3[%c0_4, %c0_5, %c0_6] : memref<2x1x32xf32, #tpu.memory_space<vmem>>, vector<1x1x32xf32>
    %9 = vector.shape_cast %8 : vector<1x1x32xf32> to vector<1x32xf32>
    %10 = vector.broadcast %9 : vector<1x32xf32> to vector<256x32xf32>
    %11 = arith.addf %7, %10 : vector<256x32xf32>
    %cst_7 = arith.constant 0.000000e+00 : f32
    %12 = vector.broadcast %cst_7 : f32 to vector<256x32xf32>
    %13 = arith.maximumf %11, %12 : vector<256x32xf32>
    %cst_8 = arith.constant dense<0.000000e+00> : vector<256xf32>
    %14 = vector.multi_reduction <add>, %13, %cst_8 [1] : vector<256x32xf32> to vector<256xf32>
    %15 = vector.shape_cast %14 : vector<256xf32> to vector<256x1xf32>
    %cst_9 = arith.constant 3.200000e+01 : f32
    %16 = vector.broadcast %cst_9 : f32 to vector<256x1xf32>
    %17 = arith.divf %15, %16 : vector<256x1xf32>
    %18 = arith.mulf %13, %13 : vector<256x32xf32>
    %cst_10 = arith.constant dense<0.000000e+00> : vector<256xf32>
    %19 = vector.multi_reduction <add>, %18, %cst_10 [1] : vector<256x32xf32> to vector<256xf32>
    %20 = vector.shape_cast %19 : vector<256xf32> to vector<256x1xf32>
    %cst_11 = arith.constant 3.200000e+01 : f32
    %21 = vector.broadcast %cst_11 : f32 to vector<256x1xf32>
    %22 = arith.divf %20, %21 : vector<256x1xf32>
    %23 = arith.mulf %17, %17 : vector<256x1xf32>
    %24 = arith.subf %22, %23 : vector<256x1xf32>
    %25 = vector.broadcast %17 : vector<256x1xf32> to vector<256x32xf32>
    %26 = arith.subf %13, %25 : vector<256x32xf32>
    %cst_12 = arith.constant 9.99999974E-6 : f32
    %27 = vector.broadcast %cst_12 : f32 to vector<256x1xf32>
    %28 = arith.addf %24, %27 : vector<256x1xf32>
    %29 = math.rsqrt %28 : vector<256x1xf32>
    %30 = vector.broadcast %29 : vector<256x1xf32> to vector<256x32xf32>
    %31 = arith.mulf %26, %30 : vector<256x32xf32>
    %c0_13 = arith.constant 0 : index
    %c0_14 = arith.constant 0 : index
    %c0_15 = arith.constant 0 : index
    %32 = vector.load %arg4[%c0_13, %c0_14, %c0_15] : memref<2x1x32xf32, #tpu.memory_space<vmem>>, vector<1x1x32xf32>
    %33 = vector.shape_cast %32 : vector<1x1x32xf32> to vector<1x32xf32>
    %34 = vector.broadcast %33 : vector<1x32xf32> to vector<256x32xf32>
    %35 = arith.mulf %31, %34 : vector<256x32xf32>
    %c0_16 = arith.constant 0 : index
    %c0_17 = arith.constant 0 : index
    %c0_18 = arith.constant 0 : index
    %36 = vector.load %arg5[%c0_16, %c0_17, %c0_18] : memref<2x1x32xf32, #tpu.memory_space<vmem>>, vector<1x1x32xf32>
    %37 = vector.shape_cast %36 : vector<1x1x32xf32> to vector<1x32xf32>
    %38 = vector.broadcast %37 : vector<1x32xf32> to vector<256x32xf32>
    %39 = arith.addf %35, %38 : vector<256x32xf32>
    %c1 = arith.constant 1 : index
    %c0_19 = arith.constant 0 : index
    %c0_20 = arith.constant 0 : index
    %40 = vector.load %arg1[%c1, %c0_19, %c0_20] : memref<2x16x16xf32, #tpu.memory_space<vmem>>, vector<1x16x16xf32>
    %41 = vector.shape_cast %40 : vector<1x16x16xf32> to vector<16x16xf32>
    %42 = vector.shape_cast %39 : vector<256x32xf32> to vector<16x16x32xf32>
    %43 = vector.shape_cast %41 : vector<16x16xf32> to vector<1x16x16xf32>
    %44 = vector.broadcast %43 : vector<1x16x16xf32> to vector<16x16x16xf32>
    "tpu.trace_start"() <{level = 10 : i32, message = "qmn,qnc->qmc"}> : () -> ()
    %cst_21 = arith.constant dense<0.000000e+00> : vector<16x16x32xf32>
    %45 = tpu.matmul %44, %42, %cst_21 {dimension_numbers = #tpu.dot_dimension_numbers<[2], [1], [1], [2], [0, 0, 0, 1, 1, 2], [0], [0]>} : vector<16x16x16xf32>, vector<16x16x32xf32>, vector<16x16x32xf32> -> vector<16x16x32xf32>
    "tpu.trace_stop"() : () -> ()
    %46 = vector.shape_cast %45 : vector<16x16x32xf32> to vector<256x32xf32>
    %c0_22 = arith.constant 0 : index
    %c0_23 = arith.constant 0 : index
    %c0_24 = arith.constant 0 : index
    %47 = vector.load %arg2[%c0_22, %c0_23, %c0_24] : memref<1x32x32xf32, #tpu.memory_space<vmem>>, vector<1x32x32xf32>
    %48 = vector.shape_cast %47 : vector<1x32x32xf32> to vector<32x32xf32>
    %cst_25 = arith.constant dense<0.000000e+00> : vector<256x32xf32>
    %49 = tpu.matmul %46, %48, %cst_25 {dimension_numbers = #tpu.dot_dimension_numbers<[1], [0], [0], [1], [0, 0, 1, 1], [], []>} : vector<256x32xf32>, vector<32x32xf32>, vector<256x32xf32> -> vector<256x32xf32>
    %c1_26 = arith.constant 1 : index
    %c0_27 = arith.constant 0 : index
    %c0_28 = arith.constant 0 : index
    %50 = vector.load %arg3[%c1_26, %c0_27, %c0_28] : memref<2x1x32xf32, #tpu.memory_space<vmem>>, vector<1x1x32xf32>
    %51 = vector.shape_cast %50 : vector<1x1x32xf32> to vector<1x32xf32>
    %52 = vector.broadcast %51 : vector<1x32xf32> to vector<256x32xf32>
    %53 = arith.addf %49, %52 : vector<256x32xf32>
    %cst_29 = arith.constant 0.000000e+00 : f32
    %54 = vector.broadcast %cst_29 : f32 to vector<256x32xf32>
    %55 = arith.maximumf %53, %54 : vector<256x32xf32>
    %cst_30 = arith.constant dense<0.000000e+00> : vector<256xf32>
    %56 = vector.multi_reduction <add>, %55, %cst_30 [1] : vector<256x32xf32> to vector<256xf32>
    %57 = vector.shape_cast %56 : vector<256xf32> to vector<256x1xf32>
    %cst_31 = arith.constant 3.200000e+01 : f32
    %58 = vector.broadcast %cst_31 : f32 to vector<256x1xf32>
    %59 = arith.divf %57, %58 : vector<256x1xf32>
    %60 = arith.mulf %55, %55 : vector<256x32xf32>
    %cst_32 = arith.constant dense<0.000000e+00> : vector<256xf32>
    %61 = vector.multi_reduction <add>, %60, %cst_32 [1] : vector<256x32xf32> to vector<256xf32>
    %62 = vector.shape_cast %61 : vector<256xf32> to vector<256x1xf32>
    %cst_33 = arith.constant 3.200000e+01 : f32
    %63 = vector.broadcast %cst_33 : f32 to vector<256x1xf32>
    %64 = arith.divf %62, %63 : vector<256x1xf32>
    %65 = arith.mulf %59, %59 : vector<256x1xf32>
    %66 = arith.subf %64, %65 : vector<256x1xf32>
    %67 = vector.broadcast %59 : vector<256x1xf32> to vector<256x32xf32>
    %68 = arith.subf %55, %67 : vector<256x32xf32>
    %cst_34 = arith.constant 9.99999974E-6 : f32
    %69 = vector.broadcast %cst_34 : f32 to vector<256x1xf32>
    %70 = arith.addf %66, %69 : vector<256x1xf32>
    %71 = math.rsqrt %70 : vector<256x1xf32>
    %72 = vector.broadcast %71 : vector<256x1xf32> to vector<256x32xf32>
    %73 = arith.mulf %68, %72 : vector<256x32xf32>
    %c1_35 = arith.constant 1 : index
    %c0_36 = arith.constant 0 : index
    %c0_37 = arith.constant 0 : index
    %74 = vector.load %arg4[%c1_35, %c0_36, %c0_37] : memref<2x1x32xf32, #tpu.memory_space<vmem>>, vector<1x1x32xf32>
    %75 = vector.shape_cast %74 : vector<1x1x32xf32> to vector<1x32xf32>
    %76 = vector.broadcast %75 : vector<1x32xf32> to vector<256x32xf32>
    %77 = arith.mulf %73, %76 : vector<256x32xf32>
    %c1_38 = arith.constant 1 : index
    %c0_39 = arith.constant 0 : index
    %c0_40 = arith.constant 0 : index
    %78 = vector.load %arg5[%c1_38, %c0_39, %c0_40] : memref<2x1x32xf32, #tpu.memory_space<vmem>>, vector<1x1x32xf32>
    %79 = vector.shape_cast %78 : vector<1x1x32xf32> to vector<1x32xf32>
    %80 = vector.broadcast %79 : vector<1x32xf32> to vector<256x32xf32>
    %81 = arith.addf %77, %80 : vector<256x32xf32>
    %c0_41 = arith.constant 0 : index
    %c0_42 = arith.constant 0 : index
    %82 = vector.load %arg6[%c0_41, %c0_42] : memref<32x32xf32, #tpu.memory_space<vmem>>, vector<32x32xf32>
    %cst_43 = arith.constant dense<0.000000e+00> : vector<256x32xf32>
    %83 = tpu.matmul %81, %82, %cst_43 {dimension_numbers = #tpu.dot_dimension_numbers<[1], [0], [0], [1], [0, 0, 1, 1], [], []>} : vector<256x32xf32>, vector<32x32xf32>, vector<256x32xf32> -> vector<256x32xf32>
    %c0_44 = arith.constant 0 : index
    %c0_45 = arith.constant 0 : index
    %84 = vector.load %arg7[%c0_44, %c0_45] : memref<1x32xf32, #tpu.memory_space<vmem>>, vector<1x32xf32>
    %85 = vector.broadcast %84 : vector<1x32xf32> to vector<256x32xf32>
    %86 = arith.addf %83, %85 : vector<256x32xf32>
    %c0_46 = arith.constant 0 : index
    %c0_47 = arith.constant 0 : index
    %87 = vector.load %arg8[%c0_46, %c0_47] : memref<32x128xf32, #tpu.memory_space<vmem>>, vector<32x128xf32>
    %cst_48 = arith.constant dense<0.000000e+00> : vector<256x128xf32>
    %88 = tpu.matmul %86, %87, %cst_48 {dimension_numbers = #tpu.dot_dimension_numbers<[1], [0], [0], [1], [0, 0, 1, 1], [], []>} : vector<256x32xf32>, vector<32x128xf32>, vector<256x128xf32> -> vector<256x128xf32>
    %c0_49 = arith.constant 0 : index
    %c0_50 = arith.constant 0 : index
    %89 = vector.load %arg10[%c0_49, %c0_50] : memref<1x128xf32, #tpu.memory_space<vmem>>, vector<1x128xf32>
    %90 = vector.broadcast %89 : vector<1x128xf32> to vector<256x128xf32>
    %91 = arith.addf %88, %90 : vector<256x128xf32>
    %cst_51 = arith.constant 0.000000e+00 : f32
    %92 = vector.broadcast %cst_51 : f32 to vector<32x32xf32>
    %cst_52 = arith.constant 0.000000e+00 : f32
    %93 = vector.broadcast %cst_52 : f32 to vector<32x32xf32>
    %94 = vector.extract_strided_slice %91 {offsets = [0, 0], sizes = [32, 128], strides = [1, 1]} : vector<256x128xf32> to vector<32x128xf32>
    %c0_53 = arith.constant 0 : index
    %c0_54 = arith.constant 0 : index
    %95 = vector.load %arg9[%c0_53, %c0_54] : memref<32x128xf32, #tpu.memory_space<vmem>>, vector<32x128xf32>
    %cst_55 = arith.constant dense<0.000000e+00> : vector<32x128xf32>
    %96 = tpu.matmul %92, %95, %cst_55 {dimension_numbers = #tpu.dot_dimension_numbers<[1], [0], [0], [1], [0, 0, 1, 1], [], []>} : vector<32x32xf32>, vector<32x128xf32>, vector<32x128xf32> -> vector<32x128xf32>
    %97 = arith.addf %94, %96 : vector<32x128xf32>
    %98 = vector.extract_strided_slice %97 {offsets = [0, 0], sizes = [32, 32], strides = [1, 1]} : vector<32x128xf32> to vector<32x32xf32>
    %99 = arith.negf %98 : vector<32x32xf32>
    %100 = math.exp %99 : vector<32x32xf32>
    %cst_56 = arith.constant 1.000000e+00 : f32
    %101 = vector.broadcast %cst_56 : f32 to vector<32x32xf32>
    %102 = arith.addf %101, %100 : vector<32x32xf32>
    %103 = arith.divf %101, %102 : vector<32x32xf32>
    %104 = vector.extract_strided_slice %97 {offsets = [0, 32], sizes = [32, 32], strides = [1, 1]} : vector<32x128xf32> to vector<32x32xf32>
    %105 = arith.negf %104 : vector<32x32xf32>
    %106 = math.exp %105 : vector<32x32xf32>
    %cst_57 = arith.constant 1.000000e+00 : f32
    %107 = vector.broadcast %cst_57 : f32 to vector<32x32xf32>
    %108 = arith.addf %107, %106 : vector<32x32xf32>
    %109 = arith.divf %107, %108 : vector<32x32xf32>
    %110 = vector.extract_strided_slice %97 {offsets = [0, 64], sizes = [32, 32], strides = [1, 1]} : vector<32x128xf32> to vector<32x32xf32>
    %111 = math.tanh %110 : vector<32x32xf32>
    %112 = vector.extract_strided_slice %97 {offsets = [0, 96], sizes = [32, 32], strides = [1, 1]} : vector<32x128xf32> to vector<32x32xf32>
    %113 = arith.negf %112 : vector<32x32xf32>
    %114 = math.exp %113 : vector<32x32xf32>
    %cst_58 = arith.constant 1.000000e+00 : f32
    %115 = vector.broadcast %cst_58 : f32 to vector<32x32xf32>
    %116 = arith.addf %115, %114 : vector<32x32xf32>
    %117 = arith.divf %115, %116 : vector<32x32xf32>
    %118 = arith.mulf %109, %93 : vector<32x32xf32>
    %119 = arith.mulf %103, %111 : vector<32x32xf32>
    %120 = arith.addf %118, %119 : vector<32x32xf32>
    %121 = math.tanh %120 : vector<32x32xf32>
    %122 = arith.mulf %117, %121 : vector<32x32xf32>
    %c0_59 = arith.constant 0 : index
    %c0_60 = arith.constant 0 : index
    %c0_61 = arith.constant 0 : index
    %123 = vector.load %arg14[%c0_59, %c0_60, %c0_61] : memref<8x32x32xf32, #tpu.memory_space<vmem>>, vector<1x32x32xf32>
    %124 = vector.shape_cast %123 : vector<1x32x32xf32> to vector<32x32xf32>
    %125 = vector.shape_cast %122 : vector<32x32xf32> to vector<1x32x32xf32>
    tpu.vector_store %arg14[%c0_59, %c0_60, %c0_61], %125 {strides = array<i32>} : memref<8x32x32xf32, #tpu.memory_space<vmem>>, vector<1x32x32xf32>,
    %126 = vector.extract_strided_slice %91 {offsets = [32, 0], sizes = [32, 128], strides = [1, 1]} : vector<256x128xf32> to vector<32x128xf32>
    %c0_62 = arith.constant 0 : index
    %c0_63 = arith.constant 0 : index
    %127 = vector.load %arg9[%c0_62, %c0_63] : memref<32x128xf32, #tpu.memory_space<vmem>>, vector<32x128xf32>
    %cst_64 = arith.constant dense<0.000000e+00> : vector<32x128xf32>
    %128 = tpu.matmul %122, %127, %cst_64 {dimension_numbers = #tpu.dot_dimension_numbers<[1], [0], [0], [1], [0, 0, 1, 1], [], []>} : vector<32x32xf32>, vector<32x128xf32>, vector<32x128xf32> -> vector<32x128xf32>
    %129 = arith.addf %126, %128 : vector<32x128xf32>
    %130 = vector.extract_strided_slice %129 {offsets = [0, 0], sizes = [32, 32], strides = [1, 1]} : vector<32x128xf32> to vector<32x32xf32>
    %131 = arith.negf %130 : vector<32x32xf32>
    %132 = math.exp %131 : vector<32x32xf32>
    %cst_65 = arith.constant 1.000000e+00 : f32
    %133 = vector.broadcast %cst_65 : f32 to vector<32x32xf32>
    %134 = arith.addf %133, %132 : vector<32x32xf32>
    %135 = arith.divf %133, %134 : vector<32x32xf32>
    %136 = vector.extract_strided_slice %129 {offsets = [0, 32], sizes = [32, 32], strides = [1, 1]} : vector<32x128xf32> to vector<32x32xf32>
    %137 = arith.negf %136 : vector<32x32xf32>
    %138 = math.exp %137 : vector<32x32xf32>
    %cst_66 = arith.constant 1.000000e+00 : f32
    %139 = vector.broadcast %cst_66 : f32 to vector<32x32xf32>
    %140 = arith.addf %139, %138 : vector<32x32xf32>
    %141 = arith.divf %139, %140 : vector<32x32xf32>
    %142 = vector.extract_strided_slice %129 {offsets = [0, 64], sizes = [32, 32], strides = [1, 1]} : vector<32x128xf32> to vector<32x32xf32>
    %143 = math.tanh %142 : vector<32x32xf32>
    %144 = vector.extract_strided_slice %129 {offsets = [0, 96], sizes = [32, 32], strides = [1, 1]} : vector<32x128xf32> to vector<32x32xf32>
    %145 = arith.negf %144 : vector<32x32xf32>
    %146 = math.exp %145 : vector<32x32xf32>
    %cst_67 = arith.constant 1.000000e+00 : f32
    %147 = vector.broadcast %cst_67 : f32 to vector<32x32xf32>
    %148 = arith.addf %147, %146 : vector<32x32xf32>
    %149 = arith.divf %147, %148 : vector<32x32xf32>
    %150 = arith.mulf %141, %120 : vector<32x32xf32>
    %151 = arith.mulf %135, %143 : vector<32x32xf32>
    %152 = arith.addf %150, %151 : vector<32x32xf32>
    %153 = math.tanh %152 : vector<32x32xf32>
    %154 = arith.mulf %149, %153 : vector<32x32xf32>
    %c1_68 = arith.constant 1 : index
    %c0_69 = arith.constant 0 : index
    %c0_70 = arith.constant 0 : index
    %155 = vector.load %arg14[%c1_68, %c0_69, %c0_70] : memref<8x32x32xf32, #tpu.memory_space<vmem>>, vector<1x32x32xf32>
    %156 = vector.shape_cast %155 : vector<1x32x32xf32> to vector<32x32xf32>
    %157 = vector.shape_cast %154 : vector<32x32xf32> to vector<1x32x32xf32>
    tpu.vector_store %arg14[%c1_68, %c0_69, %c0_70], %157 {strides = array<i32>} : memref<8x32x32xf32, #tpu.memory_space<vmem>>, vector<1x32x32xf32>,
    %158 = vector.extract_strided_slice %91 {offsets = [64, 0], sizes = [32, 128], strides = [1, 1]} : vector<256x128xf32> to vector<32x128xf32>
    %c0_71 = arith.constant 0 : index
    %c0_72 = arith.constant 0 : index
    %159 = vector.load %arg9[%c0_71, %c0_72] : memref<32x128xf32, #tpu.memory_space<vmem>>, vector<32x128xf32>
    %cst_73 = arith.constant dense<0.000000e+00> : vector<32x128xf32>
    %160 = tpu.matmul %154, %159, %cst_73 {dimension_numbers = #tpu.dot_dimension_numbers<[1], [0], [0], [1], [0, 0, 1, 1], [], []>} : vector<32x32xf32>, vector<32x128xf32>, vector<32x128xf32> -> vector<32x128xf32>
    %161 = arith.addf %158, %160 : vector<32x128xf32>
    %162 = vector.extract_strided_slice %161 {offsets = [0, 0], sizes = [32, 32], strides = [1, 1]} : vector<32x128xf32> to vector<32x32xf32>
    %163 = arith.negf %162 : vector<32x32xf32>
    %164 = math.exp %163 : vector<32x32xf32>
    %cst_74 = arith.constant 1.000000e+00 : f32
    %165 = vector.broadcast %cst_74 : f32 to vector<32x32xf32>
    %166 = arith.addf %165, %164 : vector<32x32xf32>
    %167 = arith.divf %165, %166 : vector<32x32xf32>
    %168 = vector.extract_strided_slice %161 {offsets = [0, 32], sizes = [32, 32], strides = [1, 1]} : vector<32x128xf32> to vector<32x32xf32>
    %169 = arith.negf %168 : vector<32x32xf32>
    %170 = math.exp %169 : vector<32x32xf32>
    %cst_75 = arith.constant 1.000000e+00 : f32
    %171 = vector.broadcast %cst_75 : f32 to vector<32x32xf32>
    %172 = arith.addf %171, %170 : vector<32x32xf32>
    %173 = arith.divf %171, %172 : vector<32x32xf32>
    %174 = vector.extract_strided_slice %161 {offsets = [0, 64], sizes = [32, 32], strides = [1, 1]} : vector<32x128xf32> to vector<32x32xf32>
    %175 = math.tanh %174 : vector<32x32xf32>
    %176 = vector.extract_strided_slice %161 {offsets = [0, 96], sizes = [32, 32], strides = [1, 1]} : vector<32x128xf32> to vector<32x32xf32>
    %177 = arith.negf %176 : vector<32x32xf32>
    %178 = math.exp %177 : vector<32x32xf32>
    %cst_76 = arith.constant 1.000000e+00 : f32
    %179 = vector.broadcast %cst_76 : f32 to vector<32x32xf32>
    %180 = arith.addf %179, %178 : vector<32x32xf32>
    %181 = arith.divf %179, %180 : vector<32x32xf32>
    %182 = arith.mulf %173, %152 : vector<32x32xf32>
    %183 = arith.mulf %167, %175 : vector<32x32xf32>
    %184 = arith.addf %182, %183 : vector<32x32xf32>
    %185 = math.tanh %184 : vector<32x32xf32>
    %186 = arith.mulf %181, %185 : vector<32x32xf32>
    %c2 = arith.constant 2 : index
    %c0_77 = arith.constant 0 : index
    %c0_78 = arith.constant 0 : index
    %187 = vector.load %arg14[%c2, %c0_77, %c0_78] : memref<8x32x32xf32, #tpu.memory_space<vmem>>, vector<1x32x32xf32>
    %188 = vector.shape_cast %187 : vector<1x32x32xf32> to vector<32x32xf32>
    %189 = vector.shape_cast %186 : vector<32x32xf32> to vector<1x32x32xf32>
    tpu.vector_store %arg14[%c2, %c0_77, %c0_78], %189 {strides = array<i32>} : memref<8x32x32xf32, #tpu.memory_space<vmem>>, vector<1x32x32xf32>,
    %190 = vector.extract_strided_slice %91 {offsets = [96, 0], sizes = [32, 128], strides = [1, 1]} : vector<256x128xf32> to vector<32x128xf32>
    %c0_79 = arith.constant 0 : index
    %c0_80 = arith.constant 0 : index
    %191 = vector.load %arg9[%c0_79, %c0_80] : memref<32x128xf32, #tpu.memory_space<vmem>>, vector<32x128xf32>
    %cst_81 = arith.constant dense<0.000000e+00> : vector<32x128xf32>
    %192 = tpu.matmul %186, %191, %cst_81 {dimension_numbers = #tpu.dot_dimension_numbers<[1], [0], [0], [1], [0, 0, 1, 1], [], []>} : vector<32x32xf32>, vector<32x128xf32>, vector<32x128xf32> -> vector<32x128xf32>
    %193 = arith.addf %190, %192 : vector<32x128xf32>
    %194 = vector.extract_strided_slice %193 {offsets = [0, 0], sizes = [32, 32], strides = [1, 1]} : vector<32x128xf32> to vector<32x32xf32>
    %195 = arith.negf %194 : vector<32x32xf32>
    %196 = math.exp %195 : vector<32x32xf32>
    %cst_82 = arith.constant 1.000000e+00 : f32
    %197 = vector.broadcast %cst_82 : f32 to vector<32x32xf32>
    %198 = arith.addf %197, %196 : vector<32x32xf32>
    %199 = arith.divf %197, %198 : vector<32x32xf32>
    %200 = vector.extract_strided_slice %193 {offsets = [0, 32], sizes = [32, 32], strides = [1, 1]} : vector<32x128xf32> to vector<32x32xf32>
    %201 = arith.negf %200 : vector<32x32xf32>
    %202 = math.exp %201 : vector<32x32xf32>
    %cst_83 = arith.constant 1.000000e+00 : f32
    %203 = vector.broadcast %cst_83 : f32 to vector<32x32xf32>
    %204 = arith.addf %203, %202 : vector<32x32xf32>
    %205 = arith.divf %203, %204 : vector<32x32xf32>
    %206 = vector.extract_strided_slice %193 {offsets = [0, 64], sizes = [32, 32], strides = [1, 1]} : vector<32x128xf32> to vector<32x32xf32>
    %207 = math.tanh %206 : vector<32x32xf32>
    %208 = vector.extract_strided_slice %193 {offsets = [0, 96], sizes = [32, 32], strides = [1, 1]} : vector<32x128xf32> to vector<32x32xf32>
    %209 = arith.negf %208 : vector<32x32xf32>
    %210 = math.exp %209 : vector<32x32xf32>
    %cst_84 = arith.constant 1.000000e+00 : f32
    %211 = vector.broadcast %cst_84 : f32 to vector<32x32xf32>
    %212 = arith.addf %211, %210 : vector<32x32xf32>
    %213 = arith.divf %211, %212 : vector<32x32xf32>
    %214 = arith.mulf %205, %184 : vector<32x32xf32>
    %215 = arith.mulf %199, %207 : vector<32x32xf32>
    %216 = arith.addf %214, %215 : vector<32x32xf32>
    %217 = math.tanh %216 : vector<32x32xf32>
    %218 = arith.mulf %213, %217 : vector<32x32xf32>
    %c3 = arith.constant 3 : index
    %c0_85 = arith.constant 0 : index
    %c0_86 = arith.constant 0 : index
    %219 = vector.load %arg14[%c3, %c0_85, %c0_86] : memref<8x32x32xf32, #tpu.memory_space<vmem>>, vector<1x32x32xf32>
    %220 = vector.shape_cast %219 : vector<1x32x32xf32> to vector<32x32xf32>
    %221 = vector.shape_cast %218 : vector<32x32xf32> to vector<1x32x32xf32>
    tpu.vector_store %arg14[%c3, %c0_85, %c0_86], %221 {strides = array<i32>} : memref<8x32x32xf32, #tpu.memory_space<vmem>>, vector<1x32x32xf32>,
    %222 = vector.extract_strided_slice %91 {offsets = [128, 0], sizes = [32, 128], strides = [1, 1]} : vector<256x128xf32> to vector<32x128xf32>
    %c0_87 = arith.constant 0 : index
    %c0_88 = arith.constant 0 : index
    %223 = vector.load %arg9[%c0_87, %c0_88] : memref<32x128xf32, #tpu.memory_space<vmem>>, vector<32x128xf32>
    %cst_89 = arith.constant dense<0.000000e+00> : vector<32x128xf32>
    %224 = tpu.matmul %218, %223, %cst_89 {dimension_numbers = #tpu.dot_dimension_numbers<[1], [0], [0], [1], [0, 0, 1, 1], [], []>} : vector<32x32xf32>, vector<32x128xf32>, vector<32x128xf32> -> vector<32x128xf32>
    %225 = arith.addf %222, %224 : vector<32x128xf32>
    %226 = vector.extract_strided_slice %225 {offsets = [0, 0], sizes = [32, 32], strides = [1, 1]} : vector<32x128xf32> to vector<32x32xf32>
    %227 = arith.negf %226 : vector<32x32xf32>
    %228 = math.exp %227 : vector<32x32xf32>
    %cst_90 = arith.constant 1.000000e+00 : f32
    %229 = vector.broadcast %cst_90 : f32 to vector<32x32xf32>
    %230 = arith.addf %229, %228 : vector<32x32xf32>
    %231 = arith.divf %229, %230 : vector<32x32xf32>
    %232 = vector.extract_strided_slice %225 {offsets = [0, 32], sizes = [32, 32], strides = [1, 1]} : vector<32x128xf32> to vector<32x32xf32>
    %233 = arith.negf %232 : vector<32x32xf32>
    %234 = math.exp %233 : vector<32x32xf32>
    %cst_91 = arith.constant 1.000000e+00 : f32
    %235 = vector.broadcast %cst_91 : f32 to vector<32x32xf32>
    %236 = arith.addf %235, %234 : vector<32x32xf32>
    %237 = arith.divf %235, %236 : vector<32x32xf32>
    %238 = vector.extract_strided_slice %225 {offsets = [0, 64], sizes = [32, 32], strides = [1, 1]} : vector<32x128xf32> to vector<32x32xf32>
    %239 = math.tanh %238 : vector<32x32xf32>
    %240 = vector.extract_strided_slice %225 {offsets = [0, 96], sizes = [32, 32], strides = [1, 1]} : vector<32x128xf32> to vector<32x32xf32>
    %241 = arith.negf %240 : vector<32x32xf32>
    %242 = math.exp %241 : vector<32x32xf32>
    %cst_92 = arith.constant 1.000000e+00 : f32
    %243 = vector.broadcast %cst_92 : f32 to vector<32x32xf32>
    %244 = arith.addf %243, %242 : vector<32x32xf32>
    %245 = arith.divf %243, %244 : vector<32x32xf32>
    %246 = arith.mulf %237, %216 : vector<32x32xf32>
    %247 = arith.mulf %231, %239 : vector<32x32xf32>
    %248 = arith.addf %246, %247 : vector<32x32xf32>
    %249 = math.tanh %248 : vector<32x32xf32>
    %250 = arith.mulf %245, %249 : vector<32x32xf32>
    %c4 = arith.constant 4 : index
    %c0_93 = arith.constant 0 : index
    %c0_94 = arith.constant 0 : index
    %251 = vector.load %arg14[%c4, %c0_93, %c0_94] : memref<8x32x32xf32, #tpu.memory_space<vmem>>, vector<1x32x32xf32>
    %252 = vector.shape_cast %251 : vector<1x32x32xf32> to vector<32x32xf32>
    %253 = vector.shape_cast %250 : vector<32x32xf32> to vector<1x32x32xf32>
    tpu.vector_store %arg14[%c4, %c0_93, %c0_94], %253 {strides = array<i32>} : memref<8x32x32xf32, #tpu.memory_space<vmem>>, vector<1x32x32xf32>,
    %254 = vector.extract_strided_slice %91 {offsets = [160, 0], sizes = [32, 128], strides = [1, 1]} : vector<256x128xf32> to vector<32x128xf32>
    %c0_95 = arith.constant 0 : index
    %c0_96 = arith.constant 0 : index
    %255 = vector.load %arg9[%c0_95, %c0_96] : memref<32x128xf32, #tpu.memory_space<vmem>>, vector<32x128xf32>
    %cst_97 = arith.constant dense<0.000000e+00> : vector<32x128xf32>
    %256 = tpu.matmul %250, %255, %cst_97 {dimension_numbers = #tpu.dot_dimension_numbers<[1], [0], [0], [1], [0, 0, 1, 1], [], []>} : vector<32x32xf32>, vector<32x128xf32>, vector<32x128xf32> -> vector<32x128xf32>
    %257 = arith.addf %254, %256 : vector<32x128xf32>
    %258 = vector.extract_strided_slice %257 {offsets = [0, 0], sizes = [32, 32], strides = [1, 1]} : vector<32x128xf32> to vector<32x32xf32>
    %259 = arith.negf %258 : vector<32x32xf32>
    %260 = math.exp %259 : vector<32x32xf32>
    %cst_98 = arith.constant 1.000000e+00 : f32
    %261 = vector.broadcast %cst_98 : f32 to vector<32x32xf32>
    %262 = arith.addf %261, %260 : vector<32x32xf32>
    %263 = arith.divf %261, %262 : vector<32x32xf32>
    %264 = vector.extract_strided_slice %257 {offsets = [0, 32], sizes = [32, 32], strides = [1, 1]} : vector<32x128xf32> to vector<32x32xf32>
    %265 = arith.negf %264 : vector<32x32xf32>
    %266 = math.exp %265 : vector<32x32xf32>
    %cst_99 = arith.constant 1.000000e+00 : f32
    %267 = vector.broadcast %cst_99 : f32 to vector<32x32xf32>
    %268 = arith.addf %267, %266 : vector<32x32xf32>
    %269 = arith.divf %267, %268 : vector<32x32xf32>
    %270 = vector.extract_strided_slice %257 {offsets = [0, 64], sizes = [32, 32], strides = [1, 1]} : vector<32x128xf32> to vector<32x32xf32>
    %271 = math.tanh %270 : vector<32x32xf32>
    %272 = vector.extract_strided_slice %257 {offsets = [0, 96], sizes = [32, 32], strides = [1, 1]} : vector<32x128xf32> to vector<32x32xf32>
    %273 = arith.negf %272 : vector<32x32xf32>
    %274 = math.exp %273 : vector<32x32xf32>
    %cst_100 = arith.constant 1.000000e+00 : f32
    %275 = vector.broadcast %cst_100 : f32 to vector<32x32xf32>
    %276 = arith.addf %275, %274 : vector<32x32xf32>
    %277 = arith.divf %275, %276 : vector<32x32xf32>
    %278 = arith.mulf %269, %248 : vector<32x32xf32>
    %279 = arith.mulf %263, %271 : vector<32x32xf32>
    %280 = arith.addf %278, %279 : vector<32x32xf32>
    %281 = math.tanh %280 : vector<32x32xf32>
    %282 = arith.mulf %277, %281 : vector<32x32xf32>
    %c5 = arith.constant 5 : index
    %c0_101 = arith.constant 0 : index
    %c0_102 = arith.constant 0 : index
    %283 = vector.load %arg14[%c5, %c0_101, %c0_102] : memref<8x32x32xf32, #tpu.memory_space<vmem>>, vector<1x32x32xf32>
    %284 = vector.shape_cast %283 : vector<1x32x32xf32> to vector<32x32xf32>
    %285 = vector.shape_cast %282 : vector<32x32xf32> to vector<1x32x32xf32>
    tpu.vector_store %arg14[%c5, %c0_101, %c0_102], %285 {strides = array<i32>} : memref<8x32x32xf32, #tpu.memory_space<vmem>>, vector<1x32x32xf32>,
    %286 = vector.extract_strided_slice %91 {offsets = [192, 0], sizes = [32, 128], strides = [1, 1]} : vector<256x128xf32> to vector<32x128xf32>
    %c0_103 = arith.constant 0 : index
    %c0_104 = arith.constant 0 : index
    %287 = vector.load %arg9[%c0_103, %c0_104] : memref<32x128xf32, #tpu.memory_space<vmem>>, vector<32x128xf32>
    %cst_105 = arith.constant dense<0.000000e+00> : vector<32x128xf32>
    %288 = tpu.matmul %282, %287, %cst_105 {dimension_numbers = #tpu.dot_dimension_numbers<[1], [0], [0], [1], [0, 0, 1, 1], [], []>} : vector<32x32xf32>, vector<32x128xf32>, vector<32x128xf32> -> vector<32x128xf32>
    %289 = arith.addf %286, %288 : vector<32x128xf32>
    %290 = vector.extract_strided_slice %289 {offsets = [0, 0], sizes = [32, 32], strides = [1, 1]} : vector<32x128xf32> to vector<32x32xf32>
    %291 = arith.negf %290 : vector<32x32xf32>
    %292 = math.exp %291 : vector<32x32xf32>
    %cst_106 = arith.constant 1.000000e+00 : f32
    %293 = vector.broadcast %cst_106 : f32 to vector<32x32xf32>
    %294 = arith.addf %293, %292 : vector<32x32xf32>
    %295 = arith.divf %293, %294 : vector<32x32xf32>
    %296 = vector.extract_strided_slice %289 {offsets = [0, 32], sizes = [32, 32], strides = [1, 1]} : vector<32x128xf32> to vector<32x32xf32>
    %297 = arith.negf %296 : vector<32x32xf32>
    %298 = math.exp %297 : vector<32x32xf32>
    %cst_107 = arith.constant 1.000000e+00 : f32
    %299 = vector.broadcast %cst_107 : f32 to vector<32x32xf32>
    %300 = arith.addf %299, %298 : vector<32x32xf32>
    %301 = arith.divf %299, %300 : vector<32x32xf32>
    %302 = vector.extract_strided_slice %289 {offsets = [0, 64], sizes = [32, 32], strides = [1, 1]} : vector<32x128xf32> to vector<32x32xf32>
    %303 = math.tanh %302 : vector<32x32xf32>
    %304 = vector.extract_strided_slice %289 {offsets = [0, 96], sizes = [32, 32], strides = [1, 1]} : vector<32x128xf32> to vector<32x32xf32>
    %305 = arith.negf %304 : vector<32x32xf32>
    %306 = math.exp %305 : vector<32x32xf32>
    %cst_108 = arith.constant 1.000000e+00 : f32
    %307 = vector.broadcast %cst_108 : f32 to vector<32x32xf32>
    %308 = arith.addf %307, %306 : vector<32x32xf32>
    %309 = arith.divf %307, %308 : vector<32x32xf32>
    %310 = arith.mulf %301, %280 : vector<32x32xf32>
    %311 = arith.mulf %295, %303 : vector<32x32xf32>
    %312 = arith.addf %310, %311 : vector<32x32xf32>
    %313 = math.tanh %312 : vector<32x32xf32>
    %314 = arith.mulf %309, %313 : vector<32x32xf32>
    %c6 = arith.constant 6 : index
    %c0_109 = arith.constant 0 : index
    %c0_110 = arith.constant 0 : index
    %315 = vector.load %arg14[%c6, %c0_109, %c0_110] : memref<8x32x32xf32, #tpu.memory_space<vmem>>, vector<1x32x32xf32>
    %316 = vector.shape_cast %315 : vector<1x32x32xf32> to vector<32x32xf32>
    %317 = vector.shape_cast %314 : vector<32x32xf32> to vector<1x32x32xf32>
    tpu.vector_store %arg14[%c6, %c0_109, %c0_110], %317 {strides = array<i32>} : memref<8x32x32xf32, #tpu.memory_space<vmem>>, vector<1x32x32xf32>,
    %318 = vector.extract_strided_slice %91 {offsets = [224, 0], sizes = [32, 128], strides = [1, 1]} : vector<256x128xf32> to vector<32x128xf32>
    %c0_111 = arith.constant 0 : index
    %c0_112 = arith.constant 0 : index
    %319 = vector.load %arg9[%c0_111, %c0_112] : memref<32x128xf32, #tpu.memory_space<vmem>>, vector<32x128xf32>
    %cst_113 = arith.constant dense<0.000000e+00> : vector<32x128xf32>
    %320 = tpu.matmul %314, %319, %cst_113 {dimension_numbers = #tpu.dot_dimension_numbers<[1], [0], [0], [1], [0, 0, 1, 1], [], []>} : vector<32x32xf32>, vector<32x128xf32>, vector<32x128xf32> -> vector<32x128xf32>
    %321 = arith.addf %318, %320 : vector<32x128xf32>
    %322 = vector.extract_strided_slice %321 {offsets = [0, 0], sizes = [32, 32], strides = [1, 1]} : vector<32x128xf32> to vector<32x32xf32>
    %323 = arith.negf %322 : vector<32x32xf32>
    %324 = math.exp %323 : vector<32x32xf32>
    %cst_114 = arith.constant 1.000000e+00 : f32
    %325 = vector.broadcast %cst_114 : f32 to vector<32x32xf32>
    %326 = arith.addf %325, %324 : vector<32x32xf32>
    %327 = arith.divf %325, %326 : vector<32x32xf32>
    %328 = vector.extract_strided_slice %321 {offsets = [0, 32], sizes = [32, 32], strides = [1, 1]} : vector<32x128xf32> to vector<32x32xf32>
    %329 = arith.negf %328 : vector<32x32xf32>
    %330 = math.exp %329 : vector<32x32xf32>
    %cst_115 = arith.constant 1.000000e+00 : f32
    %331 = vector.broadcast %cst_115 : f32 to vector<32x32xf32>
    %332 = arith.addf %331, %330 : vector<32x32xf32>
    %333 = arith.divf %331, %332 : vector<32x32xf32>
    %334 = vector.extract_strided_slice %321 {offsets = [0, 64], sizes = [32, 32], strides = [1, 1]} : vector<32x128xf32> to vector<32x32xf32>
    %335 = math.tanh %334 : vector<32x32xf32>
    %336 = vector.extract_strided_slice %321 {offsets = [0, 96], sizes = [32, 32], strides = [1, 1]} : vector<32x128xf32> to vector<32x32xf32>
    %337 = arith.negf %336 : vector<32x32xf32>
    %338 = math.exp %337 : vector<32x32xf32>
    %cst_116 = arith.constant 1.000000e+00 : f32
    %339 = vector.broadcast %cst_116 : f32 to vector<32x32xf32>
    %340 = arith.addf %339, %338 : vector<32x32xf32>
    %341 = arith.divf %339, %340 : vector<32x32xf32>
    %342 = arith.mulf %333, %312 : vector<32x32xf32>
    %343 = arith.mulf %327, %335 : vector<32x32xf32>
    %344 = arith.addf %342, %343 : vector<32x32xf32>
    %345 = math.tanh %344 : vector<32x32xf32>
    %346 = arith.mulf %341, %345 : vector<32x32xf32>
    %c7 = arith.constant 7 : index
    %c0_117 = arith.constant 0 : index
    %c0_118 = arith.constant 0 : index
    %347 = vector.load %arg14[%c7, %c0_117, %c0_118] : memref<8x32x32xf32, #tpu.memory_space<vmem>>, vector<1x32x32xf32>
    %348 = vector.shape_cast %347 : vector<1x32x32xf32> to vector<32x32xf32>
    %349 = vector.shape_cast %346 : vector<32x32xf32> to vector<1x32x32xf32>
    tpu.vector_store %arg14[%c7, %c0_117, %c0_118], %349 {strides = array<i32>} : memref<8x32x32xf32, #tpu.memory_space<vmem>>, vector<1x32x32xf32>,
    %c0_119 = arith.constant 0 : index
    %c0_120 = arith.constant 0 : index
    %c0_121 = arith.constant 0 : index
    %350 = vector.load %arg14[%c0_119, %c0_120, %c0_121] : memref<8x32x32xf32, #tpu.memory_space<vmem>>, vector<8x32x32xf32>
    %351 = vector.shape_cast %350 : vector<8x32x32xf32> to vector<256x32xf32>
    %c0_122 = arith.constant 0 : index
    %c0_123 = arith.constant 0 : index
    %352 = vector.load %arg11[%c0_122, %c0_123] : memref<32x2xf32, #tpu.memory_space<vmem>>, vector<32x2xf32>
    %cst_124 = arith.constant dense<0.000000e+00> : vector<256x2xf32>
    %353 = tpu.matmul %351, %352, %cst_124 {dimension_numbers = #tpu.dot_dimension_numbers<[1], [0], [0], [1], [0, 0, 1, 1], [], []>} : vector<256x32xf32>, vector<32x2xf32>, vector<256x2xf32> -> vector<256x2xf32>
    %c0_125 = arith.constant 0 : index
    %c0_126 = arith.constant 0 : index
    %354 = vector.load %arg12[%c0_125, %c0_126] : memref<1x2xf32, #tpu.memory_space<vmem>>, vector<1x2xf32>
    %355 = vector.broadcast %354 : vector<1x2xf32> to vector<256x2xf32>
    %356 = arith.addf %353, %355 : vector<256x2xf32>
    %cst_127 = arith.constant 0.000000e+00 : f32
    %357 = vector.broadcast %cst_127 : f32 to vector<256x2xf32>
    %358 = arith.maximumf %356, %357 : vector<256x2xf32>
    %c0_128 = arith.constant 0 : index
    %c0_129 = arith.constant 0 : index
    %359 = vector.load %arg13[%c0_128, %c0_129] : memref<256x2xf32, #tpu.memory_space<vmem>>, vector<256x2xf32>
    tpu.vector_store %arg13[%c0_128, %c0_129], %358 {strides = array<i32>} : memref<256x2xf32, #tpu.memory_space<vmem>>, vector<256x2xf32>,
    return
  }
}

</mosaic_0001>

<llo_original>
// kernel: recurrent_gnn_surrogate.1
$region0: #{recurrent_gnn_surrogate.1}
  #allocation0 [shape = 'u32[]', space=smem, size = 0x4, offset = 0x4, fixed_abs, tag = 'smem constant byte address 0x4 - core index']
  #allocation1 [shape = 'u32[144,128]{1,0:T(1,128)}', space=vmem, size = 0x12000, scoped, tag = 'internal scratch']
  #allocation2 [shape = 'f32[8,32,32]{2,1,0:T(8,128)}', space=vmem, size = 0x20000, scoped, tag = 'scratch operand']
  %s0 = inlined_call_operand.vmem [shape: f32[256,32], index: 0, kind: input, shape index: {}]
  %s1 = inlined_call_operand.vmem [shape: f32[2,16,16], index: 1, kind: input, shape index: {}]
  %s2 = inlined_call_operand.vmem [shape: f32[1,32,32], index: 2, kind: input, shape index: {}]
  %s3 = inlined_call_operand.vmem [shape: f32[2,1,32], index: 3, kind: input, shape index: {}]
  %s4 = inlined_call_operand.vmem [shape: f32[2,1,32], index: 4, kind: input, shape index: {}]
  %s5 = inlined_call_operand.vmem [shape: f32[2,1,32], index: 5, kind: input, shape index: {}]
  %s6 = inlined_call_operand.vmem [shape: f32[32,32], index: 6, kind: input, shape index: {}]
  %s7 = inlined_call_operand.vmem [shape: f32[1,32], index: 7, kind: input, shape index: {}]
  %s8 = inlined_call_operand.vmem [shape: f32[32,128], index: 8, kind: input, shape index: {}]
  %s9 = inlined_call_operand.vmem [shape: f32[32,128], index: 9, kind: input, shape index: {}]
  %s10 = inlined_call_operand.vmem [shape: f32[1,128], index: 10, kind: input, shape index: {}]
  %s11 = inlined_call_operand.vmem [shape: f32[32,2], index: 11, kind: input, shape index: {}]
  %s12 = inlined_call_operand.vmem [shape: f32[1,2], index: 12, kind: input, shape index: {}]
  %s13 = inlined_call_operand.vmem [shape: f32[256,2], index: 13, kind: output, shape index: {}]
  %s14 = sld [smem:[#allocation0]]
  $region62: #{recurrent_gnn_surrogate.1} parent=0
    _
  %s16 = ssub.s32 1, %s14
  %s17 = scalar_select 0, %s16, %s14
  // Predicated region
  $region2: #{recurrent_gnn_surrogate.1} parent=0 // pred_check
    _
  $region3: #{recurrent_gnn_surrogate.1} parent=0 // pred_check_branch
    %19 = sbr.rel (0) target = $region5
  $region4: #{recurrent_gnn_surrogate.1} parent=0 // pred_region
    _
  $region5: #{recurrent_gnn_surrogate.1} parent=0 // pred_fallthru
    _
  // Predicated region
  $region6: #{recurrent_gnn_surrogate.1} parent=0 // pred_check
    _
  $region7: #{recurrent_gnn_surrogate.1} parent=0 // pred_check_branch
    %21 = sbr.rel (0) target = $region9
  $region8: #{recurrent_gnn_surrogate.1} parent=0 // pred_region
    _
  $region9: #{recurrent_gnn_surrogate.1} parent=0 // pred_fallthru
    _
  // Predicated region
  $region10: #{recurrent_gnn_surrogate.1} parent=0 // pred_check
    _
  $region11: #{recurrent_gnn_surrogate.1} parent=0 // pred_check_branch
    %23 = sbr.rel (0) target = $region13
  $region12: #{recurrent_gnn_surrogate.1} parent=0 // pred_region
    _
  $region13: #{recurrent_gnn_surrogate.1} parent=0 // pred_fallthru
    _
  // Predicated region
  $region14: #{recurrent_gnn_surrogate.1} parent=0 // pred_check
    _
  $region15: #{recurrent_gnn_surrogate.1} parent=0 // pred_check_branch
    %25 = sbr.rel (0) target = $region17
  $region16: #{recurrent_gnn_surrogate.1} parent=0 // pred_region
    _
  $region17: #{recurrent_gnn_surrogate.1} parent=0 // pred_fallthru
    _
  // Predicated region
  $region18: #{recurrent_gnn_surrogate.1} parent=0 // pred_check
    _
  $region19: #{recurrent_gnn_surrogate.1} parent=0 // pred_check_branch
    %27 = sbr.rel (0) target = $region21
  $region20: #{recurrent_gnn_surrogate.1} parent=0 // pred_region
    _
  $region21: #{recurrent_gnn_surrogate.1} parent=0 // pred_fallthru
    _
  // Predicated region
  $region22: #{recurrent_gnn_surrogate.1} parent=0 // pred_check
    _
  $region23: #{recurrent_gnn_surrogate.1} parent=0 // pred_check_branch
    %29 = sbr.rel (0) target = $region25
  $region24: #{recurrent_gnn_surrogate.1} parent=0 // pred_region
    _
  $region25: #{recurrent_gnn_surrogate.1} parent=0 // pred_fallthru
    _
  // Predicated region
  $region26: #{recurrent_gnn_surrogate.1} parent=0 // pred_check
    _
  $region27: #{recurrent_gnn_surrogate.1} parent=0 // pred_check_branch
    %31 = sbr.rel (0) target = $region29
  $region28: #{recurrent_gnn_surrogate.1} parent=0 // pred_region
    _
  $region29: #{recurrent_gnn_surrogate.1} parent=0 // pred_fallthru
    _
  // Predicated region
  $region30: #{recurrent_gnn_surrogate.1} parent=0 // pred_check
    _
  $region31: #{recurrent_gnn_surrogate.1} parent=0 // pred_check_branch
    %33 = sbr.rel (0) target = $region33
  $region32: #{recurrent_gnn_surrogate.1} parent=0 // pred_region
    _
  $region33: #{recurrent_gnn_surrogate.1} parent=0 // pred_fallthru
    _
  // Predicated region
  $region34: #{recurrent_gnn_surrogate.1} parent=0 // pred_check
    _
  $region35: #{recurrent_gnn_surrogate.1} parent=0 // pred_check_branch
    %35 = sbr.rel (0) target = $region37
  $region36: #{recurrent_gnn_surrogate.1} parent=0 // pred_region
    _
  $region37: #{recurrent_gnn_surrogate.1} parent=0 // pred_fallthru
    _
  // Predicated region
  $region38: #{recurrent_gnn_surrogate.1} parent=0 // pred_check
    _
  $region39: #{recurrent_gnn_surrogate.1} parent=0 // pred_check_branch
    %37 = sbr.rel (0) target = $region41
  $region40: #{recurrent_gnn_surrogate.1} parent=0 // pred_region
    _
  $region41: #{recurrent_gnn_surrogate.1} parent=0 // pred_fallthru
    _
  // Predicated region
  $region42: #{recurrent_gnn_surrogate.1} parent=0 // pred_check
    _
  $region43: #{recurrent_gnn_surrogate.1} parent=0 // pred_check_branch
    %39 = sbr.rel (0) target = $region45
  $region44: #{recurrent_gnn_surrogate.1} parent=0 // pred_region
    _
  $region45: #{recurrent_gnn_surrogate.1} parent=0 // pred_fallthru
    _
  // Predicated region
  $region46: #{recurrent_gnn_surrogate.1} parent=0 // pred_check
    _
  $region47: #{recurrent_gnn_surrogate.1} parent=0 // pred_check_branch
    %41 = sbr.rel (0) target = $region49
  $region48: #{recurrent_gnn_surrogate.1} parent=0 // pred_region
    _
  $region49: #{recurrent_gnn_surrogate.1} parent=0 // pred_fallthru
    _
  // Predicated region
  $region50: #{recurrent_gnn_surrogate.1} parent=0 // pred_check
    _
  $region51: #{recurrent_gnn_surrogate.1} parent=0 // pred_check_branch
    %43 = sbr.rel (0) target = $region53
  $region52: #{recurrent_gnn_surrogate.1} parent=0 // pred_region
    _
  $region53: #{recurrent_gnn_surrogate.1} parent=0 // pred_fallthru
    _
  %v44 = vld [vmem:[%s0] sm:$0xff]
  %v45 = vld [vmem:[%s0 + $0x8] sm:$0xff]
  %v46 = vld [vmem:[%s0 + $0x10] sm:$0xff]
  %v47 = vld [vmem:[%s0 + $0x18] sm:$0xff]
  %v48 = vld [vmem:[%s0 + $0x20] sm:$0xff]
  %v49 = vld [vmem:[%s0 + $0x28] sm:$0xff]
  %v50 = vld [vmem:[%s0 + $0x30] sm:$0xff]
  %v51 = vld [vmem:[%s0 + $0x38] sm:$0xff]
  %v52 = vld [vmem:[%s0 + $0x40] sm:$0xff]
  %v53 = vld [vmem:[%s0 + $0x48] sm:$0xff]
  %v54 = vld [vmem:[%s0 + $0x50] sm:$0xff]
  %v55 = vld [vmem:[%s0 + $0x58] sm:$0xff]
  %v56 = vld [vmem:[%s0 + $0x60] sm:$0xff]
  %v57 = vld [vmem:[%s0 + $0x68] sm:$0xff]
  %v58 = vld [vmem:[%s0 + $0x70] sm:$0xff]
  %v59 = vld [vmem:[%s0 + $0x78] sm:$0xff]
  %v60 = vld [vmem:[%s0 + $0x80] sm:$0xff]
  %v61 = vld [vmem:[%s0 + $0x88] sm:$0xff]
  %v62 = vld [vmem:[%s0 + $0x90] sm:$0xff]
  %v63 = vld [vmem:[%s0 + $0x98] sm:$0xff]
  %v64 = vld [vmem:[%s0 + $0xa0] sm:$0xff]
  %v65 = vld [vmem:[%s0 + $0xa8] sm:$0xff]
  %v66 = vld [vmem:[%s0 + $0xb0] sm:$0xff]
  %v67 = vld [vmem:[%s0 + $0xb8] sm:$0xff]
  %v68 = vld [vmem:[%s0 + $0xc0] sm:$0xff]
  %v69 = vld [vmem:[%s0 + $0xc8] sm:$0xff]
  %v70 = vld [vmem:[%s0 + $0xd0] sm:$0xff]
  %v71 = vld [vmem:[%s0 + $0xd8] sm:$0xff]
  %v72 = vld [vmem:[%s0 + $0xe0] sm:$0xff]
  %v73 = vld [vmem:[%s0 + $0xe8] sm:$0xff]
  %v74 = vld [vmem:[%s0 + $0xf0] sm:$0xff]
  %v75 = vld [vmem:[%s0 + $0xf8] sm:$0xff]
  %v76 = vld [vmem:[%s1] sm:$0xff]
  %v77 = vld [vmem:[%s1 + $0x8] sm:$0xff]
  %vm78 = vcmask 130048
  %v80 = vsel %vm78, %v76, 0
  %v83 = vsel %vm78, %v77, 0
  %85 = vmatprep.subr.mxu0 0.0
  %86 = vmatpush1.msra.mxu0 %v44
  %87 = vmatprep.subr.mxu0 0.0
  %88 = vmatpush1.msra.mxu0 %v45
  %89 = vmatprep.subr.mxu0 0.0
  %90 = vmatpush1.msra.mxu0 0.0
  %91 = vmatprep.subr.mxu0 0.0
  %92 = vmatpush1.msra.mxu0 0.0
  %93 = vmatprep.subr.mxu0 0.0
  %94 = vmatpush1.msra.mxu0 0.0
  %95 = vmatprep.subr.mxu0 0.0
  %96 = vmatpush1.msra.mxu0 0.0
  %97 = vmatprep.subr.mxu0 0.0
  %98 = vmatpush1.msra.mxu0 0.0
  %99 = vmatprep.subr.mxu0 0.0
  %100 = vmatpush1.msra.mxu0 0.0
  %101 = vmatprep.subr.mxu0 0.0
  %102 = vmatpush1.msra.mxu0 0.0
  %103 = vmatprep.subr.mxu0 0.0
  %104 = vmatpush1.msra.mxu0 0.0
  %105 = vmatprep.subr.mxu0 0.0
  %106 = vmatpush1.msra.mxu0 0.0
  %107 = vmatprep.subr.mxu0 0.0
  %108 = vmatpush1.msra.mxu0 0.0
  %109 = vmatprep.subr.mxu0 0.0
  %110 = vmatpush1.msra.mxu0 0.0
  %111 = vmatprep.subr.mxu0 0.0
  %112 = vmatpush1.msra.mxu0 0.0
  %113 = vmatprep.subr.mxu0 0.0
  %114 = vmatpush1.msra.mxu0 0.0
  %115 = vmatprep.subr.mxu0 0.0
  %116 = vmatpush1.msra.mxu0 0.0
  %117 = vmatprep.subr.mxu0 0.0
  %118 = vmatpush1.msra.mxu0 0.0
  %119 = vmatprep.subr.mxu0 0.0
  %120 = vmatpush1.msra.mxu0 0.0
  %121 = vmatprep.subr.mxu0 0.0
  %122 = vmatpush1.msra.mxu0 0.0
  %123 = vmatprep.subr.mxu0 0.0
  %124 = vmatpush1.msra.mxu0 0.0
  %125 = vmatprep.subr.mxu0 0.0
  %126 = vmatpush1.msra.mxu0 0.0
  %127 = vmatprep.subr.mxu0 0.0
  %128 = vmatpush1.msra.mxu0 0.0
  %129 = vmatprep.subr.mxu0 0.0
  %130 = vmatpush1.msra.mxu0 0.0
  %131 = vmatprep.subr.mxu0 0.0
  %132 = vmatpush1.msra.mxu0 0.0
  %133 = vmatprep.subr.mxu0 0.0
  %134 = vmatpush1.msra.mxu0 0.0
  %135 = vmatprep.subr.mxu0 0.0
  %136 = vmatpush1.msra.mxu0 0.0
  %137 = vmatprep.subr.mxu0 0.0
  %138 = vmatpush1.msra.mxu0 0.0
  %139 = vmatprep.subr.mxu0 0.0
  %140 = vmatpush1.msra.mxu0 0.0
  %141 = vmatprep.subr.mxu0 0.0
  %142 = vmatpush1.msra.mxu0 0.0
  %143 = vmatprep.subr.mxu0 0.0
  %144 = vmatpush1.msra.mxu0 0.0
  %145 = vmatprep.subr.mxu0 0.0
  %146 = vmatpush1.msra.mxu0 0.0
  %147 = vmatprep.subr.mxu0 0.0
  %148 = vmatpush1.msra.mxu0 0.0
  %149 = vmatprep.mubr.f32.mxu0 0.0
  %150 = vmatmul.mubr.f32.gmra.mrb[0].mxu0 %v80
  %v151 = vpop.f32.mrb[0].mxu0
  %v152 = vadd.f32 0.0, %v151
  %v153 = vpop.f32.mrb[0].mxu0
  %154 = vmatprep.mubr.f32.mxu0 0.0
  %155 = vmatmul.mubr.f32.gmra.mrb[0].mxu0 %v83
  %v156 = vpop.f32.mrb[0].mxu0
  %v157 = vadd.f32 0.0, %v156
  %v158 = vpop.f32.mrb[0].mxu0
  %159 = vdwg.mxu0
  %160 = vmatprep.subr.mxu0 0.0
  %161 = vmatpush1.msra.mxu0 %v46
  %162 = vmatprep.subr.mxu0 0.0
  %163 = vmatpush1.msra.mxu0 %v47
  %164 = vmatprep.subr.mxu0 0.0
  %165 = vmatpush1.msra.mxu0 0.0
  %166 = vmatprep.subr.mxu0 0.0
  %167 = vmatpush1.msra.mxu0 0.0
  %168 = vmatprep.subr.mxu0 0.0
  %169 = vmatpush1.msra.mxu0 0.0
  %170 = vmatprep.subr.mxu0 0.0
  %171 = vmatpush1.msra.mxu0 0.0
  %172 = vmatprep.subr.mxu0 0.0
  %173 = vmatpush1.msra.mxu0 0.0
  %174 = vmatprep.subr.mxu0 0.0
  %175 = vmatpush1.msra.mxu0 0.0
  %176 = vmatprep.subr.mxu0 0.0
  %177 = vmatpush1.msra.mxu0 0.0
  %178 = vmatprep.subr.mxu0 0.0
  %179 = vmatpush1.msra.mxu0 0.0
  %180 = vmatprep.subr.mxu0 0.0
  %181 = vmatpush1.msra.mxu0 0.0
  %182 = vmatprep.subr.mxu0 0.0
  %183 = vmatpush1.msra.mxu0 0.0
  %184 = vmatprep.subr.mxu0 0.0
  %185 = vmatpush1.msra.mxu0 0.0
  %186 = vmatprep.subr.mxu0 0.0
  %187 = vmatpush1.msra.mxu0 0.0
  %188 = vmatprep.subr.mxu0 0.0
  %189 = vmatpush1.msra.mxu0 0.0
  %190 = vmatprep.subr.mxu0 0.0
  %191 = vmatpush1.msra.mxu0 0.0
  %192 = vmatprep.subr.mxu0 0.0
  %193 = vmatpush1.msra.mxu0 0.0
  %194 = vmatprep.subr.mxu0 0.0
  %195 = vmatpush1.msra.mxu0 0.0
  %196 = vmatprep.subr.mxu0 0.0
  %197 = vmatpush1.msra.mxu0 0.0
  %198 = vmatprep.subr.mxu0 0.0
  %199 = vmatpush1.msra.mxu0 0.0
  %200 = vmatprep.subr.mxu0 0.0
  %201 = vmatpush1.msra.mxu0 0.0
  %202 = vmatprep.subr.mxu0 0.0
  %203 = vmatpush1.msra.mxu0 0.0
  %204 = vmatprep.subr.mxu0 0.0
  %205 = vmatpush1.msra.mxu0 0.0
  %206 = vmatprep.subr.mxu0 0.0
  %207 = vmatpush1.msra.mxu0 0.0
  %208 = vmatprep.subr.mxu0 0.0
  %209 = vmatpush1.msra.mxu0 0.0
  %210 = vmatprep.subr.mxu0 0.0
  %211 = vmatpush1.msra.mxu0 0.0
  %212 = vmatprep.subr.mxu0 0.0
  %213 = vmatpush1.msra.mxu0 0.0
  %214 = vmatprep.subr.mxu0 0.0
  %215 = vmatpush1.msra.mxu0 0.0
  %216 = vmatprep.subr.mxu0 0.0
  %217 = vmatpush1.msra.mxu0 0.0
  %218 = vmatprep.subr.mxu0 0.0
  %219 = vmatpush1.msra.mxu0 0.0
  %220 = vmatprep.subr.mxu0 0.0
  %221 = vmatpush1.msra.mxu0 0.0
  %222 = vmatprep.subr.mxu0 0.0
  %223 = vmatpush1.msra.mxu0 0.0
  %224 = vmatprep.mubr.f32.mxu0 0.0
  %225 = vmatmul.mubr.f32.gmra.mrb[0].mxu0 %v80
  %v226 = vpop.f32.mrb[0].mxu0
  %v227 = vadd.f32 0.0, %v226
  %v228 = vpop.f32.mrb[0].mxu0
  %229 = vmatprep.mubr.f32.mxu0 0.0
  %230 = vmatmul.mubr.f32.gmra.mrb[0].mxu0 %v83
  %v231 = vpop.f32.mrb[0].mxu0
  %v232 = vadd.f32 0.0, %v231
  %v233 = vpop.f32.mrb[0].mxu0
  %234 = vdwg.mxu0
  %235 = vmatprep.subr.mxu0 0.0
  %236 = vmatpush1.msra.mxu0 %v48
  %237 = vmatprep.subr.mxu0 0.0
  %238 = vmatpush1.msra.mxu0 %v49
  %239 = vmatprep.subr.mxu0 0.0
  %240 = vmatpush1.msra.mxu0 0.0
  %241 = vmatprep.subr.mxu0 0.0
  %242 = vmatpush1.msra.mxu0 0.0
  %243 = vmatprep.subr.mxu0 0.0
  %244 = vmatpush1.msra.mxu0 0.0
  %245 = vmatprep.subr.mxu0 0.0
  %246 = vmatpush1.msra.mxu0 0.0
  %247 = vmatprep.subr.mxu0 0.0
  %248 = vmatpush1.msra.mxu0 0.0
  %249 = vmatprep.subr.mxu0 0.0
  %250 = vmatpush1.msra.mxu0 0.0
  %251 = vmatprep.subr.mxu0 0.0
  %252 = vmatpush1.msra.mxu0 0.0
  %253 = vmatprep.subr.mxu0 0.0
  %254 = vmatpush1.msra.mxu0 0.0
  %255 = vmatprep.subr.mxu0 0.0
  %256 = vmatpush1.msra.mxu0 0.0
  %257 = vmatprep.subr.mxu0 0.0
  %258 = vmatpush1.msra.mxu0 0.0
  %259 = vmatprep.subr.mxu0 0.0
  %260 = vmatpush1.msra.mxu0 0.0
  %261 = vmatprep.subr.mxu0 0.0
  %262 = vmatpush1.msra.mxu0 0.0
  %263 = vmatprep.subr.mxu0 0.0
  %264 = vmatpush1.msra.mxu0 0.0
  %265 = vmatprep.subr.mxu0 0.0
  %266 = vmatpush1.msra.mxu0 0.0
  %267 = vmatprep.subr.mxu0 0.0
  %268 = vmatpush1.msra.mxu0 0.0
  %269 = vmatprep.subr.mxu0 0.0
  %270 = vmatpush1.msra.mxu0 0.0
  %271 = vmatprep.subr.mxu0 0.0
  %272 = vmatpush1.msra.mxu0 0.0
  %273 = vmatprep.subr.mxu0 0.0
  %274 = vmatpush1.msra.mxu0 0.0
  %275 = vmatprep.subr.mxu0 0.0
  %276 = vmatpush1.msra.mxu0 0.0
  %277 = vmatprep.subr.mxu0 0.0
  %278 = vmatpush1.msra.mxu0 0.0
  %279 = vmatprep.subr.mxu0 0.0
  %280 = vmatpush1.msra.mxu0 0.0
  %281 = vmatprep.subr.mxu0 0.0
  %282 = vmatpush1.msra.mxu0 0.0
  %283 = vmatprep.subr.mxu0 0.0
  %284 = vmatpush1.msra.mxu0 0.0
  %285 = vmatprep.subr.mxu0 0.0
  %286 = vmatpush1.msra.mxu0 0.0
  %287 = vmatprep.subr.mxu0 0.0
  %288 = vmatpush1.msra.mxu0 0.0
  %289 = vmatprep.subr.mxu0 0.0
  %290 = vmatpush1.msra.mxu0 0.0
  %291 = vmatprep.subr.mxu0 0.0
  %292 = vmatpush1.msra.mxu0 0.0
  %293 = vmatprep.subr.mxu0 0.0
  %294 = vmatpush1.msra.mxu0 0.0
  %295 = vmatprep.subr.mxu0 0.0
  %296 = vmatpush1.msra.mxu0 0.0
  %297 = vmatprep.subr.mxu0 0.0
  %298 = vmatpush1.msra.mxu0 0.0
  %299 = vmatprep.mubr.f32.mxu0 0.0
  %300 = vmatmul.mubr.f32.gmra.mrb[0].mxu0 %v80
  %v301 = vpop.f32.mrb[0].mxu0
  %v302 = vadd.f32 0.0, %v301
  %v303 = vpop.f32.mrb[0].mxu0
  %304 = vmatprep.mubr.f32.mxu0 0.0
  %305 = vmatmul.mubr.f32.gmra.mrb[0].mxu0 %v83
  %v306 = vpop.f32.mrb[0].mxu0
  %v307 = vadd.f32 0.0, %v306
  %v308 = vpop.f32.mrb[0].mxu0
  %309 = vdwg.mxu0
  %310 = vmatprep.subr.mxu0 0.0
  %311 = vmatpush1.msra.mxu0 %v50
  %312 = vmatprep.subr.mxu0 0.0
  %313 = vmatpush1.msra.mxu0 %v51
  %314 = vmatprep.subr.mxu0 0.0
  %315 = vmatpush1.msra.mxu0 0.0
  %316 = vmatprep.subr.mxu0 0.0
  %317 = vmatpush1.msra.mxu0 0.0
  %318 = vmatprep.subr.mxu0 0.0
  %319 = vmatpush1.msra.mxu0 0.0
  %320 = vmatprep.subr.mxu0 0.0
  %321 = vmatpush1.msra.mxu0 0.0
  %322 = vmatprep.subr.mxu0 0.0
  %323 = vmatpush1.msra.mxu0 0.0
  %324 = vmatprep.subr.mxu0 0.0
  %325 = vmatpush1.msra.mxu0 0.0
  %326 = vmatprep.subr.mxu0 0.0
  %327 = vmatpush1.msra.mxu0 0.0
  %328 = vmatprep.subr.mxu0 0.0
  %329 = vmatpush1.msra.mxu0 0.0
  %330 = vmatprep.subr.mxu0 0.0
  %331 = vmatpush1.msra.mxu0 0.0
  %332 = vmatprep.subr.mxu0 0.0
  %333 = vmatpush1.msra.mxu0 0.0
  %334 = vmatprep.subr.mxu0 0.0
  %335 = vmatpush1.msra.mxu0 0.0
  %336 = vmatprep.subr.mxu0 0.0
  %337 = vmatpush1.msra.mxu0 0.0
  %338 = vmatprep.subr.mxu0 0.0
  %339 = vmatpush1.msra.mxu0 0.0
  %340 = vmatprep.subr.mxu0 0.0
  %341 = vmatpush1.msra.mxu0 0.0
  %342 = vmatprep.subr.mxu0 0.0
  %343 = vmatpush1.msra.mxu0 0.0
  %344 = vmatprep.subr.mxu0 0.0
  %345 = vmatpush1.msra.mxu0 0.0
  %346 = vmatprep.subr.mxu0 0.0
  %347 = vmatpush1.msra.mxu0 0.0
  %348 = vmatprep.subr.mxu0 0.0
  %349 = vmatpush1.msra.mxu0 0.0
  %350 = vmatprep.subr.mxu0 0.0
  %351 = vmatpush1.msra.mxu0 0.0
  %352 = vmatprep.subr.mxu0 0.0
  %353 = vmatpush1.msra.mxu0 0.0
  %354 = vmatprep.subr.mxu0 0.0
  %355 = vmatpush1.msra.mxu0 0.0
  %356 = vmatprep.subr.mxu0 0.0
  %357 = vmatpush1.msra.mxu0 0.0
  %358 = vmatprep.subr.mxu0 0.0
  %359 = vmatpush1.msra.mxu0 0.0
  %360 = vmatprep.subr.mxu0 0.0
  %361 = vmatpush1.msra.mxu0 0.0
  %362 = vmatprep.subr.mxu0 0.0
  %363 = vmatpush1.msra.mxu0 0.0
  %364 = vmatprep.subr.mxu0 0.0
  %365 = vmatpush1.msra.mxu0 0.0
  %366 = vmatprep.subr.mxu0 0.0
  %367 = vmatpush1.msra.mxu0 0.0
  %368 = vmatprep.subr.mxu0 0.0
  %369 = vmatpush1.msra.mxu0 0.0
  %370 = vmatprep.subr.mxu0 0.0
  %371 = vmatpush1.msra.mxu0 0.0
  %372 = vmatprep.subr.mxu0 0.0
  %373 = vmatpush1.msra.mxu0 0.0
  %374 = vmatprep.mubr.f32.mxu0 0.0
  %375 = vmatmul.mubr.f32.gmra.mrb[0].mxu0 %v80
  %v376 = vpop.f32.mrb[0].mxu0
  %v377 = vadd.f32 0.0, %v376
  %v378 = vpop.f32.mrb[0].mxu0
  %379 = vmatprep.mubr.f32.mxu0 0.0
  %380 = vmatmul.mubr.f32.gmra.mrb[0].mxu0 %v83
  %v381 = vpop.f32.mrb[0].mxu0
  %v382 = vadd.f32 0.0, %v381
  %v383 = vpop.f32.mrb[0].mxu0
  %384 = vdwg.mxu0
  %385 = vmatprep.subr.mxu0 0.0
  %386 = vmatpush1.msra.mxu0 %v52
  %387 = vmatprep.subr.mxu0 0.0
  %388 = vmatpush1.msra.mxu0 %v53
  %389 = vmatprep.subr.mxu0 0.0
  %390 = vmatpush1.msra.mxu0 0.0
  %391 = vmatprep.subr.mxu0 0.0
  %392 = vmatpush1.msra.mxu0 0.0
  %393 = vmatprep.subr.mxu0 0.0
  %394 = vmatpush1.msra.mxu0 0.0
  %395 = vmatprep.subr.mxu0 0.0
  %396 = vmatpush1.msra.mxu0 0.0
  %397 = vmatprep.subr.mxu0 0.0
  %398 = vmatpush1.msra.mxu0 0.0
  %399 = vmatprep.subr.mxu0 0.0
  %400 = vmatpush1.msra.mxu0 0.0
  %401 = vmatprep.subr.mxu0 0.0
  %402 = vmatpush1.msra.mxu0 0.0
  %403 = vmatprep.subr.mxu0 0.0
  %404 = vmatpush1.msra.mxu0 0.0
  %405 = vmatprep.subr.mxu0 0.0
  %406 = vmatpush1.msra.mxu0 0.0
  %407 = vmatprep.subr.mxu0 0.0
  %408 = vmatpush1.msra.mxu0 0.0
  %409 = vmatprep.subr.mxu0 0.0
  %410 = vmatpush1.msra.mxu0 0.0
  %411 = vmatprep.subr.mxu0 0.0
  %412 = vmatpush1.msra.mxu0 0.0
  %413 = vmatprep.subr.mxu0 0.0
  %414 = vmatpush1.msra.mxu0 0.0
  %415 = vmatprep.subr.mxu0 0.0
  %416 = vmatpush1.msra.mxu0 0.0
  %417 = vmatprep.subr.mxu0 0.0
  %418 = vmatpush1.msra.mxu0 0.0
  %419 = vmatprep.subr.mxu0 0.0
  %420 = vmatpush1.msra.mxu0 0.0
  %421 = vmatprep.subr.mxu0 0.0
  %422 = vmatpush1.msra.mxu0 0.0
  %423 = vmatprep.subr.mxu0 0.0
  %424 = vmatpush1.msra.mxu0 0.0
  %425 = vmatprep.subr.mxu0 0.0
  %426 = vmatpush1.msra.mxu0 0.0
  %427 = vmatprep.subr.mxu0 0.0
  %428 = vmatpush1.msra.mxu0 0.0
  %429 = vmatprep.subr.mxu0 0.0
  %430 = vmatpush1.msra.mxu0 0.0
  %431 = vmatprep.subr.mxu0 0.0
  %432 = vmatpush1.msra.mxu0 0.0
  %433 = vmatprep.subr.mxu0 0.0
  %434 = vmatpush1.msra.mxu0 0.0
  %435 = vmatprep.subr.mxu0 0.0
  %436 = vmatpush1.msra.mxu0 0.0
  %437 = vmatprep.subr.mxu0 0.0
  %438 = vmatpush1.msra.mxu0 0.0
  %439 = vmatprep.subr.mxu0 0.0
  %440 = vmatpush1.msra.mxu0 0.0
  %441 = vmatprep.subr.mxu0 0.0
  %442 = vmatpush1.msra.mxu0 0.0
  %443 = vmatprep.subr.mxu0 0.0
  %444 = vmatpush1.msra.mxu0 0.0
  %445 = vmatprep.subr.mxu0 0.0
  %446 = vmatpush1.msra.mxu0 0.0
  %447 = vmatprep.subr.mxu0 0.0
  %448 = vmatpush1.msra.mxu0 0.0
  %449 = vmatprep.mubr.f32.mxu0 0.0
  %450 = vmatmul.mubr.f32.gmra.mrb[0].mxu0 %v80
  %v451 = vpop.f32.mrb[0].mxu0
  %v452 = vadd.f32 0.0, %v451
  %v453 = vpop.f32.mrb[0].mxu0
  %454 = vmatprep.mubr.f32.mxu0 0.0
  %455 = vmatmul.mubr.f32.gmra.mrb[0].mxu0 %v83
  %v456 = vpop.f32.mrb[0].mxu0
  %v457 = vadd.f32 0.0, %v456
  %v458 = vpop.f32.mrb[0].mxu0
  %459 = vdwg.mxu0
  %460 = vmatprep.subr.mxu0 0.0
  %461 = vmatpush1.msra.mxu0 %v54
  %462 = vmatprep.subr.mxu0 0.0
  %463 = vmatpush1.msra.mxu0 %v55
  %464 = vmatprep.subr.mxu0 0.0
  %465 = vmatpush1.msra.mxu0 0.0
  %466 = vmatprep.subr.mxu0 0.0
  %467 = vmatpush1.msra.mxu0 0.0
  %468 = vmatprep.subr.mxu0 0.0
  %469 = vmatpush1.msra.mxu0 0.0
  %470 = vmatprep.subr.mxu0 0.0
  %471 = vmatpush1.msra.mxu0 0.0
  %472 = vmatprep.subr.mxu0 0.0
  %473 = vmatpush1.msra.mxu0 0.0
  %474 = vmatprep.subr.mxu0 0.0
  %475 = vmatpush1.msra.mxu0 0.0
  %476 = vmatprep.subr.mxu0 0.0
  %477 = vmatpush1.msra.mxu0 0.0
  %478 = vmatprep.subr.mxu0 0.0
  %479 = vmatpush1.msra.mxu0 0.0
  %480 = vmatprep.subr.mxu0 0.0
  %481 = vmatpush1.msra.mxu0 0.0
  %482 = vmatprep.subr.mxu0 0.0
  %483 = vmatpush1.msra.mxu0 0.0
  %484 = vmatprep.subr.mxu0 0.0
  %485 = vmatpush1.msra.mxu0 0.0
  %486 = vmatprep.subr.mxu0 0.0
  %487 = vmatpush1.msra.mxu0 0.0
  %488 = vmatprep.subr.mxu0 0.0
  %489 = vmatpush1.msra.mxu0 0.0
  %490 = vmatprep.subr.mxu0 0.0
  %491 = vmatpush1.msra.mxu0 0.0
  %492 = vmatprep.subr.mxu0 0.0
  %493 = vmatpush1.msra.mxu0 0.0
  %494 = vmatprep.subr.mxu0 0.0
  %495 = vmatpush1.msra.mxu0 0.0
  %496 = vmatprep.subr.mxu0 0.0
  %497 = vmatpush1.msra.mxu0 0.0
  %498 = vmatprep.subr.mxu0 0.0
  %499 = vmatpush1.msra.mxu0 0.0
  %500 = vmatprep.subr.mxu0 0.0
  %501 = vmatpush1.msra.mxu0 0.0
  %502 = vmatprep.subr.mxu0 0.0
  %503 = vmatpush1.msra.mxu0 0.0
  %504 = vmatprep.subr.mxu0 0.0
  %505 = vmatpush1.msra.mxu0 0.0
  %506 = vmatprep.subr.mxu0 0.0
  %507 = vmatpush1.msra.mxu0 0.0
  %508 = vmatprep.subr.mxu0 0.0
  %509 = vmatpush1.msra.mxu0 0.0
  %510 = vmatprep.subr.mxu0 0.0
  %511 = vmatpush1.msra.mxu0 0.0
  %512 = vmatprep.subr.mxu0 0.0
  %513 = vmatpush1.msra.mxu0 0.0
  %514 = vmatprep.subr.mxu0 0.0
  %515 = vmatpush1.msra.mxu0 0.0
  %516 = vmatprep.subr.mxu0 0.0
  %517 = vmatpush1.msra.mxu0 0.0
  %518 = vmatprep.subr.mxu0 0.0
  %519 = vmatpush1.msra.mxu0 0.0
  %520 = vmatprep.subr.mxu0 0.0
  %521 = vmatpush1.msra.mxu0 0.0
  %522 = vmatprep.subr.mxu0 0.0
  %523 = vmatpush1.msra.mxu0 0.0
  %524 = vmatprep.mubr.f32.mxu0 0.0
  %525 = vmatmul.mubr.f32.gmra.mrb[0].mxu0 %v80
  %v526 = vpop.f32.mrb[0].mxu0
  %v527 = vadd.f32 0.0, %v526
  %v528 = vpop.f32.mrb[0].mxu0
  %529 = vmatprep.mubr.f32.mxu0 0.0
  %530 = vmatmul.mubr.f32.gmra.mrb[0].mxu0 %v83
  %v531 = vpop.f32.mrb[0].mxu0
  %v532 = vadd.f32 0.0, %v531
  %v533 = vpop.f32.mrb[0].mxu0
  %534 = vdwg.mxu0
  %535 = vmatprep.subr.mxu0 0.0
  %536 = vmatpush1.msra.mxu0 %v56
  %537 = vmatprep.subr.mxu0 0.0
  %538 = vmatpush1.msra.mxu0 %v57
  %539 = vmatprep.subr.mxu0 0.0
  %540 = vmatpush1.msra.mxu0 0.0
  %541 = vmatprep.subr.mxu0 0.0
  %542 = vmatpush1.msra.mxu0 0.0
  %543 = vmatprep.subr.mxu0 0.0
  %544 = vmatpush1.msra.mxu0 0.0
  %545 = vmatprep.subr.mxu0 0.0
  %546 = vmatpush1.msra.mxu0 0.0
  %547 = vmatprep.subr.mxu0 0.0
  %548 = vmatpush1.msra.mxu0 0.0
  %549 = vmatprep.subr.mxu0 0.0
  %550 = vmatpush1.msra.mxu0 0.0
  %551 = vmatprep.subr.mxu0 0.0
  %552 = vmatpush1.msra.mxu0 0.0
  %553 = vmatprep.subr.mxu0 0.0
  %554 = vmatpush1.msra.mxu0 0.0
  %555 = vmatprep.subr.mxu0 0.0
  %556 = vmatpush1.msra.mxu0 0.0
  %557 = vmatprep.subr.mxu0 0.0
  %558 = vmatpush1.msra.mxu0 0.0
  %559 = vmatprep.subr.mxu0 0.0
  %560 = vmatpush1.msra.mxu0 0.0
  %561 = vmatprep.subr.mxu0 0.0
  %562 = vmatpush1.msra.mxu0 0.0
  %563 = vmatprep.subr.mxu0 0.0
  %564 = vmatpush1.msra.mxu0 0.0
  %565 = vmatprep.subr.mxu0 0.0
  %566 = vmatpush1.msra.mxu0 0.0
  %567 = vmatprep.subr.mxu0 0.0
  %568 = vmatpush1.msra.mxu0 0.0
  %569 = vmatprep.subr.mxu0 0.0
  %570 = vmatpush1.msra.mxu0 0.0
  %571 = vmatprep.subr.mxu0 0.0
  %572 = vmatpush1.msra.mxu0 0.0
  %573 = vmatprep.subr.mxu0 0.0
  %574 = vmatpush1.msra.mxu0 0.0
  %575 = vmatprep.subr.mxu0 0.0
  %576 = vmatpush1.msra.mxu0 0.0
  %577 = vmatprep.subr.mxu0 0.0
  %578 = vmatpush1.msra.mxu0 0.0
  %579 = vmatprep.subr.mxu0 0.0
  %580 = vmatpush1.msra.mxu0 0.0
  %581 = vmatprep.subr.mxu0 0.0
  %582 = vmatpush1.msra.mxu0 0.0
  %583 = vmatprep.subr.mxu0 0.0
  %584 = vmatpush1.msra.mxu0 0.0
  %585 = vmatprep.subr.mxu0 0.0
  %586 = vmatpush1.msra.mxu0 0.0
  %587 = vmatprep.subr.mxu0 0.0
  %588 = vmatpush1.msra.mxu0 0.0
  %589 = vmatprep.subr.mxu0 0.0
  %590 = vmatpush1.msra.mxu0 0.0
  %591 = vmatprep.subr.mxu0 0.0
  %592 = vmatpush1.msra.mxu0 0.0
  %593 = vmatprep.subr.mxu0 0.0
  %594 = vmatpush1.msra.mxu0 0.0
  %595 = vmatprep.subr.mxu0 0.0
  %596 = vmatpush1.msra.mxu0 0.0
  %597 = vmatprep.subr.mxu0 0.0
  %598 = vmatpush1.msra.mxu0 0.0
  %599 = vmatprep.mubr.f32.mxu0 0.0
  %600 = vmatmul.mubr.f32.gmra.mrb[0].mxu0 %v80
  %v601 = vpop.f32.mrb[0].mxu0
  %v602 = vadd.f32 0.0, %v601
  %v603 = vpop.f32.mrb[0].mxu0
  %604 = vmatprep.mubr.f32.mxu0 0.0
  %605 = vmatmul.mubr.f32.gmra.mrb[0].mxu0 %v83
  %v606 = vpop.f32.mrb[0].mxu0
  %v607 = vadd.f32 0.0, %v606
  %v608 = vpop.f32.mrb[0].mxu0
  %609 = vdwg.mxu0
  %610 = vmatprep.subr.mxu0 0.0
  %611 = vmatpush1.msra.mxu0 %v58
  %612 = vmatprep.subr.mxu0 0.0
  %613 = vmatpush1.msra.mxu0 %v59
  %614 = vmatprep.subr.mxu0 0.0
  %615 = vmatpush1.msra.mxu0 0.0
  %616 = vmatprep.subr.mxu0 0.0
  %617 = vmatpush1.msra.mxu0 0.0
  %618 = vmatprep.subr.mxu0 0.0
  %619 = vmatpush1.msra.mxu0 0.0
  %620 = vmatprep.subr.mxu0 0.0
  %621 = vmatpush1.msra.mxu0 0.0
  %622 = vmatprep.subr.mxu0 0.0
  %623 = vmatpush1.msra.mxu0 0.0
  %624 = vmatprep.subr.mxu0 0.0
  %625 = vmatpush1.msra.mxu0 0.0
  %626 = vmatprep.subr.mxu0 0.0
  %627 = vmatpush1.msra.mxu0 0.0
  %628 = vmatprep.subr.mxu0 0.0
  %629 = vmatpush1.msra.mxu0 0.0
  %630 = vmatprep.subr.mxu0 0.0
  %631 = vmatpush1.msra.mxu0 0.0
  %632 = vmatprep.subr.mxu0 0.0
  %633 = vmatpush1.msra.mxu0 0.0
  %634 = vmatprep.subr.mxu0 0.0
  %635 = vmatpush1.msra.mxu0 0.0
  %636 = vmatprep.subr.mxu0 0.0
  %637 = vmatpush1.msra.mxu0 0.0
  %638 = vmatprep.subr.mxu0 0.0
  %639 = vmatpush1.msra.mxu0 0.0
  %640 = vmatprep.subr.mxu0 0.0
  %641 = vmatpush1.msra.mxu0 0.0
  %642 = vmatprep.subr.mxu0 0.0
  %643 = vmatpush1.msra.mxu0 0.0
  %644 = vmatprep.subr.mxu0 0.0
  %645 = vmatpush1.msra.mxu0 0.0
  %646 = vmatprep.subr.mxu0 0.0
  %647 = vmatpush1.msra.mxu0 0.0
  %648 = vmatprep.subr.mxu0 0.0
  %649 = vmatpush1.msra.mxu0 0.0
  %650 = vmatprep.subr.mxu0 0.0
  %651 = vmatpush1.msra.mxu0 0.0
  %652 = vmatprep.subr.mxu0 0.0
  %653 = vmatpush1.msra.mxu0 0.0
  %654 = vmatprep.subr.mxu0 0.0
  %655 = vmatpush1.msra.mxu0 0.0
  %656 = vmatprep.subr.mxu0 0.0
  %657 = vmatpush1.msra.mxu0 0.0
  %658 = vmatprep.subr.mxu0 0.0
  %659 = vmatpush1.msra.mxu0 0.0
  %660 = vmatprep.subr.mxu0 0.0
  %661 = vmatpush1.msra.mxu0 0.0
  %662 = vmatprep.subr.mxu0 0.0
  %663 = vmatpush1.msra.mxu0 0.0
  %664 = vmatprep.subr.mxu0 0.0
  %665 = vmatpush1.msra.mxu0 0.0
  %666 = vmatprep.subr.mxu0 0.0
  %667 = vmatpush1.msra.mxu0 0.0
  %668 = vmatprep.subr.mxu0 0.0
  %669 = vmatpush1.msra.mxu0 0.0
  %670 = vmatprep.subr.mxu0 0.0
  %671 = vmatpush1.msra.mxu0 0.0
  %672 = vmatprep.subr.mxu0 0.0
  %673 = vmatpush1.msra.mxu0 0.0
  %674 = vmatprep.mubr.f32.mxu0 0.0
  %675 = vmatmul.mubr.f32.gmra.mrb[0].mxu0 %v80
  %v676 = vpop.f32.mrb[0].mxu0
  %v677 = vadd.f32 0.0, %v676
  %v678 = vpop.f32.mrb[0].mxu0
  %679 = vmatprep.mubr.f32.mxu0 0.0
  %680 = vmatmul.mubr.f32.gmra.mrb[0].mxu0 %v83
  %v681 = vpop.f32.mrb[0].mxu0
  %v682 = vadd.f32 0.0, %v681
  %v683 = vpop.f32.mrb[0].mxu0
  %684 = vdwg.mxu0
  %685 = vmatprep.subr.mxu0 0.0
  %686 = vmatpush1.msra.mxu0 %v60
  %687 = vmatprep.subr.mxu0 0.0
  %688 = vmatpush1.msra.mxu0 %v61
  %689 = vmatprep.subr.mxu0 0.0
  %690 = vmatpush1.msra.mxu0 0.0
  %691 = vmatprep.subr.mxu0 0.0
  %692 = vmatpush1.msra.mxu0 0.0
  %693 = vmatprep.subr.mxu0 0.0
  %694 = vmatpush1.msra.mxu0 0.0
  %695 = vmatprep.subr.mxu0 0.0
  %696 = vmatpush1.msra.mxu0 0.0
  %697 = vmatprep.subr.mxu0 0.0
  %698 = vmatpush1.msra.mxu0 0.0
  %699 = vmatprep.subr.mxu0 0.0
  %700 = vmatpush1.msra.mxu0 0.0
  %701 = vmatprep.subr.mxu0 0.0
  %702 = vmatpush1.msra.mxu0 0.0
  %703 = vmatprep.subr.mxu0 0.0
  %704 = vmatpush1.msra.mxu0 0.0
  %705 = vmatprep.subr.mxu0 0.0
  %706 = vmatpush1.msra.mxu0 0.0
  %707 = vmatprep.subr.mxu0 0.0
  %708 = vmatpush1.msra.mxu0 0.0
  %709 = vmatprep.subr.mxu0 0.0
  %710 = vmatpush1.msra.mxu0 0.0
  %711 = vmatprep.subr.mxu0 0.0
  %712 = vmatpush1.msra.mxu0 0.0
  %713 = vmatprep.subr.mxu0 0.0
  %714 = vmatpush1.msra.mxu0 0.0
  %715 = vmatprep.subr.mxu0 0.0
  %716 = vmatpush1.msra.mxu0 0.0
  %717 = vmatprep.subr.mxu0 0.0
  %718 = vmatpush1.msra.mxu0 0.0
  %719 = vmatprep.subr.mxu0 0.0
  %720 = vmatpush1.msra.mxu0 0.0
  %721 = vmatprep.subr.mxu0 0.0
  %722 = vmatpush1.msra.mxu0 0.0
  %723 = vmatprep.subr.mxu0 0.0
  %724 = vmatpush1.msra.mxu0 0.0
  %725 = vmatprep.subr.mxu0 0.0
  %726 = vmatpush1.msra.mxu0 0.0
  %727 = vmatprep.subr.mxu0 0.0
  %728 = vmatpush1.msra.mxu0 0.0
  %729 = vmatprep.subr.mxu0 0.0
  %730 = vmatpush1.msra.mxu0 0.0
  %731 = vmatprep.subr.mxu0 0.0
  %732 = vmatpush1.msra.mxu0 0.0
  %733 = vmatprep.subr.mxu0 0.0
  %734 = vmatpush1.msra.mxu0 0.0
  %735 = vmatprep.subr.mxu0 0.0
  %736 = vmatpush1.msra.mxu0 0.0
  %737 = vmatprep.subr.mxu0 0.0
  %738 = vmatpush1.msra.mxu0 0.0
  %739 = vmatprep.subr.mxu0 0.0
  %740 = vmatpush1.msra.mxu0 0.0
  %741 = vmatprep.subr.mxu0 0.0
  %742 = vmatpush1.msra.mxu0 0.0
  %743 = vmatprep.subr.mxu0 0.0
  %744 = vmatpush1.msra.mxu0 0.0
  %745 = vmatprep.subr.mxu0 0.0
  %746 = vmatpush1.msra.mxu0 0.0
  %747 = vmatprep.subr.mxu0 0.0
  %748 = vmatpush1.msra.mxu0 0.0
  %749 = vmatprep.mubr.f32.mxu0 0.0
  %750 = vmatmul.mubr.f32.gmra.mrb[0].mxu0 %v80
  %v751 = vpop.f32.mrb[0].mxu0
  %v752 = vadd.f32 0.0, %v751
  %v753 = vpop.f32.mrb[0].mxu0
  %754 = vmatprep.mubr.f32.mxu0 0.0
  %755 = vmatmul.mubr.f32.gmra.mrb[0].mxu0 %v83
  %v756 = vpop.f32.mrb[0].mxu0
  %v757 = vadd.f32 0.0, %v756
  %v758 = vpop.f32.mrb[0].mxu0
  %759 = vdwg.mxu0
  %760 = vmatprep.subr.mxu0 0.0
  %761 = vmatpush1.msra.mxu0 %v62
  %762 = vmatprep.subr.mxu0 0.0
  %763 = vmatpush1.msra.mxu0 %v63
  %764 = vmatprep.subr.mxu0 0.0
  %765 = vmatpush1.msra.mxu0 0.0
  %766 = vmatprep.subr.mxu0 0.0
  %767 = vmatpush1.msra.mxu0 0.0
  %768 = vmatprep.subr.mxu0 0.0
  %769 = vmatpush1.msra.mxu0 0.0
  %770 = vmatprep.subr.mxu0 0.0
  %771 = vmatpush1.msra.mxu0 0.0
  %772 = vmatprep.subr.mxu0 0.0
  %773 = vmatpush1.msra.mxu0 0.0
  %774 = vmatprep.subr.mxu0 0.0
  %775 = vmatpush1.msra.mxu0 0.0
  %776 = vmatprep.subr.mxu0 0.0
  %777 = vmatpush1.msra.mxu0 0.0
  %778 = vmatprep.subr.mxu0 0.0
  %779 = vmatpush1.msra.mxu0 0.0
  %780 = vmatprep.subr.mxu0 0.0
  %781 = vmatpush1.msra.mxu0 0.0
  %782 = vmatprep.subr.mxu0 0.0
  %783 = vmatpush1.msra.mxu0 0.0
  %784 = vmatprep.subr.mxu0 0.0
  %785 = vmatpush1.msra.mxu0 0.0
  %786 = vmatprep.subr.mxu0 0.0
  %787 = vmatpush1.msra.mxu0 0.0
  %788 = vmatprep.subr.mxu0 0.0
  %789 = vmatpush1.msra.mxu0 0.0
  %790 = vmatprep.subr.mxu0 0.0
  %791 = vmatpush1.msra.mxu0 0.0
  %792 = vmatprep.subr.mxu0 0.0
  %793 = vmatpush1.msra.mxu0 0.0
  %794 = vmatprep.subr.mxu0 0.0
  %795 = vmatpush1.msra.mxu0 0.0
  %796 = vmatprep.subr.mxu0 0.0
  %797 = vmatpush1.msra.mxu0 0.0
  %798 = vmatprep.subr.mxu0 0.0
  %799 = vmatpush1.msra.mxu0 0.0
  %800 = vmatprep.subr.mxu0 0.0
  %801 = vmatpush1.msra.mxu0 0.0
  %802 = vmatprep.subr.mxu0 0.0
  %803 = vmatpush1.msra.mxu0 0.0
  %804 = vmatprep.subr.mxu0 0.0
  %805 = vmatpush1.msra.mxu0 0.0
  %806 = vmatprep.subr.mxu0 0.0
  %807 = vmatpush1.msra.mxu0 0.0
  %808 = vmatprep.subr.mxu0 0.0
  %809 = vmatpush1.msra.mxu0 0.0
  %810 = vmatprep.subr.mxu0 0.0
  %811 = vmatpush1.msra.mxu0 0.0
  %812 = vmatprep.subr.mxu0 0.0
  %813 = vmatpush1.msra.mxu0 0.0
  %814 = vmatprep.subr.mxu0 0.0
  %815 = vmatpush1.msra.mxu0 0.0
  %816 = vmatprep.subr.mxu0 0.0
  %817 = vmatpush1.msra.mxu0 0.0
  %818 = vmatprep.subr.mxu0 0.0
  %819 = vmatpush1.msra.mxu0 0.0
  %820 = vmatprep.subr.mxu0 0.0
  %821 = vmatpush1.msra.mxu0 0.0
  %822 = vmatprep.subr.mxu0 0.0
  %823 = vmatpush1.msra.mxu0 0.0
  %824 = vmatprep.mubr.f32.mxu0 0.0
  %825 = vmatmul.mubr.f32.gmra.mrb[0].mxu0 %v80
  %v826 = vpop.f32.mrb[0].mxu0
  %v827 = vadd.f32 0.0, %v826
  %v828 = vpop.f32.mrb[0].mxu0
  %829 = vmatprep.mubr.f32.mxu0 0.0
  %830 = vmatmul.mubr.f32.gmra.mrb[0].mxu0 %v83
  %v831 = vpop.f32.mrb[0].mxu0
  %v832 = vadd.f32 0.0, %v831
  %v833 = vpop.f32.mrb[0].mxu0
  %834 = vdwg.mxu0
  %835 = vmatprep.subr.mxu0 0.0
  %836 = vmatpush1.msra.mxu0 %v64
  %837 = vmatprep.subr.mxu0 0.0
  %838 = vmatpush1.msra.mxu0 %v65
  %839 = vmatprep.subr.mxu0 0.0
  %840 = vmatpush1.msra.mxu0 0.0
  %841 = vmatprep.subr.mxu0 0.0
  %842 = vmatpush1.msra.mxu0 0.0
  %843 = vmatprep.subr.mxu0 0.0
  %844 = vmatpush1.msra.mxu0 0.0
  %845 = vmatprep.subr.mxu0 0.0
  %846 = vmatpush1.msra.mxu0 0.0
  %847 = vmatprep.subr.mxu0 0.0
  %848 = vmatpush1.msra.mxu0 0.0
  %849 = vmatprep.subr.mxu0 0.0
  %850 = vmatpush1.msra.mxu0 0.0
  %851 = vmatprep.subr.mxu0 0.0
  %852 = vmatpush1.msra.mxu0 0.0
  %853 = vmatprep.subr.mxu0 0.0
  %854 = vmatpush1.msra.mxu0 0.0
  %855 = vmatprep.subr.mxu0 0.0
  %856 = vmatpush1.msra.mxu0 0.0
  %857 = vmatprep.subr.mxu0 0.0
  %858 = vmatpush1.msra.mxu0 0.0
  %859 = vmatprep.subr.mxu0 0.0
  %860 = vmatpush1.msra.mxu0 0.0
  %861 = vmatprep.subr.mxu0 0.0
  %862 = vmatpush1.msra.mxu0 0.0
  %863 = vmatprep.subr.mxu0 0.0
  %864 = vmatpush1.msra.mxu0 0.0
  %865 = vmatprep.subr.mxu0 0.0
  %866 = vmatpush1.msra.mxu0 0.0
  %867 = vmatprep.subr.mxu0 0.0
  %868 = vmatpush1.msra.mxu0 0.0
  %869 = vmatprep.subr.mxu0 0.0
  %870 = vmatpush1.msra.mxu0 0.0
  %871 = vmatprep.subr.mxu0 0.0
  %872 = vmatpush1.msra.mxu0 0.0
  %873 = vmatprep.subr.mxu0 0.0
  %874 = vmatpush1.msra.mxu0 0.0
  %875 = vmatprep.subr.mxu0 0.0
  %876 = vmatpush1.msra.mxu0 0.0
  %877 = vmatprep.subr.mxu0 0.0
  %878 = vmatpush1.msra.mxu0 0.0
  %879 = vmatprep.subr.mxu0 0.0
  %880 = vmatpush1.msra.mxu0 0.0
  %881 = vmatprep.subr.mxu0 0.0
  %882 = vmatpush1.msra.mxu0 0.0
  %883 = vmatprep.subr.mxu0 0.0
  %884 = vmatpush1.msra.mxu0 0.0
  %885 = vmatprep.subr.mxu0 0.0
  %886 = vmatpush1.msra.mxu0 0.0
  %887 = vmatprep.subr.mxu0 0.0
  %888 = vmatpush1.msra.mxu0 0.0
  %889 = vmatprep.subr.mxu0 0.0
  %890 = vmatpush1.msra.mxu0 0.0
  %891 = vmatprep.subr.mxu0 0.0
  %892 = vmatpush1.msra.mxu0 0.0
  %893 = vmatprep.subr.mxu0 0.0
  %894 = vmatpush1.msra.mxu0 0.0
  %895 = vmatprep.subr.mxu0 0.0
  %896 = vmatpush1.msra.mxu0 0.0
  %897 = vmatprep.subr.mxu0 0.0
  %898 = vmatpush1.msra.mxu0 0.0
  %899 = vmatprep.mubr.f32.mxu0 0.0
  %900 = vmatmul.mubr.f32.gmra.mrb[0].mxu0 %v80
  %v901 = vpop.f32.mrb[0].mxu0
  %v902 = vadd.f32 0.0, %v901
  %v903 = vpop.f32.mrb[0].mxu0
  %904 = vmatprep.mubr.f32.mxu0 0.0
  %905 = vmatmul.mubr.f32.gmra.mrb[0].mxu0 %v83
  %v906 = vpop.f32.mrb[0].mxu0
  %v907 = vadd.f32 0.0, %v906
  %v908 = vpop.f32.mrb[0].mxu0
  %909 = vdwg.mxu0
  %910 = vmatprep.subr.mxu0 0.0
  %911 = vmatpush1.msra.mxu0 %v66
  %912 = vmatprep.subr.mxu0 0.0
  %913 = vmatpush1.msra.mxu0 %v67
  %914 = vmatprep.subr.mxu0 0.0
  %915 = vmatpush1.msra.mxu0 0.0
  %916 = vmatprep.subr.mxu0 0.0
  %917 = vmatpush1.msra.mxu0 0.0
  %918 = vmatprep.subr.mxu0 0.0
  %919 = vmatpush1.msra.mxu0 0.0
  %920 = vmatprep.subr.mxu0 0.0
  %921 = vmatpush1.msra.mxu0 0.0
  %922 = vmatprep.subr.mxu0 0.0
  %923 = vmatpush1.msra.mxu0 0.0
  %924 = vmatprep.subr.mxu0 0.0
  %925 = vmatpush1.msra.mxu0 0.0
  %926 = vmatprep.subr.mxu0 0.0
  %927 = vmatpush1.msra.mxu0 0.0
  %928 = vmatprep.subr.mxu0 0.0
  %929 = vmatpush1.msra.mxu0 0.0
  %930 = vmatprep.subr.mxu0 0.0
  %931 = vmatpush1.msra.mxu0 0.0
  %932 = vmatprep.subr.mxu0 0.0
  %933 = vmatpush1.msra.mxu0 0.0
  %934 = vmatprep.subr.mxu0 0.0
  %935 = vmatpush1.msra.mxu0 0.0
  %936 = vmatprep.subr.mxu0 0.0
  %937 = vmatpush1.msra.mxu0 0.0
  %938 = vmatprep.subr.mxu0 0.0
  %939 = vmatpush1.msra.mxu0 0.0
  %940 = vmatprep.subr.mxu0 0.0
  %941 = vmatpush1.msra.mxu0 0.0
  %942 = vmatprep.subr.mxu0 0.0
  %943 = vmatpush1.msra.mxu0 0.0
  %944 = vmatprep.subr.mxu0 0.0
  %945 = vmatpush1.msra.mxu0 0.0
  %946 = vmatprep.subr.mxu0 0.0
  %947 = vmatpush1.msra.mxu0 0.0
  %948 = vmatprep.subr.mxu0 0.0
  %949 = vmatpush1.msra.mxu0 0.0
  %950 = vmatprep.subr.mxu0 0.0
  %951 = vmatpush1.msra.mxu0 0.0
  %952 = vmatprep.subr.mxu0 0.0
  %953 = vmatpush1.msra.mxu0 0.0
  %954 = vmatprep.subr.mxu0 0.0
  %955 = vmatpush1.msra.mxu0 0.0
  %956 = vmatprep.subr.mxu0 0.0
  %957 = vmatpush1.msra.mxu0 0.0
  %958 = vmatprep.subr.mxu0 0.0
  %959 = vmatpush1.msra.mxu0 0.0
  %960 = vmatprep.subr.mxu0 0.0
  %961 = vmatpush1.msra.mxu0 0.0
  %962 = vmatprep.subr.mxu0 0.0
  %963 = vmatpush1.msra.mxu0 0.0
  %964 = vmatprep.subr.mxu0 0.0
  %965 = vmatpush1.msra.mxu0 0.0
  %966 = vmatprep.subr.mxu0 0.0
  %967 = vmatpush1.msra.mxu0 0.0
  %968 = vmatprep.subr.mxu0 0.0
  %969 = vmatpush1.msra.mxu0 0.0
  %970 = vmatprep.subr.mxu0 0.0
  %971 = vmatpush1.msra.mxu0 0.0
  %972 = vmatprep.subr.mxu0 0.0
  %973 = vmatpush1.msra.mxu0 0.0
  %974 = vmatprep.mubr.f32.mxu0 0.0
  %975 = vmatmul.mubr.f32.gmra.mrb[0].mxu0 %v80
  %v976 = vpop.f32.mrb[0].mxu0
  %v977 = vadd.f32 0.0, %v976
  %v978 = vpop.f32.mrb[0].mxu0
  %979 = vmatprep.mubr.f32.mxu0 0.0
  %980 = vmatmul.mubr.f32.gmra.mrb[0].mxu0 %v83
  %v981 = vpop.f32.mrb[0].mxu0
  %v982 = vadd.f32 0.0, %v981
  %v983 = vpop.f32.mrb[0].mxu0
  %984 = vdwg.mxu0
  %985 = vmatprep.subr.mxu0 0.0
  %986 = vmatpush1.msra.mxu0 %v68
  %987 = vmatprep.subr.mxu0 0.0
  %988 = vmatpush1.msra.mxu0 %v69
  %989 = vmatprep.subr.mxu0 0.0
  %990 = vmatpush1.msra.mxu0 0.0
  %991 = vmatprep.subr.mxu0 0.0
  %992 = vmatpush1.msra.mxu0 0.0
  %993 = vmatprep.subr.mxu0 0.0
  %994 = vmatpush1.msra.mxu0 0.0
  %995 = vmatprep.subr.mxu0 0.0
  %996 = vmatpush1.msra.mxu0 0.0
  %997 = vmatprep.subr.mxu0 0.0
  %998 = vmatpush1.msra.mxu0 0.0
  %999 = vmatprep.subr.mxu0 0.0
  %1000 = vmatpush1.msra.mxu0 0.0
  %1001 = vmatprep.subr.mxu0 0.0
  %1002 = vmatpush1.msra.mxu0 0.0
  %1003 = vmatprep.subr.mxu0 0.0
  %1004 = vmatpush1.msra.mxu0 0.0
  %1005 = vmatprep.subr.mxu0 0.0
  %1006 = vmatpush1.msra.mxu0 0.0
  %1007 = vmatprep.subr.mxu0 0.0
  %1008 = vmatpush1.msra.mxu0 0.0
  %1009 = vmatprep.subr.mxu0 0.0
  %1010 = vmatpush1.msra.mxu0 0.0
  %1011 = vmatprep.subr.mxu0 0.0
  %1012 = vmatpush1.msra.mxu0 0.0
  %1013 = vmatprep.subr.mxu0 0.0
  %1014 = vmatpush1.msra.mxu0 0.0
  %1015 = vmatprep.subr.mxu0 0.0
  %1016 = vmatpush1.msra.mxu0 0.0
  %1017 = vmatprep.subr.mxu0 0.0
  %1018 = vmatpush1.msra.mxu0 0.0
  %1019 = vmatprep.subr.mxu0 0.0
  %1020 = vmatpush1.msra.mxu0 0.0
  %1021 = vmatprep.subr.mxu0 0.0
  %1022 = vmatpush1.msra.mxu0 0.0
  %1023 = vmatprep.subr.mxu0 0.0
  %1024 = vmatpush1.msra.mxu0 0.0
  %1025 = vmatprep.subr.mxu0 0.0
  %1026 = vmatpush1.msra.mxu0 0.0
  %1027 = vmatprep.subr.mxu0 0.0
  %1028 = vmatpush1.msra.mxu0 0.0
  %1029 = vmatprep.subr.mxu0 0.0
  %1030 = vmatpush1.msra.mxu0 0.0
  %1031 = vmatprep.subr.mxu0 0.0
  %1032 = vmatpush1.msra.mxu0 0.0
  %1033 = vmatprep.subr.mxu0 0.0
  %1034 = vmatpush1.msra.mxu0 0.0
  %1035 = vmatprep.subr.mxu0 0.0
  %1036 = vmatpush1.msra.mxu0 0.0
  %1037 = vmatprep.subr.mxu0 0.0
  %1038 = vmatpush1.msra.mxu0 0.0
  %1039 = vmatprep.subr.mxu0 0.0
  %1040 = vmatpush1.msra.mxu0 0.0
  %1041 = vmatprep.subr.mxu0 0.0
  %1042 = vmatpush1.msra.mxu0 0.0
  %1043 = vmatprep.subr.mxu0 0.0
  %1044 = vmatpush1.msra.mxu0 0.0
  %1045 = vmatprep.subr.mxu0 0.0
  %1046 = vmatpush1.msra.mxu0 0.0
  %1047 = vmatprep.subr.mxu0 0.0
  %1048 = vmatpush1.msra.mxu0 0.0
  %1049 = vmatprep.mubr.f32.mxu0 0.0
  %1050 = vmatmul.mubr.f32.gmra.mrb[0].mxu0 %v80
  %v1051 = vpop.f32.mrb[0].mxu0
  %v1052 = vadd.f32 0.0, %v1051
  %v1053 = vpop.f32.mrb[0].mxu0
  %1054 = vmatprep.mubr.f32.mxu0 0.0
  %1055 = vmatmul.mubr.f32.gmra.mrb[0].mxu0 %v83
  %v1056 = vpop.f32.mrb[0].mxu0
  %v1057 = vadd.f32 0.0, %v1056
  %v1058 = vpop.f32.mrb[0].mxu0
  %1059 = vdwg.mxu0
  %1060 = vmatprep.subr.mxu0 0.0
  %1061 = vmatpush1.msra.mxu0 %v70
  %1062 = vmatprep.subr.mxu0 0.0
  %1063 = vmatpush1.msra.mxu0 %v71
  %1064 = vmatprep.subr.mxu0 0.0
  %1065 = vmatpush1.msra.mxu0 0.0
  %1066 = vmatprep.subr.mxu0 0.0
  %1067 = vmatpush1.msra.mxu0 0.0
  %1068 = vmatprep.subr.mxu0 0.0
  %1069 = vmatpush1.msra.mxu0 0.0
  %1070 = vmatprep.subr.mxu0 0.0
  %1071 = vmatpush1.msra.mxu0 0.0
  %1072 = vmatprep.subr.mxu0 0.0
  %1073 = vmatpush1.msra.mxu0 0.0
  %1074 = vmatprep.subr.mxu0 0.0
  %1075 = vmatpush1.msra.mxu0 0.0
  %1076 = vmatprep.subr.mxu0 0.0
  %1077 = vmatpush1.msra.mxu0 0.0
  %1078 = vmatprep.subr.mxu0 0.0
  %1079 = vmatpush1.msra.mxu0 0.0
  %1080 = vmatprep.subr.mxu0 0.0
  %1081 = vmatpush1.msra.mxu0 0.0
  %1082 = vmatprep.subr.mxu0 0.0
  %1083 = vmatpush1.msra.mxu0 0.0
  %1084 = vmatprep.subr.mxu0 0.0
  %1085 = vmatpush1.msra.mxu0 0.0
  %1086 = vmatprep.subr.mxu0 0.0
  %1087 = vmatpush1.msra.mxu0 0.0
  %1088 = vmatprep.subr.mxu0 0.0
  %1089 = vmatpush1.msra.mxu0 0.0
  %1090 = vmatprep.subr.mxu0 0.0
  %1091 = vmatpush1.msra.mxu0 0.0
  %1092 = vmatprep.subr.mxu0 0.0
  %1093 = vmatpush1.msra.mxu0 0.0
  %1094 = vmatprep.subr.mxu0 0.0
  %1095 = vmatpush1.msra.mxu0 0.0
  %1096 = vmatprep.subr.mxu0 0.0
  %1097 = vmatpush1.msra.mxu0 0.0
  %1098 = vmatprep.subr.mxu0 0.0
  %1099 = vmatpush1.msra.mxu0 0.0
  %1100 = vmatprep.subr.mxu0 0.0
  %1101 = vmatpush1.msra.mxu0 0.0
  %1102 = vmatprep.subr.mxu0 0.0
  %1103 = vmatpush1.msra.mxu0 0.0
  %1104 = vmatprep.subr.mxu0 0.0
  %1105 = vmatpush1.msra.mxu0 0.0
  %1106 = vmatprep.subr.mxu0 0.0
  %1107 = vmatpush1.msra.mxu0 0.0
  %1108 = vmatprep.subr.mxu0 0.0
  %1109 = vmatpush1.msra.mxu0 0.0
  %1110 = vmatprep.subr.mxu0 0.0
  %1111 = vmatpush1.msra.mxu0 0.0
  %1112 = vmatprep.subr.mxu0 0.0
  %1113 = vmatpush1.msra.mxu0 0.0
  %1114 = vmatprep.subr.mxu0 0.0
  %1115 = vmatpush1.msra.mxu0 0.0
  %1116 = vmatprep.subr.mxu0 0.0
  %1117 = vmatpush1.msra.mxu0 0.0
  %1118 = vmatprep.subr.mxu0 0.0
  %1119 = vmatpush1.msra.mxu0 0.0
  %1120 = vmatprep.subr.mxu0 0.0
  %1121 = vmatpush1.msra.mxu0 0.0
  %1122 = vmatprep.subr.mxu0 0.0
  %1123 = vmatpush1.msra.mxu0 0.0
  %1124 = vmatprep.mubr.f32.mxu0 0.0
  %1125 = vmatmul.mubr.f32.gmra.mrb[0].mxu0 %v80
  %v1126 = vpop.f32.mrb[0].mxu0
  %v1127 = vadd.f32 0.0, %v1126
  %v1128 = vpop.f32.mrb[0].mxu0
  %1129 = vmatprep.mubr.f32.mxu0 0.0
  %1130 = vmatmul.mubr.f32.gmra.mrb[0].mxu0 %v83
  %v1131 = vpop.f32.mrb[0].mxu0
  %v1132 = vadd.f32 0.0, %v1131
  %v1133 = vpop.f32.mrb[0].mxu0
  %1134 = vdwg.mxu0
  %1135 = vmatprep.subr.mxu0 0.0
  %1136 = vmatpush1.msra.mxu0 %v72
  %1137 = vmatprep.subr.mxu0 0.0
  %1138 = vmatpush1.msra.mxu0 %v73
  %1139 = vmatprep.subr.mxu0 0.0
  %1140 = vmatpush1.msra.mxu0 0.0
  %1141 = vmatprep.subr.mxu0 0.0
  %1142 = vmatpush1.msra.mxu0 0.0
  %1143 = vmatprep.subr.mxu0 0.0
  %1144 = vmatpush1.msra.mxu0 0.0
  %1145 = vmatprep.subr.mxu0 0.0
  %1146 = vmatpush1.msra.mxu0 0.0
  %1147 = vmatprep.subr.mxu0 0.0
  %1148 = vmatpush1.msra.mxu0 0.0
  %1149 = vmatprep.subr.mxu0 0.0
  %1150 = vmatpush1.msra.mxu0 0.0
  %1151 = vmatprep.subr.mxu0 0.0
  %1152 = vmatpush1.msra.mxu0 0.0
  %1153 = vmatprep.subr.mxu0 0.0
  %1154 = vmatpush1.msra.mxu0 0.0
  %1155 = vmatprep.subr.mxu0 0.0
  %1156 = vmatpush1.msra.mxu0 0.0
  %1157 = vmatprep.subr.mxu0 0.0
  %1158 = vmatpush1.msra.mxu0 0.0
  %1159 = vmatprep.subr.mxu0 0.0
  %1160 = vmatpush1.msra.mxu0 0.0
  %1161 = vmatprep.subr.mxu0 0.0
  %1162 = vmatpush1.msra.mxu0 0.0
  %1163 = vmatprep.subr.mxu0 0.0
  %1164 = vmatpush1.msra.mxu0 0.0
  %1165 = vmatprep.subr.mxu0 0.0
  %1166 = vmatpush1.msra.mxu0 0.0
  %1167 = vmatprep.subr.mxu0 0.0
  %1168 = vmatpush1.msra.mxu0 0.0
  %1169 = vmatprep.subr.mxu0 0.0
  %1170 = vmatpush1.msra.mxu0 0.0
  %1171 = vmatprep.subr.mxu0 0.0
  %1172 = vmatpush1.msra.mxu0 0.0
  %1173 = vmatprep.subr.mxu0 0.0
  %1174 = vmatpush1.msra.mxu0 0.0
  %1175 = vmatprep.subr.mxu0 0.0
  %1176 = vmatpush1.msra.mxu0 0.0
  %1177 = vmatprep.subr.mxu0 0.0
  %1178 = vmatpush1.msra.mxu0 0.0
  %1179 = vmatprep.subr.mxu0 0.0
  %1180 = vmatpush1.msra.mxu0 0.0
  %1181 = vmatprep.subr.mxu0 0.0
  %1182 = vmatpush1.msra.mxu0 0.0
  %1183 = vmatprep.subr.mxu0 0.0
  %1184 = vmatpush1.msra.mxu0 0.0
  %1185 = vmatprep.subr.mxu0 0.0
  %1186 = vmatpush1.msra.mxu0 0.0
  %1187 = vmatprep.subr.mxu0 0.0
  %1188 = vmatpush1.msra.mxu0 0.0
  %1189 = vmatprep.subr.mxu0 0.0
  %1190 = vmatpush1.msra.mxu0 0.0
  %1191 = vmatprep.subr.mxu0 0.0
  %1192 = vmatpush1.msra.mxu0 0.0
  %1193 = vmatprep.subr.mxu0 0.0
  %1194 = vmatpush1.msra.mxu0 0.0
  %1195 = vmatprep.subr.mxu0 0.0
  %1196 = vmatpush1.msra.mxu0 0.0
  %1197 = vmatprep.subr.mxu0 0.0
  %1198 = vmatpush1.msra.mxu0 0.0
  %1199 = vmatprep.mubr.f32.mxu0 0.0
  %1200 = vmatmul.mubr.f32.gmra.mrb[0].mxu0 %v80
  %v1201 = vpop.f32.mrb[0].mxu0
  %v1202 = vadd.f32 0.0, %v1201
  %v1203 = vpop.f32.mrb[0].mxu0
  %1204 = vmatprep.mubr.f32.mxu0 0.0
  %1205 = vmatmul.mubr.f32.gmra.mrb[0].mxu0 %v83
  %v1206 = vpop.f32.mrb[0].mxu0
  %v1207 = vadd.f32 0.0, %v1206
  %v1208 = vpop.f32.mrb[0].mxu0
  %1209 = vdwg.mxu0
  %1210 = vmatprep.subr.mxu0 0.0
  %1211 = vmatpush1.msra.mxu0 %v74
  %1212 = vmatprep.subr.mxu0 0.0
  %1213 = vmatpush1.msra.mxu0 %v75
  %1214 = vmatprep.subr.mxu0 0.0
  %1215 = vmatpush1.msra.mxu0 0.0
  %1216 = vmatprep.subr.mxu0 0.0
  %1217 = vmatpush1.msra.mxu0 0.0
  %1218 = vmatprep.subr.mxu0 0.0
  %1219 = vmatpush1.msra.mxu0 0.0
  %1220 = vmatprep.subr.mxu0 0.0
  %1221 = vmatpush1.msra.mxu0 0.0
  %1222 = vmatprep.subr.mxu0 0.0
  %1223 = vmatpush1.msra.mxu0 0.0
  %1224 = vmatprep.subr.mxu0 0.0
  %1225 = vmatpush1.msra.mxu0 0.0
  %1226 = vmatprep.subr.mxu0 0.0
  %1227 = vmatpush1.msra.mxu0 0.0
  %1228 = vmatprep.subr.mxu0 0.0
  %1229 = vmatpush1.msra.mxu0 0.0
  %1230 = vmatprep.subr.mxu0 0.0
  %1231 = vmatpush1.msra.mxu0 0.0
  %1232 = vmatprep.subr.mxu0 0.0
  %1233 = vmatpush1.msra.mxu0 0.0
  %1234 = vmatprep.subr.mxu0 0.0
  %1235 = vmatpush1.msra.mxu0 0.0
  %1236 = vmatprep.subr.mxu0 0.0
  %1237 = vmatpush1.msra.mxu0 0.0
  %1238 = vmatprep.subr.mxu0 0.0
  %1239 = vmatpush1.msra.mxu0 0.0
  %1240 = vmatprep.subr.mxu0 0.0
  %1241 = vmatpush1.msra.mxu0 0.0
  %1242 = vmatprep.subr.mxu0 0.0
  %1243 = vmatpush1.msra.mxu0 0.0
  %1244 = vmatprep.subr.mxu0 0.0
  %1245 = vmatpush1.msra.mxu0 0.0
  %1246 = vmatprep.subr.mxu0 0.0
  %1247 = vmatpush1.msra.mxu0 0.0
  %1248 = vmatprep.subr.mxu0 0.0
  %1249 = vmatpush1.msra.mxu0 0.0
  %1250 = vmatprep.subr.mxu0 0.0
  %1251 = vmatpush1.msra.mxu0 0.0
  %1252 = vmatprep.subr.mxu0 0.0
  %1253 = vmatpush1.msra.mxu0 0.0
  %1254 = vmatprep.subr.mxu0 0.0
  %1255 = vmatpush1.msra.mxu0 0.0
  %1256 = vmatprep.subr.mxu0 0.0
  %1257 = vmatpush1.msra.mxu0 0.0
  %1258 = vmatprep.subr.mxu0 0.0
  %1259 = vmatpush1.msra.mxu0 0.0
  %1260 = vmatprep.subr.mxu0 0.0
  %1261 = vmatpush1.msra.mxu0 0.0
  %1262 = vmatprep.subr.mxu0 0.0
  %1263 = vmatpush1.msra.mxu0 0.0
  %1264 = vmatprep.subr.mxu0 0.0
  %1265 = vmatpush1.msra.mxu0 0.0
  %1266 = vmatprep.subr.mxu0 0.0
  %1267 = vmatpush1.msra.mxu0 0.0
  %1268 = vmatprep.subr.mxu0 0.0
  %1269 = vmatpush1.msra.mxu0 0.0
  %1270 = vmatprep.subr.mxu0 0.0
  %1271 = vmatpush1.msra.mxu0 0.0
  %1272 = vmatprep.subr.mxu0 0.0
  %1273 = vmatpush1.msra.mxu0 0.0
  %1274 = vmatprep.mubr.f32.mxu0 0.0
  %1275 = vmatmul.mubr.f32.gmra.mrb[0].mxu0 %v80
  %v1276 = vpop.f32.mrb[0].mxu0
  %v1277 = vadd.f32 0.0, %v1276
  %v1278 = vpop.f32.mrb[0].mxu0
  %1279 = vmatprep.mubr.f32.mxu0 0.0
  %1280 = vmatmul.mubr.f32.gmra.mrb[0].mxu0 %v83
  %v1281 = vpop.f32.mrb[0].mxu0
  %v1282 = vadd.f32 0.0, %v1281
  %v1283 = vpop.f32.mrb[0].mxu0
  %1284 = vdwg.mxu0
  %v1285 = vld [vmem:[%s3] sm:$0x1]
  %v1287 = vlaneseq
  %v1288 = vshrl.u32 %v1287, 7
  %v1289 = vsub.s32 0, %v1288
  %v1290 = vrot.slane %v1285, %v1289
  %v1292 = vadd.f32 %v152, %v1290
  %v1293 = vadd.f32 %v157, %v1290
  %v1294 = vadd.f32 %v227, %v1290
  %v1295 = vadd.f32 %v232, %v1290
  %v1296 = vadd.f32 %v302, %v1290
  %v1297 = vadd.f32 %v307, %v1290
  %v1298 = vadd.f32 %v377, %v1290
  %v1299 = vadd.f32 %v382, %v1290
  %v1300 = vadd.f32 %v452, %v1290
  %v1301 = vadd.f32 %v457, %v1290
  %v1302 = vadd.f32 %v527, %v1290
  %v1303 = vadd.f32 %v532, %v1290
  %v1304 = vadd.f32 %v602, %v1290
  %v1305 = vadd.f32 %v607, %v1290
  %v1306 = vadd.f32 %v677, %v1290
  %v1307 = vadd.f32 %v682, %v1290
  %v1308 = vadd.f32 %v752, %v1290
  %v1309 = vadd.f32 %v757, %v1290
  %v1310 = vadd.f32 %v827, %v1290
  %v1311 = vadd.f32 %v832, %v1290
  %v1312 = vadd.f32 %v902, %v1290
  %v1313 = vadd.f32 %v907, %v1290
  %v1314 = vadd.f32 %v977, %v1290
  %v1315 = vadd.f32 %v982, %v1290
  %v1316 = vadd.f32 %v1052, %v1290
  %v1317 = vadd.f32 %v1057, %v1290
  %v1318 = vadd.f32 %v1127, %v1290
  %v1319 = vadd.f32 %v1132, %v1290
  %v1320 = vadd.f32 %v1202, %v1290
  %v1321 = vadd.f32 %v1207, %v1290
  %v1322 = vadd.f32 %v1277, %v1290
  %v1323 = vadd.f32 %v1282, %v1290
  %v1324 = vmax.f32 %v1292, 0.0
  %v1325 = vmax.f32 %v1293, 0.0
  %v1326 = vmax.f32 %v1294, 0.0
  %v1327 = vmax.f32 %v1295, 0.0
  %v1328 = vmax.f32 %v1296, 0.0
  %v1329 = vmax.f32 %v1297, 0.0
  %v1330 = vmax.f32 %v1298, 0.0
  %v1331 = vmax.f32 %v1299, 0.0
  %v1332 = vmax.f32 %v1300, 0.0
  %v1333 = vmax.f32 %v1301, 0.0
  %v1334 = vmax.f32 %v1302, 0.0
  %v1335 = vmax.f32 %v1303, 0.0
  %v1336 = vmax.f32 %v1304, 0.0
  %v1337 = vmax.f32 %v1305, 0.0
  %v1338 = vmax.f32 %v1306, 0.0
  %v1339 = vmax.f32 %v1307, 0.0
  %v1340 = vmax.f32 %v1308, 0.0
  %v1341 = vmax.f32 %v1309, 0.0
  %v1342 = vmax.f32 %v1310, 0.0
  %v1343 = vmax.f32 %v1311, 0.0
  %v1344 = vmax.f32 %v1312, 0.0
  %v1345 = vmax.f32 %v1313, 0.0
  %v1346 = vmax.f32 %v1314, 0.0
  %v1347 = vmax.f32 %v1315, 0.0
  %v1348 = vmax.f32 %v1316, 0.0
  %v1349 = vmax.f32 %v1317, 0.0
  %v1350 = vmax.f32 %v1318, 0.0
  %v1351 = vmax.f32 %v1319, 0.0
  %v1352 = vmax.f32 %v1320, 0.0
  %v1353 = vmax.f32 %v1321, 0.0
  %v1354 = vmax.f32 %v1322, 0.0
  %v1355 = vmax.f32 %v1323, 0.0
  %vm1356 = vcmask 261120
  %v1357 = vsel %vm1356, %v1324, 0.0
  %1358 = vadd.xlane.f32.xlu0 %v1357
  %v1359 = vpop.xlane.xlu0 %1358
  %v1360 = vsel %vm1356, %v1325, 0.0
  %1361 = vadd.xlane.f32.xlu0 %v1360
  %v1362 = vpop.xlane.xlu0 %1361
  %v1363 = vsel %vm1356, %v1326, 0.0
  %1364 = vadd.xlane.f32.xlu0 %v1363
  %v1365 = vpop.xlane.xlu0 %1364
  %v1366 = vsel %vm1356, %v1327, 0.0
  %1367 = vadd.xlane.f32.xlu0 %v1366
  %v1368 = vpop.xlane.xlu0 %1367
  %v1369 = vsel %vm1356, %v1328, 0.0
  %1370 = vadd.xlane.f32.xlu0 %v1369
  %v1371 = vpop.xlane.xlu0 %1370
  %v1372 = vsel %vm1356, %v1329, 0.0
  %1373 = vadd.xlane.f32.xlu0 %v1372
  %v1374 = vpop.xlane.xlu0 %1373
  %v1375 = vsel %vm1356, %v1330, 0.0
  %1376 = vadd.xlane.f32.xlu0 %v1375
  %v1377 = vpop.xlane.xlu0 %1376
  %v1378 = vsel %vm1356, %v1331, 0.0
  %1379 = vadd.xlane.f32.xlu0 %v1378
  %v1380 = vpop.xlane.xlu0 %1379
  %v1381 = vsel %vm1356, %v1332, 0.0
  %1382 = vadd.xlane.f32.xlu0 %v1381
  %v1383 = vpop.xlane.xlu0 %1382
  %v1384 = vsel %vm1356, %v1333, 0.0
  %1385 = vadd.xlane.f32.xlu0 %v1384
  %v1386 = vpop.xlane.xlu0 %1385
  %v1387 = vsel %vm1356, %v1334, 0.0
  %1388 = vadd.xlane.f32.xlu0 %v1387
  %v1389 = vpop.xlane.xlu0 %1388
  %v1390 = vsel %vm1356, %v1335, 0.0
  %1391 = vadd.xlane.f32.xlu0 %v1390
  %v1392 = vpop.xlane.xlu0 %1391
  %v1393 = vsel %vm1356, %v1336, 0.0
  %1394 = vadd.xlane.f32.xlu0 %v1393
  %v1395 = vpop.xlane.xlu0 %1394
  %v1396 = vsel %vm1356, %v1337, 0.0
  %1397 = vadd.xlane.f32.xlu0 %v1396
  %v1398 = vpop.xlane.xlu0 %1397
  %v1399 = vsel %vm1356, %v1338, 0.0
  %1400 = vadd.xlane.f32.xlu0 %v1399
  %v1401 = vpop.xlane.xlu0 %1400
  %v1402 = vsel %vm1356, %v1339, 0.0
  %1403 = vadd.xlane.f32.xlu0 %v1402
  %v1404 = vpop.xlane.xlu0 %1403
  %v1405 = vsel %vm1356, %v1340, 0.0
  %1406 = vadd.xlane.f32.xlu0 %v1405
  %v1407 = vpop.xlane.xlu0 %1406
  %v1408 = vsel %vm1356, %v1341, 0.0
  %1409 = vadd.xlane.f32.xlu0 %v1408
  %v1410 = vpop.xlane.xlu0 %1409
  %v1411 = vsel %vm1356, %v1342, 0.0
  %1412 = vadd.xlane.f32.xlu0 %v1411
  %v1413 = vpop.xlane.xlu0 %1412
  %v1414 = vsel %vm1356, %v1343, 0.0
  %1415 = vadd.xlane.f32.xlu0 %v1414
  %v1416 = vpop.xlane.xlu0 %1415
  %v1417 = vsel %vm1356, %v1344, 0.0
  %1418 = vadd.xlane.f32.xlu0 %v1417
  %v1419 = vpop.xlane.xlu0 %1418
  %v1420 = vsel %vm1356, %v1345, 0.0
  %1421 = vadd.xlane.f32.xlu0 %v1420
  %v1422 = vpop.xlane.xlu0 %1421
  %v1423 = vsel %vm1356, %v1346, 0.0
  %1424 = vadd.xlane.f32.xlu0 %v1423
  %v1425 = vpop.xlane.xlu0 %1424
  %v1426 = vsel %vm1356, %v1347, 0.0
  %1427 = vadd.xlane.f32.xlu0 %v1426
  %v1428 = vpop.xlane.xlu0 %1427
  %v1429 = vsel %vm1356, %v1348, 0.0
  %1430 = vadd.xlane.f32.xlu0 %v1429
  %v1431 = vpop.xlane.xlu0 %1430
  %v1432 = vsel %vm1356, %v1349, 0.0
  %1433 = vadd.xlane.f32.xlu0 %v1432
  %v1434 = vpop.xlane.xlu0 %1433
  %v1435 = vsel %vm1356, %v1350, 0.0
  %1436 = vadd.xlane.f32.xlu0 %v1435
  %v1437 = vpop.xlane.xlu0 %1436
  %v1438 = vsel %vm1356, %v1351, 0.0
  %1439 = vadd.xlane.f32.xlu0 %v1438
  %v1440 = vpop.xlane.xlu0 %1439
  %v1441 = vsel %vm1356, %v1352, 0.0
  %1442 = vadd.xlane.f32.xlu0 %v1441
  %v1443 = vpop.xlane.xlu0 %1442
  %v1444 = vsel %vm1356, %v1353, 0.0
  %1445 = vadd.xlane.f32.xlu0 %v1444
  %v1446 = vpop.xlane.xlu0 %1445
  %v1447 = vsel %vm1356, %v1354, 0.0
  %1448 = vadd.xlane.f32.xlu0 %v1447
  %v1449 = vpop.xlane.xlu0 %1448
  %v1450 = vsel %vm1356, %v1355, 0.0
  %1451 = vadd.xlane.f32.xlu0 %v1450
  %v1452 = vpop.xlane.xlu0 %1451
  %v1453 = vrcp.pop 32.0
  %v1454 = vmul.f32 %v1359, %v1453
  %v1455 = vmul.f32 %v1362, %v1453
  %v1456 = vmul.f32 %v1365, %v1453
  %v1457 = vmul.f32 %v1368, %v1453
  %v1458 = vmul.f32 %v1371, %v1453
  %v1459 = vmul.f32 %v1374, %v1453
  %v1460 = vmul.f32 %v1377, %v1453
  %v1461 = vmul.f32 %v1380, %v1453
  %v1462 = vmul.f32 %v1383, %v1453
  %v1463 = vmul.f32 %v1386, %v1453
  %v1464 = vmul.f32 %v1389, %v1453
  %v1465 = vmul.f32 %v1392, %v1453
  %v1466 = vmul.f32 %v1395, %v1453
  %v1467 = vmul.f32 %v1398, %v1453
  %v1468 = vmul.f32 %v1401, %v1453
  %v1469 = vmul.f32 %v1404, %v1453
  %v1470 = vmul.f32 %v1407, %v1453
  %v1471 = vmul.f32 %v1410, %v1453
  %v1472 = vmul.f32 %v1413, %v1453
  %v1473 = vmul.f32 %v1416, %v1453
  %v1474 = vmul.f32 %v1419, %v1453
  %v1475 = vmul.f32 %v1422, %v1453
  %v1476 = vmul.f32 %v1425, %v1453
  %v1477 = vmul.f32 %v1428, %v1453
  %v1478 = vmul.f32 %v1431, %v1453
  %v1479 = vmul.f32 %v1434, %v1453
  %v1480 = vmul.f32 %v1437, %v1453
  %v1481 = vmul.f32 %v1440, %v1453
  %v1482 = vmul.f32 %v1443, %v1453
  %v1483 = vmul.f32 %v1446, %v1453
  %v1484 = vmul.f32 %v1449, %v1453
  %v1485 = vmul.f32 %v1452, %v1453
  %v1486 = vmul.f32 %v1324, %v1324
  %v1487 = vmul.f32 %v1325, %v1325
  %v1488 = vmul.f32 %v1326, %v1326
  %v1489 = vmul.f32 %v1327, %v1327
  %v1490 = vmul.f32 %v1328, %v1328
  %v1491 = vmul.f32 %v1329, %v1329
  %v1492 = vmul.f32 %v1330, %v1330
  %v1493 = vmul.f32 %v1331, %v1331
  %v1494 = vmul.f32 %v1332, %v1332
  %v1495 = vmul.f32 %v1333, %v1333
  %v1496 = vmul.f32 %v1334, %v1334
  %v1497 = vmul.f32 %v1335, %v1335
  %v1498 = vmul.f32 %v1336, %v1336
  %v1499 = vmul.f32 %v1337, %v1337
  %v1500 = vmul.f32 %v1338, %v1338
  %v1501 = vmul.f32 %v1339, %v1339
  %v1502 = vmul.f32 %v1340, %v1340
  %v1503 = vmul.f32 %v1341, %v1341
  %v1504 = vmul.f32 %v1342, %v1342
  %v1505 = vmul.f32 %v1343, %v1343
  %v1506 = vmul.f32 %v1344, %v1344
  %v1507 = vmul.f32 %v1345, %v1345
  %v1508 = vmul.f32 %v1346, %v1346
  %v1509 = vmul.f32 %v1347, %v1347
  %v1510 = vmul.f32 %v1348, %v1348
  %v1511 = vmul.f32 %v1349, %v1349
  %v1512 = vmul.f32 %v1350, %v1350
  %v1513 = vmul.f32 %v1351, %v1351
  %v1514 = vmul.f32 %v1352, %v1352
  %v1515 = vmul.f32 %v1353, %v1353
  %v1516 = vmul.f32 %v1354, %v1354
  %v1517 = vmul.f32 %v1355, %v1355
  %v1518 = vsel %vm1356, %v1486, 0.0
  %1519 = vadd.xlane.f32.xlu0 %v1518
  %v1520 = vpop.xlane.xlu0 %1519
  %v1521 = vsel %vm1356, %v1487, 0.0
  %1522 = vadd.xlane.f32.xlu0 %v1521
  %v1523 = vpop.xlane.xlu0 %1522
  %v1524 = vsel %vm1356, %v1488, 0.0
  %1525 = vadd.xlane.f32.xlu0 %v1524
  %v1526 = vpop.xlane.xlu0 %1525
  %v1527 = vsel %vm1356, %v1489, 0.0
  %1528 = vadd.xlane.f32.xlu0 %v1527
  %v1529 = vpop.xlane.xlu0 %1528
  %v1530 = vsel %vm1356, %v1490, 0.0
  %1531 = vadd.xlane.f32.xlu0 %v1530
  %v1532 = vpop.xlane.xlu0 %1531
  %v1533 = vsel %vm1356, %v1491, 0.0
  %1534 = vadd.xlane.f32.xlu0 %v1533
  %v1535 = vpop.xlane.xlu0 %1534
  %v1536 = vsel %vm1356, %v1492, 0.0
  %1537 = vadd.xlane.f32.xlu0 %v1536
  %v1538 = vpop.xlane.xlu0 %1537
  %v1539 = vsel %vm1356, %v1493, 0.0
  %1540 = vadd.xlane.f32.xlu0 %v1539
  %v1541 = vpop.xlane.xlu0 %1540
  %v1542 = vsel %vm1356, %v1494, 0.0
  %1543 = vadd.xlane.f32.xlu0 %v1542
  %v1544 = vpop.xlane.xlu0 %1543
  %v1545 = vsel %vm1356, %v1495, 0.0
  %1546 = vadd.xlane.f32.xlu0 %v1545
  %v1547 = vpop.xlane.xlu0 %1546
  %v1548 = vsel %vm1356, %v1496, 0.0
  %1549 = vadd.xlane.f32.xlu0 %v1548
  %v1550 = vpop.xlane.xlu0 %1549
  %v1551 = vsel %vm1356, %v1497, 0.0
  %1552 = vadd.xlane.f32.xlu0 %v1551
  %v1553 = vpop.xlane.xlu0 %1552
  %v1554 = vsel %vm1356, %v1498, 0.0
  %1555 = vadd.xlane.f32.xlu0 %v1554
  %v1556 = vpop.xlane.xlu0 %1555
  %v1557 = vsel %vm1356, %v1499, 0.0
  %1558 = vadd.xlane.f32.xlu0 %v1557
  %v1559 = vpop.xlane.xlu0 %1558
  %v1560 = vsel %vm1356, %v1500, 0.0
  %1561 = vadd.xlane.f32.xlu0 %v1560
  %v1562 = vpop.xlane.xlu0 %1561
  %v1563 = vsel %vm1356, %v1501, 0.0
  %1564 = vadd.xlane.f32.xlu0 %v1563
  %v1565 = vpop.xlane.xlu0 %1564
  %v1566 = vsel %vm1356, %v1502, 0.0
  %1567 = vadd.xlane.f32.xlu0 %v1566
  %v1568 = vpop.xlane.xlu0 %1567
  %v1569 = vsel %vm1356, %v1503, 0.0
  %1570 = vadd.xlane.f32.xlu0 %v1569
  %v1571 = vpop.xlane.xlu0 %1570
  %v1572 = vsel %vm1356, %v1504, 0.0
  %1573 = vadd.xlane.f32.xlu0 %v1572
  %v1574 = vpop.xlane.xlu0 %1573
  %v1575 = vsel %vm1356, %v1505, 0.0
  %1576 = vadd.xlane.f32.xlu0 %v1575
  %v1577 = vpop.xlane.xlu0 %1576
  %v1578 = vsel %vm1356, %v1506, 0.0
  %1579 = vadd.xlane.f32.xlu0 %v1578
  %v1580 = vpop.xlane.xlu0 %1579
  %v1581 = vsel %vm1356, %v1507, 0.0
  %1582 = vadd.xlane.f32.xlu0 %v1581
  %v1583 = vpop.xlane.xlu0 %1582
  %v1584 = vsel %vm1356, %v1508, 0.0
  %1585 = vadd.xlane.f32.xlu0 %v1584
  %v1586 = vpop.xlane.xlu0 %1585
  %v1587 = vsel %vm1356, %v1509, 0.0
  %1588 = vadd.xlane.f32.xlu0 %v1587
  %v1589 = vpop.xlane.xlu0 %1588
  %v1590 = vsel %vm1356, %v1510, 0.0
  %1591 = vadd.xlane.f32.xlu0 %v1590
  %v1592 = vpop.xlane.xlu0 %1591
  %v1593 = vsel %vm1356, %v1511, 0.0
  %1594 = vadd.xlane.f32.xlu0 %v1593
  %v1595 = vpop.xlane.xlu0 %1594
  %v1596 = vsel %vm1356, %v1512, 0.0
  %1597 = vadd.xlane.f32.xlu0 %v1596
  %v1598 = vpop.xlane.xlu0 %1597
  %v1599 = vsel %vm1356, %v1513, 0.0
  %1600 = vadd.xlane.f32.xlu0 %v1599
  %v1601 = vpop.xlane.xlu0 %1600
  %v1602 = vsel %vm1356, %v1514, 0.0
  %1603 = vadd.xlane.f32.xlu0 %v1602
  %v1604 = vpop.xlane.xlu0 %1603
  %v1605 = vsel %vm1356, %v1515, 0.0
  %1606 = vadd.xlane.f32.xlu0 %v1605
  %v1607 = vpop.xlane.xlu0 %1606
  %v1608 = vsel %vm1356, %v1516, 0.0
  %1609 = vadd.xlane.f32.xlu0 %v1608
  %v1610 = vpop.xlane.xlu0 %1609
  %v1611 = vsel %vm1356, %v1517, 0.0
  %1612 = vadd.xlane.f32.xlu0 %v1611
  %v1613 = vpop.xlane.xlu0 %1612
  %v1614 = vmul.f32 %v1520, %v1453
  %v1615 = vmul.f32 %v1523, %v1453
  %v1616 = vmul.f32 %v1526, %v1453
  %v1617 = vmul.f32 %v1529, %v1453
  %v1618 = vmul.f32 %v1532, %v1453
  %v1619 = vmul.f32 %v1535, %v1453
  %v1620 = vmul.f32 %v1538, %v1453
  %v1621 = vmul.f32 %v1541, %v1453
  %v1622 = vmul.f32 %v1544, %v1453
  %v1623 = vmul.f32 %v1547, %v1453
  %v1624 = vmul.f32 %v1550, %v1453
  %v1625 = vmul.f32 %v1553, %v1453
  %v1626 = vmul.f32 %v1556, %v1453
  %v1627 = vmul.f32 %v1559, %v1453
  %v1628 = vmul.f32 %v1562, %v1453
  %v1629 = vmul.f32 %v1565, %v1453
  %v1630 = vmul.f32 %v1568, %v1453
  %v1631 = vmul.f32 %v1571, %v1453
  %v1632 = vmul.f32 %v1574, %v1453
  %v1633 = vmul.f32 %v1577, %v1453
  %v1634 = vmul.f32 %v1580, %v1453
  %v1635 = vmul.f32 %v1583, %v1453
  %v1636 = vmul.f32 %v1586, %v1453
  %v1637 = vmul.f32 %v1589, %v1453
  %v1638 = vmul.f32 %v1592, %v1453
  %v1639 = vmul.f32 %v1595, %v1453
  %v1640 = vmul.f32 %v1598, %v1453
  %v1641 = vmul.f32 %v1601, %v1453
  %v1642 = vmul.f32 %v1604, %v1453
  %v1643 = vmul.f32 %v1607, %v1453
  %v1644 = vmul.f32 %v1610, %v1453
  %v1645 = vmul.f32 %v1613, %v1453
  %v1646 = vmul.f32 %v1454, %v1454
  %v1647 = vmul.f32 %v1455, %v1455
  %v1648 = vmul.f32 %v1456, %v1456
  %v1649 = vmul.f32 %v1457, %v1457
  %v1650 = vmul.f32 %v1458, %v1458
  %v1651 = vmul.f32 %v1459, %v1459
  %v1652 = vmul.f32 %v1460, %v1460
  %v1653 = vmul.f32 %v1461, %v1461
  %v1654 = vmul.f32 %v1462, %v1462
  %v1655 = vmul.f32 %v1463, %v1463
  %v1656 = vmul.f32 %v1464, %v1464
  %v1657 = vmul.f32 %v1465, %v1465
  %v1658 = vmul.f32 %v1466, %v1466
  %v1659 = vmul.f32 %v1467, %v1467
  %v1660 = vmul.f32 %v1468, %v1468
  %v1661 = vmul.f32 %v1469, %v1469
  %v1662 = vmul.f32 %v1470, %v1470
  %v1663 = vmul.f32 %v1471, %v1471
  %v1664 = vmul.f32 %v1472, %v1472
  %v1665 = vmul.f32 %v1473, %v1473
  %v1666 = vmul.f32 %v1474, %v1474
  %v1667 = vmul.f32 %v1475, %v1475
  %v1668 = vmul.f32 %v1476, %v1476
  %v1669 = vmul.f32 %v1477, %v1477
  %v1670 = vmul.f32 %v1478, %v1478
  %v1671 = vmul.f32 %v1479, %v1479
  %v1672 = vmul.f32 %v1480, %v1480
  %v1673 = vmul.f32 %v1481, %v1481
  %v1674 = vmul.f32 %v1482, %v1482
  %v1675 = vmul.f32 %v1483, %v1483
  %v1676 = vmul.f32 %v1484, %v1484
  %v1677 = vmul.f32 %v1485, %v1485
  %v1678 = vsub.f32 %v1614, %v1646
  %v1679 = vsub.f32 %v1615, %v1647
  %v1680 = vsub.f32 %v1616, %v1648
  %v1681 = vsub.f32 %v1617, %v1649
  %v1682 = vsub.f32 %v1618, %v1650
  %v1683 = vsub.f32 %v1619, %v1651
  %v1684 = vsub.f32 %v1620, %v1652
  %v1685 = vsub.f32 %v1621, %v1653
  %v1686 = vsub.f32 %v1622, %v1654
  %v1687 = vsub.f32 %v1623, %v1655
  %v1688 = vsub.f32 %v1624, %v1656
  %v1689 = vsub.f32 %v1625, %v1657
  %v1690 = vsub.f32 %v1626, %v1658
  %v1691 = vsub.f32 %v1627, %v1659
  %v1692 = vsub.f32 %v1628, %v1660
  %v1693 = vsub.f32 %v1629, %v1661
  %v1694 = vsub.f32 %v1630, %v1662
  %v1695 = vsub.f32 %v1631, %v1663
  %v1696 = vsub.f32 %v1632, %v1664
  %v1697 = vsub.f32 %v1633, %v1665
  %v1698 = vsub.f32 %v1634, %v1666
  %v1699 = vsub.f32 %v1635, %v1667
  %v1700 = vsub.f32 %v1636, %v1668
  %v1701 = vsub.f32 %v1637, %v1669
  %v1702 = vsub.f32 %v1638, %v1670
  %v1703 = vsub.f32 %v1639, %v1671
  %v1704 = vsub.f32 %v1640, %v1672
  %v1705 = vsub.f32 %v1641, %v1673
  %v1706 = vsub.f32 %v1642, %v1674
  %v1707 = vsub.f32 %v1643, %v1675
  %v1708 = vsub.f32 %v1644, %v1676
  %v1709 = vsub.f32 %v1645, %v1677
  %v1710 = vsub.f32 %v1324, %v1454
  %v1711 = vsub.f32 %v1325, %v1455
  %v1712 = vsub.f32 %v1326, %v1456
  %v1713 = vsub.f32 %v1327, %v1457
  %v1714 = vsub.f32 %v1328, %v1458
  %v1715 = vsub.f32 %v1329, %v1459
  %v1716 = vsub.f32 %v1330, %v1460
  %v1717 = vsub.f32 %v1331, %v1461
  %v1718 = vsub.f32 %v1332, %v1462
  %v1719 = vsub.f32 %v1333, %v1463
  %v1720 = vsub.f32 %v1334, %v1464
  %v1721 = vsub.f32 %v1335, %v1465
  %v1722 = vsub.f32 %v1336, %v1466
  %v1723 = vsub.f32 %v1337, %v1467
  %v1724 = vsub.f32 %v1338, %v1468
  %v1725 = vsub.f32 %v1339, %v1469
  %v1726 = vsub.f32 %v1340, %v1470
  %v1727 = vsub.f32 %v1341, %v1471
  %v1728 = vsub.f32 %v1342, %v1472
  %v1729 = vsub.f32 %v1343, %v1473
  %v1730 = vsub.f32 %v1344, %v1474
  %v1731 = vsub.f32 %v1345, %v1475
  %v1732 = vsub.f32 %v1346, %v1476
  %v1733 = vsub.f32 %v1347, %v1477
  %v1734 = vsub.f32 %v1348, %v1478
  %v1735 = vsub.f32 %v1349, %v1479
  %v1736 = vsub.f32 %v1350, %v1480
  %v1737 = vsub.f32 %v1351, %v1481
  %v1738 = vsub.f32 %v1352, %v1482
  %v1739 = vsub.f32 %v1353, %v1483
  %v1740 = vsub.f32 %v1354, %v1484
  %v1741 = vsub.f32 %v1355, %v1485
  %v1742 = vadd.f32 %v1678, 1e-05
  %v1743 = vadd.f32 %v1679, 1e-05
  %v1744 = vadd.f32 %v1680, 1e-05
  %v1745 = vadd.f32 %v1681, 1e-05
  %v1746 = vadd.f32 %v1682, 1e-05
  %v1747 = vadd.f32 %v1683, 1e-05
  %v1748 = vadd.f32 %v1684, 1e-05
  %v1749 = vadd.f32 %v1685, 1e-05
  %v1750 = vadd.f32 %v1686, 1e-05
  %v1751 = vadd.f32 %v1687, 1e-05
  %v1752 = vadd.f32 %v1688, 1e-05
  %v1753 = vadd.f32 %v1689, 1e-05
  %v1754 = vadd.f32 %v1690, 1e-05
  %v1755 = vadd.f32 %v1691, 1e-05
  %v1756 = vadd.f32 %v1692, 1e-05
  %v1757 = vadd.f32 %v1693, 1e-05
  %v1758 = vadd.f32 %v1694, 1e-05
  %v1759 = vadd.f32 %v1695, 1e-05
  %v1760 = vadd.f32 %v1696, 1e-05
  %v1761 = vadd.f32 %v1697, 1e-05
  %v1762 = vadd.f32 %v1698, 1e-05
  %v1763 = vadd.f32 %v1699, 1e-05
  %v1764 = vadd.f32 %v1700, 1e-05
  %v1765 = vadd.f32 %v1701, 1e-05
  %v1766 = vadd.f32 %v1702, 1e-05
  %v1767 = vadd.f32 %v1703, 1e-05
  %v1768 = vadd.f32 %v1704, 1e-05
  %v1769 = vadd.f32 %v1705, 1e-05
  %v1770 = vadd.f32 %v1706, 1e-05
  %v1771 = vadd.f32 %v1707, 1e-05
  %v1772 = vadd.f32 %v1708, 1e-05
  %v1773 = vadd.f32 %v1709, 1e-05
  %v1774 = vrsqrt.pop %v1742
  %v1775 = vrsqrt.pop %v1743
  %v1776 = vrsqrt.pop %v1744
  %v1777 = vrsqrt.pop %v1745
  %v1778 = vrsqrt.pop %v1746
  %v1779 = vrsqrt.pop %v1747
  %v1780 = vrsqrt.pop %v1748
  %v1781 = vrsqrt.pop %v1749
  %v1782 = vrsqrt.pop %v1750
  %v1783 = vrsqrt.pop %v1751
  %v1784 = vrsqrt.pop %v1752
  %v1785 = vrsqrt.pop %v1753
  %v1786 = vrsqrt.pop %v1754
  %v1787 = vrsqrt.pop %v1755
  %v1788 = vrsqrt.pop %v1756
  %v1789 = vrsqrt.pop %v1757
  %v1790 = vrsqrt.pop %v1758
  %v1791 = vrsqrt.pop %v1759
  %v1792 = vrsqrt.pop %v1760
  %v1793 = vrsqrt.pop %v1761
  %v1794 = vrsqrt.pop %v1762
  %v1795 = vrsqrt.pop %v1763
  %v1796 = vrsqrt.pop %v1764
  %v1797 = vrsqrt.pop %v1765
  %v1798 = vrsqrt.pop %v1766
  %v1799 = vrsqrt.pop %v1767
  %v1800 = vrsqrt.pop %v1768
  %v1801 = vrsqrt.pop %v1769
  %v1802 = vrsqrt.pop %v1770
  %v1803 = vrsqrt.pop %v1771
  %v1804 = vrsqrt.pop %v1772
  %v1805 = vrsqrt.pop %v1773
  %v1806 = vmul.f32 %v1710, %v1774
  %v1807 = vmul.f32 %v1711, %v1775
  %v1808 = vmul.f32 %v1712, %v1776
  %v1809 = vmul.f32 %v1713, %v1777
  %v1810 = vmul.f32 %v1714, %v1778
  %v1811 = vmul.f32 %v1715, %v1779
  %v1812 = vmul.f32 %v1716, %v1780
  %v1813 = vmul.f32 %v1717, %v1781
  %v1814 = vmul.f32 %v1718, %v1782
  %v1815 = vmul.f32 %v1719, %v1783
  %v1816 = vmul.f32 %v1720, %v1784
  %v1817 = vmul.f32 %v1721, %v1785
  %v1818 = vmul.f32 %v1722, %v1786
  %v1819 = vmul.f32 %v1723, %v1787
  %v1820 = vmul.f32 %v1724, %v1788
  %v1821 = vmul.f32 %v1725, %v1789
  %v1822 = vmul.f32 %v1726, %v1790
  %v1823 = vmul.f32 %v1727, %v1791
  %v1824 = vmul.f32 %v1728, %v1792
  %v1825 = vmul.f32 %v1729, %v1793
  %v1826 = vmul.f32 %v1730, %v1794
  %v1827 = vmul.f32 %v1731, %v1795
  %v1828 = vmul.f32 %v1732, %v1796
  %v1829 = vmul.f32 %v1733, %v1797
  %v1830 = vmul.f32 %v1734, %v1798
  %v1831 = vmul.f32 %v1735, %v1799
  %v1832 = vmul.f32 %v1736, %v1800
  %v1833 = vmul.f32 %v1737, %v1801
  %v1834 = vmul.f32 %v1738, %v1802
  %v1835 = vmul.f32 %v1739, %v1803
  %v1836 = vmul.f32 %v1740, %v1804
  %v1837 = vmul.f32 %v1741, %v1805
  %v1838 = vld [vmem:[%s4] sm:$0x1]
  %v1840 = vlaneseq
  %v1841 = vshrl.u32 %v1840, 7
  %v1842 = vsub.s32 0, %v1841
  %v1843 = vrot.slane %v1838, %v1842
  %v1845 = vmul.f32 %v1806, %v1843
  %v1846 = vmul.f32 %v1807, %v1843
  %v1847 = vmul.f32 %v1808, %v1843
  %v1848 = vmul.f32 %v1809, %v1843
  %v1849 = vmul.f32 %v1810, %v1843
  %v1850 = vmul.f32 %v1811, %v1843
  %v1851 = vmul.f32 %v1812, %v1843
  %v1852 = vmul.f32 %v1813, %v1843
  %v1853 = vmul.f32 %v1814, %v1843
  %v1854 = vmul.f32 %v1815, %v1843
  %v1855 = vmul.f32 %v1816, %v1843
  %v1856 = vmul.f32 %v1817, %v1843
  %v1857 = vmul.f32 %v1818, %v1843
  %v1858 = vmul.f32 %v1819, %v1843
  %v1859 = vmul.f32 %v1820, %v1843
  %v1860 = vmul.f32 %v1821, %v1843
  %v1861 = vmul.f32 %v1822, %v1843
  %v1862 = vmul.f32 %v1823, %v1843
  %v1863 = vmul.f32 %v1824, %v1843
  %v1864 = vmul.f32 %v1825, %v1843
  %v1865 = vmul.f32 %v1826, %v1843
  %v1866 = vmul.f32 %v1827, %v1843
  %v1867 = vmul.f32 %v1828, %v1843
  %v1868 = vmul.f32 %v1829, %v1843
  %v1869 = vmul.f32 %v1830, %v1843
  %v1870 = vmul.f32 %v1831, %v1843
  %v1871 = vmul.f32 %v1832, %v1843
  %v1872 = vmul.f32 %v1833, %v1843
  %v1873 = vmul.f32 %v1834, %v1843
  %v1874 = vmul.f32 %v1835, %v1843
  %v1875 = vmul.f32 %v1836, %v1843
  %v1876 = vmul.f32 %v1837, %v1843
  %v1877 = vld [vmem:[%s5] sm:$0x1]
  %v1879 = vlaneseq
  %v1880 = vshrl.u32 %v1879, 7
  %v1881 = vsub.s32 0, %v1880
  %v1882 = vrot.slane %v1877, %v1881
  %v1884 = vadd.f32 %v1845, %v1882
  %v1885 = vadd.f32 %v1846, %v1882
  %v1886 = vadd.f32 %v1847, %v1882
  %v1887 = vadd.f32 %v1848, %v1882
  %v1888 = vadd.f32 %v1849, %v1882
  %v1889 = vadd.f32 %v1850, %v1882
  %v1890 = vadd.f32 %v1851, %v1882
  %v1891 = vadd.f32 %v1852, %v1882
  %v1892 = vadd.f32 %v1853, %v1882
  %v1893 = vadd.f32 %v1854, %v1882
  %v1894 = vadd.f32 %v1855, %v1882
  %v1895 = vadd.f32 %v1856, %v1882
  %v1896 = vadd.f32 %v1857, %v1882
  %v1897 = vadd.f32 %v1858, %v1882
  %v1898 = vadd.f32 %v1859, %v1882
  %v1899 = vadd.f32 %v1860, %v1882
  %v1900 = vadd.f32 %v1861, %v1882
  %v1901 = vadd.f32 %v1862, %v1882
  %v1902 = vadd.f32 %v1863, %v1882
  %v1903 = vadd.f32 %v1864, %v1882
  %v1904 = vadd.f32 %v1865, %v1882
  %v1905 = vadd.f32 %v1866, %v1882
  %v1906 = vadd.f32 %v1867, %v1882
  %v1907 = vadd.f32 %v1868, %v1882
  %v1908 = vadd.f32 %v1869, %v1882
  %v1909 = vadd.f32 %v1870, %v1882
  %v1910 = vadd.f32 %v1871, %v1882
  %v1911 = vadd.f32 %v1872, %v1882
  %v1912 = vadd.f32 %v1873, %v1882
  %v1913 = vadd.f32 %v1874, %v1882
  %v1914 = vadd.f32 %v1875, %v1882
  %v1915 = vadd.f32 %v1876, %v1882
  %s1916 = scalar_lea.vmem %s1, 16
  %v1917 = vld [vmem:[%s1916] sm:$0xff]
  %v1918 = vld [vmem:[%s1916 + $0x8] sm:$0xff]
  %v1920 = vsel %vm78, %v1917, 0
  %v1923 = vsel %vm78, %v1918, 0
  %1925 = vmatprep.subr.mxu0 0.0
  %1926 = vmatpush1.msra.mxu0 %v1884
  %1927 = vmatprep.subr.mxu0 0.0
  %1928 = vmatpush1.msra.mxu0 %v1885
  %1929 = vmatprep.subr.mxu0 0.0
  %1930 = vmatpush1.msra.mxu0 0.0
  %1931 = vmatprep.subr.mxu0 0.0
  %1932 = vmatpush1.msra.mxu0 0.0
  %1933 = vmatprep.subr.mxu0 0.0
  %1934 = vmatpush1.msra.mxu0 0.0
  %1935 = vmatprep.subr.mxu0 0.0
  %1936 = vmatpush1.msra.mxu0 0.0
  %1937 = vmatprep.subr.mxu0 0.0
  %1938 = vmatpush1.msra.mxu0 0.0
  %1939 = vmatprep.subr.mxu0 0.0
  %1940 = vmatpush1.msra.mxu0 0.0
  %1941 = vmatprep.subr.mxu0 0.0
  %1942 = vmatpush1.msra.mxu0 0.0
  %1943 = vmatprep.subr.mxu0 0.0
  %1944 = vmatpush1.msra.mxu0 0.0
  %1945 = vmatprep.subr.mxu0 0.0
  %1946 = vmatpush1.msra.mxu0 0.0
  %1947 = vmatprep.subr.mxu0 0.0
  %1948 = vmatpush1.msra.mxu0 0.0
  %1949 = vmatprep.subr.mxu0 0.0
  %1950 = vmatpush1.msra.mxu0 0.0
  %1951 = vmatprep.subr.mxu0 0.0
  %1952 = vmatpush1.msra.mxu0 0.0
  %1953 = vmatprep.subr.mxu0 0.0
  %1954 = vmatpush1.msra.mxu0 0.0
  %1955 = vmatprep.subr.mxu0 0.0
  %1956 = vmatpush1.msra.mxu0 0.0
  %1957 = vmatprep.subr.mxu0 0.0
  %1958 = vmatpush1.msra.mxu0 0.0
  %1959 = vmatprep.subr.mxu0 0.0
  %1960 = vmatpush1.msra.mxu0 0.0
  %1961 = vmatprep.subr.mxu0 0.0
  %1962 = vmatpush1.msra.mxu0 0.0
  %1963 = vmatprep.subr.mxu0 0.0
  %1964 = vmatpush1.msra.mxu0 0.0
  %1965 = vmatprep.subr.mxu0 0.0
  %1966 = vmatpush1.msra.mxu0 0.0
  %1967 = vmatprep.subr.mxu0 0.0
  %1968 = vmatpush1.msra.mxu0 0.0
  %1969 = vmatprep.subr.mxu0 0.0
  %1970 = vmatpush1.msra.mxu0 0.0
  %1971 = vmatprep.subr.mxu0 0.0
  %1972 = vmatpush1.msra.mxu0 0.0
  %1973 = vmatprep.subr.mxu0 0.0
  %1974 = vmatpush1.msra.mxu0 0.0
  %1975 = vmatprep.subr.mxu0 0.0
  %1976 = vmatpush1.msra.mxu0 0.0
  %1977 = vmatprep.subr.mxu0 0.0
  %1978 = vmatpush1.msra.mxu0 0.0
  %1979 = vmatprep.subr.mxu0 0.0
  %1980 = vmatpush1.msra.mxu0 0.0
  %1981 = vmatprep.subr.mxu0 0.0
  %1982 = vmatpush1.msra.mxu0 0.0
  %1983 = vmatprep.subr.mxu0 0.0
  %1984 = vmatpush1.msra.mxu0 0.0
  %1985 = vmatprep.subr.mxu0 0.0
  %1986 = vmatpush1.msra.mxu0 0.0
  %1987 = vmatprep.subr.mxu0 0.0
  %1988 = vmatpush1.msra.mxu0 0.0
  %1989 = vmatprep.mubr.f32.mxu0 0.0
  %1990 = vmatmul.mubr.f32.gmra.mrb[0].mxu0 %v1920
  %v1991 = vpop.f32.mrb[0].mxu0
  %v1992 = vadd.f32 0.0, %v1991
  %v1993 = vpop.f32.mrb[0].mxu0
  %1994 = vmatprep.mubr.f32.mxu0 0.0
  %1995 = vmatmul.mubr.f32.gmra.mrb[0].mxu0 %v1923
  %v1996 = vpop.f32.mrb[0].mxu0
  %v1997 = vadd.f32 0.0, %v1996
  %v1998 = vpop.f32.mrb[0].mxu0
  %1999 = vdwg.mxu0
  %2000 = vmatprep.subr.mxu0 0.0
  %2001 = vmatpush1.msra.mxu0 %v1886
  %2002 = vmatprep.subr.mxu0 0.0
  %2003 = vmatpush1.msra.mxu0 %v1887
  %2004 = vmatprep.subr.mxu0 0.0
  %2005 = vmatpush1.msra.mxu0 0.0
  %2006 = vmatprep.subr.mxu0 0.0
  %2007 = vmatpush1.msra.mxu0 0.0
  %2008 = vmatprep.subr.mxu0 0.0
  %2009 = vmatpush1.msra.mxu0 0.0
  %2010 = vmatprep.subr.mxu0 0.0
  %2011 = vmatpush1.msra.mxu0 0.0
  %2012 = vmatprep.subr.mxu0 0.0
  %2013 = vmatpush1.msra.mxu0 0.0
  %2014 = vmatprep.subr.mxu0 0.0
  %2015 = vmatpush1.msra.mxu0 0.0
  %2016 = vmatprep.subr.mxu0 0.0
  %2017 = vmatpush1.msra.mxu0 0.0
  %2018 = vmatprep.subr.mxu0 0.0
  %2019 = vmatpush1.msra.mxu0 0.0
  %2020 = vmatprep.subr.mxu0 0.0
  %2021 = vmatpush1.msra.mxu0 0.0
  %2022 = vmatprep.subr.mxu0 0.0
  %2023 = vmatpush1.msra.mxu0 0.0
  %2024 = vmatprep.subr.mxu0 0.0
  %2025 = vmatpush1.msra.mxu0 0.0
  %2026 = vmatprep.subr.mxu0 0.0
  %2027 = vmatpush1.msra.mxu0 0.0
  %2028 = vmatprep.subr.mxu0 0.0
  %2029 = vmatpush1.msra.mxu0 0.0
  %2030 = vmatprep.subr.mxu0 0.0
  %2031 = vmatpush1.msra.mxu0 0.0
  %2032 = vmatprep.subr.mxu0 0.0
  %2033 = vmatpush1.msra.mxu0 0.0
  %2034 = vmatprep.subr.mxu0 0.0
  %2035 = vmatpush1.msra.mxu0 0.0
  %2036 = vmatprep.subr.mxu0 0.0
  %2037 = vmatpush1.msra.mxu0 0.0
  %2038 = vmatprep.subr.mxu0 0.0
  %2039 = vmatpush1.msra.mxu0 0.0
  %2040 = vmatprep.subr.mxu0 0.0
  %2041 = vmatpush1.msra.mxu0 0.0
  %2042 = vmatprep.subr.mxu0 0.0
  %2043 = vmatpush1.msra.mxu0 0.0
  %2044 = vmatprep.subr.mxu0 0.0
  %2045 = vmatpush1.msra.mxu0 0.0
  %2046 = vmatprep.subr.mxu0 0.0
  %2047 = vmatpush1.msra.mxu0 0.0
  %2048 = vmatprep.subr.mxu0 0.0
  %2049 = vmatpush1.msra.mxu0 0.0
  %2050 = vmatprep.subr.mxu0 0.0
  %2051 = vmatpush1.msra.mxu0 0.0
  %2052 = vmatprep.subr.mxu0 0.0
  %2053 = vmatpush1.msra.mxu0 0.0
  %2054 = vmatprep.subr.mxu0 0.0
  %2055 = vmatpush1.msra.mxu0 0.0
  %2056 = vmatprep.subr.mxu0 0.0
  %2057 = vmatpush1.msra.mxu0 0.0
  %2058 = vmatprep.subr.mxu0 0.0
  %2059 = vmatpush1.msra.mxu0 0.0
  %2060 = vmatprep.subr.mxu0 0.0
  %2061 = vmatpush1.msra.mxu0 0.0
  %2062 = vmatprep.subr.mxu0 0.0
  %2063 = vmatpush1.msra.mxu0 0.0
  %2064 = vmatprep.mubr.f32.mxu0 0.0
  %2065 = vmatmul.mubr.f32.gmra.mrb[0].mxu0 %v1920
  %v2066 = vpop.f32.mrb[0].mxu0
  %v2067 = vadd.f32 0.0, %v2066
  %v2068 = vpop.f32.mrb[0].mxu0
  %2069 = vmatprep.mubr.f32.mxu0 0.0
  %2070 = vmatmul.mubr.f32.gmra.mrb[0].mxu0 %v1923
  %v2071 = vpop.f32.mrb[0].mxu0
  %v2072 = vadd.f32 0.0, %v2071
  %v2073 = vpop.f32.mrb[0].mxu0
  %2074 = vdwg.mxu0
  %2075 = vmatprep.subr.mxu0 0.0
  %2076 = vmatpush1.msra.mxu0 %v1888
  %2077 = vmatprep.subr.mxu0 0.0
  %2078 = vmatpush1.msra.mxu0 %v1889
  %2079 = vmatprep.subr.mxu0 0.0
  %2080 = vmatpush1.msra.mxu0 0.0
  %2081 = vmatprep.subr.mxu0 0.0
  %2082 = vmatpush1.msra.mxu0 0.0
  %2083 = vmatprep.subr.mxu0 0.0
  %2084 = vmatpush1.msra.mxu0 0.0
  %2085 = vmatprep.subr.mxu0 0.0
  %2086 = vmatpush1.msra.mxu0 0.0
  %2087 = vmatprep.subr.mxu0 0.0
  %2088 = vmatpush1.msra.mxu0 0.0
  %2089 = vmatprep.subr.mxu0 0.0
  %2090 = vmatpush1.msra.mxu0 0.0
  %2091 = vmatprep.subr.mxu0 0.0
  %2092 = vmatpush1.msra.mxu0 0.0
  %2093 = vmatprep.subr.mxu0 0.0
  %2094 = vmatpush1.msra.mxu0 0.0
  %2095 = vmatprep.subr.mxu0 0.0
  %2096 = vmatpush1.msra.mxu0 0.0
  %2097 = vmatprep.subr.mxu0 0.0
  %2098 = vmatpush1.msra.mxu0 0.0
  %2099 = vmatprep.subr.mxu0 0.0
  %2100 = vmatpush1.msra.mxu0 0.0
  %2101 = vmatprep.subr.mxu0 0.0
  %2102 = vmatpush1.msra.mxu0 0.0
  %2103 = vmatprep.subr.mxu0 0.0
  %2104 = vmatpush1.msra.mxu0 0.0
  %2105 = vmatprep.subr.mxu0 0.0
  %2106 = vmatpush1.msra.mxu0 0.0
  %2107 = vmatprep.subr.mxu0 0.0
  %2108 = vmatpush1.msra.mxu0 0.0
  %2109 = vmatprep.subr.mxu0 0.0
  %2110 = vmatpush1.msra.mxu0 0.0
  %2111 = vmatprep.subr.mxu0 0.0
  %2112 = vmatpush1.msra.mxu0 0.0
  %2113 = vmatprep.subr.mxu0 0.0
  %2114 = vmatpush1.msra.mxu0 0.0
  %2115 = vmatprep.subr.mxu0 0.0
  %2116 = vmatpush1.msra.mxu0 0.0
  %2117 = vmatprep.subr.mxu0 0.0
  %2118 = vmatpush1.msra.mxu0 0.0
  %2119 = vmatprep.subr.mxu0 0.0
  %2120 = vmatpush1.msra.mxu0 0.0
  %2121 = vmatprep.subr.mxu0 0.0
  %2122 = vmatpush1.msra.mxu0 0.0
  %2123 = vmatprep.subr.mxu0 0.0
  %2124 = vmatpush1.msra.mxu0 0.0
  %2125 = vmatprep.subr.mxu0 0.0
  %2126 = vmatpush1.msra.mxu0 0.0
  %2127 = vmatprep.subr.mxu0 0.0
  %2128 = vmatpush1.msra.mxu0 0.0
  %2129 = vmatprep.subr.mxu0 0.0
  %2130 = vmatpush1.msra.mxu0 0.0
  %2131 = vmatprep.subr.mxu0 0.0
  %2132 = vmatpush1.msra.mxu0 0.0
  %2133 = vmatprep.subr.mxu0 0.0
  %2134 = vmatpush1.msra.mxu0 0.0
  %2135 = vmatprep.subr.mxu0 0.0
  %2136 = vmatpush1.msra.mxu0 0.0
  %2137 = vmatprep.subr.mxu0 0.0
  %2138 = vmatpush1.msra.mxu0 0.0
  %2139 = vmatprep.mubr.f32.mxu0 0.0
  %2140 = vmatmul.mubr.f32.gmra.mrb[0].mxu0 %v1920
  %v2141 = vpop.f32.mrb[0].mxu0
  %v2142 = vadd.f32 0.0, %v2141
  %v2143 = vpop.f32.mrb[0].mxu0
  %2144 = vmatprep.mubr.f32.mxu0 0.0
  %2145 = vmatmul.mubr.f32.gmra.mrb[0].mxu0 %v1923
  %v2146 = vpop.f32.mrb[0].mxu0
  %v2147 = vadd.f32 0.0, %v2146
  %v2148 = vpop.f32.mrb[0].mxu0
  %2149 = vdwg.mxu0
  %2150 = vmatprep.subr.mxu0 0.0
  %2151 = vmatpush1.msra.mxu0 %v1890
  %2152 = vmatprep.subr.mxu0 0.0
  %2153 = vmatpush1.msra.mxu0 %v1891
  %2154 = vmatprep.subr.mxu0 0.0
  %2155 = vmatpush1.msra.mxu0 0.0
  %2156 = vmatprep.subr.mxu0 0.0
  %2157 = vmatpush1.msra.mxu0 0.0
  %2158 = vmatprep.subr.mxu0 0.0
  %2159 = vmatpush1.msra.mxu0 0.0
  %2160 = vmatprep.subr.mxu0 0.0
  %2161 = vmatpush1.msra.mxu0 0.0
  %2162 = vmatprep.subr.mxu0 0.0
  %2163 = vmatpush1.msra.mxu0 0.0
  %2164 = vmatprep.subr.mxu0 0.0
  %2165 = vmatpush1.msra.mxu0 0.0
  %2166 = vmatprep.subr.mxu0 0.0
  %2167 = vmatpush1.msra.mxu0 0.0
  %2168 = vmatprep.subr.mxu0 0.0
  %2169 = vmatpush1.msra.mxu0 0.0
  %2170 = vmatprep.subr.mxu0 0.0
  %2171 = vmatpush1.msra.mxu0 0.0
  %2172 = vmatprep.subr.mxu0 0.0
  %2173 = vmatpush1.msra.mxu0 0.0
  %2174 = vmatprep.subr.mxu0 0.0
  %2175 = vmatpush1.msra.mxu0 0.0
  %2176 = vmatprep.subr.mxu0 0.0
  %2177 = vmatpush1.msra.mxu0 0.0
  %2178 = vmatprep.subr.mxu0 0.0
  %2179 = vmatpush1.msra.mxu0 0.0
  %2180 = vmatprep.subr.mxu0 0.0
  %2181 = vmatpush1.msra.mxu0 0.0
  %2182 = vmatprep.subr.mxu0 0.0
  %2183 = vmatpush1.msra.mxu0 0.0
  %2184 = vmatprep.subr.mxu0 0.0
  %2185 = vmatpush1.msra.mxu0 0.0
  %2186 = vmatprep.subr.mxu0 0.0
  %2187 = vmatpush1.msra.mxu0 0.0
  %2188 = vmatprep.subr.mxu0 0.0
  %2189 = vmatpush1.msra.mxu0 0.0
  %2190 = vmatprep.subr.mxu0 0.0
  %2191 = vmatpush1.msra.mxu0 0.0
  %2192 = vmatprep.subr.mxu0 0.0
  %2193 = vmatpush1.msra.mxu0 0.0
  %2194 = vmatprep.subr.mxu0 0.0
  %2195 = vmatpush1.msra.mxu0 0.0
  %2196 = vmatprep.subr.mxu0 0.0
  %2197 = vmatpush1.msra.mxu0 0.0
  %2198 = vmatprep.subr.mxu0 0.0
  %2199 = vmatpush1.msra.mxu0 0.0
  %2200 = vmatprep.subr.mxu0 0.0
  %2201 = vmatpush1.msra.mxu0 0.0
  %2202 = vmatprep.subr.mxu0 0.0
  %2203 = vmatpush1.msra.mxu0 0.0
  %2204 = vmatprep.subr.mxu0 0.0
  %2205 = vmatpush1.msra.mxu0 0.0
  %2206 = vmatprep.subr.mxu0 0.0
  %2207 = vmatpush1.msra.mxu0 0.0
  %2208 = vmatprep.subr.mxu0 0.0
  %2209 = vmatpush1.msra.mxu0 0.0
  %2210 = vmatprep.subr.mxu0 0.0
  %2211 = vmatpush1.msra.mxu0 0.0
  %2212 = vmatprep.subr.mxu0 0.0
  %2213 = vmatpush1.msra.mxu0 0.0
  %2214 = vmatprep.mubr.f32.mxu0 0.0
  %2215 = vmatmul.mubr.f32.gmra.mrb[0].mxu0 %v1920
  %v2216 = vpop.f32.mrb[0].mxu0
  %v2217 = vadd.f32 0.0, %v2216
  %v2218 = vpop.f32.mrb[0].mxu0
  %2219 = vmatprep.mubr.f32.mxu0 0.0
  %2220 = vmatmul.mubr.f32.gmra.mrb[0].mxu0 %v1923
  %v2221 = vpop.f32.mrb[0].mxu0
  %v2222 = vadd.f32 0.0, %v2221
  %v2223 = vpop.f32.mrb[0].mxu0
  %2224 = vdwg.mxu0
  %2225 = vmatprep.subr.mxu0 0.0
  %2226 = vmatpush1.msra.mxu0 %v1892
  %2227 = vmatprep.subr.mxu0 0.0
  %2228 = vmatpush1.msra.mxu0 %v1893
  %2229 = vmatprep.subr.mxu0 0.0
  %2230 = vmatpush1.msra.mxu0 0.0
  %2231 = vmatprep.subr.mxu0 0.0
  %2232 = vmatpush1.msra.mxu0 0.0
  %2233 = vmatprep.subr.mxu0 0.0
  %2234 = vmatpush1.msra.mxu0 0.0
  %2235 = vmatprep.subr.mxu0 0.0
  %2236 = vmatpush1.msra.mxu0 0.0
  %2237 = vmatprep.subr.mxu0 0.0
  %2238 = vmatpush1.msra.mxu0 0.0
  %2239 = vmatprep.subr.mxu0 0.0
  %2240 = vmatpush1.msra.mxu0 0.0
  %2241 = vmatprep.subr.mxu0 0.0
  %2242 = vmatpush1.msra.mxu0 0.0
  %2243 = vmatprep.subr.mxu0 0.0
  %2244 = vmatpush1.msra.mxu0 0.0
  %2245 = vmatprep.subr.mxu0 0.0
  %2246 = vmatpush1.msra.mxu0 0.0
  %2247 = vmatprep.subr.mxu0 0.0
  %2248 = vmatpush1.msra.mxu0 0.0
  %2249 = vmatprep.subr.mxu0 0.0
  %2250 = vmatpush1.msra.mxu0 0.0
  %2251 = vmatprep.subr.mxu0 0.0
  %2252 = vmatpush1.msra.mxu0 0.0
  %2253 = vmatprep.subr.mxu0 0.0
  %2254 = vmatpush1.msra.mxu0 0.0
  %2255 = vmatprep.subr.mxu0 0.0
  %2256 = vmatpush1.msra.mxu0 0.0
  %2257 = vmatprep.subr.mxu0 0.0
  %2258 = vmatpush1.msra.mxu0 0.0
  %2259 = vmatprep.subr.mxu0 0.0
  %2260 = vmatpush1.msra.mxu0 0.0
  %2261 = vmatprep.subr.mxu0 0.0
  %2262 = vmatpush1.msra.mxu0 0.0
  %2263 = vmatprep.subr.mxu0 0.0
  %2264 = vmatpush1.msra.mxu0 0.0
  %2265 = vmatprep.subr.mxu0 0.0
  %2266 = vmatpush1.msra.mxu0 0.0
  %2267 = vmatprep.subr.mxu0 0.0
  %2268 = vmatpush1.msra.mxu0 0.0
  %2269 = vmatprep.subr.mxu0 0.0
  %2270 = vmatpush1.msra.mxu0 0.0
  %2271 = vmatprep.subr.mxu0 0.0
  %2272 = vmatpush1.msra.mxu0 0.0
  %2273 = vmatprep.subr.mxu0 0.0
  %2274 = vmatpush1.msra.mxu0 0.0
  %2275 = vmatprep.subr.mxu0 0.0
  %2276 = vmatpush1.msra.mxu0 0.0
  %2277 = vmatprep.subr.mxu0 0.0
  %2278 = vmatpush1.msra.mxu0 0.0
  %2279 = vmatprep.subr.mxu0 0.0
  %2280 = vmatpush1.msra.mxu0 0.0
  %2281 = vmatprep.subr.mxu0 0.0
  %2282 = vmatpush1.msra.mxu0 0.0
  %2283 = vmatprep.subr.mxu0 0.0
  %2284 = vmatpush1.msra.mxu0 0.0
  %2285 = vmatprep.subr.mxu0 0.0
  %2286 = vmatpush1.msra.mxu0 0.0
  %2287 = vmatprep.subr.mxu0 0.0
  %2288 = vmatpush1.msra.mxu0 0.0
  %2289 = vmatprep.mubr.f32.mxu0 0.0
  %2290 = vmatmul.mubr.f32.gmra.mrb[0].mxu0 %v1920
  %v2291 = vpop.f32.mrb[0].mxu0
  %v2292 = vadd.f32 0.0, %v2291
  %v2293 = vpop.f32.mrb[0].mxu0
  %2294 = vmatprep.mubr.f32.mxu0 0.0
  %2295 = vmatmul.mubr.f32.gmra.mrb[0].mxu0 %v1923
  %v2296 = vpop.f32.mrb[0].mxu0
  %v2297 = vadd.f32 0.0, %v2296
  %v2298 = vpop.f32.mrb[0].mxu0
  %2299 = vdwg.mxu0
  %2300 = vmatprep.subr.mxu0 0.0
  %2301 = vmatpush1.msra.mxu0 %v1894
  %2302 = vmatprep.subr.mxu0 0.0
  %2303 = vmatpush1.msra.mxu0 %v1895
  %2304 = vmatprep.subr.mxu0 0.0
  %2305 = vmatpush1.msra.mxu0 0.0
  %2306 = vmatprep.subr.mxu0 0.0
  %2307 = vmatpush1.msra.mxu0 0.0
  %2308 = vmatprep.subr.mxu0 0.0
  %2309 = vmatpush1.msra.mxu0 0.0
  %2310 = vmatprep.subr.mxu0 0.0
  %2311 = vmatpush1.msra.mxu0 0.0
  %2312 = vmatprep.subr.mxu0 0.0
  %2313 = vmatpush1.msra.mxu0 0.0
  %2314 = vmatprep.subr.mxu0 0.0
  %2315 = vmatpush1.msra.mxu0 0.0
  %2316 = vmatprep.subr.mxu0 0.0
  %2317 = vmatpush1.msra.mxu0 0.0
  %2318 = vmatprep.subr.mxu0 0.0
  %2319 = vmatpush1.msra.mxu0 0.0
  %2320 = vmatprep.subr.mxu0 0.0
  %2321 = vmatpush1.msra.mxu0 0.0
  %2322 = vmatprep.subr.mxu0 0.0
  %2323 = vmatpush1.msra.mxu0 0.0
  %2324 = vmatprep.subr.mxu0 0.0
  %2325 = vmatpush1.msra.mxu0 0.0
  %2326 = vmatprep.subr.mxu0 0.0
  %2327 = vmatpush1.msra.mxu0 0.0
  %2328 = vmatprep.subr.mxu0 0.0
  %2329 = vmatpush1.msra.mxu0 0.0
  %2330 = vmatprep.subr.mxu0 0.0
  %2331 = vmatpush1.msra.mxu0 0.0
  %2332 = vmatprep.subr.mxu0 0.0
  %2333 = vmatpush1.msra.mxu0 0.0
  %2334 = vmatprep.subr.mxu0 0.0
  %2335 = vmatpush1.msra.mxu0 0.0
  %2336 = vmatprep.subr.mxu0 0.0
  %2337 = vmatpush1.msra.mxu0 0.0
  %2338 = vmatprep.subr.mxu0 0.0
  %2339 = vmatpush1.msra.mxu0 0.0
  %2340 = vmatprep.subr.mxu0 0.0
  %2341 = vmatpush1.msra.mxu0 0.0
  %2342 = vmatprep.subr.mxu0 0.0
  %2343 = vmatpush1.msra.mxu0 0.0
  %2344 = vmatprep.subr.mxu0 0.0
  %2345 = vmatpush1.msra.mxu0 0.0
  %2346 = vmatprep.subr.mxu0 0.0
  %2347 = vmatpush1.msra.mxu0 0.0
  %2348 = vmatprep.subr.mxu0 0.0
  %2349 = vmatpush1.msra.mxu0 0.0
  %2350 = vmatprep.subr.mxu0 0.0
  %2351 = vmatpush1.msra.mxu0 0.0
  %2352 = vmatprep.subr.mxu0 0.0
  %2353 = vmatpush1.msra.mxu0 0.0
  %2354 = vmatprep.subr.mxu0 0.0
  %2355 = vmatpush1.msra.mxu0 0.0
  %2356 = vmatprep.subr.mxu0 0.0
  %2357 = vmatpush1.msra.mxu0 0.0
  %2358 = vmatprep.subr.mxu0 0.0
  %2359 = vmatpush1.msra.mxu0 0.0
  %2360 = vmatprep.subr.mxu0 0.0
  %2361 = vmatpush1.msra.mxu0 0.0
  %2362 = vmatprep.subr.mxu0 0.0
  %2363 = vmatpush1.msra.mxu0 0.0
  %2364 = vmatprep.mubr.f32.mxu0 0.0
  %2365 = vmatmul.mubr.f32.gmra.mrb[0].mxu0 %v1920
  %v2366 = vpop.f32.mrb[0].mxu0
  %v2367 = vadd.f32 0.0, %v2366
  %v2368 = vpop.f32.mrb[0].mxu0
  %2369 = vmatprep.mubr.f32.mxu0 0.0
  %2370 = vmatmul.mubr.f32.gmra.mrb[0].mxu0 %v1923
  %v2371 = vpop.f32.mrb[0].mxu0
  %v2372 = vadd.f32 0.0, %v2371
  %v2373 = vpop.f32.mrb[0].mxu0
  %2374 = vdwg.mxu0
  %2375 = vmatprep.subr.mxu0 0.0
  %2376 = vmatpush1.msra.mxu0 %v1896
  %2377 = vmatprep.subr.mxu0 0.0
  %2378 = vmatpush1.msra.mxu0 %v1897
  %2379 = vmatprep.subr.mxu0 0.0
  %2380 = vmatpush1.msra.mxu0 0.0
  %2381 = vmatprep.subr.mxu0 0.0
  %2382 = vmatpush1.msra.mxu0 0.0
  %2383 = vmatprep.subr.mxu0 0.0
  %2384 = vmatpush1.msra.mxu0 0.0
  %2385 = vmatprep.subr.mxu0 0.0
  %2386 = vmatpush1.msra.mxu0 0.0
  %2387 = vmatprep.subr.mxu0 0.0
  %2388 = vmatpush1.msra.mxu0 0.0
  %2389 = vmatprep.subr.mxu0 0.0
  %2390 = vmatpush1.msra.mxu0 0.0
  %2391 = vmatprep.subr.mxu0 0.0
  %2392 = vmatpush1.msra.mxu0 0.0
  %2393 = vmatprep.subr.mxu0 0.0
  %2394 = vmatpush1.msra.mxu0 0.0
  %2395 = vmatprep.subr.mxu0 0.0
  %2396 = vmatpush1.msra.mxu0 0.0
  %2397 = vmatprep.subr.mxu0 0.0
  %2398 = vmatpush1.msra.mxu0 0.0
  %2399 = vmatprep.subr.mxu0 0.0
  %2400 = vmatpush1.msra.mxu0 0.0
  %2401 = vmatprep.subr.mxu0 0.0
  %2402 = vmatpush1.msra.mxu0 0.0
  %2403 = vmatprep.subr.mxu0 0.0
  %2404 = vmatpush1.msra.mxu0 0.0
  %2405 = vmatprep.subr.mxu0 0.0
  %2406 = vmatpush1.msra.mxu0 0.0
  %2407 = vmatprep.subr.mxu0 0.0
  %2408 = vmatpush1.msra.mxu0 0.0
  %2409 = vmatprep.subr.mxu0 0.0
  %2410 = vmatpush1.msra.mxu0 0.0
  %2411 = vmatprep.subr.mxu0 0.0
  %2412 = vmatpush1.msra.mxu0 0.0
  %2413 = vmatprep.subr.mxu0 0.0
  %2414 = vmatpush1.msra.mxu0 0.0
  %2415 = vmatprep.subr.mxu0 0.0
  %2416 = vmatpush1.msra.mxu0 0.0
  %2417 = vmatprep.subr.mxu0 0.0
  %2418 = vmatpush1.msra.mxu0 0.0
  %2419 = vmatprep.subr.mxu0 0.0
  %2420 = vmatpush1.msra.mxu0 0.0
  %2421 = vmatprep.subr.mxu0 0.0
  %2422 = vmatpush1.msra.mxu0 0.0
  %2423 = vmatprep.subr.mxu0 0.0
  %2424 = vmatpush1.msra.mxu0 0.0
  %2425 = vmatprep.subr.mxu0 0.0
  %2426 = vmatpush1.msra.mxu0 0.0
  %2427 = vmatprep.subr.mxu0 0.0
  %2428 = vmatpush1.msra.mxu0 0.0
  %2429 = vmatprep.subr.mxu0 0.0
  %2430 = vmatpush1.msra.mxu0 0.0
  %2431 = vmatprep.subr.mxu0 0.0
  %2432 = vmatpush1.msra.mxu0 0.0
  %2433 = vmatprep.subr.mxu0 0.0
  %2434 = vmatpush1.msra.mxu0 0.0
  %2435 = vmatprep.subr.mxu0 0.0
  %2436 = vmatpush1.msra.mxu0 0.0
  %2437 = vmatprep.subr.mxu0 0.0
  %2438 = vmatpush1.msra.mxu0 0.0
  %2439 = vmatprep.mubr.f32.mxu0 0.0
  %2440 = vmatmul.mubr.f32.gmra.mrb[0].mxu0 %v1920
  %v2441 = vpop.f32.mrb[0].mxu0
  %v2442 = vadd.f32 0.0, %v2441
  %v2443 = vpop.f32.mrb[0].mxu0
  %2444 = vmatprep.mubr.f32.mxu0 0.0
  %2445 = vmatmul.mubr.f32.gmra.mrb[0].mxu0 %v1923
  %v2446 = vpop.f32.mrb[0].mxu0
  %v2447 = vadd.f32 0.0, %v2446
  %v2448 = vpop.f32.mrb[0].mxu0
  %2449 = vdwg.mxu0
  %2450 = vmatprep.subr.mxu0 0.0
  %2451 = vmatpush1.msra.mxu0 %v1898
  %2452 = vmatprep.subr.mxu0 0.0
  %2453 = vmatpush1.msra.mxu0 %v1899
  %2454 = vmatprep.subr.mxu0 0.0
  %2455 = vmatpush1.msra.mxu0 0.0
  %2456 = vmatprep.subr.mxu0 0.0
  %2457 = vmatpush1.msra.mxu0 0.0
  %2458 = vmatprep.subr.mxu0 0.0
  %2459 = vmatpush1.msra.mxu0 0.0
  %2460 = vmatprep.subr.mxu0 0.0
  %2461 = vmatpush1.msra.mxu0 0.0
  %2462 = vmatprep.subr.mxu0 0.0
  %2463 = vmatpush1.msra.mxu0 0.0
  %2464 = vmatprep.subr.mxu0 0.0
  %2465 = vmatpush1.msra.mxu0 0.0
  %2466 = vmatprep.subr.mxu0 0.0
  %2467 = vmatpush1.msra.mxu0 0.0
  %2468 = vmatprep.subr.mxu0 0.0
  %2469 = vmatpush1.msra.mxu0 0.0
  %2470 = vmatprep.subr.mxu0 0.0
  %2471 = vmatpush1.msra.mxu0 0.0
  %2472 = vmatprep.subr.mxu0 0.0
  %2473 = vmatpush1.msra.mxu0 0.0
  %2474 = vmatprep.subr.mxu0 0.0
  %2475 = vmatpush1.msra.mxu0 0.0
  %2476 = vmatprep.subr.mxu0 0.0
  %2477 = vmatpush1.msra.mxu0 0.0
  %2478 = vmatprep.subr.mxu0 0.0
  %2479 = vmatpush1.msra.mxu0 0.0
  %2480 = vmatprep.subr.mxu0 0.0
  %2481 = vmatpush1.msra.mxu0 0.0
  %2482 = vmatprep.subr.mxu0 0.0
  %2483 = vmatpush1.msra.mxu0 0.0
  %2484 = vmatprep.subr.mxu0 0.0
  %2485 = vmatpush1.msra.mxu0 0.0
  %2486 = vmatprep.subr.mxu0 0.0
  %2487 = vmatpush1.msra.mxu0 0.0
  %2488 = vmatprep.subr.mxu0 0.0
  %2489 = vmatpush1.msra.mxu0 0.0
  %2490 = vmatprep.subr.mxu0 0.0
  %2491 = vmatpush1.msra.mxu0 0.0
  %2492 = vmatprep.subr.mxu0 0.0
  %2493 = vmatpush1.msra.mxu0 0.0
  %2494 = vmatprep.subr.mxu0 0.0
  %2495 = vmatpush1.msra.mxu0 0.0
  %2496 = vmatprep.subr.mxu0 0.0
  %2497 = vmatpush1.msra.mxu0 0.0
  %2498 = vmatprep.subr.mxu0 0.0
  %2499 = vmatpush1.msra.mxu0 0.0
  %2500 = vmatprep.subr.mxu0 0.0
  %2501 = vmatpush1.msra.mxu0 0.0
  %2502 = vmatprep.subr.mxu0 0.0
  %2503 = vmatpush1.msra.mxu0 0.0
  %2504 = vmatprep.subr.mxu0 0.0
  %2505 = vmatpush1.msra.mxu0 0.0
  %2506 = vmatprep.subr.mxu0 0.0
  %2507 = vmatpush1.msra.mxu0 0.0
  %2508 = vmatprep.subr.mxu0 0.0
  %2509 = vmatpush1.msra.mxu0 0.0
  %2510 = vmatprep.subr.mxu0 0.0
  %2511 = vmatpush1.msra.mxu0 0.0
  %2512 = vmatprep.subr.mxu0 0.0
  %2513 = vmatpush1.msra.mxu0 0.0
  %2514 = vmatprep.mubr.f32.mxu0 0.0
  %2515 = vmatmul.mubr.f32.gmra.mrb[0].mxu0 %v1920
  %v2516 = vpop.f32.mrb[0].mxu0
  %v2517 = vadd.f32 0.0, %v2516
  %v2518 = vpop.f32.mrb[0].mxu0
  %2519 = vmatprep.mubr.f32.mxu0 0.0
  %2520 = vmatmul.mubr.f32.gmra.mrb[0].mxu0 %v1923
  %v2521 = vpop.f32.mrb[0].mxu0
  %v2522 = vadd.f32 0.0, %v2521
  %v2523 = vpop.f32.mrb[0].mxu0
  %2524 = vdwg.mxu0
  %2525 = vmatprep.subr.mxu0 0.0
  %2526 = vmatpush1.msra.mxu0 %v1900
  %2527 = vmatprep.subr.mxu0 0.0
  %2528 = vmatpush1.msra.mxu0 %v1901
  %2529 = vmatprep.subr.mxu0 0.0
  %2530 = vmatpush1.msra.mxu0 0.0
  %2531 = vmatprep.subr.mxu0 0.0
  %2532 = vmatpush1.msra.mxu0 0.0
  %2533 = vmatprep.subr.mxu0 0.0
  %2534 = vmatpush1.msra.mxu0 0.0
  %2535 = vmatprep.subr.mxu0 0.0
  %2536 = vmatpush1.msra.mxu0 0.0
  %2537 = vmatprep.subr.mxu0 0.0
  %2538 = vmatpush1.msra.mxu0 0.0
  %2539 = vmatprep.subr.mxu0 0.0
  %2540 = vmatpush1.msra.mxu0 0.0
  %2541 = vmatprep.subr.mxu0 0.0
  %2542 = vmatpush1.msra.mxu0 0.0
  %2543 = vmatprep.subr.mxu0 0.0
  %2544 = vmatpush1.msra.mxu0 0.0
  %2545 = vmatprep.subr.mxu0 0.0
  %2546 = vmatpush1.msra.mxu0 0.0
  %2547 = vmatprep.subr.mxu0 0.0
  %2548 = vmatpush1.msra.mxu0 0.0
  %2549 = vmatprep.subr.mxu0 0.0
  %2550 = vmatpush1.msra.mxu0 0.0
  %2551 = vmatprep.subr.mxu0 0.0
  %2552 = vmatpush1.msra.mxu0 0.0
  %2553 = vmatprep.subr.mxu0 0.0
  %2554 = vmatpush1.msra.mxu0 0.0
  %2555 = vmatprep.subr.mxu0 0.0
  %2556 = vmatpush1.msra.mxu0 0.0
  %2557 = vmatprep.subr.mxu0 0.0
  %2558 = vmatpush1.msra.mxu0 0.0
  %2559 = vmatprep.subr.mxu0 0.0
  %2560 = vmatpush1.msra.mxu0 0.0
  %2561 = vmatprep.subr.mxu0 0.0
  %2562 = vmatpush1.msra.mxu0 0.0
  %2563 = vmatprep.subr.mxu0 0.0
  %2564 = vmatpush1.msra.mxu0 0.0
  %2565 = vmatprep.subr.mxu0 0.0
  %2566 = vmatpush1.msra.mxu0 0.0
  %2567 = vmatprep.subr.mxu0 0.0
  %2568 = vmatpush1.msra.mxu0 0.0
  %2569 = vmatprep.subr.mxu0 0.0
  %2570 = vmatpush1.msra.mxu0 0.0
  %2571 = vmatprep.subr.mxu0 0.0
  %2572 = vmatpush1.msra.mxu0 0.0
  %2573 = vmatprep.subr.mxu0 0.0
  %2574 = vmatpush1.msra.mxu0 0.0
  %2575 = vmatprep.subr.mxu0 0.0
  %2576 = vmatpush1.msra.mxu0 0.0
  %2577 = vmatprep.subr.mxu0 0.0
  %2578 = vmatpush1.msra.mxu0 0.0
  %2579 = vmatprep.subr.mxu0 0.0
  %2580 = vmatpush1.msra.mxu0 0.0
  %2581 = vmatprep.subr.mxu0 0.0
  %2582 = vmatpush1.msra.mxu0 0.0
  %2583 = vmatprep.subr.mxu0 0.0
  %2584 = vmatpush1.msra.mxu0 0.0
  %2585 = vmatprep.subr.mxu0 0.0
  %2586 = vmatpush1.msra.mxu0 0.0
  %2587 = vmatprep.subr.mxu0 0.0
  %2588 = vmatpush1.msra.mxu0 0.0
  %2589 = vmatprep.mubr.f32.mxu0 0.0
  %2590 = vmatmul.mubr.f32.gmra.mrb[0].mxu0 %v1920
  %v2591 = vpop.f32.mrb[0].mxu0
  %v2592 = vadd.f32 0.0, %v2591
  %v2593 = vpop.f32.mrb[0].mxu0
  %2594 = vmatprep.mubr.f32.mxu0 0.0
  %2595 = vmatmul.mubr.f32.gmra.mrb[0].mxu0 %v1923
  %v2596 = vpop.f32.mrb[0].mxu0
  %v2597 = vadd.f32 0.0, %v2596
  %v2598 = vpop.f32.mrb[0].mxu0
  %2599 = vdwg.mxu0
  %2600 = vmatprep.subr.mxu0 0.0
  %2601 = vmatpush1.msra.mxu0 %v1902
  %2602 = vmatprep.subr.mxu0 0.0
  %2603 = vmatpush1.msra.mxu0 %v1903
  %2604 = vmatprep.subr.mxu0 0.0
  %2605 = vmatpush1.msra.mxu0 0.0
  %2606 = vmatprep.subr.mxu0 0.0
  %2607 = vmatpush1.msra.mxu0 0.0
  %2608 = vmatprep.subr.mxu0 0.0
  %2609 = vmatpush1.msra.mxu0 0.0
  %2610 = vmatprep.subr.mxu0 0.0
  %2611 = vmatpush1.msra.mxu0 0.0
  %2612 = vmatprep.subr.mxu0 0.0
  %2613 = vmatpush1.msra.mxu0 0.0
  %2614 = vmatprep.subr.mxu0 0.0
  %2615 = vmatpush1.msra.mxu0 0.0
  %2616 = vmatprep.subr.mxu0 0.0
  %2617 = vmatpush1.msra.mxu0 0.0
  %2618 = vmatprep.subr.mxu0 0.0
  %2619 = vmatpush1.msra.mxu0 0.0
  %2620 = vmatprep.subr.mxu0 0.0
  %2621 = vmatpush1.msra.mxu0 0.0
  %2622 = vmatprep.subr.mxu0 0.0
  %2623 = vmatpush1.msra.mxu0 0.0
  %2624 = vmatprep.subr.mxu0 0.0
  %2625 = vmatpush1.msra.mxu0 0.0
  %2626 = vmatprep.subr.mxu0 0.0
  %2627 = vmatpush1.msra.mxu0 0.0
  %2628 = vmatprep.subr.mxu0 0.0
  %2629 = vmatpush1.msra.mxu0 0.0
  %2630 = vmatprep.subr.mxu0 0.0
  %2631 = vmatpush1.msra.mxu0 0.0
  %2632 = vmatprep.subr.mxu0 0.0
  %2633 = vmatpush1.msra.mxu0 0.0
  %2634 = vmatprep.subr.mxu0 0.0
  %2635 = vmatpush1.msra.mxu0 0.0
  %2636 = vmatprep.subr.mxu0 0.0
  %2637 = vmatpush1.msra.mxu0 0.0
  %2638 = vmatprep.subr.mxu0 0.0
  %2639 = vmatpush1.msra.mxu0 0.0
  %2640 = vmatprep.subr.mxu0 0.0
  %2641 = vmatpush1.msra.mxu0 0.0
  %2642 = vmatprep.subr.mxu0 0.0
  %2643 = vmatpush1.msra.mxu0 0.0
  %2644 = vmatprep.subr.mxu0 0.0
  %2645 = vmatpush1.msra.mxu0 0.0
  %2646 = vmatprep.subr.mxu0 0.0
  %2647 = vmatpush1.msra.mxu0 0.0
  %2648 = vmatprep.subr.mxu0 0.0
  %2649 = vmatpush1.msra.mxu0 0.0
  %2650 = vmatprep.subr.mxu0 0.0
  %2651 = vmatpush1.msra.mxu0 0.0
  %2652 = vmatprep.subr.mxu0 0.0
  %2653 = vmatpush1.msra.mxu0 0.0
  %2654 = vmatprep.subr.mxu0 0.0
  %2655 = vmatpush1.msra.mxu0 0.0
  %2656 = vmatprep.subr.mxu0 0.0
  %2657 = vmatpush1.msra.mxu0 0.0
  %2658 = vmatprep.subr.mxu0 0.0
  %2659 = vmatpush1.msra.mxu0 0.0
  %2660 = vmatprep.subr.mxu0 0.0
  %2661 = vmatpush1.msra.mxu0 0.0
  %2662 = vmatprep.subr.mxu0 0.0
  %2663 = vmatpush1.msra.mxu0 0.0
  %2664 = vmatprep.mubr.f32.mxu0 0.0
  %2665 = vmatmul.mubr.f32.gmra.mrb[0].mxu0 %v1920
  %v2666 = vpop.f32.mrb[0].mxu0
  %v2667 = vadd.f32 0.0, %v2666
  %v2668 = vpop.f32.mrb[0].mxu0
  %2669 = vmatprep.mubr.f32.mxu0 0.0
  %2670 = vmatmul.mubr.f32.gmra.mrb[0].mxu0 %v1923
  %v2671 = vpop.f32.mrb[0].mxu0
  %v2672 = vadd.f32 0.0, %v2671
  %v2673 = vpop.f32.mrb[0].mxu0
  %2674 = vdwg.mxu0
  %2675 = vmatprep.subr.mxu0 0.0
  %2676 = vmatpush1.msra.mxu0 %v1904
  %2677 = vmatprep.subr.mxu0 0.0
  %2678 = vmatpush1.msra.mxu0 %v1905
  %2679 = vmatprep.subr.mxu0 0.0
  %2680 = vmatpush1.msra.mxu0 0.0
  %2681 = vmatprep.subr.mxu0 0.0
  %2682 = vmatpush1.msra.mxu0 0.0
  %2683 = vmatprep.subr.mxu0 0.0
  %2684 = vmatpush1.msra.mxu0 0.0
  %2685 = vmatprep.subr.mxu0 0.0
  %2686 = vmatpush1.msra.mxu0 0.0
  %2687 = vmatprep.subr.mxu0 0.0
  %2688 = vmatpush1.msra.mxu0 0.0
  %2689 = vmatprep.subr.mxu0 0.0
  %2690 = vmatpush1.msra.mxu0 0.0
  %2691 = vmatprep.subr.mxu0 0.0
  %2692 = vmatpush1.msra.mxu0 0.0
  %2693 = vmatprep.subr.mxu0 0.0
  %2694 = vmatpush1.msra.mxu0 0.0
  %2695 = vmatprep.subr.mxu0 0.0
  %2696 = vmatpush1.msra.mxu0 0.0
  %2697 = vmatprep.subr.mxu0 0.0
  %2698 = vmatpush1.msra.mxu0 0.0
  %2699 = vmatprep.subr.mxu0 0.0
  %2700 = vmatpush1.msra.mxu0 0.0
  %2701 = vmatprep.subr.mxu0 0.0
  %2702 = vmatpush1.msra.mxu0 0.0
  %2703 = vmatprep.subr.mxu0 0.0
  %2704 = vmatpush1.msra.mxu0 0.0
  %2705 = vmatprep.subr.mxu0 0.0
  %2706 = vmatpush1.msra.mxu0 0.0
  %2707 = vmatprep.subr.mxu0 0.0
  %2708 = vmatpush1.msra.mxu0 0.0
  %2709 = vmatprep.subr.mxu0 0.0
  %2710 = vmatpush1.msra.mxu0 0.0
  %2711 = vmatprep.subr.mxu0 0.0
  %2712 = vmatpush1.msra.mxu0 0.0
  %2713 = vmatprep.subr.mxu0 0.0
  %2714 = vmatpush1.msra.mxu0 0.0
  %2715 = vmatprep.subr.mxu0 0.0
  %2716 = vmatpush1.msra.mxu0 0.0
  %2717 = vmatprep.subr.mxu0 0.0
  %2718 = vmatpush1.msra.mxu0 0.0
  %2719 = vmatprep.subr.mxu0 0.0
  %2720 = vmatpush1.msra.mxu0 0.0
  %2721 = vmatprep.subr.mxu0 0.0
  %2722 = vmatpush1.msra.mxu0 0.0
  %2723 = vmatprep.subr.mxu0 0.0
  %2724 = vmatpush1.msra.mxu0 0.0
  %2725 = vmatprep.subr.mxu0 0.0
  %2726 = vmatpush1.msra.mxu0 0.0
  %2727 = vmatprep.subr.mxu0 0.0
  %2728 = vmatpush1.msra.mxu0 0.0
  %2729 = vmatprep.subr.mxu0 0.0
  %2730 = vmatpush1.msra.mxu0 0.0
  %2731 = vmatprep.subr.mxu0 0.0
  %2732 = vmatpush1.msra.mxu0 0.0
  %2733 = vmatprep.subr.mxu0 0.0
  %2734 = vmatpush1.msra.mxu0 0.0
  %2735 = vmatprep.subr.mxu0 0.0
  %2736 = vmatpush1.msra.mxu0 0.0
  %2737 = vmatprep.subr.mxu0 0.0
  %2738 = vmatpush1.msra.mxu0 0.0
  %2739 = vmatprep.mubr.f32.mxu0 0.0
  %2740 = vmatmul.mubr.f32.gmra.mrb[0].mxu0 %v1920
  %v2741 = vpop.f32.mrb[0].mxu0
  %v2742 = vadd.f32 0.0, %v2741
  %v2743 = vpop.f32.mrb[0].mxu0
  %2744 = vmatprep.mubr.f32.mxu0 0.0
  %2745 = vmatmul.mubr.f32.gmra.mrb[0].mxu0 %v1923
  %v2746 = vpop.f32.mrb[0].mxu0
  %v2747 = vadd.f32 0.0, %v2746
  %v2748 = vpop.f32.mrb[0].mxu0
  %2749 = vdwg.mxu0
  %2750 = vmatprep.subr.mxu0 0.0
  %2751 = vmatpush1.msra.mxu0 %v1906
  %2752 = vmatprep.subr.mxu0 0.0
  %2753 = vmatpush1.msra.mxu0 %v1907
  %2754 = vmatprep.subr.mxu0 0.0
  %2755 = vmatpush1.msra.mxu0 0.0
  %2756 = vmatprep.subr.mxu0 0.0
  %2757 = vmatpush1.msra.mxu0 0.0
  %2758 = vmatprep.subr.mxu0 0.0
  %2759 = vmatpush1.msra.mxu0 0.0
  %2760 = vmatprep.subr.mxu0 0.0
  %2761 = vmatpush1.msra.mxu0 0.0
  %2762 = vmatprep.subr.mxu0 0.0
  %2763 = vmatpush1.msra.mxu0 0.0
  %2764 = vmatprep.subr.mxu0 0.0
  %2765 = vmatpush1.msra.mxu0 0.0
  %2766 = vmatprep.subr.mxu0 0.0
  %2767 = vmatpush1.msra.mxu0 0.0
  %2768 = vmatprep.subr.mxu0 0.0
  %2769 = vmatpush1.msra.mxu0 0.0
  %2770 = vmatprep.subr.mxu0 0.0
  %2771 = vmatpush1.msra.mxu0 0.0
  %2772 = vmatprep.subr.mxu0 0.0
  %2773 = vmatpush1.msra.mxu0 0.0
  %2774 = vmatprep.subr.mxu0 0.0
  %2775 = vmatpush1.msra.mxu0 0.0
  %2776 = vmatprep.subr.mxu0 0.0
  %2777 = vmatpush1.msra.mxu0 0.0
  %2778 = vmatprep.subr.mxu0 0.0
  %2779 = vmatpush1.msra.mxu0 0.0
  %2780 = vmatprep.subr.mxu0 0.0
  %2781 = vmatpush1.msra.mxu0 0.0
  %2782 = vmatprep.subr.mxu0 0.0
  %2783 = vmatpush1.msra.mxu0 0.0
  %2784 = vmatprep.subr.mxu0 0.0
  %2785 = vmatpush1.msra.mxu0 0.0
  %2786 = vmatprep.subr.mxu0 0.0
  %2787 = vmatpush1.msra.mxu0 0.0
  %2788 = vmatprep.subr.mxu0 0.0
  %2789 = vmatpush1.msra.mxu0 0.0
  %2790 = vmatprep.subr.mxu0 0.0
  %2791 = vmatpush1.msra.mxu0 0.0
  %2792 = vmatprep.subr.mxu0 0.0
  %2793 = vmatpush1.msra.mxu0 0.0
  %2794 = vmatprep.subr.mxu0 0.0
  %2795 = vmatpush1.msra.mxu0 0.0
  %2796 = vmatprep.subr.mxu0 0.0
  %2797 = vmatpush1.msra.mxu0 0.0
  %2798 = vmatprep.subr.mxu0 0.0
  %2799 = vmatpush1.msra.mxu0 0.0
  %2800 = vmatprep.subr.mxu0 0.0
  %2801 = vmatpush1.msra.mxu0 0.0
  %2802 = vmatprep.subr.mxu0 0.0
  %2803 = vmatpush1.msra.mxu0 0.0
  %2804 = vmatprep.subr.mxu0 0.0
  %2805 = vmatpush1.msra.mxu0 0.0
  %2806 = vmatprep.subr.mxu0 0.0
  %2807 = vmatpush1.msra.mxu0 0.0
  %2808 = vmatprep.subr.mxu0 0.0
  %2809 = vmatpush1.msra.mxu0 0.0
  %2810 = vmatprep.subr.mxu0 0.0
  %2811 = vmatpush1.msra.mxu0 0.0
  %2812 = vmatprep.subr.mxu0 0.0
  %2813 = vmatpush1.msra.mxu0 0.0
  %2814 = vmatprep.mubr.f32.mxu0 0.0
  %2815 = vmatmul.mubr.f32.gmra.mrb[0].mxu0 %v1920
  %v2816 = vpop.f32.mrb[0].mxu0
  %v2817 = vadd.f32 0.0, %v2816
  %v2818 = vpop.f32.mrb[0].mxu0
  %2819 = vmatprep.mubr.f32.mxu0 0.0
  %2820 = vmatmul.mubr.f32.gmra.mrb[0].mxu0 %v1923
  %v2821 = vpop.f32.mrb[0].mxu0
  %v2822 = vadd.f32 0.0, %v2821
  %v2823 = vpop.f32.mrb[0].mxu0
  %2824 = vdwg.mxu0
  %2825 = vmatprep.subr.mxu0 0.0
  %2826 = vmatpush1.msra.mxu0 %v1908
  %2827 = vmatprep.subr.mxu0 0.0
  %2828 = vmatpush1.msra.mxu0 %v1909
  %2829 = vmatprep.subr.mxu0 0.0
  %2830 = vmatpush1.msra.mxu0 0.0
  %2831 = vmatprep.subr.mxu0 0.0
  %2832 = vmatpush1.msra.mxu0 0.0
  %2833 = vmatprep.subr.mxu0 0.0
  %2834 = vmatpush1.msra.mxu0 0.0
  %2835 = vmatprep.subr.mxu0 0.0
  %2836 = vmatpush1.msra.mxu0 0.0
  %2837 = vmatprep.subr.mxu0 0.0
  %2838 = vmatpush1.msra.mxu0 0.0
  %2839 = vmatprep.subr.mxu0 0.0
  %2840 = vmatpush1.msra.mxu0 0.0
  %2841 = vmatprep.subr.mxu0 0.0
  %2842 = vmatpush1.msra.mxu0 0.0
  %2843 = vmatprep.subr.mxu0 0.0
  %2844 = vmatpush1.msra.mxu0 0.0
  %2845 = vmatprep.subr.mxu0 0.0
  %2846 = vmatpush1.msra.mxu0 0.0
  %2847 = vmatprep.subr.mxu0 0.0
  %2848 = vmatpush1.msra.mxu0 0.0
  %2849 = vmatprep.subr.mxu0 0.0
  %2850 = vmatpush1.msra.mxu0 0.0
  %2851 = vmatprep.subr.mxu0 0.0
  %2852 = vmatpush1.msra.mxu0 0.0
  %2853 = vmatprep.subr.mxu0 0.0
  %2854 = vmatpush1.msra.mxu0 0.0
  %2855 = vmatprep.subr.mxu0 0.0
  %2856 = vmatpush1.msra.mxu0 0.0
  %2857 = vmatprep.subr.mxu0 0.0
  %2858 = vmatpush1.msra.mxu0 0.0
  %2859 = vmatprep.subr.mxu0 0.0
  %2860 = vmatpush1.msra.mxu0 0.0
  %2861 = vmatprep.subr.mxu0 0.0
  %2862 = vmatpush1.msra.mxu0 0.0
  %2863 = vmatprep.subr.mxu0 0.0
  %2864 = vmatpush1.msra.mxu0 0.0
  %2865 = vmatprep.subr.mxu0 0.0
  %2866 = vmatpush1.msra.mxu0 0.0
  %2867 = vmatprep.subr.mxu0 0.0
  %2868 = vmatpush1.msra.mxu0 0.0
  %2869 = vmatprep.subr.mxu0 0.0
  %2870 = vmatpush1.msra.mxu0 0.0
  %2871 = vmatprep.subr.mxu0 0.0
  %2872 = vmatpush1.msra.mxu0 0.0
  %2873 = vmatprep.subr.mxu0 0.0
  %2874 = vmatpush1.msra.mxu0 0.0
  %2875 = vmatprep.subr.mxu0 0.0
  %2876 = vmatpush1.msra.mxu0 0.0
  %2877 = vmatprep.subr.mxu0 0.0
  %2878 = vmatpush1.msra.mxu0 0.0
  %2879 = vmatprep.subr.mxu0 0.0
  %2880 = vmatpush1.msra.mxu0 0.0
  %2881 = vmatprep.subr.mxu0 0.0
  %2882 = vmatpush1.msra.mxu0 0.0
  %2883 = vmatprep.subr.mxu0 0.0
  %2884 = vmatpush1.msra.mxu0 0.0
  %2885 = vmatprep.subr.mxu0 0.0
  %2886 = vmatpush1.msra.mxu0 0.0
  %2887 = vmatprep.subr.mxu0 0.0
  %2888 = vmatpush1.msra.mxu0 0.0
  %2889 = vmatprep.mubr.f32.mxu0 0.0
  %2890 = vmatmul.mubr.f32.gmra.mrb[0].mxu0 %v1920
  %v2891 = vpop.f32.mrb[0].mxu0
  %v2892 = vadd.f32 0.0, %v2891
  %v2893 = vpop.f32.mrb[0].mxu0
  %2894 = vmatprep.mubr.f32.mxu0 0.0
  %2895 = vmatmul.mubr.f32.gmra.mrb[0].mxu0 %v1923
  %v2896 = vpop.f32.mrb[0].mxu0
  %v2897 = vadd.f32 0.0, %v2896
  %v2898 = vpop.f32.mrb[0].mxu0
  %2899 = vdwg.mxu0
  %2900 = vmatprep.subr.mxu0 0.0
  %2901 = vmatpush1.msra.mxu0 %v1910
  %2902 = vmatprep.subr.mxu0 0.0
  %2903 = vmatpush1.msra.mxu0 %v1911
  %2904 = vmatprep.subr.mxu0 0.0
  %2905 = vmatpush1.msra.mxu0 0.0
  %2906 = vmatprep.subr.mxu0 0.0
  %2907 = vmatpush1.msra.mxu0 0.0
  %2908 = vmatprep.subr.mxu0 0.0
  %2909 = vmatpush1.msra.mxu0 0.0
  %2910 = vmatprep.subr.mxu0 0.0
  %2911 = vmatpush1.msra.mxu0 0.0
  %2912 = vmatprep.subr.mxu0 0.0
  %2913 = vmatpush1.msra.mxu0 0.0
  %2914 = vmatprep.subr.mxu0 0.0
  %2915 = vmatpush1.msra.mxu0 0.0
  %2916 = vmatprep.subr.mxu0 0.0
  %2917 = vmatpush1.msra.mxu0 0.0
  %2918 = vmatprep.subr.mxu0 0.0
  %2919 = vmatpush1.msra.mxu0 0.0
  %2920 = vmatprep.subr.mxu0 0.0
  %2921 = vmatpush1.msra.mxu0 0.0
  %2922 = vmatprep.subr.mxu0 0.0
  %2923 = vmatpush1.msra.mxu0 0.0
  %2924 = vmatprep.subr.mxu0 0.0
  %2925 = vmatpush1.msra.mxu0 0.0
  %2926 = vmatprep.subr.mxu0 0.0
  %2927 = vmatpush1.msra.mxu0 0.0
  %2928 = vmatprep.subr.mxu0 0.0
  %2929 = vmatpush1.msra.mxu0 0.0
  %2930 = vmatprep.subr.mxu0 0.0
  %2931 = vmatpush1.msra.mxu0 0.0
  %2932 = vmatprep.subr.mxu0 0.0
  %2933 = vmatpush1.msra.mxu0 0.0
  %2934 = vmatprep.subr.mxu0 0.0
  %2935 = vmatpush1.msra.mxu0 0.0
  %2936 = vmatprep.subr.mxu0 0.0
  %2937 = vmatpush1.msra.mxu0 0.0
  %2938 = vmatprep.subr.mxu0 0.0
  %2939 = vmatpush1.msra.mxu0 0.0
  %2940 = vmatprep.subr.mxu0 0.0
  %2941 = vmatpush1.msra.mxu0 0.0
  %2942 = vmatprep.subr.mxu0 0.0
  %2943 = vmatpush1.msra.mxu0 0.0
  %2944 = vmatprep.subr.mxu0 0.0
  %2945 = vmatpush1.msra.mxu0 0.0
  %2946 = vmatprep.subr.mxu0 0.0
  %2947 = vmatpush1.msra.mxu0 0.0
  %2948 = vmatprep.subr.mxu0 0.0
  %2949 = vmatpush1.msra.mxu0 0.0
  %2950 = vmatprep.subr.mxu0 0.0
  %2951 = vmatpush1.msra.mxu0 0.0
  %2952 = vmatprep.subr.mxu0 0.0
  %2953 = vmatpush1.msra.mxu0 0.0
  %2954 = vmatprep.subr.mxu0 0.0
  %2955 = vmatpush1.msra.mxu0 0.0
  %2956 = vmatprep.subr.mxu0 0.0
  %2957 = vmatpush1.msra.mxu0 0.0
  %2958 = vmatprep.subr.mxu0 0.0
  %2959 = vmatpush1.msra.mxu0 0.0
  %2960 = vmatprep.subr.mxu0 0.0
  %2961 = vmatpush1.msra.mxu0 0.0
  %2962 = vmatprep.subr.mxu0 0.0
  %2963 = vmatpush1.msra.mxu0 0.0
  %2964 = vmatprep.mubr.f32.mxu0 0.0
  %2965 = vmatmul.mubr.f32.gmra.mrb[0].mxu0 %v1920
  %v2966 = vpop.f32.mrb[0].mxu0
  %v2967 = vadd.f32 0.0, %v2966
  %v2968 = vpop.f32.mrb[0].mxu0
  %2969 = vmatprep.mubr.f32.mxu0 0.0
  %2970 = vmatmul.mubr.f32.gmra.mrb[0].mxu0 %v1923
  %v2971 = vpop.f32.mrb[0].mxu0
  %v2972 = vadd.f32 0.0, %v2971
  %v2973 = vpop.f32.mrb[0].mxu0
  %2974 = vdwg.mxu0
  %2975 = vmatprep.subr.mxu0 0.0
  %2976 = vmatpush1.msra.mxu0 %v1912
  %2977 = vmatprep.subr.mxu0 0.0
  %2978 = vmatpush1.msra.mxu0 %v1913
  %2979 = vmatprep.subr.mxu0 0.0
  %2980 = vmatpush1.msra.mxu0 0.0
  %2981 = vmatprep.subr.mxu0 0.0
  %2982 = vmatpush1.msra.mxu0 0.0
  %2983 = vmatprep.subr.mxu0 0.0
  %2984 = vmatpush1.msra.mxu0 0.0
  %2985 = vmatprep.subr.mxu0 0.0
  %2986 = vmatpush1.msra.mxu0 0.0
  %2987 = vmatprep.subr.mxu0 0.0
  %2988 = vmatpush1.msra.mxu0 0.0
  %2989 = vmatprep.subr.mxu0 0.0
  %2990 = vmatpush1.msra.mxu0 0.0
  %2991 = vmatprep.subr.mxu0 0.0
  %2992 = vmatpush1.msra.mxu0 0.0
  %2993 = vmatprep.subr.mxu0 0.0
  %2994 = vmatpush1.msra.mxu0 0.0
  %2995 = vmatprep.subr.mxu0 0.0
  %2996 = vmatpush1.msra.mxu0 0.0
  %2997 = vmatprep.subr.mxu0 0.0
  %2998 = vmatpush1.msra.mxu0 0.0
  %2999 = vmatprep.subr.mxu0 0.0
  %3000 = vmatpush1.msra.mxu0 0.0
  %3001 = vmatprep.subr.mxu0 0.0
  %3002 = vmatpush1.msra.mxu0 0.0
  %3003 = vmatprep.subr.mxu0 0.0
  %3004 = vmatpush1.msra.mxu0 0.0
  %3005 = vmatprep.subr.mxu0 0.0
  %3006 = vmatpush1.msra.mxu0 0.0
  %3007 = vmatprep.subr.mxu0 0.0
  %3008 = vmatpush1.msra.mxu0 0.0
  %3009 = vmatprep.subr.mxu0 0.0
  %3010 = vmatpush1.msra.mxu0 0.0
  %3011 = vmatprep.subr.mxu0 0.0
  %3012 = vmatpush1.msra.mxu0 0.0
  %3013 = vmatprep.subr.mxu0 0.0
  %3014 = vmatpush1.msra.mxu0 0.0
  %3015 = vmatprep.subr.mxu0 0.0
  %3016 = vmatpush1.msra.mxu0 0.0
  %3017 = vmatprep.subr.mxu0 0.0
  %3018 = vmatpush1.msra.mxu0 0.0
  %3019 = vmatprep.subr.mxu0 0.0
  %3020 = vmatpush1.msra.mxu0 0.0
  %3021 = vmatprep.subr.mxu0 0.0
  %3022 = vmatpush1.msra.mxu0 0.0
  %3023 = vmatprep.subr.mxu0 0.0
  %3024 = vmatpush1.msra.mxu0 0.0
  %3025 = vmatprep.subr.mxu0 0.0
  %3026 = vmatpush1.msra.mxu0 0.0
  %3027 = vmatprep.subr.mxu0 0.0
  %3028 = vmatpush1.msra.mxu0 0.0
  %3029 = vmatprep.subr.mxu0 0.0
  %3030 = vmatpush1.msra.mxu0 0.0
  %3031 = vmatprep.subr.mxu0 0.0
  %3032 = vmatpush1.msra.mxu0 0.0
  %3033 = vmatprep.subr.mxu0 0.0
  %3034 = vmatpush1.msra.mxu0 0.0
  %3035 = vmatprep.subr.mxu0 0.0
  %3036 = vmatpush1.msra.mxu0 0.0
  %3037 = vmatprep.subr.mxu0 0.0
  %3038 = vmatpush1.msra.mxu0 0.0
  %3039 = vmatprep.mubr.f32.mxu0 0.0
  %3040 = vmatmul.mubr.f32.gmra.mrb[0].mxu0 %v1920
  %v3041 = vpop.f32.mrb[0].mxu0
  %v3042 = vadd.f32 0.0, %v3041
  %v3043 = vpop.f32.mrb[0].mxu0
  %3044 = vmatprep.mubr.f32.mxu0 0.0
  %3045 = vmatmul.mubr.f32.gmra.mrb[0].mxu0 %v1923
  %v3046 = vpop.f32.mrb[0].mxu0
  %v3047 = vadd.f32 0.0, %v3046
  %v3048 = vpop.f32.mrb[0].mxu0
  %3049 = vdwg.mxu0
  %3050 = vmatprep.subr.mxu0 0.0
  %3051 = vmatpush1.msra.mxu0 %v1914
  %3052 = vmatprep.subr.mxu0 0.0
  %3053 = vmatpush1.msra.mxu0 %v1915
  %3054 = vmatprep.subr.mxu0 0.0
  %3055 = vmatpush1.msra.mxu0 0.0
  %3056 = vmatprep.subr.mxu0 0.0
  %3057 = vmatpush1.msra.mxu0 0.0
  %3058 = vmatprep.subr.mxu0 0.0
  %3059 = vmatpush1.msra.mxu0 0.0
  %3060 = vmatprep.subr.mxu0 0.0
  %3061 = vmatpush1.msra.mxu0 0.0
  %3062 = vmatprep.subr.mxu0 0.0
  %3063 = vmatpush1.msra.mxu0 0.0
  %3064 = vmatprep.subr.mxu0 0.0
  %3065 = vmatpush1.msra.mxu0 0.0
  %3066 = vmatprep.subr.mxu0 0.0
  %3067 = vmatpush1.msra.mxu0 0.0
  %3068 = vmatprep.subr.mxu0 0.0
  %3069 = vmatpush1.msra.mxu0 0.0
  %3070 = vmatprep.subr.mxu0 0.0
  %3071 = vmatpush1.msra.mxu0 0.0
  %3072 = vmatprep.subr.mxu0 0.0
  %3073 = vmatpush1.msra.mxu0 0.0
  %3074 = vmatprep.subr.mxu0 0.0
  %3075 = vmatpush1.msra.mxu0 0.0
  %3076 = vmatprep.subr.mxu0 0.0
  %3077 = vmatpush1.msra.mxu0 0.0
  %3078 = vmatprep.subr.mxu0 0.0
  %3079 = vmatpush1.msra.mxu0 0.0
  %3080 = vmatprep.subr.mxu0 0.0
  %3081 = vmatpush1.msra.mxu0 0.0
  %3082 = vmatprep.subr.mxu0 0.0
  %3083 = vmatpush1.msra.mxu0 0.0
  %3084 = vmatprep.subr.mxu0 0.0
  %3085 = vmatpush1.msra.mxu0 0.0
  %3086 = vmatprep.subr.mxu0 0.0
  %3087 = vmatpush1.msra.mxu0 0.0
  %3088 = vmatprep.subr.mxu0 0.0
  %3089 = vmatpush1.msra.mxu0 0.0
  %3090 = vmatprep.subr.mxu0 0.0
  %3091 = vmatpush1.msra.mxu0 0.0
  %3092 = vmatprep.subr.mxu0 0.0
  %3093 = vmatpush1.msra.mxu0 0.0
  %3094 = vmatprep.subr.mxu0 0.0
  %3095 = vmatpush1.msra.mxu0 0.0
  %3096 = vmatprep.subr.mxu0 0.0
  %3097 = vmatpush1.msra.mxu0 0.0
  %3098 = vmatprep.subr.mxu0 0.0
  %3099 = vmatpush1.msra.mxu0 0.0
  %3100 = vmatprep.subr.mxu0 0.0
  %3101 = vmatpush1.msra.mxu0 0.0
  %3102 = vmatprep.subr.mxu0 0.0
  %3103 = vmatpush1.msra.mxu0 0.0
  %3104 = vmatprep.subr.mxu0 0.0
  %3105 = vmatpush1.msra.mxu0 0.0
  %3106 = vmatprep.subr.mxu0 0.0
  %3107 = vmatpush1.msra.mxu0 0.0
  %3108 = vmatprep.subr.mxu0 0.0
  %3109 = vmatpush1.msra.mxu0 0.0
  %3110 = vmatprep.subr.mxu0 0.0
  %3111 = vmatpush1.msra.mxu0 0.0
  %3112 = vmatprep.subr.mxu0 0.0
  %3113 = vmatpush1.msra.mxu0 0.0
  %3114 = vmatprep.mubr.f32.mxu0 0.0
  %3115 = vmatmul.mubr.f32.gmra.mrb[0].mxu0 %v1920
  %v3116 = vpop.f32.mrb[0].mxu0
  %v3117 = vadd.f32 0.0, %v3116
  %v3118 = vpop.f32.mrb[0].mxu0
  %3119 = vmatprep.mubr.f32.mxu0 0.0
  %3120 = vmatmul.mubr.f32.gmra.mrb[0].mxu0 %v1923
  %v3121 = vpop.f32.mrb[0].mxu0
  %v3122 = vadd.f32 0.0, %v3121
  %v3123 = vpop.f32.mrb[0].mxu0
  %3124 = vdwg.mxu0
  %v3125 = vld [vmem:[%s2] sm:$0xff]
  %v3126 = vld [vmem:[%s2 + $0x8] sm:$0xff]
  %v3127 = vld [vmem:[%s2 + $0x10] sm:$0xff]
  %v3128 = vld [vmem:[%s2 + $0x18] sm:$0xff]
  %s3129 = scalar_lea.vmem %s3, 1
  %v3130 = vld [vmem:[%s3129] sm:$0x1]
  %v3132 = vlaneseq
  %v3133 = vshrl.u32 %v3132, 7
  %v3134 = vsub.s32 0, %v3133
  %v3135 = vrot.slane %v3130, %v3134
  %v3138 = vsel %vm1356, %v1992, 0
  %v3141 = vsel %vm1356, %v1997, 0
  %v3144 = vsel %vm1356, %v2067, 0
  %v3147 = vsel %vm1356, %v2072, 0
  %v3150 = vsel %vm1356, %v2142, 0
  %v3153 = vsel %vm1356, %v2147, 0
  %v3156 = vsel %vm1356, %v2217, 0
  %v3159 = vsel %vm1356, %v2222, 0
  %v3162 = vsel %vm1356, %v2292, 0
  %v3165 = vsel %vm1356, %v2297, 0
  %v3168 = vsel %vm1356, %v2367, 0
  %v3171 = vsel %vm1356, %v2372, 0
  %v3174 = vsel %vm1356, %v2442, 0
  %v3177 = vsel %vm1356, %v2447, 0
  %v3180 = vsel %vm1356, %v2517, 0
  %v3183 = vsel %vm1356, %v2522, 0
  %v3186 = vsel %vm1356, %v2592, 0
  %v3189 = vsel %vm1356, %v2597, 0
  %v3192 = vsel %vm1356, %v2667, 0
  %v3195 = vsel %vm1356, %v2672, 0
  %v3198 = vsel %vm1356, %v2742, 0
  %v3201 = vsel %vm1356, %v2747, 0
  %v3204 = vsel %vm1356, %v2817, 0
  %v3207 = vsel %vm1356, %v2822, 0
  %v3210 = vsel %vm1356, %v2892, 0
  %v3213 = vsel %vm1356, %v2897, 0
  %v3216 = vsel %vm1356, %v2967, 0
  %v3219 = vsel %vm1356, %v2972, 0
  %v3222 = vsel %vm1356, %v3042, 0
  %v3225 = vsel %vm1356, %v3047, 0
  %v3228 = vsel %vm1356, %v3117, 0
  %v3231 = vsel %vm1356, %v3122, 0
  %3233 = vmatprep.subr.mxu0 0.0
  %3234 = vmatpush1.msra.mxu0 %v3125
  %3235 = vmatprep.subr.mxu0 0.0
  %3236 = vmatpush1.msra.mxu0 %v3126
  %3237 = vmatprep.subr.mxu0 0.0
  %3238 = vmatpush1.msra.mxu0 %v3127
  %3239 = vmatprep.subr.mxu0 0.0
  %3240 = vmatpush1.msra.mxu0 %v3128
  %3241 = vmatprep.subr.mxu0 0.0
  %3242 = vmatpush1.msra.mxu0 0.0
  %3243 = vmatprep.subr.mxu0 0.0
  %3244 = vmatpush1.msra.mxu0 0.0
  %3245 = vmatprep.subr.mxu0 0.0
  %3246 = vmatpush1.msra.mxu0 0.0
  %3247 = vmatprep.subr.mxu0 0.0
  %3248 = vmatpush1.msra.mxu0 0.0
  %3249 = vmatprep.subr.mxu0 0.0
  %3250 = vmatpush1.msra.mxu0 0.0
  %3251 = vmatprep.subr.mxu0 0.0
  %3252 = vmatpush1.msra.mxu0 0.0
  %3253 = vmatprep.subr.mxu0 0.0
  %3254 = vmatpush1.msra.mxu0 0.0
  %3255 = vmatprep.subr.mxu0 0.0
  %3256 = vmatpush1.msra.mxu0 0.0
  %3257 = vmatprep.subr.mxu0 0.0
  %3258 = vmatpush1.msra.mxu0 0.0
  %3259 = vmatprep.subr.mxu0 0.0
  %3260 = vmatpush1.msra.mxu0 0.0
  %3261 = vmatprep.subr.mxu0 0.0
  %3262 = vmatpush1.msra.mxu0 0.0
  %3263 = vmatprep.subr.mxu0 0.0
  %3264 = vmatpush1.msra.mxu0 0.0
  %3265 = vmatprep.subr.mxu0 0.0
  %3266 = vmatpush1.msra.mxu0 0.0
  %3267 = vmatprep.subr.mxu0 0.0
  %3268 = vmatpush1.msra.mxu0 0.0
  %3269 = vmatprep.subr.mxu0 0.0
  %3270 = vmatpush1.msra.mxu0 0.0
  %3271 = vmatprep.subr.mxu0 0.0
  %3272 = vmatpush1.msra.mxu0 0.0
  %3273 = vmatprep.subr.mxu0 0.0
  %3274 = vmatpush1.msra.mxu0 0.0
  %3275 = vmatprep.subr.mxu0 0.0
  %3276 = vmatpush1.msra.mxu0 0.0
  %3277 = vmatprep.subr.mxu0 0.0
  %3278 = vmatpush1.msra.mxu0 0.0
  %3279 = vmatprep.subr.mxu0 0.0
  %3280 = vmatpush1.msra.mxu0 0.0
  %3281 = vmatprep.subr.mxu0 0.0
  %3282 = vmatpush1.msra.mxu0 0.0
  %3283 = vmatprep.subr.mxu0 0.0
  %3284 = vmatpush1.msra.mxu0 0.0
  %3285 = vmatprep.subr.mxu0 0.0
  %3286 = vmatpush1.msra.mxu0 0.0
  %3287 = vmatprep.subr.mxu0 0.0
  %3288 = vmatpush1.msra.mxu0 0.0
  %3289 = vmatprep.subr.mxu0 0.0
  %3290 = vmatpush1.msra.mxu0 0.0
  %3291 = vmatprep.subr.mxu0 0.0
  %3292 = vmatpush1.msra.mxu0 0.0
  %3293 = vmatprep.subr.mxu0 0.0
  %3294 = vmatpush1.msra.mxu0 0.0
  %3295 = vmatprep.subr.mxu0 0.0
  %3296 = vmatpush1.msra.mxu0 0.0
  %3297 = vmatprep.mubr.f32.mxu0 0.0
  %3298 = vmatmul.mubr.f32.gmra.mrb[0].mxu0 %v3138
  %v3299 = vpop.f32.mrb[0].mxu0
  %v3300 = vadd.f32 %v3135, %v3299
  %v3301 = vpop.f32.mrb[0].mxu0
  %3302 = vmatprep.mubr.f32.mxu0 0.0
  %3303 = vmatmul.mubr.f32.gmra.mrb[0].mxu0 %v3141
  %v3304 = vpop.f32.mrb[0].mxu0
  %v3305 = vadd.f32 %v3135, %v3304
  %v3306 = vpop.f32.mrb[0].mxu0
  %3307 = vmatprep.mubr.f32.mxu0 0.0
  %3308 = vmatmul.mubr.f32.gmra.mrb[0].mxu0 %v3144
  %v3309 = vpop.f32.mrb[0].mxu0
  %v3310 = vadd.f32 %v3135, %v3309
  %v3311 = vpop.f32.mrb[0].mxu0
  %3312 = vmatprep.mubr.f32.mxu0 0.0
  %3313 = vmatmul.mubr.f32.gmra.mrb[0].mxu0 %v3147
  %v3314 = vpop.f32.mrb[0].mxu0
  %v3315 = vadd.f32 %v3135, %v3314
  %v3316 = vpop.f32.mrb[0].mxu0
  %3317 = vmatprep.mubr.f32.mxu0 0.0
  %3318 = vmatmul.mubr.f32.gmra.mrb[0].mxu0 %v3150
  %v3319 = vpop.f32.mrb[0].mxu0
  %v3320 = vadd.f32 %v3135, %v3319
  %v3321 = vpop.f32.mrb[0].mxu0
  %3322 = vmatprep.mubr.f32.mxu0 0.0
  %3323 = vmatmul.mubr.f32.gmra.mrb[0].mxu0 %v3153
  %v3324 = vpop.f32.mrb[0].mxu0
  %v3325 = vadd.f32 %v3135, %v3324
  %v3326 = vpop.f32.mrb[0].mxu0
  %3327 = vmatprep.mubr.f32.mxu0 0.0
  %3328 = vmatmul.mubr.f32.gmra.mrb[0].mxu0 %v3156
  %v3329 = vpop.f32.mrb[0].mxu0
  %v3330 = vadd.f32 %v3135, %v3329
  %v3331 = vpop.f32.mrb[0].mxu0
  %3332 = vmatprep.mubr.f32.mxu0 0.0
  %3333 = vmatmul.mubr.f32.gmra.mrb[0].mxu0 %v3159
  %v3334 = vpop.f32.mrb[0].mxu0
  %v3335 = vadd.f32 %v3135, %v3334
  %v3336 = vpop.f32.mrb[0].mxu0
  %3337 = vmatprep.mubr.f32.mxu0 0.0
  %3338 = vmatmul.mubr.f32.gmra.mrb[0].mxu0 %v3162
  %v3339 = vpop.f32.mrb[0].mxu0
  %v3340 = vadd.f32 %v3135, %v3339
  %v3341 = vpop.f32.mrb[0].mxu0
  %3342 = vmatprep.mubr.f32.mxu0 0.0
  %3343 = vmatmul.mubr.f32.gmra.mrb[0].mxu0 %v3165
  %v3344 = vpop.f32.mrb[0].mxu0
  %v3345 = vadd.f32 %v3135, %v3344
  %v3346 = vpop.f32.mrb[0].mxu0
  %3347 = vmatprep.mubr.f32.mxu0 0.0
  %3348 = vmatmul.mubr.f32.gmra.mrb[0].mxu0 %v3168
  %v3349 = vpop.f32.mrb[0].mxu0
  %v3350 = vadd.f32 %v3135, %v3349
  %v3351 = vpop.f32.mrb[0].mxu0
  %3352 = vmatprep.mubr.f32.mxu0 0.0
  %3353 = vmatmul.mubr.f32.gmra.mrb[0].mxu0 %v3171
  %v3354 = vpop.f32.mrb[0].mxu0
  %v3355 = vadd.f32 %v3135, %v3354
  %v3356 = vpop.f32.mrb[0].mxu0
  %3357 = vmatprep.mubr.f32.mxu0 0.0
  %3358 = vmatmul.mubr.f32.gmra.mrb[0].mxu0 %v3174
  %v3359 = vpop.f32.mrb[0].mxu0
  %v3360 = vadd.f32 %v3135, %v3359
  %v3361 = vpop.f32.mrb[0].mxu0
  %3362 = vmatprep.mubr.f32.mxu0 0.0
  %3363 = vmatmul.mubr.f32.gmra.mrb[0].mxu0 %v3177
  %v3364 = vpop.f32.mrb[0].mxu0
  %v3365 = vadd.f32 %v3135, %v3364
  %v3366 = vpop.f32.mrb[0].mxu0
  %3367 = vmatprep.mubr.f32.mxu0 0.0
  %3368 = vmatmul.mubr.f32.gmra.mrb[0].mxu0 %v3180
  %v3369 = vpop.f32.mrb[0].mxu0
  %v3370 = vadd.f32 %v3135, %v3369
  %v3371 = vpop.f32.mrb[0].mxu0
  %3372 = vmatprep.mubr.f32.mxu0 0.0
  %3373 = vmatmul.mubr.f32.gmra.mrb[0].mxu0 %v3183
  %v3374 = vpop.f32.mrb[0].mxu0
  %v3375 = vadd.f32 %v3135, %v3374
  %v3376 = vpop.f32.mrb[0].mxu0
  %3377 = vmatprep.mubr.f32.mxu0 0.0
  %3378 = vmatmul.mubr.f32.gmra.mrb[0].mxu0 %v3186
  %v3379 = vpop.f32.mrb[0].mxu0
  %v3380 = vadd.f32 %v3135, %v3379
  %v3381 = vpop.f32.mrb[0].mxu0
  %3382 = vmatprep.mubr.f32.mxu0 0.0
  %3383 = vmatmul.mubr.f32.gmra.mrb[0].mxu0 %v3189
  %v3384 = vpop.f32.mrb[0].mxu0
  %v3385 = vadd.f32 %v3135, %v3384
  %v3386 = vpop.f32.mrb[0].mxu0
  %3387 = vmatprep.mubr.f32.mxu0 0.0
  %3388 = vmatmul.mubr.f32.gmra.mrb[0].mxu0 %v3192
  %v3389 = vpop.f32.mrb[0].mxu0
  %v3390 = vadd.f32 %v3135, %v3389
  %v3391 = vpop.f32.mrb[0].mxu0
  %3392 = vmatprep.mubr.f32.mxu0 0.0
  %3393 = vmatmul.mubr.f32.gmra.mrb[0].mxu0 %v3195
  %v3394 = vpop.f32.mrb[0].mxu0
  %v3395 = vadd.f32 %v3135, %v3394
  %v3396 = vpop.f32.mrb[0].mxu0
  %3397 = vmatprep.mubr.f32.mxu0 0.0
  %3398 = vmatmul.mubr.f32.gmra.mrb[0].mxu0 %v3198
  %v3399 = vpop.f32.mrb[0].mxu0
  %v3400 = vadd.f32 %v3135, %v3399
  %v3401 = vpop.f32.mrb[0].mxu0
  %3402 = vmatprep.mubr.f32.mxu0 0.0
  %3403 = vmatmul.mubr.f32.gmra.mrb[0].mxu0 %v3201
  %v3404 = vpop.f32.mrb[0].mxu0
  %v3405 = vadd.f32 %v3135, %v3404
  %v3406 = vpop.f32.mrb[0].mxu0
  %3407 = vmatprep.mubr.f32.mxu0 0.0
  %3408 = vmatmul.mubr.f32.gmra.mrb[0].mxu0 %v3204
  %v3409 = vpop.f32.mrb[0].mxu0
  %v3410 = vadd.f32 %v3135, %v3409
  %v3411 = vpop.f32.mrb[0].mxu0
  %3412 = vmatprep.mubr.f32.mxu0 0.0
  %3413 = vmatmul.mubr.f32.gmra.mrb[0].mxu0 %v3207
  %v3414 = vpop.f32.mrb[0].mxu0
  %v3415 = vadd.f32 %v3135, %v3414
  %v3416 = vpop.f32.mrb[0].mxu0
  %3417 = vmatprep.mubr.f32.mxu0 0.0
  %3418 = vmatmul.mubr.f32.gmra.mrb[0].mxu0 %v3210
  %v3419 = vpop.f32.mrb[0].mxu0
  %v3420 = vadd.f32 %v3135, %v3419
  %v3421 = vpop.f32.mrb[0].mxu0
  %3422 = vmatprep.mubr.f32.mxu0 0.0
  %3423 = vmatmul.mubr.f32.gmra.mrb[0].mxu0 %v3213
  %v3424 = vpop.f32.mrb[0].mxu0
  %v3425 = vadd.f32 %v3135, %v3424
  %v3426 = vpop.f32.mrb[0].mxu0
  %3427 = vmatprep.mubr.f32.mxu0 0.0
  %3428 = vmatmul.mubr.f32.gmra.mrb[0].mxu0 %v3216
  %v3429 = vpop.f32.mrb[0].mxu0
  %v3430 = vadd.f32 %v3135, %v3429
  %v3431 = vpop.f32.mrb[0].mxu0
  %3432 = vmatprep.mubr.f32.mxu0 0.0
  %3433 = vmatmul.mubr.f32.gmra.mrb[0].mxu0 %v3219
  %v3434 = vpop.f32.mrb[0].mxu0
  %v3435 = vadd.f32 %v3135, %v3434
  %v3436 = vpop.f32.mrb[0].mxu0
  %3437 = vmatprep.mubr.f32.mxu0 0.0
  %3438 = vmatmul.mubr.f32.gmra.mrb[0].mxu0 %v3222
  %v3439 = vpop.f32.mrb[0].mxu0
  %v3440 = vadd.f32 %v3135, %v3439
  %v3441 = vpop.f32.mrb[0].mxu0
  %3442 = vmatprep.mubr.f32.mxu0 0.0
  %3443 = vmatmul.mubr.f32.gmra.mrb[0].mxu0 %v3225
  %v3444 = vpop.f32.mrb[0].mxu0
  %v3445 = vadd.f32 %v3135, %v3444
  %v3446 = vpop.f32.mrb[0].mxu0
  %3447 = vmatprep.mubr.f32.mxu0 0.0
  %3448 = vmatmul.mubr.f32.gmra.mrb[0].mxu0 %v3228
  %v3449 = vpop.f32.mrb[0].mxu0
  %v3450 = vadd.f32 %v3135, %v3449
  %v3451 = vpop.f32.mrb[0].mxu0
  %3452 = vmatprep.mubr.f32.mxu0 0.0
  %3453 = vmatmul.mubr.f32.gmra.mrb[0].mxu0 %v3231
  %v3454 = vpop.f32.mrb[0].mxu0
  %v3455 = vadd.f32 %v3135, %v3454
  %v3456 = vpop.f32.mrb[0].mxu0
  %3457 = vdwg.mxu0
  %v3458 = vmax.f32 %v3300, 0.0
  %v3459 = vmax.f32 %v3305, 0.0
  %v3460 = vmax.f32 %v3310, 0.0
  %v3461 = vmax.f32 %v3315, 0.0
  %v3462 = vmax.f32 %v3320, 0.0
  %v3463 = vmax.f32 %v3325, 0.0
  %v3464 = vmax.f32 %v3330, 0.0
  %v3465 = vmax.f32 %v3335, 0.0
  %v3466 = vmax.f32 %v3340, 0.0
  %v3467 = vmax.f32 %v3345, 0.0
  %v3468 = vmax.f32 %v3350, 0.0
  %v3469 = vmax.f32 %v3355, 0.0
  %v3470 = vmax.f32 %v3360, 0.0
  %v3471 = vmax.f32 %v3365, 0.0
  %v3472 = vmax.f32 %v3370, 0.0
  %v3473 = vmax.f32 %v3375, 0.0
  %v3474 = vmax.f32 %v3380, 0.0
  %v3475 = vmax.f32 %v3385, 0.0
  %v3476 = vmax.f32 %v3390, 0.0
  %v3477 = vmax.f32 %v3395, 0.0
  %v3478 = vmax.f32 %v3400, 0.0
  %v3479 = vmax.f32 %v3405, 0.0
  %v3480 = vmax.f32 %v3410, 0.0
  %v3481 = vmax.f32 %v3415, 0.0
  %v3482 = vmax.f32 %v3420, 0.0
  %v3483 = vmax.f32 %v3425, 0.0
  %v3484 = vmax.f32 %v3430, 0.0
  %v3485 = vmax.f32 %v3435, 0.0
  %v3486 = vmax.f32 %v3440, 0.0
  %v3487 = vmax.f32 %v3445, 0.0
  %v3488 = vmax.f32 %v3450, 0.0
  %v3489 = vmax.f32 %v3455, 0.0
  %v3490 = vsel %vm1356, %v3458, 0.0
  %3491 = vadd.xlane.f32.xlu0 %v3490
  %v3492 = vpop.xlane.xlu0 %3491
  %v3493 = vsel %vm1356, %v3459, 0.0
  %3494 = vadd.xlane.f32.xlu0 %v3493
  %v3495 = vpop.xlane.xlu0 %3494
  %v3496 = vsel %vm1356, %v3460, 0.0
  %3497 = vadd.xlane.f32.xlu0 %v3496
  %v3498 = vpop.xlane.xlu0 %3497
  %v3499 = vsel %vm1356, %v3461, 0.0
  %3500 = vadd.xlane.f32.xlu0 %v3499
  %v3501 = vpop.xlane.xlu0 %3500
  %v3502 = vsel %vm1356, %v3462, 0.0
  %3503 = vadd.xlane.f32.xlu0 %v3502
  %v3504 = vpop.xlane.xlu0 %3503
  %v3505 = vsel %vm1356, %v3463, 0.0
  %3506 = vadd.xlane.f32.xlu0 %v3505
  %v3507 = vpop.xlane.xlu0 %3506
  %v3508 = vsel %vm1356, %v3464, 0.0
  %3509 = vadd.xlane.f32.xlu0 %v3508
  %v3510 = vpop.xlane.xlu0 %3509
  %v3511 = vsel %vm1356, %v3465, 0.0
  %3512 = vadd.xlane.f32.xlu0 %v3511
  %v3513 = vpop.xlane.xlu0 %3512
  %v3514 = vsel %vm1356, %v3466, 0.0
  %3515 = vadd.xlane.f32.xlu0 %v3514
  %v3516 = vpop.xlane.xlu0 %3515
  %v3517 = vsel %vm1356, %v3467, 0.0
  %3518 = vadd.xlane.f32.xlu0 %v3517
  %v3519 = vpop.xlane.xlu0 %3518
  %v3520 = vsel %vm1356, %v3468, 0.0
  %3521 = vadd.xlane.f32.xlu0 %v3520
  %v3522 = vpop.xlane.xlu0 %3521
  %v3523 = vsel %vm1356, %v3469, 0.0
  %3524 = vadd.xlane.f32.xlu0 %v3523
  %v3525 = vpop.xlane.xlu0 %3524
  %v3526 = vsel %vm1356, %v3470, 0.0
  %3527 = vadd.xlane.f32.xlu0 %v3526
  %v3528 = vpop.xlane.xlu0 %3527
  %v3529 = vsel %vm1356, %v3471, 0.0
  %3530 = vadd.xlane.f32.xlu0 %v3529
  %v3531 = vpop.xlane.xlu0 %3530
  %v3532 = vsel %vm1356, %v3472, 0.0
  %3533 = vadd.xlane.f32.xlu0 %v3532
  %v3534 = vpop.xlane.xlu0 %3533
  %v3535 = vsel %vm1356, %v3473, 0.0
  %3536 = vadd.xlane.f32.xlu0 %v3535
  %v3537 = vpop.xlane.xlu0 %3536
  %v3538 = vsel %vm1356, %v3474, 0.0
  %3539 = vadd.xlane.f32.xlu0 %v3538
  %v3540 = vpop.xlane.xlu0 %3539
  %v3541 = vsel %vm1356, %v3475, 0.0
  %3542 = vadd.xlane.f32.xlu0 %v3541
  %v3543 = vpop.xlane.xlu0 %3542
  %v3544 = vsel %vm1356, %v3476, 0.0
  %3545 = vadd.xlane.f32.xlu0 %v3544
  %v3546 = vpop.xlane.xlu0 %3545
  %v3547 = vsel %vm1356, %v3477, 0.0
  %3548 = vadd.xlane.f32.xlu0 %v3547
  %v3549 = vpop.xlane.xlu0 %3548
  %v3550 = vsel %vm1356, %v3478, 0.0
  %3551 = vadd.xlane.f32.xlu0 %v3550
  %v3552 = vpop.xlane.xlu0 %3551
  %v3553 = vsel %vm1356, %v3479, 0.0
  %3554 = vadd.xlane.f32.xlu0 %v3553
  %v3555 = vpop.xlane.xlu0 %3554
  %v3556 = vsel %vm1356, %v3480, 0.0
  %3557 = vadd.xlane.f32.xlu0 %v3556
  %v3558 = vpop.xlane.xlu0 %3557
  %v3559 = vsel %vm1356, %v3481, 0.0
  %3560 = vadd.xlane.f32.xlu0 %v3559
  %v3561 = vpop.xlane.xlu0 %3560
  %v3562 = vsel %vm1356, %v3482, 0.0
  %3563 = vadd.xlane.f32.xlu0 %v3562
  %v3564 = vpop.xlane.xlu0 %3563
  %v3565 = vsel %vm1356, %v3483, 0.0
  %3566 = vadd.xlane.f32.xlu0 %v3565
  %v3567 = vpop.xlane.xlu0 %3566
  %v3568 = vsel %vm1356, %v3484, 0.0
  %3569 = vadd.xlane.f32.xlu0 %v3568
  %v3570 = vpop.xlane.xlu0 %3569
  %v3571 = vsel %vm1356, %v3485, 0.0
  %3572 = vadd.xlane.f32.xlu0 %v3571
  %v3573 = vpop.xlane.xlu0 %3572
  %v3574 = vsel %vm1356, %v3486, 0.0
  %3575 = vadd.xlane.f32.xlu0 %v3574
  %v3576 = vpop.xlane.xlu0 %3575
  %v3577 = vsel %vm1356, %v3487, 0.0
  %3578 = vadd.xlane.f32.xlu0 %v3577
  %v3579 = vpop.xlane.xlu0 %3578
  %v3580 = vsel %vm1356, %v3488, 0.0
  %3581 = vadd.xlane.f32.xlu0 %v3580
  %v3582 = vpop.xlane.xlu0 %3581
  %v3583 = vsel %vm1356, %v3489, 0.0
  %3584 = vadd.xlane.f32.xlu0 %v3583
  %v3585 = vpop.xlane.xlu0 %3584
  %v3586 = vmul.f32 %v3492, %v1453
  %v3587 = vmul.f32 %v3495, %v1453
  %v3588 = vmul.f32 %v3498, %v1453
  %v3589 = vmul.f32 %v3501, %v1453
  %v3590 = vmul.f32 %v3504, %v1453
  %v3591 = vmul.f32 %v3507, %v1453
  %v3592 = vmul.f32 %v3510, %v1453
  %v3593 = vmul.f32 %v3513, %v1453
  %v3594 = vmul.f32 %v3516, %v1453
  %v3595 = vmul.f32 %v3519, %v1453
  %v3596 = vmul.f32 %v3522, %v1453
  %v3597 = vmul.f32 %v3525, %v1453
  %v3598 = vmul.f32 %v3528, %v1453
  %v3599 = vmul.f32 %v3531, %v1453
  %v3600 = vmul.f32 %v3534, %v1453
  %v3601 = vmul.f32 %v3537, %v1453
  %v3602 = vmul.f32 %v3540, %v1453
  %v3603 = vmul.f32 %v3543, %v1453
  %v3604 = vmul.f32 %v3546, %v1453
  %v3605 = vmul.f32 %v3549, %v1453
  %v3606 = vmul.f32 %v3552, %v1453
  %v3607 = vmul.f32 %v3555, %v1453
  %v3608 = vmul.f32 %v3558, %v1453
  %v3609 = vmul.f32 %v3561, %v1453
  %v3610 = vmul.f32 %v3564, %v1453
  %v3611 = vmul.f32 %v3567, %v1453
  %v3612 = vmul.f32 %v3570, %v1453
  %v3613 = vmul.f32 %v3573, %v1453
  %v3614 = vmul.f32 %v3576, %v1453
  %v3615 = vmul.f32 %v3579, %v1453
  %v3616 = vmul.f32 %v3582, %v1453
  %v3617 = vmul.f32 %v3585, %v1453
  %v3618 = vmul.f32 %v3458, %v3458
  %v3619 = vmul.f32 %v3459, %v3459
  %v3620 = vmul.f32 %v3460, %v3460
  %v3621 = vmul.f32 %v3461, %v3461
  %v3622 = vmul.f32 %v3462, %v3462
  %v3623 = vmul.f32 %v3463, %v3463
  %v3624 = vmul.f32 %v3464, %v3464
  %v3625 = vmul.f32 %v3465, %v3465
  %v3626 = vmul.f32 %v3466, %v3466
  %v3627 = vmul.f32 %v3467, %v3467
  %v3628 = vmul.f32 %v3468, %v3468
  %v3629 = vmul.f32 %v3469, %v3469
  %v3630 = vmul.f32 %v3470, %v3470
  %v3631 = vmul.f32 %v3471, %v3471
  %v3632 = vmul.f32 %v3472, %v3472
  %v3633 = vmul.f32 %v3473, %v3473
  %v3634 = vmul.f32 %v3474, %v3474
  %v3635 = vmul.f32 %v3475, %v3475
  %v3636 = vmul.f32 %v3476, %v3476
  %v3637 = vmul.f32 %v3477, %v3477
  %v3638 = vmul.f32 %v3478, %v3478
  %v3639 = vmul.f32 %v3479, %v3479
  %v3640 = vmul.f32 %v3480, %v3480
  %v3641 = vmul.f32 %v3481, %v3481
  %v3642 = vmul.f32 %v3482, %v3482
  %v3643 = vmul.f32 %v3483, %v3483
  %v3644 = vmul.f32 %v3484, %v3484
  %v3645 = vmul.f32 %v3485, %v3485
  %v3646 = vmul.f32 %v3486, %v3486
  %v3647 = vmul.f32 %v3487, %v3487
  %v3648 = vmul.f32 %v3488, %v3488
  %v3649 = vmul.f32 %v3489, %v3489
  %v3650 = vsel %vm1356, %v3618, 0.0
  %3651 = vadd.xlane.f32.xlu0 %v3650
  %v3652 = vpop.xlane.xlu0 %3651
  %v3653 = vsel %vm1356, %v3619, 0.0
  %3654 = vadd.xlane.f32.xlu0 %v3653
  %v3655 = vpop.xlane.xlu0 %3654
  %v3656 = vsel %vm1356, %v3620, 0.0
  %3657 = vadd.xlane.f32.xlu0 %v3656
  %v3658 = vpop.xlane.xlu0 %3657
  %v3659 = vsel %vm1356, %v3621, 0.0
  %3660 = vadd.xlane.f32.xlu0 %v3659
  %v3661 = vpop.xlane.xlu0 %3660
  %v3662 = vsel %vm1356, %v3622, 0.0
  %3663 = vadd.xlane.f32.xlu0 %v3662
  %v3664 = vpop.xlane.xlu0 %3663
  %v3665 = vsel %vm1356, %v3623, 0.0
  %3666 = vadd.xlane.f32.xlu0 %v3665
  %v3667 = vpop.xlane.xlu0 %3666
  %v3668 = vsel %vm1356, %v3624, 0.0
  %3669 = vadd.xlane.f32.xlu0 %v3668
  %v3670 = vpop.xlane.xlu0 %3669
  %v3671 = vsel %vm1356, %v3625, 0.0
  %3672 = vadd.xlane.f32.xlu0 %v3671
  %v3673 = vpop.xlane.xlu0 %3672
  %v3674 = vsel %vm1356, %v3626, 0.0
  %3675 = vadd.xlane.f32.xlu0 %v3674
  %v3676 = vpop.xlane.xlu0 %3675
  %v3677 = vsel %vm1356, %v3627, 0.0
  %3678 = vadd.xlane.f32.xlu0 %v3677
  %v3679 = vpop.xlane.xlu0 %3678
  %v3680 = vsel %vm1356, %v3628, 0.0
  %3681 = vadd.xlane.f32.xlu0 %v3680
  %v3682 = vpop.xlane.xlu0 %3681
  %v3683 = vsel %vm1356, %v3629, 0.0
  %3684 = vadd.xlane.f32.xlu0 %v3683
  %v3685 = vpop.xlane.xlu0 %3684
  %v3686 = vsel %vm1356, %v3630, 0.0
  %3687 = vadd.xlane.f32.xlu0 %v3686
  %v3688 = vpop.xlane.xlu0 %3687
  %v3689 = vsel %vm1356, %v3631, 0.0
  %3690 = vadd.xlane.f32.xlu0 %v3689
  %v3691 = vpop.xlane.xlu0 %3690
  %v3692 = vsel %vm1356, %v3632, 0.0
  %3693 = vadd.xlane.f32.xlu0 %v3692
  %v3694 = vpop.xlane.xlu0 %3693
  %v3695 = vsel %vm1356, %v3633, 0.0
  %3696 = vadd.xlane.f32.xlu0 %v3695
  %v3697 = vpop.xlane.xlu0 %3696
  %v3698 = vsel %vm1356, %v3634, 0.0
  %3699 = vadd.xlane.f32.xlu0 %v3698
  %v3700 = vpop.xlane.xlu0 %3699
  %v3701 = vsel %vm1356, %v3635, 0.0
  %3702 = vadd.xlane.f32.xlu0 %v3701
  %v3703 = vpop.xlane.xlu0 %3702
  %v3704 = vsel %vm1356, %v3636, 0.0
  %3705 = vadd.xlane.f32.xlu0 %v3704
  %v3706 = vpop.xlane.xlu0 %3705
  %v3707 = vsel %vm1356, %v3637, 0.0
  %3708 = vadd.xlane.f32.xlu0 %v3707
  %v3709 = vpop.xlane.xlu0 %3708
  %v3710 = vsel %vm1356, %v3638, 0.0
  %3711 = vadd.xlane.f32.xlu0 %v3710
  %v3712 = vpop.xlane.xlu0 %3711
  %v3713 = vsel %vm1356, %v3639, 0.0
  %3714 = vadd.xlane.f32.xlu0 %v3713
  %v3715 = vpop.xlane.xlu0 %3714
  %v3716 = vsel %vm1356, %v3640, 0.0
  %3717 = vadd.xlane.f32.xlu0 %v3716
  %v3718 = vpop.xlane.xlu0 %3717
  %v3719 = vsel %vm1356, %v3641, 0.0
  %3720 = vadd.xlane.f32.xlu0 %v3719
  %v3721 = vpop.xlane.xlu0 %3720
  %v3722 = vsel %vm1356, %v3642, 0.0
  %3723 = vadd.xlane.f32.xlu0 %v3722
  %v3724 = vpop.xlane.xlu0 %3723
  %v3725 = vsel %vm1356, %v3643, 0.0
  %3726 = vadd.xlane.f32.xlu0 %v3725
  %v3727 = vpop.xlane.xlu0 %3726
  %v3728 = vsel %vm1356, %v3644, 0.0
  %3729 = vadd.xlane.f32.xlu0 %v3728
  %v3730 = vpop.xlane.xlu0 %3729
  %v3731 = vsel %vm1356, %v3645, 0.0
  %3732 = vadd.xlane.f32.xlu0 %v3731
  %v3733 = vpop.xlane.xlu0 %3732
  %v3734 = vsel %vm1356, %v3646, 0.0
  %3735 = vadd.xlane.f32.xlu0 %v3734
  %v3736 = vpop.xlane.xlu0 %3735
  %v3737 = vsel %vm1356, %v3647, 0.0
  %3738 = vadd.xlane.f32.xlu0 %v3737
  %v3739 = vpop.xlane.xlu0 %3738
  %v3740 = vsel %vm1356, %v3648, 0.0
  %3741 = vadd.xlane.f32.xlu0 %v3740
  %v3742 = vpop.xlane.xlu0 %3741
  %v3743 = vsel %vm1356, %v3649, 0.0
  %3744 = vadd.xlane.f32.xlu0 %v3743
  %v3745 = vpop.xlane.xlu0 %3744
  %v3746 = vmul.f32 %v3652, %v1453
  %v3747 = vmul.f32 %v3655, %v1453
  %v3748 = vmul.f32 %v3658, %v1453
  %v3749 = vmul.f32 %v3661, %v1453
  %v3750 = vmul.f32 %v3664, %v1453
  %v3751 = vmul.f32 %v3667, %v1453
  %v3752 = vmul.f32 %v3670, %v1453
  %v3753 = vmul.f32 %v3673, %v1453
  %v3754 = vmul.f32 %v3676, %v1453
  %v3755 = vmul.f32 %v3679, %v1453
  %v3756 = vmul.f32 %v3682, %v1453
  %v3757 = vmul.f32 %v3685, %v1453
  %v3758 = vmul.f32 %v3688, %v1453
  %v3759 = vmul.f32 %v3691, %v1453
  %v3760 = vmul.f32 %v3694, %v1453
  %v3761 = vmul.f32 %v3697, %v1453
  %v3762 = vmul.f32 %v3700, %v1453
  %v3763 = vmul.f32 %v3703, %v1453
  %v3764 = vmul.f32 %v3706, %v1453
  %v3765 = vmul.f32 %v3709, %v1453
  %v3766 = vmul.f32 %v3712, %v1453
  %v3767 = vmul.f32 %v3715, %v1453
  %v3768 = vmul.f32 %v3718, %v1453
  %v3769 = vmul.f32 %v3721, %v1453
  %v3770 = vmul.f32 %v3724, %v1453
  %v3771 = vmul.f32 %v3727, %v1453
  %v3772 = vmul.f32 %v3730, %v1453
  %v3773 = vmul.f32 %v3733, %v1453
  %v3774 = vmul.f32 %v3736, %v1453
  %v3775 = vmul.f32 %v3739, %v1453
  %v3776 = vmul.f32 %v3742, %v1453
  %v3777 = vmul.f32 %v3745, %v1453
  %v3778 = vmul.f32 %v3586, %v3586
  %v3779 = vmul.f32 %v3587, %v3587
  %v3780 = vmul.f32 %v3588, %v3588
  %v3781 = vmul.f32 %v3589, %v3589
  %v3782 = vmul.f32 %v3590, %v3590
  %v3783 = vmul.f32 %v3591, %v3591
  %v3784 = vmul.f32 %v3592, %v3592
  %v3785 = vmul.f32 %v3593, %v3593
  %v3786 = vmul.f32 %v3594, %v3594
  %v3787 = vmul.f32 %v3595, %v3595
  %v3788 = vmul.f32 %v3596, %v3596
  %v3789 = vmul.f32 %v3597, %v3597
  %v3790 = vmul.f32 %v3598, %v3598
  %v3791 = vmul.f32 %v3599, %v3599
  %v3792 = vmul.f32 %v3600, %v3600
  %v3793 = vmul.f32 %v3601, %v3601
  %v3794 = vmul.f32 %v3602, %v3602
  %v3795 = vmul.f32 %v3603, %v3603
  %v3796 = vmul.f32 %v3604, %v3604
  %v3797 = vmul.f32 %v3605, %v3605
  %v3798 = vmul.f32 %v3606, %v3606
  %v3799 = vmul.f32 %v3607, %v3607
  %v3800 = vmul.f32 %v3608, %v3608
  %v3801 = vmul.f32 %v3609, %v3609
  %v3802 = vmul.f32 %v3610, %v3610
  %v3803 = vmul.f32 %v3611, %v3611
  %v3804 = vmul.f32 %v3612, %v3612
  %v3805 = vmul.f32 %v3613, %v3613
  %v3806 = vmul.f32 %v3614, %v3614
  %v3807 = vmul.f32 %v3615, %v3615
  %v3808 = vmul.f32 %v3616, %v3616
  %v3809 = vmul.f32 %v3617, %v3617
  %v3810 = vsub.f32 %v3746, %v3778
  %v3811 = vsub.f32 %v3747, %v3779
  %v3812 = vsub.f32 %v3748, %v3780
  %v3813 = vsub.f32 %v3749, %v3781
  %v3814 = vsub.f32 %v3750, %v3782
  %v3815 = vsub.f32 %v3751, %v3783
  %v3816 = vsub.f32 %v3752, %v3784
  %v3817 = vsub.f32 %v3753, %v3785
  %v3818 = vsub.f32 %v3754, %v3786
  %v3819 = vsub.f32 %v3755, %v3787
  %v3820 = vsub.f32 %v3756, %v3788
  %v3821 = vsub.f32 %v3757, %v3789
  %v3822 = vsub.f32 %v3758, %v3790
  %v3823 = vsub.f32 %v3759, %v3791
  %v3824 = vsub.f32 %v3760, %v3792
  %v3825 = vsub.f32 %v3761, %v3793
  %v3826 = vsub.f32 %v3762, %v3794
  %v3827 = vsub.f32 %v3763, %v3795
  %v3828 = vsub.f32 %v3764, %v3796
  %v3829 = vsub.f32 %v3765, %v3797
  %v3830 = vsub.f32 %v3766, %v3798
  %v3831 = vsub.f32 %v3767, %v3799
  %v3832 = vsub.f32 %v3768, %v3800
  %v3833 = vsub.f32 %v3769, %v3801
  %v3834 = vsub.f32 %v3770, %v3802
  %v3835 = vsub.f32 %v3771, %v3803
  %v3836 = vsub.f32 %v3772, %v3804
  %v3837 = vsub.f32 %v3773, %v3805
  %v3838 = vsub.f32 %v3774, %v3806
  %v3839 = vsub.f32 %v3775, %v3807
  %v3840 = vsub.f32 %v3776, %v3808
  %v3841 = vsub.f32 %v3777, %v3809
  %v3842 = vsub.f32 %v3458, %v3586
  %v3843 = vsub.f32 %v3459, %v3587
  %v3844 = vsub.f32 %v3460, %v3588
  %v3845 = vsub.f32 %v3461, %v3589
  %v3846 = vsub.f32 %v3462, %v3590
  %v3847 = vsub.f32 %v3463, %v3591
  %v3848 = vsub.f32 %v3464, %v3592
  %v3849 = vsub.f32 %v3465, %v3593
  %v3850 = vsub.f32 %v3466, %v3594
  %v3851 = vsub.f32 %v3467, %v3595
  %v3852 = vsub.f32 %v3468, %v3596
  %v3853 = vsub.f32 %v3469, %v3597
  %v3854 = vsub.f32 %v3470, %v3598
  %v3855 = vsub.f32 %v3471, %v3599
  %v3856 = vsub.f32 %v3472, %v3600
  %v3857 = vsub.f32 %v3473, %v3601
  %v3858 = vsub.f32 %v3474, %v3602
  %v3859 = vsub.f32 %v3475, %v3603
  %v3860 = vsub.f32 %v3476, %v3604
  %v3861 = vsub.f32 %v3477, %v3605
  %v3862 = vsub.f32 %v3478, %v3606
  %v3863 = vsub.f32 %v3479, %v3607
  %v3864 = vsub.f32 %v3480, %v3608
  %v3865 = vsub.f32 %v3481, %v3609
  %v3866 = vsub.f32 %v3482, %v3610
  %v3867 = vsub.f32 %v3483, %v3611
  %v3868 = vsub.f32 %v3484, %v3612
  %v3869 = vsub.f32 %v3485, %v3613
  %v3870 = vsub.f32 %v3486, %v3614
  %v3871 = vsub.f32 %v3487, %v3615
  %v3872 = vsub.f32 %v3488, %v3616
  %v3873 = vsub.f32 %v3489, %v3617
  %v3874 = vadd.f32 %v3810, 1e-05
  %v3875 = vadd.f32 %v3811, 1e-05
  %v3876 = vadd.f32 %v3812, 1e-05
  %v3877 = vadd.f32 %v3813, 1e-05
  %v3878 = vadd.f32 %v3814, 1e-05
  %v3879 = vadd.f32 %v3815, 1e-05
  %v3880 = vadd.f32 %v3816, 1e-05
  %v3881 = vadd.f32 %v3817, 1e-05
  %v3882 = vadd.f32 %v3818, 1e-05
  %v3883 = vadd.f32 %v3819, 1e-05
  %v3884 = vadd.f32 %v3820, 1e-05
  %v3885 = vadd.f32 %v3821, 1e-05
  %v3886 = vadd.f32 %v3822, 1e-05
  %v3887 = vadd.f32 %v3823, 1e-05
  %v3888 = vadd.f32 %v3824, 1e-05
  %v3889 = vadd.f32 %v3825, 1e-05
  %v3890 = vadd.f32 %v3826, 1e-05
  %v3891 = vadd.f32 %v3827, 1e-05
  %v3892 = vadd.f32 %v3828, 1e-05
  %v3893 = vadd.f32 %v3829, 1e-05
  %v3894 = vadd.f32 %v3830, 1e-05
  %v3895 = vadd.f32 %v3831, 1e-05
  %v3896 = vadd.f32 %v3832, 1e-05
  %v3897 = vadd.f32 %v3833, 1e-05
  %v3898 = vadd.f32 %v3834, 1e-05
  %v3899 = vadd.f32 %v3835, 1e-05
  %v3900 = vadd.f32 %v3836, 1e-05
  %v3901 = vadd.f32 %v3837, 1e-05
  %v3902 = vadd.f32 %v3838, 1e-05
  %v3903 = vadd.f32 %v3839, 1e-05
  %v3904 = vadd.f32 %v3840, 1e-05
  %v3905 = vadd.f32 %v3841, 1e-05
  %v3906 = vrsqrt.pop %v3874
  %v3907 = vrsqrt.pop %v3875
  %v3908 = vrsqrt.pop %v3876
  %v3909 = vrsqrt.pop %v3877
  %v3910 = vrsqrt.pop %v3878
  %v3911 = vrsqrt.pop %v3879
  %v3912 = vrsqrt.pop %v3880
  %v3913 = vrsqrt.pop %v3881
  %v3914 = vrsqrt.pop %v3882
  %v3915 = vrsqrt.pop %v3883
  %v3916 = vrsqrt.pop %v3884
  %v3917 = vrsqrt.pop %v3885
  %v3918 = vrsqrt.pop %v3886
  %v3919 = vrsqrt.pop %v3887
  %v3920 = vrsqrt.pop %v3888
  %v3921 = vrsqrt.pop %v3889
  %v3922 = vrsqrt.pop %v3890
  %v3923 = vrsqrt.pop %v3891
  %v3924 = vrsqrt.pop %v3892
  %v3925 = vrsqrt.pop %v3893
  %v3926 = vrsqrt.pop %v3894
  %v3927 = vrsqrt.pop %v3895
  %v3928 = vrsqrt.pop %v3896
  %v3929 = vrsqrt.pop %v3897
  %v3930 = vrsqrt.pop %v3898
  %v3931 = vrsqrt.pop %v3899
  %v3932 = vrsqrt.pop %v3900
  %v3933 = vrsqrt.pop %v3901
  %v3934 = vrsqrt.pop %v3902
  %v3935 = vrsqrt.pop %v3903
  %v3936 = vrsqrt.pop %v3904
  %v3937 = vrsqrt.pop %v3905
  %v3938 = vmul.f32 %v3842, %v3906
  %v3939 = vmul.f32 %v3843, %v3907
  %v3940 = vmul.f32 %v3844, %v3908
  %v3941 = vmul.f32 %v3845, %v3909
  %v3942 = vmul.f32 %v3846, %v3910
  %v3943 = vmul.f32 %v3847, %v3911
  %v3944 = vmul.f32 %v3848, %v3912
  %v3945 = vmul.f32 %v3849, %v3913
  %v3946 = vmul.f32 %v3850, %v3914
  %v3947 = vmul.f32 %v3851, %v3915
  %v3948 = vmul.f32 %v3852, %v3916
  %v3949 = vmul.f32 %v3853, %v3917
  %v3950 = vmul.f32 %v3854, %v3918
  %v3951 = vmul.f32 %v3855, %v3919
  %v3952 = vmul.f32 %v3856, %v3920
  %v3953 = vmul.f32 %v3857, %v3921
  %v3954 = vmul.f32 %v3858, %v3922
  %v3955 = vmul.f32 %v3859, %v3923
  %v3956 = vmul.f32 %v3860, %v3924
  %v3957 = vmul.f32 %v3861, %v3925
  %v3958 = vmul.f32 %v3862, %v3926
  %v3959 = vmul.f32 %v3863, %v3927
  %v3960 = vmul.f32 %v3864, %v3928
  %v3961 = vmul.f32 %v3865, %v3929
  %v3962 = vmul.f32 %v3866, %v3930
  %v3963 = vmul.f32 %v3867, %v3931
  %v3964 = vmul.f32 %v3868, %v3932
  %v3965 = vmul.f32 %v3869, %v3933
  %v3966 = vmul.f32 %v3870, %v3934
  %v3967 = vmul.f32 %v3871, %v3935
  %v3968 = vmul.f32 %v3872, %v3936
  %v3969 = vmul.f32 %v3873, %v3937
  %s3970 = scalar_lea.vmem %s4, 1
  %v3971 = vld [vmem:[%s3970] sm:$0x1]
  %v3973 = vlaneseq
  %v3974 = vshrl.u32 %v3973, 7
  %v3975 = vsub.s32 0, %v3974
  %v3976 = vrot.slane %v3971, %v3975
  %v3978 = vmul.f32 %v3938, %v3976
  %v3979 = vmul.f32 %v3939, %v3976
  %v3980 = vmul.f32 %v3940, %v3976
  %v3981 = vmul.f32 %v3941, %v3976
  %v3982 = vmul.f32 %v3942, %v3976
  %v3983 = vmul.f32 %v3943, %v3976
  %v3984 = vmul.f32 %v3944, %v3976
  %v3985 = vmul.f32 %v3945, %v3976
  %v3986 = vmul.f32 %v3946, %v3976
  %v3987 = vmul.f32 %v3947, %v3976
  %v3988 = vmul.f32 %v3948, %v3976
  %v3989 = vmul.f32 %v3949, %v3976
  %v3990 = vmul.f32 %v3950, %v3976
  %v3991 = vmul.f32 %v3951, %v3976
  %v3992 = vmul.f32 %v3952, %v3976
  %v3993 = vmul.f32 %v3953, %v3976
  %v3994 = vmul.f32 %v3954, %v3976
  %v3995 = vmul.f32 %v3955, %v3976
  %v3996 = vmul.f32 %v3956, %v3976
  %v3997 = vmul.f32 %v3957, %v3976
  %v3998 = vmul.f32 %v3958, %v3976
  %v3999 = vmul.f32 %v3959, %v3976
  %v4000 = vmul.f32 %v3960, %v3976
  %v4001 = vmul.f32 %v3961, %v3976
  %v4002 = vmul.f32 %v3962, %v3976
  %v4003 = vmul.f32 %v3963, %v3976
  %v4004 = vmul.f32 %v3964, %v3976
  %v4005 = vmul.f32 %v3965, %v3976
  %v4006 = vmul.f32 %v3966, %v3976
  %v4007 = vmul.f32 %v3967, %v3976
  %v4008 = vmul.f32 %v3968, %v3976
  %v4009 = vmul.f32 %v3969, %v3976
  %s4010 = scalar_lea.vmem %s5, 1
  %v4011 = vld [vmem:[%s4010] sm:$0x1]
  %v4013 = vlaneseq
  %v4014 = vshrl.u32 %v4013, 7
  %v4015 = vsub.s32 0, %v4014
  %v4016 = vrot.slane %v4011, %v4015
  %v4018 = vadd.f32 %v3978, %v4016
  %v4019 = vadd.f32 %v3979, %v4016
  %v4020 = vadd.f32 %v3980, %v4016
  %v4021 = vadd.f32 %v3981, %v4016
  %v4022 = vadd.f32 %v3982, %v4016
  %v4023 = vadd.f32 %v3983, %v4016
  %v4024 = vadd.f32 %v3984, %v4016
  %v4025 = vadd.f32 %v3985, %v4016
  %v4026 = vadd.f32 %v3986, %v4016
  %v4027 = vadd.f32 %v3987, %v4016
  %v4028 = vadd.f32 %v3988, %v4016
  %v4029 = vadd.f32 %v3989, %v4016
  %v4030 = vadd.f32 %v3990, %v4016
  %v4031 = vadd.f32 %v3991, %v4016
  %v4032 = vadd.f32 %v3992, %v4016
  %v4033 = vadd.f32 %v3993, %v4016
  %v4034 = vadd.f32 %v3994, %v4016
  %v4035 = vadd.f32 %v3995, %v4016
  %v4036 = vadd.f32 %v3996, %v4016
  %v4037 = vadd.f32 %v3997, %v4016
  %v4038 = vadd.f32 %v3998, %v4016
  %v4039 = vadd.f32 %v3999, %v4016
  %v4040 = vadd.f32 %v4000, %v4016
  %v4041 = vadd.f32 %v4001, %v4016
  %v4042 = vadd.f32 %v4002, %v4016
  %v4043 = vadd.f32 %v4003, %v4016
  %v4044 = vadd.f32 %v4004, %v4016
  %v4045 = vadd.f32 %v4005, %v4016
  %v4046 = vadd.f32 %v4006, %v4016
  %v4047 = vadd.f32 %v4007, %v4016
  %v4048 = vadd.f32 %v4008, %v4016
  %v4049 = vadd.f32 %v4009, %v4016
  %v4050 = vld [vmem:[%s6] sm:$0xff]
  %v4051 = vld [vmem:[%s6 + $0x8] sm:$0xff]
  %v4052 = vld [vmem:[%s6 + $0x10] sm:$0xff]
  %v4053 = vld [vmem:[%s6 + $0x18] sm:$0xff]
  %v4054 = vld [vmem:[%s7] sm:$0x1]
  %v4056 = vlaneseq
  %v4057 = vshrl.u32 %v4056, 7
  %v4058 = vsub.s32 0, %v4057
  %v4059 = vrot.slane %v4054, %v4058
  %v4062 = vsel %vm1356, %v4018, 0
  %v4065 = vsel %vm1356, %v4019, 0
  %v4068 = vsel %vm1356, %v4020, 0
  %v4071 = vsel %vm1356, %v4021, 0
  %v4074 = vsel %vm1356, %v4022, 0
  %v4077 = vsel %vm1356, %v4023, 0
  %v4080 = vsel %vm1356, %v4024, 0
  %v4083 = vsel %vm1356, %v4025, 0
  %v4086 = vsel %vm1356, %v4026, 0
  %v4089 = vsel %vm1356, %v4027, 0
  %v4092 = vsel %vm1356, %v4028, 0
  %v4095 = vsel %vm1356, %v4029, 0
  %v4098 = vsel %vm1356, %v4030, 0
  %v4101 = vsel %vm1356, %v4031, 0
  %v4104 = vsel %vm1356, %v4032, 0
  %v4107 = vsel %vm1356, %v4033, 0
  %v4110 = vsel %vm1356, %v4034, 0
  %v4113 = vsel %vm1356, %v4035, 0
  %v4116 = vsel %vm1356, %v4036, 0
  %v4119 = vsel %vm1356, %v4037, 0
  %v4122 = vsel %vm1356, %v4038, 0
  %v4125 = vsel %vm1356, %v4039, 0
  %v4128 = vsel %vm1356, %v4040, 0
  %v4131 = vsel %vm1356, %v4041, 0
  %v4134 = vsel %vm1356, %v4042, 0
  %v4137 = vsel %vm1356, %v4043, 0
  %v4140 = vsel %vm1356, %v4044, 0
  %v4143 = vsel %vm1356, %v4045, 0
  %v4146 = vsel %vm1356, %v4046, 0
  %v4149 = vsel %vm1356, %v4047, 0
  %v4152 = vsel %vm1356, %v4048, 0
  %v4155 = vsel %vm1356, %v4049, 0
  %4157 = vmatprep.subr.mxu0 0.0
  %4158 = vmatpush1.msra.mxu0 %v4050
  %4159 = vmatprep.subr.mxu0 0.0
  %4160 = vmatpush1.msra.mxu0 %v4051
  %4161 = vmatprep.subr.mxu0 0.0
  %4162 = vmatpush1.msra.mxu0 %v4052
  %4163 = vmatprep.subr.mxu0 0.0
  %4164 = vmatpush1.msra.mxu0 %v4053
  %4165 = vmatprep.subr.mxu0 0.0
  %4166 = vmatpush1.msra.mxu0 0.0
  %4167 = vmatprep.subr.mxu0 0.0
  %4168 = vmatpush1.msra.mxu0 0.0
  %4169 = vmatprep.subr.mxu0 0.0
  %4170 = vmatpush1.msra.mxu0 0.0
  %4171 = vmatprep.subr.mxu0 0.0
  %4172 = vmatpush1.msra.mxu0 0.0
  %4173 = vmatprep.subr.mxu0 0.0
  %4174 = vmatpush1.msra.mxu0 0.0
  %4175 = vmatprep.subr.mxu0 0.0
  %4176 = vmatpush1.msra.mxu0 0.0
  %4177 = vmatprep.subr.mxu0 0.0
  %4178 = vmatpush1.msra.mxu0 0.0
  %4179 = vmatprep.subr.mxu0 0.0
  %4180 = vmatpush1.msra.mxu0 0.0
  %4181 = vmatprep.subr.mxu0 0.0
  %4182 = vmatpush1.msra.mxu0 0.0
  %4183 = vmatprep.subr.mxu0 0.0
  %4184 = vmatpush1.msra.mxu0 0.0
  %4185 = vmatprep.subr.mxu0 0.0
  %4186 = vmatpush1.msra.mxu0 0.0
  %4187 = vmatprep.subr.mxu0 0.0
  %4188 = vmatpush1.msra.mxu0 0.0
  %4189 = vmatprep.subr.mxu0 0.0
  %4190 = vmatpush1.msra.mxu0 0.0
  %4191 = vmatprep.subr.mxu0 0.0
  %4192 = vmatpush1.msra.mxu0 0.0
  %4193 = vmatprep.subr.mxu0 0.0
  %4194 = vmatpush1.msra.mxu0 0.0
  %4195 = vmatprep.subr.mxu0 0.0
  %4196 = vmatpush1.msra.mxu0 0.0
  %4197 = vmatprep.subr.mxu0 0.0
  %4198 = vmatpush1.msra.mxu0 0.0
  %4199 = vmatprep.subr.mxu0 0.0
  %4200 = vmatpush1.msra.mxu0 0.0
  %4201 = vmatprep.subr.mxu0 0.0
  %4202 = vmatpush1.msra.mxu0 0.0
  %4203 = vmatprep.subr.mxu0 0.0
  %4204 = vmatpush1.msra.mxu0 0.0
  %4205 = vmatprep.subr.mxu0 0.0
  %4206 = vmatpush1.msra.mxu0 0.0
  %4207 = vmatprep.subr.mxu0 0.0
  %4208 = vmatpush1.msra.mxu0 0.0
  %4209 = vmatprep.subr.mxu0 0.0
  %4210 = vmatpush1.msra.mxu0 0.0
  %4211 = vmatprep.subr.mxu0 0.0
  %4212 = vmatpush1.msra.mxu0 0.0
  %4213 = vmatprep.subr.mxu0 0.0
  %4214 = vmatpush1.msra.mxu0 0.0
  %4215 = vmatprep.subr.mxu0 0.0
  %4216 = vmatpush1.msra.mxu0 0.0
  %4217 = vmatprep.subr.mxu0 0.0
  %4218 = vmatpush1.msra.mxu0 0.0
  %4219 = vmatprep.subr.mxu0 0.0
  %4220 = vmatpush1.msra.mxu0 0.0
  %4221 = vmatprep.mubr.f32.mxu0 0.0
  %4222 = vmatmul.mubr.f32.gmra.mrb[0].mxu0 %v4062
  %v4223 = vpop.f32.mrb[0].mxu0
  %v4224 = vadd.f32 %v4059, %v4223
  %v4225 = vpop.f32.mrb[0].mxu0
  %4226 = vmatprep.mubr.f32.mxu0 0.0
  %4227 = vmatmul.mubr.f32.gmra.mrb[0].mxu0 %v4065
  %v4228 = vpop.f32.mrb[0].mxu0
  %v4229 = vadd.f32 %v4059, %v4228
  %v4230 = vpop.f32.mrb[0].mxu0
  %4231 = vmatprep.mubr.f32.mxu0 0.0
  %4232 = vmatmul.mubr.f32.gmra.mrb[0].mxu0 %v4068
  %v4233 = vpop.f32.mrb[0].mxu0
  %v4234 = vadd.f32 %v4059, %v4233
  %v4235 = vpop.f32.mrb[0].mxu0
  %4236 = vmatprep.mubr.f32.mxu0 0.0
  %4237 = vmatmul.mubr.f32.gmra.mrb[0].mxu0 %v4071
  %v4238 = vpop.f32.mrb[0].mxu0
  %v4239 = vadd.f32 %v4059, %v4238
  %v4240 = vpop.f32.mrb[0].mxu0
  %4241 = vmatprep.mubr.f32.mxu0 0.0
  %4242 = vmatmul.mubr.f32.gmra.mrb[0].mxu0 %v4074
  %v4243 = vpop.f32.mrb[0].mxu0
  %v4244 = vadd.f32 %v4059, %v4243
  %v4245 = vpop.f32.mrb[0].mxu0
  %4246 = vmatprep.mubr.f32.mxu0 0.0
  %4247 = vmatmul.mubr.f32.gmra.mrb[0].mxu0 %v4077
  %v4248 = vpop.f32.mrb[0].mxu0
  %v4249 = vadd.f32 %v4059, %v4248
  %v4250 = vpop.f32.mrb[0].mxu0
  %4251 = vmatprep.mubr.f32.mxu0 0.0
  %4252 = vmatmul.mubr.f32.gmra.mrb[0].mxu0 %v4080
  %v4253 = vpop.f32.mrb[0].mxu0
  %v4254 = vadd.f32 %v4059, %v4253
  %v4255 = vpop.f32.mrb[0].mxu0
  %4256 = vmatprep.mubr.f32.mxu0 0.0
  %4257 = vmatmul.mubr.f32.gmra.mrb[0].mxu0 %v4083
  %v4258 = vpop.f32.mrb[0].mxu0
  %v4259 = vadd.f32 %v4059, %v4258
  %v4260 = vpop.f32.mrb[0].mxu0
  %4261 = vmatprep.mubr.f32.mxu0 0.0
  %4262 = vmatmul.mubr.f32.gmra.mrb[0].mxu0 %v4086
  %v4263 = vpop.f32.mrb[0].mxu0
  %v4264 = vadd.f32 %v4059, %v4263
  %v4265 = vpop.f32.mrb[0].mxu0
  %4266 = vmatprep.mubr.f32.mxu0 0.0
  %4267 = vmatmul.mubr.f32.gmra.mrb[0].mxu0 %v4089
  %v4268 = vpop.f32.mrb[0].mxu0
  %v4269 = vadd.f32 %v4059, %v4268
  %v4270 = vpop.f32.mrb[0].mxu0
  %4271 = vmatprep.mubr.f32.mxu0 0.0
  %4272 = vmatmul.mubr.f32.gmra.mrb[0].mxu0 %v4092
  %v4273 = vpop.f32.mrb[0].mxu0
  %v4274 = vadd.f32 %v4059, %v4273
  %v4275 = vpop.f32.mrb[0].mxu0
  %4276 = vmatprep.mubr.f32.mxu0 0.0
  %4277 = vmatmul.mubr.f32.gmra.mrb[0].mxu0 %v4095
  %v4278 = vpop.f32.mrb[0].mxu0
  %v4279 = vadd.f32 %v4059, %v4278
  %v4280 = vpop.f32.mrb[0].mxu0
  %4281 = vmatprep.mubr.f32.mxu0 0.0
  %4282 = vmatmul.mubr.f32.gmra.mrb[0].mxu0 %v4098
  %v4283 = vpop.f32.mrb[0].mxu0
  %v4284 = vadd.f32 %v4059, %v4283
  %v4285 = vpop.f32.mrb[0].mxu0
  %4286 = vmatprep.mubr.f32.mxu0 0.0
  %4287 = vmatmul.mubr.f32.gmra.mrb[0].mxu0 %v4101
  %v4288 = vpop.f32.mrb[0].mxu0
  %v4289 = vadd.f32 %v4059, %v4288
  %v4290 = vpop.f32.mrb[0].mxu0
  %4291 = vmatprep.mubr.f32.mxu0 0.0
  %4292 = vmatmul.mubr.f32.gmra.mrb[0].mxu0 %v4104
  %v4293 = vpop.f32.mrb[0].mxu0
  %v4294 = vadd.f32 %v4059, %v4293
  %v4295 = vpop.f32.mrb[0].mxu0
  %4296 = vmatprep.mubr.f32.mxu0 0.0
  %4297 = vmatmul.mubr.f32.gmra.mrb[0].mxu0 %v4107
  %v4298 = vpop.f32.mrb[0].mxu0
  %v4299 = vadd.f32 %v4059, %v4298
  %v4300 = vpop.f32.mrb[0].mxu0
  %4301 = vmatprep.mubr.f32.mxu0 0.0
  %4302 = vmatmul.mubr.f32.gmra.mrb[0].mxu0 %v4110
  %v4303 = vpop.f32.mrb[0].mxu0
  %v4304 = vadd.f32 %v4059, %v4303
  %v4305 = vpop.f32.mrb[0].mxu0
  %4306 = vmatprep.mubr.f32.mxu0 0.0
  %4307 = vmatmul.mubr.f32.gmra.mrb[0].mxu0 %v4113
  %v4308 = vpop.f32.mrb[0].mxu0
  %v4309 = vadd.f32 %v4059, %v4308
  %v4310 = vpop.f32.mrb[0].mxu0
  %4311 = vmatprep.mubr.f32.mxu0 0.0
  %4312 = vmatmul.mubr.f32.gmra.mrb[0].mxu0 %v4116
  %v4313 = vpop.f32.mrb[0].mxu0
  %v4314 = vadd.f32 %v4059, %v4313
  %v4315 = vpop.f32.mrb[0].mxu0
  %4316 = vmatprep.mubr.f32.mxu0 0.0
  %4317 = vmatmul.mubr.f32.gmra.mrb[0].mxu0 %v4119
  %v4318 = vpop.f32.mrb[0].mxu0
  %v4319 = vadd.f32 %v4059, %v4318
  %v4320 = vpop.f32.mrb[0].mxu0
  %4321 = vmatprep.mubr.f32.mxu0 0.0
  %4322 = vmatmul.mubr.f32.gmra.mrb[0].mxu0 %v4122
  %v4323 = vpop.f32.mrb[0].mxu0
  %v4324 = vadd.f32 %v4059, %v4323
  %v4325 = vpop.f32.mrb[0].mxu0
  %4326 = vmatprep.mubr.f32.mxu0 0.0
  %4327 = vmatmul.mubr.f32.gmra.mrb[0].mxu0 %v4125
  %v4328 = vpop.f32.mrb[0].mxu0
  %v4329 = vadd.f32 %v4059, %v4328
  %v4330 = vpop.f32.mrb[0].mxu0
  %4331 = vmatprep.mubr.f32.mxu0 0.0
  %4332 = vmatmul.mubr.f32.gmra.mrb[0].mxu0 %v4128
  %v4333 = vpop.f32.mrb[0].mxu0
  %v4334 = vadd.f32 %v4059, %v4333
  %v4335 = vpop.f32.mrb[0].mxu0
  %4336 = vmatprep.mubr.f32.mxu0 0.0
  %4337 = vmatmul.mubr.f32.gmra.mrb[0].mxu0 %v4131
  %v4338 = vpop.f32.mrb[0].mxu0
  %v4339 = vadd.f32 %v4059, %v4338
  %v4340 = vpop.f32.mrb[0].mxu0
  %4341 = vmatprep.mubr.f32.mxu0 0.0
  %4342 = vmatmul.mubr.f32.gmra.mrb[0].mxu0 %v4134
  %v4343 = vpop.f32.mrb[0].mxu0
  %v4344 = vadd.f32 %v4059, %v4343
  %v4345 = vpop.f32.mrb[0].mxu0
  %4346 = vmatprep.mubr.f32.mxu0 0.0
  %4347 = vmatmul.mubr.f32.gmra.mrb[0].mxu0 %v4137
  %v4348 = vpop.f32.mrb[0].mxu0
  %v4349 = vadd.f32 %v4059, %v4348
  %v4350 = vpop.f32.mrb[0].mxu0
  %4351 = vmatprep.mubr.f32.mxu0 0.0
  %4352 = vmatmul.mubr.f32.gmra.mrb[0].mxu0 %v4140
  %v4353 = vpop.f32.mrb[0].mxu0
  %v4354 = vadd.f32 %v4059, %v4353
  %v4355 = vpop.f32.mrb[0].mxu0
  %4356 = vmatprep.mubr.f32.mxu0 0.0
  %4357 = vmatmul.mubr.f32.gmra.mrb[0].mxu0 %v4143
  %v4358 = vpop.f32.mrb[0].mxu0
  %v4359 = vadd.f32 %v4059, %v4358
  %v4360 = vpop.f32.mrb[0].mxu0
  %4361 = vmatprep.mubr.f32.mxu0 0.0
  %4362 = vmatmul.mubr.f32.gmra.mrb[0].mxu0 %v4146
  %v4363 = vpop.f32.mrb[0].mxu0
  %v4364 = vadd.f32 %v4059, %v4363
  %v4365 = vpop.f32.mrb[0].mxu0
  %4366 = vmatprep.mubr.f32.mxu0 0.0
  %4367 = vmatmul.mubr.f32.gmra.mrb[0].mxu0 %v4149
  %v4368 = vpop.f32.mrb[0].mxu0
  %v4369 = vadd.f32 %v4059, %v4368
  %v4370 = vpop.f32.mrb[0].mxu0
  %4371 = vmatprep.mubr.f32.mxu0 0.0
  %4372 = vmatmul.mubr.f32.gmra.mrb[0].mxu0 %v4152
  %v4373 = vpop.f32.mrb[0].mxu0
  %v4374 = vadd.f32 %v4059, %v4373
  %v4375 = vpop.f32.mrb[0].mxu0
  %4376 = vmatprep.mubr.f32.mxu0 0.0
  %4377 = vmatmul.mubr.f32.gmra.mrb[0].mxu0 %v4155
  %v4378 = vpop.f32.mrb[0].mxu0
  %v4379 = vadd.f32 %v4059, %v4378
  %v4380 = vpop.f32.mrb[0].mxu0
  %4381 = vdwg.mxu0
  %v4382 = vld [vmem:[%s8] sm:$0xff]
  %v4383 = vld [vmem:[%s8 + $0x8] sm:$0xff]
  %v4384 = vld [vmem:[%s8 + $0x10] sm:$0xff]
  %v4385 = vld [vmem:[%s8 + $0x18] sm:$0xff]
  %v4386 = vld [vmem:[%s10] sm:$0x1]
  %v4388 = vlaneseq
  %v4389 = vshrl.u32 %v4388, 7
  %v4390 = vsub.s32 0, %v4389
  %v4391 = vrot.slane %v4386, %v4390
  %v4394 = vsel %vm1356, %v4224, 0
  %v4397 = vsel %vm1356, %v4229, 0
  %v4400 = vsel %vm1356, %v4234, 0
  %v4403 = vsel %vm1356, %v4239, 0
  %v4406 = vsel %vm1356, %v4244, 0
  %v4409 = vsel %vm1356, %v4249, 0
  %v4412 = vsel %vm1356, %v4254, 0
  %v4415 = vsel %vm1356, %v4259, 0
  %v4418 = vsel %vm1356, %v4264, 0
  %v4421 = vsel %vm1356, %v4269, 0
  %v4424 = vsel %vm1356, %v4274, 0
  %v4427 = vsel %vm1356, %v4279, 0
  %v4430 = vsel %vm1356, %v4284, 0
  %v4433 = vsel %vm1356, %v4289, 0
  %v4436 = vsel %vm1356, %v4294, 0
  %v4439 = vsel %vm1356, %v4299, 0
  %v4442 = vsel %vm1356, %v4304, 0
  %v4445 = vsel %vm1356, %v4309, 0
  %v4448 = vsel %vm1356, %v4314, 0
  %v4451 = vsel %vm1356, %v4319, 0
  %v4454 = vsel %vm1356, %v4324, 0
  %v4457 = vsel %vm1356, %v4329, 0
  %v4460 = vsel %vm1356, %v4334, 0
  %v4463 = vsel %vm1356, %v4339, 0
  %v4466 = vsel %vm1356, %v4344, 0
  %v4469 = vsel %vm1356, %v4349, 0
  %v4472 = vsel %vm1356, %v4354, 0
  %v4475 = vsel %vm1356, %v4359, 0
  %v4478 = vsel %vm1356, %v4364, 0
  %v4481 = vsel %vm1356, %v4369, 0
  %v4484 = vsel %vm1356, %v4374, 0
  %v4487 = vsel %vm1356, %v4379, 0
  %4489 = vmatprep.subr.mxu0 0.0
  %4490 = vmatpush1.msra.mxu0 %v4382
  %4491 = vmatprep.subr.mxu0 0.0
  %4492 = vmatpush1.msra.mxu0 %v4383
  %4493 = vmatprep.subr.mxu0 0.0
  %4494 = vmatpush1.msra.mxu0 %v4384
  %4495 = vmatprep.subr.mxu0 0.0
  %4496 = vmatpush1.msra.mxu0 %v4385
  %4497 = vmatprep.subr.mxu0 0.0
  %4498 = vmatpush1.msra.mxu0 0.0
  %4499 = vmatprep.subr.mxu0 0.0
  %4500 = vmatpush1.msra.mxu0 0.0
  %4501 = vmatprep.subr.mxu0 0.0
  %4502 = vmatpush1.msra.mxu0 0.0
  %4503 = vmatprep.subr.mxu0 0.0
  %4504 = vmatpush1.msra.mxu0 0.0
  %4505 = vmatprep.subr.mxu0 0.0
  %4506 = vmatpush1.msra.mxu0 0.0
  %4507 = vmatprep.subr.mxu0 0.0
  %4508 = vmatpush1.msra.mxu0 0.0
  %4509 = vmatprep.subr.mxu0 0.0
  %4510 = vmatpush1.msra.mxu0 0.0
  %4511 = vmatprep.subr.mxu0 0.0
  %4512 = vmatpush1.msra.mxu0 0.0
  %4513 = vmatprep.subr.mxu0 0.0
  %4514 = vmatpush1.msra.mxu0 0.0
  %4515 = vmatprep.subr.mxu0 0.0
  %4516 = vmatpush1.msra.mxu0 0.0
  %4517 = vmatprep.subr.mxu0 0.0
  %4518 = vmatpush1.msra.mxu0 0.0
  %4519 = vmatprep.subr.mxu0 0.0
  %4520 = vmatpush1.msra.mxu0 0.0
  %4521 = vmatprep.subr.mxu0 0.0
  %4522 = vmatpush1.msra.mxu0 0.0
  %4523 = vmatprep.subr.mxu0 0.0
  %4524 = vmatpush1.msra.mxu0 0.0
  %4525 = vmatprep.subr.mxu0 0.0
  %4526 = vmatpush1.msra.mxu0 0.0
  %4527 = vmatprep.subr.mxu0 0.0
  %4528 = vmatpush1.msra.mxu0 0.0
  %4529 = vmatprep.subr.mxu0 0.0
  %4530 = vmatpush1.msra.mxu0 0.0
  %4531 = vmatprep.subr.mxu0 0.0
  %4532 = vmatpush1.msra.mxu0 0.0
  %4533 = vmatprep.subr.mxu0 0.0
  %4534 = vmatpush1.msra.mxu0 0.0
  %4535 = vmatprep.subr.mxu0 0.0
  %4536 = vmatpush1.msra.mxu0 0.0
  %4537 = vmatprep.subr.mxu0 0.0
  %4538 = vmatpush1.msra.mxu0 0.0
  %4539 = vmatprep.subr.mxu0 0.0
  %4540 = vmatpush1.msra.mxu0 0.0
  %4541 = vmatprep.subr.mxu0 0.0
  %4542 = vmatpush1.msra.mxu0 0.0
  %4543 = vmatprep.subr.mxu0 0.0
  %4544 = vmatpush1.msra.mxu0 0.0
  %4545 = vmatprep.subr.mxu0 0.0
  %4546 = vmatpush1.msra.mxu0 0.0
  %4547 = vmatprep.subr.mxu0 0.0
  %4548 = vmatpush1.msra.mxu0 0.0
  %4549 = vmatprep.subr.mxu0 0.0
  %4550 = vmatpush1.msra.mxu0 0.0
  %4551 = vmatprep.subr.mxu0 0.0
  %4552 = vmatpush1.msra.mxu0 0.0
  %4553 = vmatprep.mubr.f32.mxu0 0.0
  %4554 = vmatmul.mubr.f32.gmra.mrb[0].mxu0 %v4394
  %v4555 = vpop.f32.mrb[0].mxu0
  %v4556 = vadd.f32 %v4391, %v4555
  %v4557 = vpop.f32.mrb[0].mxu0
  %4558 = vmatprep.mubr.f32.mxu0 0.0
  %4559 = vmatmul.mubr.f32.gmra.mrb[0].mxu0 %v4397
  %v4560 = vpop.f32.mrb[0].mxu0
  %v4561 = vadd.f32 %v4391, %v4560
  %v4562 = vpop.f32.mrb[0].mxu0
  %4563 = vmatprep.mubr.f32.mxu0 0.0
  %4564 = vmatmul.mubr.f32.gmra.mrb[0].mxu0 %v4400
  %v4565 = vpop.f32.mrb[0].mxu0
  %v4566 = vadd.f32 %v4391, %v4565
  %v4567 = vpop.f32.mrb[0].mxu0
  %4568 = vmatprep.mubr.f32.mxu0 0.0
  %4569 = vmatmul.mubr.f32.gmra.mrb[0].mxu0 %v4403
  %v4570 = vpop.f32.mrb[0].mxu0
  %v4571 = vadd.f32 %v4391, %v4570
  %v4572 = vpop.f32.mrb[0].mxu0
  %4573 = vmatprep.mubr.f32.mxu0 0.0
  %4574 = vmatmul.mubr.f32.gmra.mrb[0].mxu0 %v4406
  %v4575 = vpop.f32.mrb[0].mxu0
  %v4576 = vadd.f32 %v4391, %v4575
  %v4577 = vpop.f32.mrb[0].mxu0
  %4578 = vmatprep.mubr.f32.mxu0 0.0
  %4579 = vmatmul.mubr.f32.gmra.mrb[0].mxu0 %v4409
  %v4580 = vpop.f32.mrb[0].mxu0
  %v4581 = vadd.f32 %v4391, %v4580
  %v4582 = vpop.f32.mrb[0].mxu0
  %4583 = vmatprep.mubr.f32.mxu0 0.0
  %4584 = vmatmul.mubr.f32.gmra.mrb[0].mxu0 %v4412
  %v4585 = vpop.f32.mrb[0].mxu0
  %v4586 = vadd.f32 %v4391, %v4585
  %v4587 = vpop.f32.mrb[0].mxu0
  %4588 = vmatprep.mubr.f32.mxu0 0.0
  %4589 = vmatmul.mubr.f32.gmra.mrb[0].mxu0 %v4415
  %v4590 = vpop.f32.mrb[0].mxu0
  %v4591 = vadd.f32 %v4391, %v4590
  %v4592 = vpop.f32.mrb[0].mxu0
  %4593 = vmatprep.mubr.f32.mxu0 0.0
  %4594 = vmatmul.mubr.f32.gmra.mrb[0].mxu0 %v4418
  %v4595 = vpop.f32.mrb[0].mxu0
  %v4596 = vadd.f32 %v4391, %v4595
  %v4597 = vpop.f32.mrb[0].mxu0
  %4598 = vmatprep.mubr.f32.mxu0 0.0
  %4599 = vmatmul.mubr.f32.gmra.mrb[0].mxu0 %v4421
  %v4600 = vpop.f32.mrb[0].mxu0
  %v4601 = vadd.f32 %v4391, %v4600
  %v4602 = vpop.f32.mrb[0].mxu0
  %4603 = vmatprep.mubr.f32.mxu0 0.0
  %4604 = vmatmul.mubr.f32.gmra.mrb[0].mxu0 %v4424
  %v4605 = vpop.f32.mrb[0].mxu0
  %v4606 = vadd.f32 %v4391, %v4605
  %v4607 = vpop.f32.mrb[0].mxu0
  %4608 = vmatprep.mubr.f32.mxu0 0.0
  %4609 = vmatmul.mubr.f32.gmra.mrb[0].mxu0 %v4427
  %v4610 = vpop.f32.mrb[0].mxu0
  %v4611 = vadd.f32 %v4391, %v4610
  %v4612 = vpop.f32.mrb[0].mxu0
  %4613 = vmatprep.mubr.f32.mxu0 0.0
  %4614 = vmatmul.mubr.f32.gmra.mrb[0].mxu0 %v4430
  %v4615 = vpop.f32.mrb[0].mxu0
  %v4616 = vadd.f32 %v4391, %v4615
  %v4617 = vpop.f32.mrb[0].mxu0
  %4618 = vmatprep.mubr.f32.mxu0 0.0
  %4619 = vmatmul.mubr.f32.gmra.mrb[0].mxu0 %v4433
  %v4620 = vpop.f32.mrb[0].mxu0
  %v4621 = vadd.f32 %v4391, %v4620
  %v4622 = vpop.f32.mrb[0].mxu0
  %4623 = vmatprep.mubr.f32.mxu0 0.0
  %4624 = vmatmul.mubr.f32.gmra.mrb[0].mxu0 %v4436
  %v4625 = vpop.f32.mrb[0].mxu0
  %v4626 = vadd.f32 %v4391, %v4625
  %v4627 = vpop.f32.mrb[0].mxu0
  %4628 = vmatprep.mubr.f32.mxu0 0.0
  %4629 = vmatmul.mubr.f32.gmra.mrb[0].mxu0 %v4439
  %v4630 = vpop.f32.mrb[0].mxu0
  %v4631 = vadd.f32 %v4391, %v4630
  %v4632 = vpop.f32.mrb[0].mxu0
  %4633 = vmatprep.mubr.f32.mxu0 0.0
  %4634 = vmatmul.mubr.f32.gmra.mrb[0].mxu0 %v4442
  %v4635 = vpop.f32.mrb[0].mxu0
  %v4636 = vadd.f32 %v4391, %v4635
  %v4637 = vpop.f32.mrb[0].mxu0
  %4638 = vmatprep.mubr.f32.mxu0 0.0
  %4639 = vmatmul.mubr.f32.gmra.mrb[0].mxu0 %v4445
  %v4640 = vpop.f32.mrb[0].mxu0
  %v4641 = vadd.f32 %v4391, %v4640
  %v4642 = vpop.f32.mrb[0].mxu0
  %4643 = vmatprep.mubr.f32.mxu0 0.0
  %4644 = vmatmul.mubr.f32.gmra.mrb[0].mxu0 %v4448
  %v4645 = vpop.f32.mrb[0].mxu0
  %v4646 = vadd.f32 %v4391, %v4645
  %v4647 = vpop.f32.mrb[0].mxu0
  %4648 = vmatprep.mubr.f32.mxu0 0.0
  %4649 = vmatmul.mubr.f32.gmra.mrb[0].mxu0 %v4451
  %v4650 = vpop.f32.mrb[0].mxu0
  %v4651 = vadd.f32 %v4391, %v4650
  %v4652 = vpop.f32.mrb[0].mxu0
  %4653 = vmatprep.mubr.f32.mxu0 0.0
  %4654 = vmatmul.mubr.f32.gmra.mrb[0].mxu0 %v4454
  %v4655 = vpop.f32.mrb[0].mxu0
  %v4656 = vadd.f32 %v4391, %v4655
  %v4657 = vpop.f32.mrb[0].mxu0
  %4658 = vmatprep.mubr.f32.mxu0 0.0
  %4659 = vmatmul.mubr.f32.gmra.mrb[0].mxu0 %v4457
  %v4660 = vpop.f32.mrb[0].mxu0
  %v4661 = vadd.f32 %v4391, %v4660
  %v4662 = vpop.f32.mrb[0].mxu0
  %4663 = vmatprep.mubr.f32.mxu0 0.0
  %4664 = vmatmul.mubr.f32.gmra.mrb[0].mxu0 %v4460
  %v4665 = vpop.f32.mrb[0].mxu0
  %v4666 = vadd.f32 %v4391, %v4665
  %v4667 = vpop.f32.mrb[0].mxu0
  %4668 = vmatprep.mubr.f32.mxu0 0.0
  %4669 = vmatmul.mubr.f32.gmra.mrb[0].mxu0 %v4463
  %v4670 = vpop.f32.mrb[0].mxu0
  %v4671 = vadd.f32 %v4391, %v4670
  %v4672 = vpop.f32.mrb[0].mxu0
  %4673 = vmatprep.mubr.f32.mxu0 0.0
  %4674 = vmatmul.mubr.f32.gmra.mrb[0].mxu0 %v4466
  %v4675 = vpop.f32.mrb[0].mxu0
  %v4676 = vadd.f32 %v4391, %v4675
  %v4677 = vpop.f32.mrb[0].mxu0
  %4678 = vmatprep.mubr.f32.mxu0 0.0
  %4679 = vmatmul.mubr.f32.gmra.mrb[0].mxu0 %v4469
  %v4680 = vpop.f32.mrb[0].mxu0
  %v4681 = vadd.f32 %v4391, %v4680
  %v4682 = vpop.f32.mrb[0].mxu0
  %4683 = vmatprep.mubr.f32.mxu0 0.0
  %4684 = vmatmul.mubr.f32.gmra.mrb[0].mxu0 %v4472
  %v4685 = vpop.f32.mrb[0].mxu0
  %v4686 = vadd.f32 %v4391, %v4685
  %v4687 = vpop.f32.mrb[0].mxu0
  %4688 = vmatprep.mubr.f32.mxu0 0.0
  %4689 = vmatmul.mubr.f32.gmra.mrb[0].mxu0 %v4475
  %v4690 = vpop.f32.mrb[0].mxu0
  %v4691 = vadd.f32 %v4391, %v4690
  %v4692 = vpop.f32.mrb[0].mxu0
  %4693 = vmatprep.mubr.f32.mxu0 0.0
  %4694 = vmatmul.mubr.f32.gmra.mrb[0].mxu0 %v4478
  %v4695 = vpop.f32.mrb[0].mxu0
  %v4696 = vadd.f32 %v4391, %v4695
  %v4697 = vpop.f32.mrb[0].mxu0
  %4698 = vmatprep.mubr.f32.mxu0 0.0
  %4699 = vmatmul.mubr.f32.gmra.mrb[0].mxu0 %v4481
  %v4700 = vpop.f32.mrb[0].mxu0
  %v4701 = vadd.f32 %v4391, %v4700
  %v4702 = vpop.f32.mrb[0].mxu0
  %4703 = vmatprep.mubr.f32.mxu0 0.0
  %4704 = vmatmul.mubr.f32.gmra.mrb[0].mxu0 %v4484
  %v4705 = vpop.f32.mrb[0].mxu0
  %v4706 = vadd.f32 %v4391, %v4705
  %v4707 = vpop.f32.mrb[0].mxu0
  %4708 = vmatprep.mubr.f32.mxu0 0.0
  %4709 = vmatmul.mubr.f32.gmra.mrb[0].mxu0 %v4487
  %v4710 = vpop.f32.mrb[0].mxu0
  %v4711 = vadd.f32 %v4391, %v4710
  %v4712 = vpop.f32.mrb[0].mxu0
  %4713 = vdwg.mxu0
  %v4714 = vld [vmem:[%s9] sm:$0xff]
  %v4715 = vld [vmem:[%s9 + $0x8] sm:$0xff]
  %v4716 = vld [vmem:[%s9 + $0x10] sm:$0xff]
  %v4717 = vld [vmem:[%s9 + $0x18] sm:$0xff]
  %v4719 = vsel %vm1356, 0.0, 0
  %4721 = vmatprep.subr.mxu0 0.0
  %4722 = vmatpush1.msra.mxu0 %v4714
  %4723 = vmatprep.subr.mxu0 0.0
  %4724 = vmatpush1.msra.mxu0 %v4715
  %4725 = vmatprep.subr.mxu0 0.0
  %4726 = vmatpush1.msra.mxu0 %v4716
  %4727 = vmatprep.subr.mxu0 0.0
  %4728 = vmatpush1.msra.mxu0 %v4717
  %4729 = vmatprep.subr.mxu0 0.0
  %4730 = vmatpush1.msra.mxu0 0.0
  %4731 = vmatprep.subr.mxu0 0.0
  %4732 = vmatpush1.msra.mxu0 0.0
  %4733 = vmatprep.subr.mxu0 0.0
  %4734 = vmatpush1.msra.mxu0 0.0
  %4735 = vmatprep.subr.mxu0 0.0
  %4736 = vmatpush1.msra.mxu0 0.0
  %4737 = vmatprep.subr.mxu0 0.0
  %4738 = vmatpush1.msra.mxu0 0.0
  %4739 = vmatprep.subr.mxu0 0.0
  %4740 = vmatpush1.msra.mxu0 0.0
  %4741 = vmatprep.subr.mxu0 0.0
  %4742 = vmatpush1.msra.mxu0 0.0
  %4743 = vmatprep.subr.mxu0 0.0
  %4744 = vmatpush1.msra.mxu0 0.0
  %4745 = vmatprep.subr.mxu0 0.0
  %4746 = vmatpush1.msra.mxu0 0.0
  %4747 = vmatprep.subr.mxu0 0.0
  %4748 = vmatpush1.msra.mxu0 0.0
  %4749 = vmatprep.subr.mxu0 0.0
  %4750 = vmatpush1.msra.mxu0 0.0
  %4751 = vmatprep.subr.mxu0 0.0
  %4752 = vmatpush1.msra.mxu0 0.0
  %4753 = vmatprep.subr.mxu0 0.0
  %4754 = vmatpush1.msra.mxu0 0.0
  %4755 = vmatprep.subr.mxu0 0.0
  %4756 = vmatpush1.msra.mxu0 0.0
  %4757 = vmatprep.subr.mxu0 0.0
  %4758 = vmatpush1.msra.mxu0 0.0
  %4759 = vmatprep.subr.mxu0 0.0
  %4760 = vmatpush1.msra.mxu0 0.0
  %4761 = vmatprep.subr.mxu0 0.0
  %4762 = vmatpush1.msra.mxu0 0.0
  %4763 = vmatprep.subr.mxu0 0.0
  %4764 = vmatpush1.msra.mxu0 0.0
  %4765 = vmatprep.subr.mxu0 0.0
  %4766 = vmatpush1.msra.mxu0 0.0
  %4767 = vmatprep.subr.mxu0 0.0
  %4768 = vmatpush1.msra.mxu0 0.0
  %4769 = vmatprep.subr.mxu0 0.0
  %4770 = vmatpush1.msra.mxu0 0.0
  %4771 = vmatprep.subr.mxu0 0.0
  %4772 = vmatpush1.msra.mxu0 0.0
  %4773 = vmatprep.subr.mxu0 0.0
  %4774 = vmatpush1.msra.mxu0 0.0
  %4775 = vmatprep.subr.mxu0 0.0
  %4776 = vmatpush1.msra.mxu0 0.0
  %4777 = vmatprep.subr.mxu0 0.0
  %4778 = vmatpush1.msra.mxu0 0.0
  %4779 = vmatprep.subr.mxu0 0.0
  %4780 = vmatpush1.msra.mxu0 0.0
  %4781 = vmatprep.subr.mxu0 0.0
  %4782 = vmatpush1.msra.mxu0 0.0
  %4783 = vmatprep.subr.mxu0 0.0
  %4784 = vmatpush1.msra.mxu0 0.0
  %4785 = vmatprep.mubr.f32.mxu0 0.0
  %4786 = vmatmul.mubr.f32.gmra.mrb[0].mxu0 %v4719
  %v4787 = vpop.f32.mrb[0].mxu0
  %v4788 = vadd.f32 0.0, %v4787
  %v4789 = vpop.f32.mrb[0].mxu0
  %4790 = vmatprep.mubr.f32.mxu0 0.0
  %4791 = vmatmul.mubr.f32.gmra.mrb[0].mxu0 %v4719
  %v4792 = vpop.f32.mrb[0].mxu0
  %v4793 = vadd.f32 0.0, %v4792
  %v4794 = vpop.f32.mrb[0].mxu0
  %4795 = vmatprep.mubr.f32.mxu0 0.0
  %4796 = vmatmul.mubr.f32.gmra.mrb[0].mxu0 %v4719
  %v4797 = vpop.f32.mrb[0].mxu0
  %v4798 = vadd.f32 0.0, %v4797
  %v4799 = vpop.f32.mrb[0].mxu0
  %4800 = vmatprep.mubr.f32.mxu0 0.0
  %4801 = vmatmul.mubr.f32.gmra.mrb[0].mxu0 %v4719
  %v4802 = vpop.f32.mrb[0].mxu0
  %v4803 = vadd.f32 0.0, %v4802
  %v4804 = vpop.f32.mrb[0].mxu0
  %4805 = vdwg.mxu0
  %v4806 = vadd.f32 %v4556, %v4788
  %v4807 = vadd.f32 %v4561, %v4793
  %v4808 = vadd.f32 %v4566, %v4798
  %v4809 = vadd.f32 %v4571, %v4803
  %v4810 = vxor.u32 %v4806, 2147483648
  %v4811 = vxor.u32 %v4807, 2147483648
  %v4812 = vxor.u32 %v4808, 2147483648
  %v4813 = vxor.u32 %v4809, 2147483648
  %v4814 = vmul.f32 %v4810, 1.442695
  %v4815 = vpow.pop %v4814
  %v4816 = vmul.f32 %v4811, 1.442695
  %v4817 = vpow.pop %v4816
  %v4818 = vmul.f32 %v4812, 1.442695
  %v4819 = vpow.pop %v4818
  %v4820 = vmul.f32 %v4813, 1.442695
  %v4821 = vpow.pop %v4820
  %v4822 = vadd.f32 %v4815, 1.0
  %v4823 = vadd.f32 %v4817, 1.0
  %v4824 = vadd.f32 %v4819, 1.0
  %v4825 = vadd.f32 %v4821, 1.0
  %v4826 = vrcp.pop %v4822
  %v4827 = vmul.f32 1.0, %v4826
  %v4828 = vrcp.pop %v4823
  %v4829 = vmul.f32 1.0, %v4828
  %v4830 = vrcp.pop %v4824
  %v4831 = vmul.f32 1.0, %v4830
  %v4832 = vrcp.pop %v4825
  %v4833 = vmul.f32 1.0, %v4832
  %v4834 = vtanh.pop %v4806
  %v4835 = vtanh.pop %v4807
  %v4836 = vtanh.pop %v4808
  %v4837 = vtanh.pop %v4809
  %v4838 = vmul.f32 %v4827, 0.0
  %v4839 = vmul.f32 %v4829, 0.0
  %v4840 = vmul.f32 %v4831, 0.0
  %v4841 = vmul.f32 %v4833, 0.0
  %4846 = vrot.lane.b32.xlu0 %v4834, 64
  %v4847 = vpop.permute.xlu0 %4846
  %4848 = vrot.lane.b32.xlu0 %v4835, 64
  %v4849 = vpop.permute.xlu0 %4848
  %4850 = vrot.lane.b32.xlu0 %v4836, 64
  %v4851 = vpop.permute.xlu0 %4850
  %4852 = vrot.lane.b32.xlu0 %v4837, 64
  %v4853 = vpop.permute.xlu0 %4852
  %v4858 = vmul.f32 %v4827, %v4847
  %v4859 = vmul.f32 %v4829, %v4849
  %v4860 = vmul.f32 %v4831, %v4851
  %v4861 = vmul.f32 %v4833, %v4853
  %4866 = vrot.lane.b32.xlu0 %v4858, 32
  %v4867 = vpop.permute.xlu0 %4866
  %4868 = vrot.lane.b32.xlu0 %v4859, 32
  %v4869 = vpop.permute.xlu0 %4868
  %4870 = vrot.lane.b32.xlu0 %v4860, 32
  %v4871 = vpop.permute.xlu0 %4870
  %4872 = vrot.lane.b32.xlu0 %v4861, 32
  %v4873 = vpop.permute.xlu0 %4872
  %v4878 = vadd.f32 %v4838, %v4867
  %v4879 = vadd.f32 %v4839, %v4869
  %v4880 = vadd.f32 %v4840, %v4871
  %v4881 = vadd.f32 %v4841, %v4873
  %v4882 = vtanh.pop %v4878
  %v4883 = vtanh.pop %v4879
  %v4884 = vtanh.pop %v4880
  %v4885 = vtanh.pop %v4881
  %4890 = vrot.lane.b32.xlu0 %v4882, 64
  %v4891 = vpop.permute.xlu0 %4890
  %4892 = vrot.lane.b32.xlu0 %v4883, 64
  %v4893 = vpop.permute.xlu0 %4892
  %4894 = vrot.lane.b32.xlu0 %v4884, 64
  %v4895 = vpop.permute.xlu0 %4894
  %4896 = vrot.lane.b32.xlu0 %v4885, 64
  %v4897 = vpop.permute.xlu0 %4896
  %v4902 = vmul.f32 %v4827, %v4891
  %v4903 = vmul.f32 %v4829, %v4893
  %v4904 = vmul.f32 %v4831, %v4895
  %v4905 = vmul.f32 %v4833, %v4897
  %4910 = vrot.lane.b32.xlu0 %v4902, 32
  %v4911 = vpop.permute.xlu0 %4910
  %4912 = vrot.lane.b32.xlu0 %v4903, 32
  %v4913 = vpop.permute.xlu0 %4912
  %4914 = vrot.lane.b32.xlu0 %v4904, 32
  %v4915 = vpop.permute.xlu0 %4914
  %4916 = vrot.lane.b32.xlu0 %v4905, 32
  %v4917 = vpop.permute.xlu0 %4916
  %4922 = vst.msk [vmem:[#allocation2] sm:$0xff] %vm1356, %v4911
  %4923 = vst.msk [vmem:[#allocation2 + $0x8] sm:$0xff] %vm1356, %v4913
  %4924 = vst.msk [vmem:[#allocation2 + $0x10] sm:$0xff] %vm1356, %v4915
  %4925 = vst.msk [vmem:[#allocation2 + $0x18] sm:$0xff] %vm1356, %v4917
  %v4926 = vld [vmem:[%s9] sm:$0xff]
  %v4927 = vld [vmem:[%s9 + $0x8] sm:$0xff]
  %v4928 = vld [vmem:[%s9 + $0x10] sm:$0xff]
  %v4929 = vld [vmem:[%s9 + $0x18] sm:$0xff]
  %v4930 = vsel %vm1356, %v4911, 0
  %v4932 = vsel %vm1356, %v4913, 0
  %v4934 = vsel %vm1356, %v4915, 0
  %v4936 = vsel %vm1356, %v4917, 0
  %4938 = vmatprep.subr.mxu0 0.0
  %4939 = vmatpush1.msra.mxu0 %v4926
  %4940 = vmatprep.subr.mxu0 0.0
  %4941 = vmatpush1.msra.mxu0 %v4927
  %4942 = vmatprep.subr.mxu0 0.0
  %4943 = vmatpush1.msra.mxu0 %v4928
  %4944 = vmatprep.subr.mxu0 0.0
  %4945 = vmatpush1.msra.mxu0 %v4929
  %4946 = vmatprep.subr.mxu0 0.0
  %4947 = vmatpush1.msra.mxu0 0.0
  %4948 = vmatprep.subr.mxu0 0.0
  %4949 = vmatpush1.msra.mxu0 0.0
  %4950 = vmatprep.subr.mxu0 0.0
  %4951 = vmatpush1.msra.mxu0 0.0
  %4952 = vmatprep.subr.mxu0 0.0
  %4953 = vmatpush1.msra.mxu0 0.0
  %4954 = vmatprep.subr.mxu0 0.0
  %4955 = vmatpush1.msra.mxu0 0.0
  %4956 = vmatprep.subr.mxu0 0.0
  %4957 = vmatpush1.msra.mxu0 0.0
  %4958 = vmatprep.subr.mxu0 0.0
  %4959 = vmatpush1.msra.mxu0 0.0
  %4960 = vmatprep.subr.mxu0 0.0
  %4961 = vmatpush1.msra.mxu0 0.0
  %4962 = vmatprep.subr.mxu0 0.0
  %4963 = vmatpush1.msra.mxu0 0.0
  %4964 = vmatprep.subr.mxu0 0.0
  %4965 = vmatpush1.msra.mxu0 0.0
  %4966 = vmatprep.subr.mxu0 0.0
  %4967 = vmatpush1.msra.mxu0 0.0
  %4968 = vmatprep.subr.mxu0 0.0
  %4969 = vmatpush1.msra.mxu0 0.0
  %4970 = vmatprep.subr.mxu0 0.0
  %4971 = vmatpush1.msra.mxu0 0.0
  %4972 = vmatprep.subr.mxu0 0.0
  %4973 = vmatpush1.msra.mxu0 0.0
  %4974 = vmatprep.subr.mxu0 0.0
  %4975 = vmatpush1.msra.mxu0 0.0
  %4976 = vmatprep.subr.mxu0 0.0
  %4977 = vmatpush1.msra.mxu0 0.0
  %4978 = vmatprep.subr.mxu0 0.0
  %4979 = vmatpush1.msra.mxu0 0.0
  %4980 = vmatprep.subr.mxu0 0.0
  %4981 = vmatpush1.msra.mxu0 0.0
  %4982 = vmatprep.subr.mxu0 0.0
  %4983 = vmatpush1.msra.mxu0 0.0
  %4984 = vmatprep.subr.mxu0 0.0
  %4985 = vmatpush1.msra.mxu0 0.0
  %4986 = vmatprep.subr.mxu0 0.0
  %4987 = vmatpush1.msra.mxu0 0.0
  %4988 = vmatprep.subr.mxu0 0.0
  %4989 = vmatpush1.msra.mxu0 0.0
  %4990 = vmatprep.subr.mxu0 0.0
  %4991 = vmatpush1.msra.mxu0 0.0
  %4992 = vmatprep.subr.mxu0 0.0
  %4993 = vmatpush1.msra.mxu0 0.0
  %4994 = vmatprep.subr.mxu0 0.0
  %4995 = vmatpush1.msra.mxu0 0.0
  %4996 = vmatprep.subr.mxu0 0.0
  %4997 = vmatpush1.msra.mxu0 0.0
  %4998 = vmatprep.subr.mxu0 0.0
  %4999 = vmatpush1.msra.mxu0 0.0
  %5000 = vmatprep.subr.mxu0 0.0
  %5001 = vmatpush1.msra.mxu0 0.0
  %5002 = vmatprep.mubr.f32.mxu0 0.0
  %5003 = vmatmul.mubr.f32.gmra.mrb[0].mxu0 %v4930
  %v5004 = vpop.f32.mrb[0].mxu0
  %v5005 = vadd.f32 0.0, %v5004
  %v5006 = vpop.f32.mrb[0].mxu0
  %5007 = vmatprep.mubr.f32.mxu0 0.0
  %5008 = vmatmul.mubr.f32.gmra.mrb[0].mxu0 %v4932
  %v5009 = vpop.f32.mrb[0].mxu0
  %v5010 = vadd.f32 0.0, %v5009
  %v5011 = vpop.f32.mrb[0].mxu0
  %5012 = vmatprep.mubr.f32.mxu0 0.0
  %5013 = vmatmul.mubr.f32.gmra.mrb[0].mxu0 %v4934
  %v5014 = vpop.f32.mrb[0].mxu0
  %v5015 = vadd.f32 0.0, %v5014
  %v5016 = vpop.f32.mrb[0].mxu0
  %5017 = vmatprep.mubr.f32.mxu0 0.0
  %5018 = vmatmul.mubr.f32.gmra.mrb[0].mxu0 %v4936
  %v5019 = vpop.f32.mrb[0].mxu0
  %v5020 = vadd.f32 0.0, %v5019
  %v5021 = vpop.f32.mrb[0].mxu0
  %5022 = vdwg.mxu0
  %v5023 = vadd.f32 %v4576, %v5005
  %v5024 = vadd.f32 %v4581, %v5010
  %v5025 = vadd.f32 %v4586, %v5015
  %v5026 = vadd.f32 %v4591, %v5020
  %v5027 = vxor.u32 %v5023, 2147483648
  %v5028 = vxor.u32 %v5024, 2147483648
  %v5029 = vxor.u32 %v5025, 2147483648
  %v5030 = vxor.u32 %v5026, 2147483648
  %v5031 = vmul.f32 %v5027, 1.442695
  %v5032 = vpow.pop %v5031
  %v5033 = vmul.f32 %v5028, 1.442695
  %v5034 = vpow.pop %v5033
  %v5035 = vmul.f32 %v5029, 1.442695
  %v5036 = vpow.pop %v5035
  %v5037 = vmul.f32 %v5030, 1.442695
  %v5038 = vpow.pop %v5037
  %v5039 = vadd.f32 %v5032, 1.0
  %v5040 = vadd.f32 %v5034, 1.0
  %v5041 = vadd.f32 %v5036, 1.0
  %v5042 = vadd.f32 %v5038, 1.0
  %v5043 = vrcp.pop %v5039
  %v5044 = vmul.f32 1.0, %v5043
  %v5045 = vrcp.pop %v5040
  %v5046 = vmul.f32 1.0, %v5045
  %v5047 = vrcp.pop %v5041
  %v5048 = vmul.f32 1.0, %v5047
  %v5049 = vrcp.pop %v5042
  %v5050 = vmul.f32 1.0, %v5049
  %v5051 = vtanh.pop %v5023
  %v5052 = vtanh.pop %v5024
  %v5053 = vtanh.pop %v5025
  %v5054 = vtanh.pop %v5026
  %v5055 = vmul.f32 %v5044, %v4878
  %v5056 = vmul.f32 %v5046, %v4879
  %v5057 = vmul.f32 %v5048, %v4880
  %v5058 = vmul.f32 %v5050, %v4881
  %5063 = vrot.lane.b32.xlu0 %v5051, 64
  %v5064 = vpop.permute.xlu0 %5063
  %5065 = vrot.lane.b32.xlu0 %v5052, 64
  %v5066 = vpop.permute.xlu0 %5065
  %5067 = vrot.lane.b32.xlu0 %v5053, 64
  %v5068 = vpop.permute.xlu0 %5067
  %5069 = vrot.lane.b32.xlu0 %v5054, 64
  %v5070 = vpop.permute.xlu0 %5069
  %v5075 = vmul.f32 %v5044, %v5064
  %v5076 = vmul.f32 %v5046, %v5066
  %v5077 = vmul.f32 %v5048, %v5068
  %v5078 = vmul.f32 %v5050, %v5070
  %5083 = vrot.lane.b32.xlu0 %v5075, 32
  %v5084 = vpop.permute.xlu0 %5083
  %5085 = vrot.lane.b32.xlu0 %v5076, 32
  %v5086 = vpop.permute.xlu0 %5085
  %5087 = vrot.lane.b32.xlu0 %v5077, 32
  %v5088 = vpop.permute.xlu0 %5087
  %5089 = vrot.lane.b32.xlu0 %v5078, 32
  %v5090 = vpop.permute.xlu0 %5089
  %v5095 = vadd.f32 %v5055, %v5084
  %v5096 = vadd.f32 %v5056, %v5086
  %v5097 = vadd.f32 %v5057, %v5088
  %v5098 = vadd.f32 %v5058, %v5090
  %v5099 = vtanh.pop %v5095
  %v5100 = vtanh.pop %v5096
  %v5101 = vtanh.pop %v5097
  %v5102 = vtanh.pop %v5098
  %5107 = vrot.lane.b32.xlu0 %v5099, 64
  %v5108 = vpop.permute.xlu0 %5107
  %5109 = vrot.lane.b32.xlu0 %v5100, 64
  %v5110 = vpop.permute.xlu0 %5109
  %5111 = vrot.lane.b32.xlu0 %v5101, 64
  %v5112 = vpop.permute.xlu0 %5111
  %5113 = vrot.lane.b32.xlu0 %v5102, 64
  %v5114 = vpop.permute.xlu0 %5113
  %v5119 = vmul.f32 %v5044, %v5108
  %v5120 = vmul.f32 %v5046, %v5110
  %v5121 = vmul.f32 %v5048, %v5112
  %v5122 = vmul.f32 %v5050, %v5114
  %5127 = vrot.lane.b32.xlu0 %v5119, 32
  %v5128 = vpop.permute.xlu0 %5127
  %5129 = vrot.lane.b32.xlu0 %v5120, 32
  %v5130 = vpop.permute.xlu0 %5129
  %5131 = vrot.lane.b32.xlu0 %v5121, 32
  %v5132 = vpop.permute.xlu0 %5131
  %5133 = vrot.lane.b32.xlu0 %v5122, 32
  %v5134 = vpop.permute.xlu0 %5133
  %s5139 = scalar_lea.vmem [#allocation2], 32
  %5140 = vst.msk [vmem:[%s5139] sm:$0xff] %vm1356, %v5128
  %5141 = vst.msk [vmem:[%s5139 + $0x8] sm:$0xff] %vm1356, %v5130
  %5142 = vst.msk [vmem:[%s5139 + $0x10] sm:$0xff] %vm1356, %v5132
  %5143 = vst.msk [vmem:[%s5139 + $0x18] sm:$0xff] %vm1356, %v5134
  %v5144 = vld [vmem:[%s9] sm:$0xff]
  %v5145 = vld [vmem:[%s9 + $0x8] sm:$0xff]
  %v5146 = vld [vmem:[%s9 + $0x10] sm:$0xff]
  %v5147 = vld [vmem:[%s9 + $0x18] sm:$0xff]
  %v5148 = vsel %vm1356, %v5128, 0
  %v5150 = vsel %vm1356, %v5130, 0
  %v5152 = vsel %vm1356, %v5132, 0
  %v5154 = vsel %vm1356, %v5134, 0
  %5156 = vmatprep.subr.mxu0 0.0
  %5157 = vmatpush1.msra.mxu0 %v5144
  %5158 = vmatprep.subr.mxu0 0.0
  %5159 = vmatpush1.msra.mxu0 %v5145
  %5160 = vmatprep.subr.mxu0 0.0
  %5161 = vmatpush1.msra.mxu0 %v5146
  %5162 = vmatprep.subr.mxu0 0.0
  %5163 = vmatpush1.msra.mxu0 %v5147
  %5164 = vmatprep.subr.mxu0 0.0
  %5165 = vmatpush1.msra.mxu0 0.0
  %5166 = vmatprep.subr.mxu0 0.0
  %5167 = vmatpush1.msra.mxu0 0.0
  %5168 = vmatprep.subr.mxu0 0.0
  %5169 = vmatpush1.msra.mxu0 0.0
  %5170 = vmatprep.subr.mxu0 0.0
  %5171 = vmatpush1.msra.mxu0 0.0
  %5172 = vmatprep.subr.mxu0 0.0
  %5173 = vmatpush1.msra.mxu0 0.0
  %5174 = vmatprep.subr.mxu0 0.0
  %5175 = vmatpush1.msra.mxu0 0.0
  %5176 = vmatprep.subr.mxu0 0.0
  %5177 = vmatpush1.msra.mxu0 0.0
  %5178 = vmatprep.subr.mxu0 0.0
  %5179 = vmatpush1.msra.mxu0 0.0
  %5180 = vmatprep.subr.mxu0 0.0
  %5181 = vmatpush1.msra.mxu0 0.0
  %5182 = vmatprep.subr.mxu0 0.0
  %5183 = vmatpush1.msra.mxu0 0.0
  %5184 = vmatprep.subr.mxu0 0.0
  %5185 = vmatpush1.msra.mxu0 0.0
  %5186 = vmatprep.subr.mxu0 0.0
  %5187 = vmatpush1.msra.mxu0 0.0
  %5188 = vmatprep.subr.mxu0 0.0
  %5189 = vmatpush1.msra.mxu0 0.0
  %5190 = vmatprep.subr.mxu0 0.0
  %5191 = vmatpush1.msra.mxu0 0.0
  %5192 = vmatprep.subr.mxu0 0.0
  %5193 = vmatpush1.msra.mxu0 0.0
  %5194 = vmatprep.subr.mxu0 0.0
  %5195 = vmatpush1.msra.mxu0 0.0
  %5196 = vmatprep.subr.mxu0 0.0
  %5197 = vmatpush1.msra.mxu0 0.0
  %5198 = vmatprep.subr.mxu0 0.0
  %5199 = vmatpush1.msra.mxu0 0.0
  %5200 = vmatprep.subr.mxu0 0.0
  %5201 = vmatpush1.msra.mxu0 0.0
  %5202 = vmatprep.subr.mxu0 0.0
  %5203 = vmatpush1.msra.mxu0 0.0
  %5204 = vmatprep.subr.mxu0 0.0
  %5205 = vmatpush1.msra.mxu0 0.0
  %5206 = vmatprep.subr.mxu0 0.0
  %5207 = vmatpush1.msra.mxu0 0.0
  %5208 = vmatprep.subr.mxu0 0.0
  %5209 = vmatpush1.msra.mxu0 0.0
  %5210 = vmatprep.subr.mxu0 0.0
  %5211 = vmatpush1.msra.mxu0 0.0
  %5212 = vmatprep.subr.mxu0 0.0
  %5213 = vmatpush1.msra.mxu0 0.0
  %5214 = vmatprep.subr.mxu0 0.0
  %5215 = vmatpush1.msra.mxu0 0.0
  %5216 = vmatprep.subr.mxu0 0.0
  %5217 = vmatpush1.msra.mxu0 0.0
  %5218 = vmatprep.subr.mxu0 0.0
  %5219 = vmatpush1.msra.mxu0 0.0
  %5220 = vmatprep.mubr.f32.mxu0 0.0
  %5221 = vmatmul.mubr.f32.gmra.mrb[0].mxu0 %v5148
  %v5222 = vpop.f32.mrb[0].mxu0
  %v5223 = vadd.f32 0.0, %v5222
  %v5224 = vpop.f32.mrb[0].mxu0
  %5225 = vmatprep.mubr.f32.mxu0 0.0
  %5226 = vmatmul.mubr.f32.gmra.mrb[0].mxu0 %v5150
  %v5227 = vpop.f32.mrb[0].mxu0
  %v5228 = vadd.f32 0.0, %v5227
  %v5229 = vpop.f32.mrb[0].mxu0
  %5230 = vmatprep.mubr.f32.mxu0 0.0
  %5231 = vmatmul.mubr.f32.gmra.mrb[0].mxu0 %v5152
  %v5232 = vpop.f32.mrb[0].mxu0
  %v5233 = vadd.f32 0.0, %v5232
  %v5234 = vpop.f32.mrb[0].mxu0
  %5235 = vmatprep.mubr.f32.mxu0 0.0
  %5236 = vmatmul.mubr.f32.gmra.mrb[0].mxu0 %v5154
  %v5237 = vpop.f32.mrb[0].mxu0
  %v5238 = vadd.f32 0.0, %v5237
  %v5239 = vpop.f32.mrb[0].mxu0
  %5240 = vdwg.mxu0
  %v5241 = vadd.f32 %v4596, %v5223
  %v5242 = vadd.f32 %v4601, %v5228
  %v5243 = vadd.f32 %v4606, %v5233
  %v5244 = vadd.f32 %v4611, %v5238
  %v5245 = vxor.u32 %v5241, 2147483648
  %v5246 = vxor.u32 %v5242, 2147483648
  %v5247 = vxor.u32 %v5243, 2147483648
  %v5248 = vxor.u32 %v5244, 2147483648
  %v5249 = vmul.f32 %v5245, 1.442695
  %v5250 = vpow.pop %v5249
  %v5251 = vmul.f32 %v5246, 1.442695
  %v5252 = vpow.pop %v5251
  %v5253 = vmul.f32 %v5247, 1.442695
  %v5254 = vpow.pop %v5253
  %v5255 = vmul.f32 %v5248, 1.442695
  %v5256 = vpow.pop %v5255
  %v5257 = vadd.f32 %v5250, 1.0
  %v5258 = vadd.f32 %v5252, 1.0
  %v5259 = vadd.f32 %v5254, 1.0
  %v5260 = vadd.f32 %v5256, 1.0
  %v5261 = vrcp.pop %v5257
  %v5262 = vmul.f32 1.0, %v5261
  %v5263 = vrcp.pop %v5258
  %v5264 = vmul.f32 1.0, %v5263
  %v5265 = vrcp.pop %v5259
  %v5266 = vmul.f32 1.0, %v5265
  %v5267 = vrcp.pop %v5260
  %v5268 = vmul.f32 1.0, %v5267
  %v5269 = vtanh.pop %v5241
  %v5270 = vtanh.pop %v5242
  %v5271 = vtanh.pop %v5243
  %v5272 = vtanh.pop %v5244
  %v5273 = vmul.f32 %v5262, %v5095
  %v5274 = vmul.f32 %v5264, %v5096
  %v5275 = vmul.f32 %v5266, %v5097
  %v5276 = vmul.f32 %v5268, %v5098
  %5281 = vrot.lane.b32.xlu0 %v5269, 64
  %v5282 = vpop.permute.xlu0 %5281
  %5283 = vrot.lane.b32.xlu0 %v5270, 64
  %v5284 = vpop.permute.xlu0 %5283
  %5285 = vrot.lane.b32.xlu0 %v5271, 64
  %v5286 = vpop.permute.xlu0 %5285
  %5287 = vrot.lane.b32.xlu0 %v5272, 64
  %v5288 = vpop.permute.xlu0 %5287
  %v5293 = vmul.f32 %v5262, %v5282
  %v5294 = vmul.f32 %v5264, %v5284
  %v5295 = vmul.f32 %v5266, %v5286
  %v5296 = vmul.f32 %v5268, %v5288
  %5301 = vrot.lane.b32.xlu0 %v5293, 32
  %v5302 = vpop.permute.xlu0 %5301
  %5303 = vrot.lane.b32.xlu0 %v5294, 32
  %v5304 = vpop.permute.xlu0 %5303
  %5305 = vrot.lane.b32.xlu0 %v5295, 32
  %v5306 = vpop.permute.xlu0 %5305
  %5307 = vrot.lane.b32.xlu0 %v5296, 32
  %v5308 = vpop.permute.xlu0 %5307
  %v5313 = vadd.f32 %v5273, %v5302
  %v5314 = vadd.f32 %v5274, %v5304
  %v5315 = vadd.f32 %v5275, %v5306
  %v5316 = vadd.f32 %v5276, %v5308
  %v5317 = vtanh.pop %v5313
  %v5318 = vtanh.pop %v5314
  %v5319 = vtanh.pop %v5315
  %v5320 = vtanh.pop %v5316
  %5325 = vrot.lane.b32.xlu0 %v5317, 64
  %v5326 = vpop.permute.xlu0 %5325
  %5327 = vrot.lane.b32.xlu0 %v5318, 64
  %v5328 = vpop.permute.xlu0 %5327
  %5329 = vrot.lane.b32.xlu0 %v5319, 64
  %v5330 = vpop.permute.xlu0 %5329
  %5331 = vrot.lane.b32.xlu0 %v5320, 64
  %v5332 = vpop.permute.xlu0 %5331
  %v5337 = vmul.f32 %v5262, %v5326
  %v5338 = vmul.f32 %v5264, %v5328
  %v5339 = vmul.f32 %v5266, %v5330
  %v5340 = vmul.f32 %v5268, %v5332
  %5345 = vrot.lane.b32.xlu0 %v5337, 32
  %v5346 = vpop.permute.xlu0 %5345
  %5347 = vrot.lane.b32.xlu0 %v5338, 32
  %v5348 = vpop.permute.xlu0 %5347
  %5349 = vrot.lane.b32.xlu0 %v5339, 32
  %v5350 = vpop.permute.xlu0 %5349
  %5351 = vrot.lane.b32.xlu0 %v5340, 32
  %v5352 = vpop.permute.xlu0 %5351
  %s5357 = scalar_lea.vmem [#allocation2], 64
  %5358 = vst.msk [vmem:[%s5357] sm:$0xff] %vm1356, %v5346
  %5359 = vst.msk [vmem:[%s5357 + $0x8] sm:$0xff] %vm1356, %v5348
  %5360 = vst.msk [vmem:[%s5357 + $0x10] sm:$0xff] %vm1356, %v5350
  %5361 = vst.msk [vmem:[%s5357 + $0x18] sm:$0xff] %vm1356, %v5352
  %v5362 = vld [vmem:[%s9] sm:$0xff]
  %v5363 = vld [vmem:[%s9 + $0x8] sm:$0xff]
  %v5364 = vld [vmem:[%s9 + $0x10] sm:$0xff]
  %v5365 = vld [vmem:[%s9 + $0x18] sm:$0xff]
  %v5366 = vsel %vm1356, %v5346, 0
  %v5368 = vsel %vm1356, %v5348, 0
  %v5370 = vsel %vm1356, %v5350, 0
  %v5372 = vsel %vm1356, %v5352, 0
  %5374 = vmatprep.subr.mxu0 0.0
  %5375 = vmatpush1.msra.mxu0 %v5362
  %5376 = vmatprep.subr.mxu0 0.0
  %5377 = vmatpush1.msra.mxu0 %v5363
  %5378 = vmatprep.subr.mxu0 0.0
  %5379 = vmatpush1.msra.mxu0 %v5364
  %5380 = vmatprep.subr.mxu0 0.0
  %5381 = vmatpush1.msra.mxu0 %v5365
  %5382 = vmatprep.subr.mxu0 0.0
  %5383 = vmatpush1.msra.mxu0 0.0
  %5384 = vmatprep.subr.mxu0 0.0
  %5385 = vmatpush1.msra.mxu0 0.0
  %5386 = vmatprep.subr.mxu0 0.0
  %5387 = vmatpush1.msra.mxu0 0.0
  %5388 = vmatprep.subr.mxu0 0.0
  %5389 = vmatpush1.msra.mxu0 0.0
  %5390 = vmatprep.subr.mxu0 0.0
  %5391 = vmatpush1.msra.mxu0 0.0
  %5392 = vmatprep.subr.mxu0 0.0
  %5393 = vmatpush1.msra.mxu0 0.0
  %5394 = vmatprep.subr.mxu0 0.0
  %5395 = vmatpush1.msra.mxu0 0.0
  %5396 = vmatprep.subr.mxu0 0.0
  %5397 = vmatpush1.msra.mxu0 0.0
  %5398 = vmatprep.subr.mxu0 0.0
  %5399 = vmatpush1.msra.mxu0 0.0
  %5400 = vmatprep.subr.mxu0 0.0
  %5401 = vmatpush1.msra.mxu0 0.0
  %5402 = vmatprep.subr.mxu0 0.0
  %5403 = vmatpush1.msra.mxu0 0.0
  %5404 = vmatprep.subr.mxu0 0.0
  %5405 = vmatpush1.msra.mxu0 0.0
  %5406 = vmatprep.subr.mxu0 0.0
  %5407 = vmatpush1.msra.mxu0 0.0
  %5408 = vmatprep.subr.mxu0 0.0
  %5409 = vmatpush1.msra.mxu0 0.0
  %5410 = vmatprep.subr.mxu0 0.0
  %5411 = vmatpush1.msra.mxu0 0.0
  %5412 = vmatprep.subr.mxu0 0.0
  %5413 = vmatpush1.msra.mxu0 0.0
  %5414 = vmatprep.subr.mxu0 0.0
  %5415 = vmatpush1.msra.mxu0 0.0
  %5416 = vmatprep.subr.mxu0 0.0
  %5417 = vmatpush1.msra.mxu0 0.0
  %5418 = vmatprep.subr.mxu0 0.0
  %5419 = vmatpush1.msra.mxu0 0.0
  %5420 = vmatprep.subr.mxu0 0.0
  %5421 = vmatpush1.msra.mxu0 0.0
  %5422 = vmatprep.subr.mxu0 0.0
  %5423 = vmatpush1.msra.mxu0 0.0
  %5424 = vmatprep.subr.mxu0 0.0
  %5425 = vmatpush1.msra.mxu0 0.0
  %5426 = vmatprep.subr.mxu0 0.0
  %5427 = vmatpush1.msra.mxu0 0.0
  %5428 = vmatprep.subr.mxu0 0.0
  %5429 = vmatpush1.msra.mxu0 0.0
  %5430 = vmatprep.subr.mxu0 0.0
  %5431 = vmatpush1.msra.mxu0 0.0
  %5432 = vmatprep.subr.mxu0 0.0
  %5433 = vmatpush1.msra.mxu0 0.0
  %5434 = vmatprep.subr.mxu0 0.0
  %5435 = vmatpush1.msra.mxu0 0.0
  %5436 = vmatprep.subr.mxu0 0.0
  %5437 = vmatpush1.msra.mxu0 0.0
  %5438 = vmatprep.mubr.f32.mxu0 0.0
  %5439 = vmatmul.mubr.f32.gmra.mrb[0].mxu0 %v5366
  %v5440 = vpop.f32.mrb[0].mxu0
  %v5441 = vadd.f32 0.0, %v5440
  %v5442 = vpop.f32.mrb[0].mxu0
  %5443 = vmatprep.mubr.f32.mxu0 0.0
  %5444 = vmatmul.mubr.f32.gmra.mrb[0].mxu0 %v5368
  %v5445 = vpop.f32.mrb[0].mxu0
  %v5446 = vadd.f32 0.0, %v5445
  %v5447 = vpop.f32.mrb[0].mxu0
  %5448 = vmatprep.mubr.f32.mxu0 0.0
  %5449 = vmatmul.mubr.f32.gmra.mrb[0].mxu0 %v5370
  %v5450 = vpop.f32.mrb[0].mxu0
  %v5451 = vadd.f32 0.0, %v5450
  %v5452 = vpop.f32.mrb[0].mxu0
  %5453 = vmatprep.mubr.f32.mxu0 0.0
  %5454 = vmatmul.mubr.f32.gmra.mrb[0].mxu0 %v5372
  %v5455 = vpop.f32.mrb[0].mxu0
  %v5456 = vadd.f32 0.0, %v5455
  %v5457 = vpop.f32.mrb[0].mxu0
  %5458 = vdwg.mxu0
  %v5459 = vadd.f32 %v4616, %v5441
  %v5460 = vadd.f32 %v4621, %v5446
  %v5461 = vadd.f32 %v4626, %v5451
  %v5462 = vadd.f32 %v4631, %v5456
  %v5463 = vxor.u32 %v5459, 2147483648
  %v5464 = vxor.u32 %v5460, 2147483648
  %v5465 = vxor.u32 %v5461, 2147483648
  %v5466 = vxor.u32 %v5462, 2147483648
  %v5467 = vmul.f32 %v5463, 1.442695
  %v5468 = vpow.pop %v5467
  %v5469 = vmul.f32 %v5464, 1.442695
  %v5470 = vpow.pop %v5469
  %v5471 = vmul.f32 %v5465, 1.442695
  %v5472 = vpow.pop %v5471
  %v5473 = vmul.f32 %v5466, 1.442695
  %v5474 = vpow.pop %v5473
  %v5475 = vadd.f32 %v5468, 1.0
  %v5476 = vadd.f32 %v5470, 1.0
  %v5477 = vadd.f32 %v5472, 1.0
  %v5478 = vadd.f32 %v5474, 1.0
  %v5479 = vrcp.pop %v5475
  %v5480 = vmul.f32 1.0, %v5479
  %v5481 = vrcp.pop %v5476
  %v5482 = vmul.f32 1.0, %v5481
  %v5483 = vrcp.pop %v5477
  %v5484 = vmul.f32 1.0, %v5483
  %v5485 = vrcp.pop %v5478
  %v5486 = vmul.f32 1.0, %v5485
  %v5487 = vtanh.pop %v5459
  %v5488 = vtanh.pop %v5460
  %v5489 = vtanh.pop %v5461
  %v5490 = vtanh.pop %v5462
  %v5491 = vmul.f32 %v5480, %v5313
  %v5492 = vmul.f32 %v5482, %v5314
  %v5493 = vmul.f32 %v5484, %v5315
  %v5494 = vmul.f32 %v5486, %v5316
  %5499 = vrot.lane.b32.xlu0 %v5487, 64
  %v5500 = vpop.permute.xlu0 %5499
  %5501 = vrot.lane.b32.xlu0 %v5488, 64
  %v5502 = vpop.permute.xlu0 %5501
  %5503 = vrot.lane.b32.xlu0 %v5489, 64
  %v5504 = vpop.permute.xlu0 %5503
  %5505 = vrot.lane.b32.xlu0 %v5490, 64
  %v5506 = vpop.permute.xlu0 %5505
  %v5511 = vmul.f32 %v5480, %v5500
  %v5512 = vmul.f32 %v5482, %v5502
  %v5513 = vmul.f32 %v5484, %v5504
  %v5514 = vmul.f32 %v5486, %v5506
  %5519 = vrot.lane.b32.xlu0 %v5511, 32
  %v5520 = vpop.permute.xlu0 %5519
  %5521 = vrot.lane.b32.xlu0 %v5512, 32
  %v5522 = vpop.permute.xlu0 %5521
  %5523 = vrot.lane.b32.xlu0 %v5513, 32
  %v5524 = vpop.permute.xlu0 %5523
  %5525 = vrot.lane.b32.xlu0 %v5514, 32
  %v5526 = vpop.permute.xlu0 %5525
  %v5531 = vadd.f32 %v5491, %v5520
  %v5532 = vadd.f32 %v5492, %v5522
  %v5533 = vadd.f32 %v5493, %v5524
  %v5534 = vadd.f32 %v5494, %v5526
  %v5535 = vtanh.pop %v5531
  %v5536 = vtanh.pop %v5532
  %v5537 = vtanh.pop %v5533
  %v5538 = vtanh.pop %v5534
  %5543 = vrot.lane.b32.xlu0 %v5535, 64
  %v5544 = vpop.permute.xlu0 %5543
  %5545 = vrot.lane.b32.xlu0 %v5536, 64
  %v5546 = vpop.permute.xlu0 %5545
  %5547 = vrot.lane.b32.xlu0 %v5537, 64
  %v5548 = vpop.permute.xlu0 %5547
  %5549 = vrot.lane.b32.xlu0 %v5538, 64
  %v5550 = vpop.permute.xlu0 %5549
  %v5555 = vmul.f32 %v5480, %v5544
  %v5556 = vmul.f32 %v5482, %v5546
  %v5557 = vmul.f32 %v5484, %v5548
  %v5558 = vmul.f32 %v5486, %v5550
  %5563 = vrot.lane.b32.xlu0 %v5555, 32
  %v5564 = vpop.permute.xlu0 %5563
  %5565 = vrot.lane.b32.xlu0 %v5556, 32
  %v5566 = vpop.permute.xlu0 %5565
  %5567 = vrot.lane.b32.xlu0 %v5557, 32
  %v5568 = vpop.permute.xlu0 %5567
  %5569 = vrot.lane.b32.xlu0 %v5558, 32
  %v5570 = vpop.permute.xlu0 %5569
  %s5575 = scalar_lea.vmem [#allocation2], 96
  %5576 = vst.msk [vmem:[%s5575] sm:$0xff] %vm1356, %v5564
  %5577 = vst.msk [vmem:[%s5575 + $0x8] sm:$0xff] %vm1356, %v5566
  %5578 = vst.msk [vmem:[%s5575 + $0x10] sm:$0xff] %vm1356, %v5568
  %5579 = vst.msk [vmem:[%s5575 + $0x18] sm:$0xff] %vm1356, %v5570
  %v5580 = vld [vmem:[%s9] sm:$0xff]
  %v5581 = vld [vmem:[%s9 + $0x8] sm:$0xff]
  %v5582 = vld [vmem:[%s9 + $0x10] sm:$0xff]
  %v5583 = vld [vmem:[%s9 + $0x18] sm:$0xff]
  %v5584 = vsel %vm1356, %v5564, 0
  %v5586 = vsel %vm1356, %v5566, 0
  %v5588 = vsel %vm1356, %v5568, 0
  %v5590 = vsel %vm1356, %v5570, 0
  %5592 = vmatprep.subr.mxu0 0.0
  %5593 = vmatpush1.msra.mxu0 %v5580
  %5594 = vmatprep.subr.mxu0 0.0
  %5595 = vmatpush1.msra.mxu0 %v5581
  %5596 = vmatprep.subr.mxu0 0.0
  %5597 = vmatpush1.msra.mxu0 %v5582
  %5598 = vmatprep.subr.mxu0 0.0
  %5599 = vmatpush1.msra.mxu0 %v5583
  %5600 = vmatprep.subr.mxu0 0.0
  %5601 = vmatpush1.msra.mxu0 0.0
  %5602 = vmatprep.subr.mxu0 0.0
  %5603 = vmatpush1.msra.mxu0 0.0
  %5604 = vmatprep.subr.mxu0 0.0
  %5605 = vmatpush1.msra.mxu0 0.0
  %5606 = vmatprep.subr.mxu0 0.0
  %5607 = vmatpush1.msra.mxu0 0.0
  %5608 = vmatprep.subr.mxu0 0.0
  %5609 = vmatpush1.msra.mxu0 0.0
  %5610 = vmatprep.subr.mxu0 0.0
  %5611 = vmatpush1.msra.mxu0 0.0
  %5612 = vmatprep.subr.mxu0 0.0
  %5613 = vmatpush1.msra.mxu0 0.0
  %5614 = vmatprep.subr.mxu0 0.0
  %5615 = vmatpush1.msra.mxu0 0.0
  %5616 = vmatprep.subr.mxu0 0.0
  %5617 = vmatpush1.msra.mxu0 0.0
  %5618 = vmatprep.subr.mxu0 0.0
  %5619 = vmatpush1.msra.mxu0 0.0
  %5620 = vmatprep.subr.mxu0 0.0
  %5621 = vmatpush1.msra.mxu0 0.0
  %5622 = vmatprep.subr.mxu0 0.0
  %5623 = vmatpush1.msra.mxu0 0.0
  %5624 = vmatprep.subr.mxu0 0.0
  %5625 = vmatpush1.msra.mxu0 0.0
  %5626 = vmatprep.subr.mxu0 0.0
  %5627 = vmatpush1.msra.mxu0 0.0
  %5628 = vmatprep.subr.mxu0 0.0
  %5629 = vmatpush1.msra.mxu0 0.0
  %5630 = vmatprep.subr.mxu0 0.0
  %5631 = vmatpush1.msra.mxu0 0.0
  %5632 = vmatprep.subr.mxu0 0.0
  %5633 = vmatpush1.msra.mxu0 0.0
  %5634 = vmatprep.subr.mxu0 0.0
  %5635 = vmatpush1.msra.mxu0 0.0
  %5636 = vmatprep.subr.mxu0 0.0
  %5637 = vmatpush1.msra.mxu0 0.0
  %5638 = vmatprep.subr.mxu0 0.0
  %5639 = vmatpush1.msra.mxu0 0.0
  %5640 = vmatprep.subr.mxu0 0.0
  %5641 = vmatpush1.msra.mxu0 0.0
  %5642 = vmatprep.subr.mxu0 0.0
  %5643 = vmatpush1.msra.mxu0 0.0
  %5644 = vmatprep.subr.mxu0 0.0
  %5645 = vmatpush1.msra.mxu0 0.0
  %5646 = vmatprep.subr.mxu0 0.0
  %5647 = vmatpush1.msra.mxu0 0.0
  %5648 = vmatprep.subr.mxu0 0.0
  %5649 = vmatpush1.msra.mxu0 0.0
  %5650 = vmatprep.subr.mxu0 0.0
  %5651 = vmatpush1.msra.mxu0 0.0
  %5652 = vmatprep.subr.mxu0 0.0
  %5653 = vmatpush1.msra.mxu0 0.0
  %5654 = vmatprep.subr.mxu0 0.0
  %5655 = vmatpush1.msra.mxu0 0.0
  %5656 = vmatprep.mubr.f32.mxu0 0.0
  %5657 = vmatmul.mubr.f32.gmra.mrb[0].mxu0 %v5584
  %v5658 = vpop.f32.mrb[0].mxu0
  %v5659 = vadd.f32 0.0, %v5658
  %v5660 = vpop.f32.mrb[0].mxu0
  %5661 = vmatprep.mubr.f32.mxu0 0.0
  %5662 = vmatmul.mubr.f32.gmra.mrb[0].mxu0 %v5586
  %v5663 = vpop.f32.mrb[0].mxu0
  %v5664 = vadd.f32 0.0, %v5663
  %v5665 = vpop.f32.mrb[0].mxu0
  %5666 = vmatprep.mubr.f32.mxu0 0.0
  %5667 = vmatmul.mubr.f32.gmra.mrb[0].mxu0 %v5588
  %v5668 = vpop.f32.mrb[0].mxu0
  %v5669 = vadd.f32 0.0, %v5668
  %v5670 = vpop.f32.mrb[0].mxu0
  %5671 = vmatprep.mubr.f32.mxu0 0.0
  %5672 = vmatmul.mubr.f32.gmra.mrb[0].mxu0 %v5590
  %v5673 = vpop.f32.mrb[0].mxu0
  %v5674 = vadd.f32 0.0, %v5673
  %v5675 = vpop.f32.mrb[0].mxu0
  %5676 = vdwg.mxu0
  %v5677 = vadd.f32 %v4636, %v5659
  %v5678 = vadd.f32 %v4641, %v5664
  %v5679 = vadd.f32 %v4646, %v5669
  %v5680 = vadd.f32 %v4651, %v5674
  %v5681 = vxor.u32 %v5677, 2147483648
  %v5682 = vxor.u32 %v5678, 2147483648
  %v5683 = vxor.u32 %v5679, 2147483648
  %v5684 = vxor.u32 %v5680, 2147483648
  %v5685 = vmul.f32 %v5681, 1.442695
  %v5686 = vpow.pop %v5685
  %v5687 = vmul.f32 %v5682, 1.442695
  %v5688 = vpow.pop %v5687
  %v5689 = vmul.f32 %v5683, 1.442695
  %v5690 = vpow.pop %v5689
  %v5691 = vmul.f32 %v5684, 1.442695
  %v5692 = vpow.pop %v5691
  %v5693 = vadd.f32 %v5686, 1.0
  %v5694 = vadd.f32 %v5688, 1.0
  %v5695 = vadd.f32 %v5690, 1.0
  %v5696 = vadd.f32 %v5692, 1.0
  %v5697 = vrcp.pop %v5693
  %v5698 = vmul.f32 1.0, %v5697
  %v5699 = vrcp.pop %v5694
  %v5700 = vmul.f32 1.0, %v5699
  %v5701 = vrcp.pop %v5695
  %v5702 = vmul.f32 1.0, %v5701
  %v5703 = vrcp.pop %v5696
  %v5704 = vmul.f32 1.0, %v5703
  %v5705 = vtanh.pop %v5677
  %v5706 = vtanh.pop %v5678
  %v5707 = vtanh.pop %v5679
  %v5708 = vtanh.pop %v5680
  %v5709 = vmul.f32 %v5698, %v5531
  %v5710 = vmul.f32 %v5700, %v5532
  %v5711 = vmul.f32 %v5702, %v5533
  %v5712 = vmul.f32 %v5704, %v5534
  %5717 = vrot.lane.b32.xlu0 %v5705, 64
  %v5718 = vpop.permute.xlu0 %5717
  %5719 = vrot.lane.b32.xlu0 %v5706, 64
  %v5720 = vpop.permute.xlu0 %5719
  %5721 = vrot.lane.b32.xlu0 %v5707, 64
  %v5722 = vpop.permute.xlu0 %5721
  %5723 = vrot.lane.b32.xlu0 %v5708, 64
  %v5724 = vpop.permute.xlu0 %5723
  %v5729 = vmul.f32 %v5698, %v5718
  %v5730 = vmul.f32 %v5700, %v5720
  %v5731 = vmul.f32 %v5702, %v5722
  %v5732 = vmul.f32 %v5704, %v5724
  %5737 = vrot.lane.b32.xlu0 %v5729, 32
  %v5738 = vpop.permute.xlu0 %5737
  %5739 = vrot.lane.b32.xlu0 %v5730, 32
  %v5740 = vpop.permute.xlu0 %5739
  %5741 = vrot.lane.b32.xlu0 %v5731, 32
  %v5742 = vpop.permute.xlu0 %5741
  %5743 = vrot.lane.b32.xlu0 %v5732, 32
  %v5744 = vpop.permute.xlu0 %5743
  %v5749 = vadd.f32 %v5709, %v5738
  %v5750 = vadd.f32 %v5710, %v5740
  %v5751 = vadd.f32 %v5711, %v5742
  %v5752 = vadd.f32 %v5712, %v5744
  %v5753 = vtanh.pop %v5749
  %v5754 = vtanh.pop %v5750
  %v5755 = vtanh.pop %v5751
  %v5756 = vtanh.pop %v5752
  %5761 = vrot.lane.b32.xlu0 %v5753, 64
  %v5762 = vpop.permute.xlu0 %5761
  %5763 = vrot.lane.b32.xlu0 %v5754, 64
  %v5764 = vpop.permute.xlu0 %5763
  %5765 = vrot.lane.b32.xlu0 %v5755, 64
  %v5766 = vpop.permute.xlu0 %5765
  %5767 = vrot.lane.b32.xlu0 %v5756, 64
  %v5768 = vpop.permute.xlu0 %5767
  %v5773 = vmul.f32 %v5698, %v5762
  %v5774 = vmul.f32 %v5700, %v5764
  %v5775 = vmul.f32 %v5702, %v5766
  %v5776 = vmul.f32 %v5704, %v5768
  %5781 = vrot.lane.b32.xlu0 %v5773, 32
  %v5782 = vpop.permute.xlu0 %5781
  %5783 = vrot.lane.b32.xlu0 %v5774, 32
  %v5784 = vpop.permute.xlu0 %5783
  %5785 = vrot.lane.b32.xlu0 %v5775, 32
  %v5786 = vpop.permute.xlu0 %5785
  %5787 = vrot.lane.b32.xlu0 %v5776, 32
  %v5788 = vpop.permute.xlu0 %5787
  %s5793 = scalar_lea.vmem [#allocation2], 128
  %5794 = vst.msk [vmem:[%s5793] sm:$0xff] %vm1356, %v5782
  %5795 = vst.msk [vmem:[%s5793 + $0x8] sm:$0xff] %vm1356, %v5784
  %5796 = vst.msk [vmem:[%s5793 + $0x10] sm:$0xff] %vm1356, %v5786
  %5797 = vst.msk [vmem:[%s5793 + $0x18] sm:$0xff] %vm1356, %v5788
  %v5798 = vld [vmem:[%s9] sm:$0xff]
  %v5799 = vld [vmem:[%s9 + $0x8] sm:$0xff]
  %v5800 = vld [vmem:[%s9 + $0x10] sm:$0xff]
  %v5801 = vld [vmem:[%s9 + $0x18] sm:$0xff]
  %v5802 = vsel %vm1356, %v5782, 0
  %v5804 = vsel %vm1356, %v5784, 0
  %v5806 = vsel %vm1356, %v5786, 0
  %v5808 = vsel %vm1356, %v5788, 0
  %5810 = vmatprep.subr.mxu0 0.0
  %5811 = vmatpush1.msra.mxu0 %v5798
  %5812 = vmatprep.subr.mxu0 0.0
  %5813 = vmatpush1.msra.mxu0 %v5799
  %5814 = vmatprep.subr.mxu0 0.0
  %5815 = vmatpush1.msra.mxu0 %v5800
  %5816 = vmatprep.subr.mxu0 0.0
  %5817 = vmatpush1.msra.mxu0 %v5801
  %5818 = vmatprep.subr.mxu0 0.0
  %5819 = vmatpush1.msra.mxu0 0.0
  %5820 = vmatprep.subr.mxu0 0.0
  %5821 = vmatpush1.msra.mxu0 0.0
  %5822 = vmatprep.subr.mxu0 0.0
  %5823 = vmatpush1.msra.mxu0 0.0
  %5824 = vmatprep.subr.mxu0 0.0
  %5825 = vmatpush1.msra.mxu0 0.0
  %5826 = vmatprep.subr.mxu0 0.0
  %5827 = vmatpush1.msra.mxu0 0.0
  %5828 = vmatprep.subr.mxu0 0.0
  %5829 = vmatpush1.msra.mxu0 0.0
  %5830 = vmatprep.subr.mxu0 0.0
  %5831 = vmatpush1.msra.mxu0 0.0
  %5832 = vmatprep.subr.mxu0 0.0
  %5833 = vmatpush1.msra.mxu0 0.0
  %5834 = vmatprep.subr.mxu0 0.0
  %5835 = vmatpush1.msra.mxu0 0.0
  %5836 = vmatprep.subr.mxu0 0.0
  %5837 = vmatpush1.msra.mxu0 0.0
  %5838 = vmatprep.subr.mxu0 0.0
  %5839 = vmatpush1.msra.mxu0 0.0
  %5840 = vmatprep.subr.mxu0 0.0
  %5841 = vmatpush1.msra.mxu0 0.0
  %5842 = vmatprep.subr.mxu0 0.0
  %5843 = vmatpush1.msra.mxu0 0.0
  %5844 = vmatprep.subr.mxu0 0.0
  %5845 = vmatpush1.msra.mxu0 0.0
  %5846 = vmatprep.subr.mxu0 0.0
  %5847 = vmatpush1.msra.mxu0 0.0
  %5848 = vmatprep.subr.mxu0 0.0
  %5849 = vmatpush1.msra.mxu0 0.0
  %5850 = vmatprep.subr.mxu0 0.0
  %5851 = vmatpush1.msra.mxu0 0.0
  %5852 = vmatprep.subr.mxu0 0.0
  %5853 = vmatpush1.msra.mxu0 0.0
  %5854 = vmatprep.subr.mxu0 0.0
  %5855 = vmatpush1.msra.mxu0 0.0
  %5856 = vmatprep.subr.mxu0 0.0
  %5857 = vmatpush1.msra.mxu0 0.0
  %5858 = vmatprep.subr.mxu0 0.0
  %5859 = vmatpush1.msra.mxu0 0.0
  %5860 = vmatprep.subr.mxu0 0.0
  %5861 = vmatpush1.msra.mxu0 0.0
  %5862 = vmatprep.subr.mxu0 0.0
  %5863 = vmatpush1.msra.mxu0 0.0
  %5864 = vmatprep.subr.mxu0 0.0
  %5865 = vmatpush1.msra.mxu0 0.0
  %5866 = vmatprep.subr.mxu0 0.0
  %5867 = vmatpush1.msra.mxu0 0.0
  %5868 = vmatprep.subr.mxu0 0.0
  %5869 = vmatpush1.msra.mxu0 0.0
  %5870 = vmatprep.subr.mxu0 0.0
  %5871 = vmatpush1.msra.mxu0 0.0
  %5872 = vmatprep.subr.mxu0 0.0
  %5873 = vmatpush1.msra.mxu0 0.0
  %5874 = vmatprep.mubr.f32.mxu0 0.0
  %5875 = vmatmul.mubr.f32.gmra.mrb[0].mxu0 %v5802
  %v5876 = vpop.f32.mrb[0].mxu0
  %v5877 = vadd.f32 0.0, %v5876
  %v5878 = vpop.f32.mrb[0].mxu0
  %5879 = vmatprep.mubr.f32.mxu0 0.0
  %5880 = vmatmul.mubr.f32.gmra.mrb[0].mxu0 %v5804
  %v5881 = vpop.f32.mrb[0].mxu0
  %v5882 = vadd.f32 0.0, %v5881
  %v5883 = vpop.f32.mrb[0].mxu0
  %5884 = vmatprep.mubr.f32.mxu0 0.0
  %5885 = vmatmul.mubr.f32.gmra.mrb[0].mxu0 %v5806
  %v5886 = vpop.f32.mrb[0].mxu0
  %v5887 = vadd.f32 0.0, %v5886
  %v5888 = vpop.f32.mrb[0].mxu0
  %5889 = vmatprep.mubr.f32.mxu0 0.0
  %5890 = vmatmul.mubr.f32.gmra.mrb[0].mxu0 %v5808
  %v5891 = vpop.f32.mrb[0].mxu0
  %v5892 = vadd.f32 0.0, %v5891
  %v5893 = vpop.f32.mrb[0].mxu0
  %5894 = vdwg.mxu0
  %v5895 = vadd.f32 %v4656, %v5877
  %v5896 = vadd.f32 %v4661, %v5882
  %v5897 = vadd.f32 %v4666, %v5887
  %v5898 = vadd.f32 %v4671, %v5892
  %v5899 = vxor.u32 %v5895, 2147483648
  %v5900 = vxor.u32 %v5896, 2147483648
  %v5901 = vxor.u32 %v5897, 2147483648
  %v5902 = vxor.u32 %v5898, 2147483648
  %v5903 = vmul.f32 %v5899, 1.442695
  %v5904 = vpow.pop %v5903
  %v5905 = vmul.f32 %v5900, 1.442695
  %v5906 = vpow.pop %v5905
  %v5907 = vmul.f32 %v5901, 1.442695
  %v5908 = vpow.pop %v5907
  %v5909 = vmul.f32 %v5902, 1.442695
  %v5910 = vpow.pop %v5909
  %v5911 = vadd.f32 %v5904, 1.0
  %v5912 = vadd.f32 %v5906, 1.0
  %v5913 = vadd.f32 %v5908, 1.0
  %v5914 = vadd.f32 %v5910, 1.0
  %v5915 = vrcp.pop %v5911
  %v5916 = vmul.f32 1.0, %v5915
  %v5917 = vrcp.pop %v5912
  %v5918 = vmul.f32 1.0, %v5917
  %v5919 = vrcp.pop %v5913
  %v5920 = vmul.f32 1.0, %v5919
  %v5921 = vrcp.pop %v5914
  %v5922 = vmul.f32 1.0, %v5921
  %v5923 = vtanh.pop %v5895
  %v5924 = vtanh.pop %v5896
  %v5925 = vtanh.pop %v5897
  %v5926 = vtanh.pop %v5898
  %v5927 = vmul.f32 %v5916, %v5749
  %v5928 = vmul.f32 %v5918, %v5750
  %v5929 = vmul.f32 %v5920, %v5751
  %v5930 = vmul.f32 %v5922, %v5752
  %5935 = vrot.lane.b32.xlu0 %v5923, 64
  %v5936 = vpop.permute.xlu0 %5935
  %5937 = vrot.lane.b32.xlu0 %v5924, 64
  %v5938 = vpop.permute.xlu0 %5937
  %5939 = vrot.lane.b32.xlu0 %v5925, 64
  %v5940 = vpop.permute.xlu0 %5939
  %5941 = vrot.lane.b32.xlu0 %v5926, 64
  %v5942 = vpop.permute.xlu0 %5941
  %v5947 = vmul.f32 %v5916, %v5936
  %v5948 = vmul.f32 %v5918, %v5938
  %v5949 = vmul.f32 %v5920, %v5940
  %v5950 = vmul.f32 %v5922, %v5942
  %5955 = vrot.lane.b32.xlu0 %v5947, 32
  %v5956 = vpop.permute.xlu0 %5955
  %5957 = vrot.lane.b32.xlu0 %v5948, 32
  %v5958 = vpop.permute.xlu0 %5957
  %5959 = vrot.lane.b32.xlu0 %v5949, 32
  %v5960 = vpop.permute.xlu0 %5959
  %5961 = vrot.lane.b32.xlu0 %v5950, 32
  %v5962 = vpop.permute.xlu0 %5961
  %v5967 = vadd.f32 %v5927, %v5956
  %v5968 = vadd.f32 %v5928, %v5958
  %v5969 = vadd.f32 %v5929, %v5960
  %v5970 = vadd.f32 %v5930, %v5962
  %v5971 = vtanh.pop %v5967
  %v5972 = vtanh.pop %v5968
  %v5973 = vtanh.pop %v5969
  %v5974 = vtanh.pop %v5970
  %5979 = vrot.lane.b32.xlu0 %v5971, 64
  %v5980 = vpop.permute.xlu0 %5979
  %5981 = vrot.lane.b32.xlu0 %v5972, 64
  %v5982 = vpop.permute.xlu0 %5981
  %5983 = vrot.lane.b32.xlu0 %v5973, 64
  %v5984 = vpop.permute.xlu0 %5983
  %5985 = vrot.lane.b32.xlu0 %v5974, 64
  %v5986 = vpop.permute.xlu0 %5985
  %v5991 = vmul.f32 %v5916, %v5980
  %v5992 = vmul.f32 %v5918, %v5982
  %v5993 = vmul.f32 %v5920, %v5984
  %v5994 = vmul.f32 %v5922, %v5986
  %5999 = vrot.lane.b32.xlu0 %v5991, 32
  %v6000 = vpop.permute.xlu0 %5999
  %6001 = vrot.lane.b32.xlu0 %v5992, 32
  %v6002 = vpop.permute.xlu0 %6001
  %6003 = vrot.lane.b32.xlu0 %v5993, 32
  %v6004 = vpop.permute.xlu0 %6003
  %6005 = vrot.lane.b32.xlu0 %v5994, 32
  %v6006 = vpop.permute.xlu0 %6005
  %s6011 = scalar_lea.vmem [#allocation2], 160
  %6012 = vst.msk [vmem:[%s6011] sm:$0xff] %vm1356, %v6000
  %6013 = vst.msk [vmem:[%s6011 + $0x8] sm:$0xff] %vm1356, %v6002
  %6014 = vst.msk [vmem:[%s6011 + $0x10] sm:$0xff] %vm1356, %v6004
  %6015 = vst.msk [vmem:[%s6011 + $0x18] sm:$0xff] %vm1356, %v6006
  %v6016 = vld [vmem:[%s9] sm:$0xff]
  %v6017 = vld [vmem:[%s9 + $0x8] sm:$0xff]
  %v6018 = vld [vmem:[%s9 + $0x10] sm:$0xff]
  %v6019 = vld [vmem:[%s9 + $0x18] sm:$0xff]
  %v6020 = vsel %vm1356, %v6000, 0
  %v6022 = vsel %vm1356, %v6002, 0
  %v6024 = vsel %vm1356, %v6004, 0
  %v6026 = vsel %vm1356, %v6006, 0
  %6028 = vmatprep.subr.mxu0 0.0
  %6029 = vmatpush1.msra.mxu0 %v6016
  %6030 = vmatprep.subr.mxu0 0.0
  %6031 = vmatpush1.msra.mxu0 %v6017
  %6032 = vmatprep.subr.mxu0 0.0
  %6033 = vmatpush1.msra.mxu0 %v6018
  %6034 = vmatprep.subr.mxu0 0.0
  %6035 = vmatpush1.msra.mxu0 %v6019
  %6036 = vmatprep.subr.mxu0 0.0
  %6037 = vmatpush1.msra.mxu0 0.0
  %6038 = vmatprep.subr.mxu0 0.0
  %6039 = vmatpush1.msra.mxu0 0.0
  %6040 = vmatprep.subr.mxu0 0.0
  %6041 = vmatpush1.msra.mxu0 0.0
  %6042 = vmatprep.subr.mxu0 0.0
  %6043 = vmatpush1.msra.mxu0 0.0
  %6044 = vmatprep.subr.mxu0 0.0
  %6045 = vmatpush1.msra.mxu0 0.0
  %6046 = vmatprep.subr.mxu0 0.0
  %6047 = vmatpush1.msra.mxu0 0.0
  %6048 = vmatprep.subr.mxu0 0.0
  %6049 = vmatpush1.msra.mxu0 0.0
  %6050 = vmatprep.subr.mxu0 0.0
  %6051 = vmatpush1.msra.mxu0 0.0
  %6052 = vmatprep.subr.mxu0 0.0
  %6053 = vmatpush1.msra.mxu0 0.0
  %6054 = vmatprep.subr.mxu0 0.0
  %6055 = vmatpush1.msra.mxu0 0.0
  %6056 = vmatprep.subr.mxu0 0.0
  %6057 = vmatpush1.msra.mxu0 0.0
  %6058 = vmatprep.subr.mxu0 0.0
  %6059 = vmatpush1.msra.mxu0 0.0
  %6060 = vmatprep.subr.mxu0 0.0
  %6061 = vmatpush1.msra.mxu0 0.0
  %6062 = vmatprep.subr.mxu0 0.0
  %6063 = vmatpush1.msra.mxu0 0.0
  %6064 = vmatprep.subr.mxu0 0.0
  %6065 = vmatpush1.msra.mxu0 0.0
  %6066 = vmatprep.subr.mxu0 0.0
  %6067 = vmatpush1.msra.mxu0 0.0
  %6068 = vmatprep.subr.mxu0 0.0
  %6069 = vmatpush1.msra.mxu0 0.0
  %6070 = vmatprep.subr.mxu0 0.0
  %6071 = vmatpush1.msra.mxu0 0.0
  %6072 = vmatprep.subr.mxu0 0.0
  %6073 = vmatpush1.msra.mxu0 0.0
  %6074 = vmatprep.subr.mxu0 0.0
  %6075 = vmatpush1.msra.mxu0 0.0
  %6076 = vmatprep.subr.mxu0 0.0
  %6077 = vmatpush1.msra.mxu0 0.0
  %6078 = vmatprep.subr.mxu0 0.0
  %6079 = vmatpush1.msra.mxu0 0.0
  %6080 = vmatprep.subr.mxu0 0.0
  %6081 = vmatpush1.msra.mxu0 0.0
  %6082 = vmatprep.subr.mxu0 0.0
  %6083 = vmatpush1.msra.mxu0 0.0
  %6084 = vmatprep.subr.mxu0 0.0
  %6085 = vmatpush1.msra.mxu0 0.0
  %6086 = vmatprep.subr.mxu0 0.0
  %6087 = vmatpush1.msra.mxu0 0.0
  %6088 = vmatprep.subr.mxu0 0.0
  %6089 = vmatpush1.msra.mxu0 0.0
  %6090 = vmatprep.subr.mxu0 0.0
  %6091 = vmatpush1.msra.mxu0 0.0
  %6092 = vmatprep.mubr.f32.mxu0 0.0
  %6093 = vmatmul.mubr.f32.gmra.mrb[0].mxu0 %v6020
  %v6094 = vpop.f32.mrb[0].mxu0
  %v6095 = vadd.f32 0.0, %v6094
  %v6096 = vpop.f32.mrb[0].mxu0
  %6097 = vmatprep.mubr.f32.mxu0 0.0
  %6098 = vmatmul.mubr.f32.gmra.mrb[0].mxu0 %v6022
  %v6099 = vpop.f32.mrb[0].mxu0
  %v6100 = vadd.f32 0.0, %v6099
  %v6101 = vpop.f32.mrb[0].mxu0
  %6102 = vmatprep.mubr.f32.mxu0 0.0
  %6103 = vmatmul.mubr.f32.gmra.mrb[0].mxu0 %v6024
  %v6104 = vpop.f32.mrb[0].mxu0
  %v6105 = vadd.f32 0.0, %v6104
  %v6106 = vpop.f32.mrb[0].mxu0
  %6107 = vmatprep.mubr.f32.mxu0 0.0
  %6108 = vmatmul.mubr.f32.gmra.mrb[0].mxu0 %v6026
  %v6109 = vpop.f32.mrb[0].mxu0
  %v6110 = vadd.f32 0.0, %v6109
  %v6111 = vpop.f32.mrb[0].mxu0
  %6112 = vdwg.mxu0
  %v6113 = vadd.f32 %v4676, %v6095
  %v6114 = vadd.f32 %v4681, %v6100
  %v6115 = vadd.f32 %v4686, %v6105
  %v6116 = vadd.f32 %v4691, %v6110
  %v6117 = vxor.u32 %v6113, 2147483648
  %v6118 = vxor.u32 %v6114, 2147483648
  %v6119 = vxor.u32 %v6115, 2147483648
  %v6120 = vxor.u32 %v6116, 2147483648
  %v6121 = vmul.f32 %v6117, 1.442695
  %v6122 = vpow.pop %v6121
  %v6123 = vmul.f32 %v6118, 1.442695
  %v6124 = vpow.pop %v6123
  %v6125 = vmul.f32 %v6119, 1.442695
  %v6126 = vpow.pop %v6125
  %v6127 = vmul.f32 %v6120, 1.442695
  %v6128 = vpow.pop %v6127
  %v6129 = vadd.f32 %v6122, 1.0
  %v6130 = vadd.f32 %v6124, 1.0
  %v6131 = vadd.f32 %v6126, 1.0
  %v6132 = vadd.f32 %v6128, 1.0
  %v6133 = vrcp.pop %v6129
  %v6134 = vmul.f32 1.0, %v6133
  %v6135 = vrcp.pop %v6130
  %v6136 = vmul.f32 1.0, %v6135
  %v6137 = vrcp.pop %v6131
  %v6138 = vmul.f32 1.0, %v6137
  %v6139 = vrcp.pop %v6132
  %v6140 = vmul.f32 1.0, %v6139
  %v6141 = vtanh.pop %v6113
  %v6142 = vtanh.pop %v6114
  %v6143 = vtanh.pop %v6115
  %v6144 = vtanh.pop %v6116
  %v6145 = vmul.f32 %v6134, %v5967
  %v6146 = vmul.f32 %v6136, %v5968
  %v6147 = vmul.f32 %v6138, %v5969
  %v6148 = vmul.f32 %v6140, %v5970
  %6153 = vrot.lane.b32.xlu0 %v6141, 64
  %v6154 = vpop.permute.xlu0 %6153
  %6155 = vrot.lane.b32.xlu0 %v6142, 64
  %v6156 = vpop.permute.xlu0 %6155
  %6157 = vrot.lane.b32.xlu0 %v6143, 64
  %v6158 = vpop.permute.xlu0 %6157
  %6159 = vrot.lane.b32.xlu0 %v6144, 64
  %v6160 = vpop.permute.xlu0 %6159
  %v6165 = vmul.f32 %v6134, %v6154
  %v6166 = vmul.f32 %v6136, %v6156
  %v6167 = vmul.f32 %v6138, %v6158
  %v6168 = vmul.f32 %v6140, %v6160
  %6173 = vrot.lane.b32.xlu0 %v6165, 32
  %v6174 = vpop.permute.xlu0 %6173
  %6175 = vrot.lane.b32.xlu0 %v6166, 32
  %v6176 = vpop.permute.xlu0 %6175
  %6177 = vrot.lane.b32.xlu0 %v6167, 32
  %v6178 = vpop.permute.xlu0 %6177
  %6179 = vrot.lane.b32.xlu0 %v6168, 32
  %v6180 = vpop.permute.xlu0 %6179
  %v6185 = vadd.f32 %v6145, %v6174
  %v6186 = vadd.f32 %v6146, %v6176
  %v6187 = vadd.f32 %v6147, %v6178
  %v6188 = vadd.f32 %v6148, %v6180
  %v6189 = vtanh.pop %v6185
  %v6190 = vtanh.pop %v6186
  %v6191 = vtanh.pop %v6187
  %v6192 = vtanh.pop %v6188
  %6197 = vrot.lane.b32.xlu0 %v6189, 64
  %v6198 = vpop.permute.xlu0 %6197
  %6199 = vrot.lane.b32.xlu0 %v6190, 64
  %v6200 = vpop.permute.xlu0 %6199
  %6201 = vrot.lane.b32.xlu0 %v6191, 64
  %v6202 = vpop.permute.xlu0 %6201
  %6203 = vrot.lane.b32.xlu0 %v6192, 64
  %v6204 = vpop.permute.xlu0 %6203
  %v6209 = vmul.f32 %v6134, %v6198
  %v6210 = vmul.f32 %v6136, %v6200
  %v6211 = vmul.f32 %v6138, %v6202
  %v6212 = vmul.f32 %v6140, %v6204
  %6217 = vrot.lane.b32.xlu0 %v6209, 32
  %v6218 = vpop.permute.xlu0 %6217
  %6219 = vrot.lane.b32.xlu0 %v6210, 32
  %v6220 = vpop.permute.xlu0 %6219
  %6221 = vrot.lane.b32.xlu0 %v6211, 32
  %v6222 = vpop.permute.xlu0 %6221
  %6223 = vrot.lane.b32.xlu0 %v6212, 32
  %v6224 = vpop.permute.xlu0 %6223
  %s6229 = scalar_lea.vmem [#allocation2], 192
  %6230 = vst.msk [vmem:[%s6229] sm:$0xff] %vm1356, %v6218
  %6231 = vst.msk [vmem:[%s6229 + $0x8] sm:$0xff] %vm1356, %v6220
  %6232 = vst.msk [vmem:[%s6229 + $0x10] sm:$0xff] %vm1356, %v6222
  %6233 = vst.msk [vmem:[%s6229 + $0x18] sm:$0xff] %vm1356, %v6224
  %v6234 = vld [vmem:[%s9] sm:$0xff]
  %v6235 = vld [vmem:[%s9 + $0x8] sm:$0xff]
  %v6236 = vld [vmem:[%s9 + $0x10] sm:$0xff]
  %v6237 = vld [vmem:[%s9 + $0x18] sm:$0xff]
  %v6238 = vsel %vm1356, %v6218, 0
  %v6240 = vsel %vm1356, %v6220, 0
  %v6242 = vsel %vm1356, %v6222, 0
  %v6244 = vsel %vm1356, %v6224, 0
  %6246 = vmatprep.subr.mxu0 0.0
  %6247 = vmatpush1.msra.mxu0 %v6234
  %6248 = vmatprep.subr.mxu0 0.0
  %6249 = vmatpush1.msra.mxu0 %v6235
  %6250 = vmatprep.subr.mxu0 0.0
  %6251 = vmatpush1.msra.mxu0 %v6236
  %6252 = vmatprep.subr.mxu0 0.0
  %6253 = vmatpush1.msra.mxu0 %v6237
  %6254 = vmatprep.subr.mxu0 0.0
  %6255 = vmatpush1.msra.mxu0 0.0
  %6256 = vmatprep.subr.mxu0 0.0
  %6257 = vmatpush1.msra.mxu0 0.0
  %6258 = vmatprep.subr.mxu0 0.0
  %6259 = vmatpush1.msra.mxu0 0.0
  %6260 = vmatprep.subr.mxu0 0.0
  %6261 = vmatpush1.msra.mxu0 0.0
  %6262 = vmatprep.subr.mxu0 0.0
  %6263 = vmatpush1.msra.mxu0 0.0
  %6264 = vmatprep.subr.mxu0 0.0
  %6265 = vmatpush1.msra.mxu0 0.0
  %6266 = vmatprep.subr.mxu0 0.0
  %6267 = vmatpush1.msra.mxu0 0.0
  %6268 = vmatprep.subr.mxu0 0.0
  %6269 = vmatpush1.msra.mxu0 0.0
  %6270 = vmatprep.subr.mxu0 0.0
  %6271 = vmatpush1.msra.mxu0 0.0
  %6272 = vmatprep.subr.mxu0 0.0
  %6273 = vmatpush1.msra.mxu0 0.0
  %6274 = vmatprep.subr.mxu0 0.0
  %6275 = vmatpush1.msra.mxu0 0.0
  %6276 = vmatprep.subr.mxu0 0.0
  %6277 = vmatpush1.msra.mxu0 0.0
  %6278 = vmatprep.subr.mxu0 0.0
  %6279 = vmatpush1.msra.mxu0 0.0
  %6280 = vmatprep.subr.mxu0 0.0
  %6281 = vmatpush1.msra.mxu0 0.0
  %6282 = vmatprep.subr.mxu0 0.0
  %6283 = vmatpush1.msra.mxu0 0.0
  %6284 = vmatprep.subr.mxu0 0.0
  %6285 = vmatpush1.msra.mxu0 0.0
  %6286 = vmatprep.subr.mxu0 0.0
  %6287 = vmatpush1.msra.mxu0 0.0
  %6288 = vmatprep.subr.mxu0 0.0
  %6289 = vmatpush1.msra.mxu0 0.0
  %6290 = vmatprep.subr.mxu0 0.0
  %6291 = vmatpush1.msra.mxu0 0.0
  %6292 = vmatprep.subr.mxu0 0.0
  %6293 = vmatpush1.msra.mxu0 0.0
  %6294 = vmatprep.subr.mxu0 0.0
  %6295 = vmatpush1.msra.mxu0 0.0
  %6296 = vmatprep.subr.mxu0 0.0
  %6297 = vmatpush1.msra.mxu0 0.0
  %6298 = vmatprep.subr.mxu0 0.0
  %6299 = vmatpush1.msra.mxu0 0.0
  %6300 = vmatprep.subr.mxu0 0.0
  %6301 = vmatpush1.msra.mxu0 0.0
  %6302 = vmatprep.subr.mxu0 0.0
  %6303 = vmatpush1.msra.mxu0 0.0
  %6304 = vmatprep.subr.mxu0 0.0
  %6305 = vmatpush1.msra.mxu0 0.0
  %6306 = vmatprep.subr.mxu0 0.0
  %6307 = vmatpush1.msra.mxu0 0.0
  %6308 = vmatprep.subr.mxu0 0.0
  %6309 = vmatpush1.msra.mxu0 0.0
  %6310 = vmatprep.mubr.f32.mxu0 0.0
  %6311 = vmatmul.mubr.f32.gmra.mrb[0].mxu0 %v6238
  %v6312 = vpop.f32.mrb[0].mxu0
  %v6313 = vadd.f32 0.0, %v6312
  %v6314 = vpop.f32.mrb[0].mxu0
  %6315 = vmatprep.mubr.f32.mxu0 0.0
  %6316 = vmatmul.mubr.f32.gmra.mrb[0].mxu0 %v6240
  %v6317 = vpop.f32.mrb[0].mxu0
  %v6318 = vadd.f32 0.0, %v6317
  %v6319 = vpop.f32.mrb[0].mxu0
  %6320 = vmatprep.mubr.f32.mxu0 0.0
  %6321 = vmatmul.mubr.f32.gmra.mrb[0].mxu0 %v6242
  %v6322 = vpop.f32.mrb[0].mxu0
  %v6323 = vadd.f32 0.0, %v6322
  %v6324 = vpop.f32.mrb[0].mxu0
  %6325 = vmatprep.mubr.f32.mxu0 0.0
  %6326 = vmatmul.mubr.f32.gmra.mrb[0].mxu0 %v6244
  %v6327 = vpop.f32.mrb[0].mxu0
  %v6328 = vadd.f32 0.0, %v6327
  %v6329 = vpop.f32.mrb[0].mxu0
  %6330 = vdwg.mxu0
  %v6331 = vadd.f32 %v4696, %v6313
  %v6332 = vadd.f32 %v4701, %v6318
  %v6333 = vadd.f32 %v4706, %v6323
  %v6334 = vadd.f32 %v4711, %v6328
  %v6335 = vxor.u32 %v6331, 2147483648
  %v6336 = vxor.u32 %v6332, 2147483648
  %v6337 = vxor.u32 %v6333, 2147483648
  %v6338 = vxor.u32 %v6334, 2147483648
  %v6339 = vmul.f32 %v6335, 1.442695
  %v6340 = vpow.pop %v6339
  %v6341 = vmul.f32 %v6336, 1.442695
  %v6342 = vpow.pop %v6341
  %v6343 = vmul.f32 %v6337, 1.442695
  %v6344 = vpow.pop %v6343
  %v6345 = vmul.f32 %v6338, 1.442695
  %v6346 = vpow.pop %v6345
  %v6347 = vadd.f32 %v6340, 1.0
  %v6348 = vadd.f32 %v6342, 1.0
  %v6349 = vadd.f32 %v6344, 1.0
  %v6350 = vadd.f32 %v6346, 1.0
  %v6351 = vrcp.pop %v6347
  %v6352 = vmul.f32 1.0, %v6351
  %v6353 = vrcp.pop %v6348
  %v6354 = vmul.f32 1.0, %v6353
  %v6355 = vrcp.pop %v6349
  %v6356 = vmul.f32 1.0, %v6355
  %v6357 = vrcp.pop %v6350
  %v6358 = vmul.f32 1.0, %v6357
  %v6359 = vtanh.pop %v6331
  %v6360 = vtanh.pop %v6332
  %v6361 = vtanh.pop %v6333
  %v6362 = vtanh.pop %v6334
  %v6363 = vmul.f32 %v6352, %v6185
  %v6364 = vmul.f32 %v6354, %v6186
  %v6365 = vmul.f32 %v6356, %v6187
  %v6366 = vmul.f32 %v6358, %v6188
  %6371 = vrot.lane.b32.xlu0 %v6359, 64
  %v6372 = vpop.permute.xlu0 %6371
  %6373 = vrot.lane.b32.xlu0 %v6360, 64
  %v6374 = vpop.permute.xlu0 %6373
  %6375 = vrot.lane.b32.xlu0 %v6361, 64
  %v6376 = vpop.permute.xlu0 %6375
  %6377 = vrot.lane.b32.xlu0 %v6362, 64
  %v6378 = vpop.permute.xlu0 %6377
  %v6383 = vmul.f32 %v6352, %v6372
  %v6384 = vmul.f32 %v6354, %v6374
  %v6385 = vmul.f32 %v6356, %v6376
  %v6386 = vmul.f32 %v6358, %v6378
  %6391 = vrot.lane.b32.xlu0 %v6383, 32
  %v6392 = vpop.permute.xlu0 %6391
  %6393 = vrot.lane.b32.xlu0 %v6384, 32
  %v6394 = vpop.permute.xlu0 %6393
  %6395 = vrot.lane.b32.xlu0 %v6385, 32
  %v6396 = vpop.permute.xlu0 %6395
  %6397 = vrot.lane.b32.xlu0 %v6386, 32
  %v6398 = vpop.permute.xlu0 %6397
  %v6403 = vadd.f32 %v6363, %v6392
  %v6404 = vadd.f32 %v6364, %v6394
  %v6405 = vadd.f32 %v6365, %v6396
  %v6406 = vadd.f32 %v6366, %v6398
  %v6407 = vtanh.pop %v6403
  %v6408 = vtanh.pop %v6404
  %v6409 = vtanh.pop %v6405
  %v6410 = vtanh.pop %v6406
  %6415 = vrot.lane.b32.xlu0 %v6407, 64
  %v6416 = vpop.permute.xlu0 %6415
  %6417 = vrot.lane.b32.xlu0 %v6408, 64
  %v6418 = vpop.permute.xlu0 %6417
  %6419 = vrot.lane.b32.xlu0 %v6409, 64
  %v6420 = vpop.permute.xlu0 %6419
  %6421 = vrot.lane.b32.xlu0 %v6410, 64
  %v6422 = vpop.permute.xlu0 %6421
  %v6427 = vmul.f32 %v6352, %v6416
  %v6428 = vmul.f32 %v6354, %v6418
  %v6429 = vmul.f32 %v6356, %v6420
  %v6430 = vmul.f32 %v6358, %v6422
  %6435 = vrot.lane.b32.xlu0 %v6427, 32
  %v6436 = vpop.permute.xlu0 %6435
  %6437 = vrot.lane.b32.xlu0 %v6428, 32
  %v6438 = vpop.permute.xlu0 %6437
  %6439 = vrot.lane.b32.xlu0 %v6429, 32
  %v6440 = vpop.permute.xlu0 %6439
  %6441 = vrot.lane.b32.xlu0 %v6430, 32
  %v6442 = vpop.permute.xlu0 %6441
  %s6447 = scalar_lea.vmem [#allocation2], 224
  %6448 = vst.msk [vmem:[%s6447] sm:$0xff] %vm1356, %v6436
  %6449 = vst.msk [vmem:[%s6447 + $0x8] sm:$0xff] %vm1356, %v6438
  %6450 = vst.msk [vmem:[%s6447 + $0x10] sm:$0xff] %vm1356, %v6440
  %6451 = vst.msk [vmem:[%s6447 + $0x18] sm:$0xff] %vm1356, %v6442
  %v6452 = vld [vmem:[#allocation2] sm:$0xff]
  %v6453 = vld [vmem:[#allocation2 + $0x8] sm:$0xff]
  %v6454 = vld [vmem:[#allocation2 + $0x10] sm:$0xff]
  %v6455 = vld [vmem:[#allocation2 + $0x18] sm:$0xff]
  %v6456 = vld [vmem:[#allocation2 + $0x20] sm:$0xff]
  %v6457 = vld [vmem:[#allocation2 + $0x28] sm:$0xff]
  %v6458 = vld [vmem:[#allocation2 + $0x30] sm:$0xff]
  %v6459 = vld [vmem:[#allocation2 + $0x38] sm:$0xff]
  %v6460 = vld [vmem:[#allocation2 + $0x40] sm:$0xff]
  %v6461 = vld [vmem:[#allocation2 + $0x48] sm:$0xff]
  %v6462 = vld [vmem:[#allocation2 + $0x50] sm:$0xff]
  %v6463 = vld [vmem:[#allocation2 + $0x58] sm:$0xff]
  %v6464 = vld [vmem:[#allocation2 + $0x60] sm:$0xff]
  %v6465 = vld [vmem:[#allocation2 + $0x68] sm:$0xff]
  %v6466 = vld [vmem:[#allocation2 + $0x70] sm:$0xff]
  %v6467 = vld [vmem:[#allocation2 + $0x78] sm:$0xff]
  %v6468 = vld [vmem:[#allocation2 + $0x80] sm:$0xff]
  %v6469 = vld [vmem:[#allocation2 + $0x88] sm:$0xff]
  %v6470 = vld [vmem:[#allocation2 + $0x90] sm:$0xff]
  %v6471 = vld [vmem:[#allocation2 + $0x98] sm:$0xff]
  %v6472 = vld [vmem:[#allocation2 + $0xa0] sm:$0xff]
  %v6473 = vld [vmem:[#allocation2 + $0xa8] sm:$0xff]
  %v6474 = vld [vmem:[#allocation2 + $0xb0] sm:$0xff]
  %v6475 = vld [vmem:[#allocation2 + $0xb8] sm:$0xff]
  %v6476 = vld [vmem:[#allocation2 + $0xc0] sm:$0xff]
  %v6477 = vld [vmem:[#allocation2 + $0xc8] sm:$0xff]
  %v6478 = vld [vmem:[#allocation2 + $0xd0] sm:$0xff]
  %v6479 = vld [vmem:[#allocation2 + $0xd8] sm:$0xff]
  %v6480 = vld [vmem:[#allocation2 + $0xe0] sm:$0xff]
  %v6481 = vld [vmem:[#allocation2 + $0xe8] sm:$0xff]
  %v6482 = vld [vmem:[#allocation2 + $0xf0] sm:$0xff]
  %v6483 = vld [vmem:[#allocation2 + $0xf8] sm:$0xff]
  %v6484 = vld [vmem:[%s11] sm:$0xff]
  %v6485 = vld [vmem:[%s11 + $0x8] sm:$0xff]
  %v6486 = vld [vmem:[%s11 + $0x10] sm:$0xff]
  %v6487 = vld [vmem:[%s11 + $0x18] sm:$0xff]
  %v6488 = vld [vmem:[%s12] sm:$0x1]
  %v6490 = vlaneseq
  %v6491 = vshrl.u32 %v6490, 7
  %v6492 = vsub.s32 0, %v6491
  %v6493 = vrot.slane %v6488, %v6492
  %v6496 = vsel %vm1356, %v6452, 0
  %v6499 = vsel %vm1356, %v6453, 0
  %v6502 = vsel %vm1356, %v6454, 0
  %v6505 = vsel %vm1356, %v6455, 0
  %v6508 = vsel %vm1356, %v6456, 0
  %v6511 = vsel %vm1356, %v6457, 0
  %v6514 = vsel %vm1356, %v6458, 0
  %v6517 = vsel %vm1356, %v6459, 0
  %v6520 = vsel %vm1356, %v6460, 0
  %v6523 = vsel %vm1356, %v6461, 0
  %v6526 = vsel %vm1356, %v6462, 0
  %v6529 = vsel %vm1356, %v6463, 0
  %v6532 = vsel %vm1356, %v6464, 0
  %v6535 = vsel %vm1356, %v6465, 0
  %v6538 = vsel %vm1356, %v6466, 0
  %v6541 = vsel %vm1356, %v6467, 0
  %v6544 = vsel %vm1356, %v6468, 0
  %v6547 = vsel %vm1356, %v6469, 0
  %v6550 = vsel %vm1356, %v6470, 0
  %v6553 = vsel %vm1356, %v6471, 0
  %v6556 = vsel %vm1356, %v6472, 0
  %v6559 = vsel %vm1356, %v6473, 0
  %v6562 = vsel %vm1356, %v6474, 0
  %v6565 = vsel %vm1356, %v6475, 0
  %v6568 = vsel %vm1356, %v6476, 0
  %v6571 = vsel %vm1356, %v6477, 0
  %v6574 = vsel %vm1356, %v6478, 0
  %v6577 = vsel %vm1356, %v6479, 0
  %v6580 = vsel %vm1356, %v6480, 0
  %v6583 = vsel %vm1356, %v6481, 0
  %v6586 = vsel %vm1356, %v6482, 0
  %v6589 = vsel %vm1356, %v6483, 0
  %6591 = vmatprep.subr.mxu0 0.0
  %6592 = vmatpush1.msra.mxu0 %v6484
  %6593 = vmatprep.subr.mxu0 0.0
  %6594 = vmatpush1.msra.mxu0 %v6485
  %6595 = vmatprep.subr.mxu0 0.0
  %6596 = vmatpush1.msra.mxu0 %v6486
  %6597 = vmatprep.subr.mxu0 0.0
  %6598 = vmatpush1.msra.mxu0 %v6487
  %6599 = vmatprep.subr.mxu0 0.0
  %6600 = vmatpush1.msra.mxu0 0.0
  %6601 = vmatprep.subr.mxu0 0.0
  %6602 = vmatpush1.msra.mxu0 0.0
  %6603 = vmatprep.subr.mxu0 0.0
  %6604 = vmatpush1.msra.mxu0 0.0
  %6605 = vmatprep.subr.mxu0 0.0
  %6606 = vmatpush1.msra.mxu0 0.0
  %6607 = vmatprep.subr.mxu0 0.0
  %6608 = vmatpush1.msra.mxu0 0.0
  %6609 = vmatprep.subr.mxu0 0.0
  %6610 = vmatpush1.msra.mxu0 0.0
  %6611 = vmatprep.subr.mxu0 0.0
  %6612 = vmatpush1.msra.mxu0 0.0
  %6613 = vmatprep.subr.mxu0 0.0
  %6614 = vmatpush1.msra.mxu0 0.0
  %6615 = vmatprep.subr.mxu0 0.0
  %6616 = vmatpush1.msra.mxu0 0.0
  %6617 = vmatprep.subr.mxu0 0.0
  %6618 = vmatpush1.msra.mxu0 0.0
  %6619 = vmatprep.subr.mxu0 0.0
  %6620 = vmatpush1.msra.mxu0 0.0
  %6621 = vmatprep.subr.mxu0 0.0
  %6622 = vmatpush1.msra.mxu0 0.0
  %6623 = vmatprep.subr.mxu0 0.0
  %6624 = vmatpush1.msra.mxu0 0.0
  %6625 = vmatprep.subr.mxu0 0.0
  %6626 = vmatpush1.msra.mxu0 0.0
  %6627 = vmatprep.subr.mxu0 0.0
  %6628 = vmatpush1.msra.mxu0 0.0
  %6629 = vmatprep.subr.mxu0 0.0
  %6630 = vmatpush1.msra.mxu0 0.0
  %6631 = vmatprep.subr.mxu0 0.0
  %6632 = vmatpush1.msra.mxu0 0.0
  %6633 = vmatprep.subr.mxu0 0.0
  %6634 = vmatpush1.msra.mxu0 0.0
  %6635 = vmatprep.subr.mxu0 0.0
  %6636 = vmatpush1.msra.mxu0 0.0
  %6637 = vmatprep.subr.mxu0 0.0
  %6638 = vmatpush1.msra.mxu0 0.0
  %6639 = vmatprep.subr.mxu0 0.0
  %6640 = vmatpush1.msra.mxu0 0.0
  %6641 = vmatprep.subr.mxu0 0.0
  %6642 = vmatpush1.msra.mxu0 0.0
  %6643 = vmatprep.subr.mxu0 0.0
  %6644 = vmatpush1.msra.mxu0 0.0
  %6645 = vmatprep.subr.mxu0 0.0
  %6646 = vmatpush1.msra.mxu0 0.0
  %6647 = vmatprep.subr.mxu0 0.0
  %6648 = vmatpush1.msra.mxu0 0.0
  %6649 = vmatprep.subr.mxu0 0.0
  %6650 = vmatpush1.msra.mxu0 0.0
  %6651 = vmatprep.subr.mxu0 0.0
  %6652 = vmatpush1.msra.mxu0 0.0
  %6653 = vmatprep.subr.mxu0 0.0
  %6654 = vmatpush1.msra.mxu0 0.0
  %6655 = vmatprep.mubr.f32.mxu0 0.0
  %6656 = vmatmul.mubr.f32.gmra.mrb[0].mxu0 %v6496
  %v6657 = vpop.f32.mrb[0].mxu0
  %v6658 = vadd.f32 %v6493, %v6657
  %v6659 = vpop.f32.mrb[0].mxu0
  %6660 = vmatprep.mubr.f32.mxu0 0.0
  %6661 = vmatmul.mubr.f32.gmra.mrb[0].mxu0 %v6499
  %v6662 = vpop.f32.mrb[0].mxu0
  %v6663 = vadd.f32 %v6493, %v6662
  %v6664 = vpop.f32.mrb[0].mxu0
  %6665 = vmatprep.mubr.f32.mxu0 0.0
  %6666 = vmatmul.mubr.f32.gmra.mrb[0].mxu0 %v6502
  %v6667 = vpop.f32.mrb[0].mxu0
  %v6668 = vadd.f32 %v6493, %v6667
  %v6669 = vpop.f32.mrb[0].mxu0
  %6670 = vmatprep.mubr.f32.mxu0 0.0
  %6671 = vmatmul.mubr.f32.gmra.mrb[0].mxu0 %v6505
  %v6672 = vpop.f32.mrb[0].mxu0
  %v6673 = vadd.f32 %v6493, %v6672
  %v6674 = vpop.f32.mrb[0].mxu0
  %6675 = vmatprep.mubr.f32.mxu0 0.0
  %6676 = vmatmul.mubr.f32.gmra.mrb[0].mxu0 %v6508
  %v6677 = vpop.f32.mrb[0].mxu0
  %v6678 = vadd.f32 %v6493, %v6677
  %v6679 = vpop.f32.mrb[0].mxu0
  %6680 = vmatprep.mubr.f32.mxu0 0.0
  %6681 = vmatmul.mubr.f32.gmra.mrb[0].mxu0 %v6511
  %v6682 = vpop.f32.mrb[0].mxu0
  %v6683 = vadd.f32 %v6493, %v6682
  %v6684 = vpop.f32.mrb[0].mxu0
  %6685 = vmatprep.mubr.f32.mxu0 0.0
  %6686 = vmatmul.mubr.f32.gmra.mrb[0].mxu0 %v6514
  %v6687 = vpop.f32.mrb[0].mxu0
  %v6688 = vadd.f32 %v6493, %v6687
  %v6689 = vpop.f32.mrb[0].mxu0
  %6690 = vmatprep.mubr.f32.mxu0 0.0
  %6691 = vmatmul.mubr.f32.gmra.mrb[0].mxu0 %v6517
  %v6692 = vpop.f32.mrb[0].mxu0
  %v6693 = vadd.f32 %v6493, %v6692
  %v6694 = vpop.f32.mrb[0].mxu0
  %6695 = vmatprep.mubr.f32.mxu0 0.0
  %6696 = vmatmul.mubr.f32.gmra.mrb[0].mxu0 %v6520
  %v6697 = vpop.f32.mrb[0].mxu0
  %v6698 = vadd.f32 %v6493, %v6697
  %v6699 = vpop.f32.mrb[0].mxu0
  %6700 = vmatprep.mubr.f32.mxu0 0.0
  %6701 = vmatmul.mubr.f32.gmra.mrb[0].mxu0 %v6523
  %v6702 = vpop.f32.mrb[0].mxu0
  %v6703 = vadd.f32 %v6493, %v6702
  %v6704 = vpop.f32.mrb[0].mxu0
  %6705 = vmatprep.mubr.f32.mxu0 0.0
  %6706 = vmatmul.mubr.f32.gmra.mrb[0].mxu0 %v6526
  %v6707 = vpop.f32.mrb[0].mxu0
  %v6708 = vadd.f32 %v6493, %v6707
  %v6709 = vpop.f32.mrb[0].mxu0
  %6710 = vmatprep.mubr.f32.mxu0 0.0
  %6711 = vmatmul.mubr.f32.gmra.mrb[0].mxu0 %v6529
  %v6712 = vpop.f32.mrb[0].mxu0
  %v6713 = vadd.f32 %v6493, %v6712
  %v6714 = vpop.f32.mrb[0].mxu0
  %6715 = vmatprep.mubr.f32.mxu0 0.0
  %6716 = vmatmul.mubr.f32.gmra.mrb[0].mxu0 %v6532
  %v6717 = vpop.f32.mrb[0].mxu0
  %v6718 = vadd.f32 %v6493, %v6717
  %v6719 = vpop.f32.mrb[0].mxu0
  %6720 = vmatprep.mubr.f32.mxu0 0.0
  %6721 = vmatmul.mubr.f32.gmra.mrb[0].mxu0 %v6535
  %v6722 = vpop.f32.mrb[0].mxu0
  %v6723 = vadd.f32 %v6493, %v6722
  %v6724 = vpop.f32.mrb[0].mxu0
  %6725 = vmatprep.mubr.f32.mxu0 0.0
  %6726 = vmatmul.mubr.f32.gmra.mrb[0].mxu0 %v6538
  %v6727 = vpop.f32.mrb[0].mxu0
  %v6728 = vadd.f32 %v6493, %v6727
  %v6729 = vpop.f32.mrb[0].mxu0
  %6730 = vmatprep.mubr.f32.mxu0 0.0
  %6731 = vmatmul.mubr.f32.gmra.mrb[0].mxu0 %v6541
  %v6732 = vpop.f32.mrb[0].mxu0
  %v6733 = vadd.f32 %v6493, %v6732
  %v6734 = vpop.f32.mrb[0].mxu0
  %6735 = vmatprep.mubr.f32.mxu0 0.0
  %6736 = vmatmul.mubr.f32.gmra.mrb[0].mxu0 %v6544
  %v6737 = vpop.f32.mrb[0].mxu0
  %v6738 = vadd.f32 %v6493, %v6737
  %v6739 = vpop.f32.mrb[0].mxu0
  %6740 = vmatprep.mubr.f32.mxu0 0.0
  %6741 = vmatmul.mubr.f32.gmra.mrb[0].mxu0 %v6547
  %v6742 = vpop.f32.mrb[0].mxu0
  %v6743 = vadd.f32 %v6493, %v6742
  %v6744 = vpop.f32.mrb[0].mxu0
  %6745 = vmatprep.mubr.f32.mxu0 0.0
  %6746 = vmatmul.mubr.f32.gmra.mrb[0].mxu0 %v6550
  %v6747 = vpop.f32.mrb[0].mxu0
  %v6748 = vadd.f32 %v6493, %v6747
  %v6749 = vpop.f32.mrb[0].mxu0
  %6750 = vmatprep.mubr.f32.mxu0 0.0
  %6751 = vmatmul.mubr.f32.gmra.mrb[0].mxu0 %v6553
  %v6752 = vpop.f32.mrb[0].mxu0
  %v6753 = vadd.f32 %v6493, %v6752
  %v6754 = vpop.f32.mrb[0].mxu0
  %6755 = vmatprep.mubr.f32.mxu0 0.0
  %6756 = vmatmul.mubr.f32.gmra.mrb[0].mxu0 %v6556
  %v6757 = vpop.f32.mrb[0].mxu0
  %v6758 = vadd.f32 %v6493, %v6757
  %v6759 = vpop.f32.mrb[0].mxu0
  %6760 = vmatprep.mubr.f32.mxu0 0.0
  %6761 = vmatmul.mubr.f32.gmra.mrb[0].mxu0 %v6559
  %v6762 = vpop.f32.mrb[0].mxu0
  %v6763 = vadd.f32 %v6493, %v6762
  %v6764 = vpop.f32.mrb[0].mxu0
  %6765 = vmatprep.mubr.f32.mxu0 0.0
  %6766 = vmatmul.mubr.f32.gmra.mrb[0].mxu0 %v6562
  %v6767 = vpop.f32.mrb[0].mxu0
  %v6768 = vadd.f32 %v6493, %v6767
  %v6769 = vpop.f32.mrb[0].mxu0
  %6770 = vmatprep.mubr.f32.mxu0 0.0
  %6771 = vmatmul.mubr.f32.gmra.mrb[0].mxu0 %v6565
  %v6772 = vpop.f32.mrb[0].mxu0
  %v6773 = vadd.f32 %v6493, %v6772
  %v6774 = vpop.f32.mrb[0].mxu0
  %6775 = vmatprep.mubr.f32.mxu0 0.0
  %6776 = vmatmul.mubr.f32.gmra.mrb[0].mxu0 %v6568
  %v6777 = vpop.f32.mrb[0].mxu0
  %v6778 = vadd.f32 %v6493, %v6777
  %v6779 = vpop.f32.mrb[0].mxu0
  %6780 = vmatprep.mubr.f32.mxu0 0.0
  %6781 = vmatmul.mubr.f32.gmra.mrb[0].mxu0 %v6571
  %v6782 = vpop.f32.mrb[0].mxu0
  %v6783 = vadd.f32 %v6493, %v6782
  %v6784 = vpop.f32.mrb[0].mxu0
  %6785 = vmatprep.mubr.f32.mxu0 0.0
  %6786 = vmatmul.mubr.f32.gmra.mrb[0].mxu0 %v6574
  %v6787 = vpop.f32.mrb[0].mxu0
  %v6788 = vadd.f32 %v6493, %v6787
  %v6789 = vpop.f32.mrb[0].mxu0
  %6790 = vmatprep.mubr.f32.mxu0 0.0
  %6791 = vmatmul.mubr.f32.gmra.mrb[0].mxu0 %v6577
  %v6792 = vpop.f32.mrb[0].mxu0
  %v6793 = vadd.f32 %v6493, %v6792
  %v6794 = vpop.f32.mrb[0].mxu0
  %6795 = vmatprep.mubr.f32.mxu0 0.0
  %6796 = vmatmul.mubr.f32.gmra.mrb[0].mxu0 %v6580
  %v6797 = vpop.f32.mrb[0].mxu0
  %v6798 = vadd.f32 %v6493, %v6797
  %v6799 = vpop.f32.mrb[0].mxu0
  %6800 = vmatprep.mubr.f32.mxu0 0.0
  %6801 = vmatmul.mubr.f32.gmra.mrb[0].mxu0 %v6583
  %v6802 = vpop.f32.mrb[0].mxu0
  %v6803 = vadd.f32 %v6493, %v6802
  %v6804 = vpop.f32.mrb[0].mxu0
  %6805 = vmatprep.mubr.f32.mxu0 0.0
  %6806 = vmatmul.mubr.f32.gmra.mrb[0].mxu0 %v6586
  %v6807 = vpop.f32.mrb[0].mxu0
  %v6808 = vadd.f32 %v6493, %v6807
  %v6809 = vpop.f32.mrb[0].mxu0
  %6810 = vmatprep.mubr.f32.mxu0 0.0
  %6811 = vmatmul.mubr.f32.gmra.mrb[0].mxu0 %v6589
  %v6812 = vpop.f32.mrb[0].mxu0
  %v6813 = vadd.f32 %v6493, %v6812
  %v6814 = vpop.f32.mrb[0].mxu0
  %6815 = vdwg.mxu0
  %v6816 = vmax.f32 %v6658, 0.0
  %v6817 = vmax.f32 %v6663, 0.0
  %v6818 = vmax.f32 %v6668, 0.0
  %v6819 = vmax.f32 %v6673, 0.0
  %v6820 = vmax.f32 %v6678, 0.0
  %v6821 = vmax.f32 %v6683, 0.0
  %v6822 = vmax.f32 %v6688, 0.0
  %v6823 = vmax.f32 %v6693, 0.0
  %v6824 = vmax.f32 %v6698, 0.0
  %v6825 = vmax.f32 %v6703, 0.0
  %v6826 = vmax.f32 %v6708, 0.0
  %v6827 = vmax.f32 %v6713, 0.0
  %v6828 = vmax.f32 %v6718, 0.0
  %v6829 = vmax.f32 %v6723, 0.0
  %v6830 = vmax.f32 %v6728, 0.0
  %v6831 = vmax.f32 %v6733, 0.0
  %v6832 = vmax.f32 %v6738, 0.0
  %v6833 = vmax.f32 %v6743, 0.0
  %v6834 = vmax.f32 %v6748, 0.0
  %v6835 = vmax.f32 %v6753, 0.0
  %v6836 = vmax.f32 %v6758, 0.0
  %v6837 = vmax.f32 %v6763, 0.0
  %v6838 = vmax.f32 %v6768, 0.0
  %v6839 = vmax.f32 %v6773, 0.0
  %v6840 = vmax.f32 %v6778, 0.0
  %v6841 = vmax.f32 %v6783, 0.0
  %v6842 = vmax.f32 %v6788, 0.0
  %v6843 = vmax.f32 %v6793, 0.0
  %v6844 = vmax.f32 %v6798, 0.0
  %v6845 = vmax.f32 %v6803, 0.0
  %v6846 = vmax.f32 %v6808, 0.0
  %v6847 = vmax.f32 %v6813, 0.0
  %vm6848 = vcmask 15360
  %6849 = vst.msk [vmem:[%s13] sm:$0xff] %vm6848, %v6816
  %6850 = vst.msk [vmem:[%s13 + $0x8] sm:$0xff] %vm6848, %v6817
  %6851 = vst.msk [vmem:[%s13 + $0x10] sm:$0xff] %vm6848, %v6818
  %6852 = vst.msk [vmem:[%s13 + $0x18] sm:$0xff] %vm6848, %v6819
  %6853 = vst.msk [vmem:[%s13 + $0x20] sm:$0xff] %vm6848, %v6820
  %6854 = vst.msk [vmem:[%s13 + $0x28] sm:$0xff] %vm6848, %v6821
  %6855 = vst.msk [vmem:[%s13 + $0x30] sm:$0xff] %vm6848, %v6822
  %6856 = vst.msk [vmem:[%s13 + $0x38] sm:$0xff] %vm6848, %v6823
  %6857 = vst.msk [vmem:[%s13 + $0x40] sm:$0xff] %vm6848, %v6824
  %6858 = vst.msk [vmem:[%s13 + $0x48] sm:$0xff] %vm6848, %v6825
  %6859 = vst.msk [vmem:[%s13 + $0x50] sm:$0xff] %vm6848, %v6826
  %6860 = vst.msk [vmem:[%s13 + $0x58] sm:$0xff] %vm6848, %v6827
  %6861 = vst.msk [vmem:[%s13 + $0x60] sm:$0xff] %vm6848, %v6828
  %6862 = vst.msk [vmem:[%s13 + $0x68] sm:$0xff] %vm6848, %v6829
  %6863 = vst.msk [vmem:[%s13 + $0x70] sm:$0xff] %vm6848, %v6830
  %6864 = vst.msk [vmem:[%s13 + $0x78] sm:$0xff] %vm6848, %v6831
  %6865 = vst.msk [vmem:[%s13 + $0x80] sm:$0xff] %vm6848, %v6832
  %6866 = vst.msk [vmem:[%s13 + $0x88] sm:$0xff] %vm6848, %v6833
  %6867 = vst.msk [vmem:[%s13 + $0x90] sm:$0xff] %vm6848, %v6834
  %6868 = vst.msk [vmem:[%s13 + $0x98] sm:$0xff] %vm6848, %v6835
  %6869 = vst.msk [vmem:[%s13 + $0xa0] sm:$0xff] %vm6848, %v6836
  %6870 = vst.msk [vmem:[%s13 + $0xa8] sm:$0xff] %vm6848, %v6837
  %6871 = vst.msk [vmem:[%s13 + $0xb0] sm:$0xff] %vm6848, %v6838
  %6872 = vst.msk [vmem:[%s13 + $0xb8] sm:$0xff] %vm6848, %v6839
  %6873 = vst.msk [vmem:[%s13 + $0xc0] sm:$0xff] %vm6848, %v6840
  %6874 = vst.msk [vmem:[%s13 + $0xc8] sm:$0xff] %vm6848, %v6841
  %6875 = vst.msk [vmem:[%s13 + $0xd0] sm:$0xff] %vm6848, %v6842
  %6876 = vst.msk [vmem:[%s13 + $0xd8] sm:$0xff] %vm6848, %v6843
  %6877 = vst.msk [vmem:[%s13 + $0xe0] sm:$0xff] %vm6848, %v6844
  %6878 = vst.msk [vmem:[%s13 + $0xe8] sm:$0xff] %vm6848, %v6845
  %6879 = vst.msk [vmem:[%s13 + $0xf0] sm:$0xff] %vm6848, %v6846
  %6880 = vst.msk [vmem:[%s13 + $0xf8] sm:$0xff] %vm6848, %v6847
  // Predicated region
  $region54: #{recurrent_gnn_surrogate.1} parent=0 // pred_check
    _
  $region55: #{recurrent_gnn_surrogate.1} parent=0 // pred_check_branch
    %6882 = sbr.rel (0) target = $region57
  $region56: #{recurrent_gnn_surrogate.1} parent=0 // pred_region
    _
  $region57: #{recurrent_gnn_surrogate.1} parent=0 // pred_fallthru
    _
  // Predicated region
  $region58: #{recurrent_gnn_surrogate.1} parent=0 // pred_check
    _
  $region59: #{recurrent_gnn_surrogate.1} parent=0 // pred_check_branch
    %6884 = sbr.rel (0) target = $region61
  $region60: #{recurrent_gnn_surrogate.1} parent=0 // pred_region
    _
  $region61: #{recurrent_gnn_surrogate.1} parent=0 // pred_fallthru
    _

</llo_original>
